<compile_context>
chip_gen: v7x
topology: tpu7x:2x2x1
jax: 0.10.0
libtpu: 0.0.40
codegen_flags: <defaults>
</compile_context>

<pallas_src>
from functools import partial

import jax
import jax.numpy as jnp
import numpy as np
from jax.experimental import pallas as pl
from jax.experimental.pallas import tpu as pltpu

BN_EPS = 1e-5
_BF16 = jnp.bfloat16
# 48 MiB scoped VMEM: enough for tb=128 double-buffered blocks and safe on all
# generations (v7x has 64 MiB/TensorCore; v5e/v6e have 128 MiB).
_VMEM_LIMIT = 48 * 1024 * 1024


def _compiler_params():
    return pltpu.CompilerParams(
        dimension_semantics=("parallel",), vmem_limit_bytes=_VMEM_LIMIT
    )


def _round_up(x, m):
    return ((x + m - 1) // m) * m


def _choose_tb(B, target):
    """Batch tile: a multiple of 8 (sublane alignment of every (tb, ...) block)
    and, when B allows it, small enough that the grid has >= 2 steps so the
    single 'parallel' axis can shard across v7x's two TensorCores."""
    half = _round_up(max(1, (B + 1) // 2), 8)
    return max(8, min(target, half))


def _bn_tile(tb, g, cap):
    """Largest multiple of tb that divides g*tb and is <= cap (the final
    BN+ReLU pass is pure HBM streaming, so bigger tiles are better)."""
    best = tb
    for d in range(1, g + 1):
        if g % d == 0 and tb * d <= cap:
            best = tb * d
    return best


def _mm_bf16(a, b):
    return jnp.dot(a.astype(_BF16), b.astype(_BF16),
                   preferred_element_type=jnp.float32)


# --------------------------------------------------------------------------
# Kernels
# --------------------------------------------------------------------------
def adj_gcn1_kernel(z_ref, wz_ref, const_ref, b_ref,
                    adj_ref, h_ref, psum_ref, pssq_ref, *, b_actual):
    # z_ref:     (TB, V, Cz)      bf16  raw per-sample features (embedding split out)
    # wz_ref:    (Cz, 2K+2Co)     bf16  z-rows of fused [theta | phi | W1 | W2]
    # const_ref: (1, V, 2K+2Co)   f32   emb-rows contribution (+ theta/phi bias)
    # b_ref:     (1, Co)          f32   GCN bias (added twice, as in GCN.forward)
    TB, V, Cz = z_ref.shape
    Co = b_ref.shape[-1]
    K = (wz_ref.shape[-1] - 2 * Co) // 2

    z2d = z_ref[...].reshape(TB * V, Cz)
    zw = jnp.dot(z2d, wz_ref[...], preferred_element_type=jnp.float32)
    # [z|emb] @ W  ==  z @ W_z  +  emb @ W_e   (the latter is the const rows)
    tpxw = zw.reshape(TB, V, -1) + const_ref[...]            # (TB, V, 2K+2Co)

    # ---- adjacency: softmax_{dim=-2}(theta @ phi^T) ------------------------
    theta = tpxw[:, :, :K]
    phi = tpxw[:, :, K:2 * K]
    s = jnp.einsum("bvk,bwk->bvw", theta.astype(_BF16), phi.astype(_BF16),
                   preferred_element_type=jnp.float32)       # (TB, V, V)
    m = jnp.max(s, axis=1, keepdims=True)                    # softmax over dim -2
    e = jnp.exp(s - m)
    adj = e / jnp.sum(e, axis=1, keepdims=True)
    # NOTE: kept as (V, V) trailing dims (dense in HBM since the block spans the
    # full trailing dims); a lane-dense (V*V,) store would need a minor-dim
    # reshape in-kernel and adj is a small fraction of the streamed bytes.
    adj_ref[...] = adj.astype(adj_ref.dtype)

    # ---- gcn1: adj @ (x@W1) + x@W2 + 2*bias --------------------------------
    xw1 = tpxw[:, :, 2 * K:2 * K + Co]
    xw2 = tpxw[:, :, 2 * K + Co:]
    axw1 = jnp.einsum("bvw,bwd->bvd", adj.astype(_BF16), xw1.astype(_BF16),
                      preferred_element_type=jnp.float32)
    h = axw1 + xw2 + 2.0 * b_ref[...]
    h_ref[...] = h.astype(h_ref.dtype)                       # bf16 store

    # ---- masked per-block BatchNorm partials (f32, reduced in plain JAX) ---
    h2d = h.reshape(TB * V, Co)
    base = pl.program_id(0) * TB
    row = jax.lax.broadcasted_iota(jnp.int32, (TB * V, 1), 0)
    valid = (row < (b_actual - base) * V).astype(jnp.float32)   # padded rows -> 0
    hm = h2d * valid
    psum_ref[...] = jnp.sum(hm, axis=0, keepdims=True).reshape(1, 1, Co)
    pssq_ref[...] = jnp.sum(hm * h2d, axis=0, keepdims=True).reshape(1, 1, Co)


def bn_relu_gcn_kernel(h_ref, scale_ref, shift_ref, adj_ref, w12_ref, b_ref,
                       o_ref, psum_ref, pssq_ref, *, b_actual):
    # Fuses BatchNorm+ReLU of the previous block into this GCN (saves a full
    # HBM round trip of the activations).
    TB, V, Ci = h_ref.shape
    Co = b_ref.shape[-1]

    x = h_ref[...].astype(jnp.float32) * scale_ref[...] + shift_ref[...]
    x2d = jnp.maximum(x, 0.0).reshape(TB * V, Ci).astype(_BF16)

    xw = jnp.dot(x2d, w12_ref[...], preferred_element_type=jnp.float32)
    xw = xw.reshape(TB, V, 2 * Co)
    xw1 = xw[:, :, :Co]
    xw2 = xw[:, :, Co:]
    axw1 = jnp.einsum("bvw,bwd->bvd", adj_ref[...], xw1.astype(_BF16),
                      preferred_element_type=jnp.float32)
    h = axw1 + xw2 + 2.0 * b_ref[...]
    o_ref[...] = h.astype(o_ref.dtype)                       # bf16 store

    h2d = h.reshape(TB * V, Co)
    base = pl.program_id(0) * TB
    row = jax.lax.broadcasted_iota(jnp.int32, (TB * V, 1), 0)
    valid = (row < (b_actual - base) * V).astype(jnp.float32)
    hm = h2d * valid
    psum_ref[...] = jnp.sum(hm, axis=0, keepdims=True).reshape(1, 1, Co)
    pssq_ref[...] = jnp.sum(hm * h2d, axis=0, keepdims=True).reshape(1, 1, Co)


def bn_relu_kernel(h_ref, scale_ref, shift_ref, y_ref):
    x = h_ref[...].astype(jnp.float32)
    y_ref[...] = jnp.maximum(x * scale_ref[...] + shift_ref[...], 0.0
                             ).astype(y_ref.dtype)


# --------------------------------------------------------------------------
# pallas_call wrappers
# --------------------------------------------------------------------------
def adj_gcn1_pallas(z, wz, const, bias, tb, b_actual):
    Bp, V, Cz = z.shape
    W = wz.shape[-1]
    Co = bias.shape[-1]
    G = Bp // tb
    return pl.pallas_call(
        partial(adj_gcn1_kernel, b_actual=b_actual),
        out_shape=(
            jax.ShapeDtypeStruct((Bp, V, V), _BF16),           # adj (reused 2x)
            jax.ShapeDtypeStruct((Bp, V, Co), _BF16),          # h1
            jax.ShapeDtypeStruct((G, 1, Co), jnp.float32),     # BN partial sum
            jax.ShapeDtypeStruct((G, 1, Co), jnp.float32),     # BN partial sum sq
        ),
        grid=(G,),
        in_specs=[
            pl.BlockSpec((tb, V, Cz), lambda i: (i, 0, 0)),
            pl.BlockSpec((Cz, W), lambda i: (0, 0)),
            pl.BlockSpec((1, V, W), lambda i: (0, 0, 0)),
            pl.BlockSpec((1, Co), lambda i: (0, 0)),
        ],
        out_specs=(
            pl.BlockSpec((tb, V, V), lambda i: (i, 0, 0)),
            pl.BlockSpec((tb, V, Co), lambda i: (i, 0, 0)),
            pl.BlockSpec((1, 1, Co), lambda i: (i, 0, 0)),
            pl.BlockSpec((1, 1, Co), lambda i: (i, 0, 0)),
        ),
        compiler_params=_compiler_params(),
    )(z, wz, const, bias)


def bn_relu_gcn_pallas(h_in, scale, shift, adj, w12, bias, tb, b_actual):
    Bp, V, Ci = h_in.shape
    Co = bias.shape[-1]
    G = Bp // tb
    return pl.pallas_call(
        partial(bn_relu_gcn_kernel, b_actual=b_actual),
        out_shape=(
            jax.ShapeDtypeStruct((Bp, V, Co), _BF16),
            jax.ShapeDtypeStruct((G, 1, Co), jnp.float32),
            jax.ShapeDtypeStruct((G, 1, Co), jnp.float32),
        ),
        grid=(G,),
        in_specs=[
            pl.BlockSpec((tb, V, Ci), lambda i: (i, 0, 0)),
            pl.BlockSpec((1, Ci), lambda i: (0, 0)),
            pl.BlockSpec((1, Ci), lambda i: (0, 0)),
            pl.BlockSpec((tb, V, V), lambda i: (i, 0, 0)),
            pl.BlockSpec((Ci, 2 * Co), lambda i: (0, 0)),
            pl.BlockSpec((1, Co), lambda i: (0, 0)),
        ],
        out_specs=(
            pl.BlockSpec((tb, V, Co), lambda i: (i, 0, 0)),
            pl.BlockSpec((1, 1, Co), lambda i: (i, 0, 0)),
            pl.BlockSpec((1, 1, Co), lambda i: (i, 0, 0)),
        ),
        compiler_params=_compiler_params(),
    )(h_in, scale, shift, adj, w12, bias)


def bn_relu_pallas(h, scale, shift, tb):
    Bp, V, C = h.shape
    G = Bp // tb
    return pl.pallas_call(
        bn_relu_kernel,
        out_shape=jax.ShapeDtypeStruct((Bp, V, C), jnp.float32),
        grid=(G,),
        in_specs=[
            pl.BlockSpec((tb, V, C), lambda i: (i, 0, 0)),
            pl.BlockSpec((1, C), lambda i: (0, 0)),
            pl.BlockSpec((1, C), lambda i: (0, 0)),
        ],
        out_specs=pl.BlockSpec((tb, V, C), lambda i: (i, 0, 0)),
        compiler_params=_compiler_params(),
    )(h, scale, shift)


def bn_affine(psum, pssq, n, gamma, beta):
    """Fold accumulated (masked) batch statistics into per-channel scale/shift."""
    s = jnp.sum(psum, axis=0)            # (1, C)
    ss = jnp.sum(pssq, axis=0)
    mean = s / n
    # E[x^2] - mean^2 in f32 is fine here (BN keeps activations well centred);
    # a Welford-style reduction could replace it for very large batches.
    var = ss / n - mean * mean
    inv = jax.lax.rsqrt(var + BN_EPS)
    scale = gamma * inv
    shift = beta - mean * scale
    return scale, shift


# --------------------------------------------------------------------------
# Parameters + full forward
# --------------------------------------------------------------------------
def init_params(key, V, C):
    ks = jax.random.split(key, 11)

    def lin_w(k, fan_in, fan_out, scale=None):
        scale = (1.0 / np.sqrt(fan_in)) if scale is None else scale
        return jax.random.normal(k, (fan_out, fan_in), jnp.float32) * scale

    def lin_b(k, fan_out):
        return jax.random.normal(k, (fan_out,), jnp.float32) * 0.01

    p = {}
    # Embed([V, 64, 64]): Linear(V,64)+ReLU, Linear(64,64)+ReLU
    p["we1"], p["be1"] = lin_w(ks[0], V, 64), lin_b(ks[1], 64)
    p["we2"], p["be2"] = lin_w(ks[2], 64, 64), lin_b(ks[3], 64)
    # AdjacencyMatrix(V, 128, 256): theta/phi Linear(128, 256)
    cin = C + 64
    p["wt"], p["bt"] = lin_w(ks[4], cin, 256, scale=1.0 / cin), lin_b(ks[5], 256)
    p["wp"], p["bp"] = lin_w(ks[6], cin, 256, scale=1.0 / cin), lin_b(ks[7], 256)

    def gcn_p(k, c_in, c_out):
        k1, k2, k3, k4, k5 = jax.random.split(k, 5)
        w1_t = lin_w(k1, c_in, c_out).T                 # lin1 (no bias)
        w2_t = lin_w(k2, c_in, c_out).T                 # lin2 (no bias)
        return {
            "w12_t": jnp.concatenate([w1_t, w2_t], axis=1),     # (c_in, 2*c_out)
            # PyTorch inits bias/beta to 0 and gamma to 1; small random values
            # are used here so the test actually exercises those terms.
            "bias": 0.05 * jax.random.normal(k3, (1, c_out), jnp.float32),
            "gamma": 1.0 + 0.1 * jax.random.normal(k4, (1, c_out), jnp.float32),
            "beta": 0.05 * jax.random.normal(k5, (1, c_out), jnp.float32),
        }

    p["gcn1"] = gcn_p(ks[8], cin, 128)
    p["gcn2"] = gcn_p(ks[9], 128, 256)
    p["gcn3"] = gcn_p(ks[10], 256, 256)
    return p


def joint_embedding(p, V):
    # Embed(one_hot(V)) — tiny (V, V) constant, computed once in plain JAX.
    one_hot = jnp.eye(V, dtype=jnp.float32)
    e = jnp.maximum(one_hot @ p["we1"].T + p["be1"], 0.0)
    e = jnp.maximum(e @ p["we2"].T + p["be2"], 0.0)
    return e                                                    # (V, 64)


def joint_level_forward(z, p, tb_gcn=128, tb_bn=512):
    N, T, M, V, C = z.shape
    B = N * T * M
    n_true = float(B * V)

    tb = _choose_tb(B, tb_gcn)
    G = -(-B // tb)
    B_pad = G * tb

    zf = z.reshape(B, V, C)
    if B_pad != B:                       # pad to the tile; padded samples are
        zf = jnp.pad(zf, ((0, B_pad - B), (0, 0), (0, 0)))      # masked in BN stats
    zb = zf.astype(_BF16)

    q1, q2, q3 = p["gcn1"], p["gcn2"], p["gcn3"]
    Co1 = q1["bias"].shape[-1]

    # Constant joint embedding is never streamed through HBM per sample:
    # [z | emb] @ W == z @ W_z (in-kernel) + emb @ W_e (precomputed const rows).
    emb = joint_embedding(p, V)                                          # (V, 64)
    w_all = jnp.concatenate([p["wt"].T, p["wp"].T, q1["w12_t"]], axis=1)  # (C+64, 512+2*Co1)
    w_all_z = w_all[:C].astype(_BF16)
    bias_vec = jnp.concatenate(
        [p["bt"], p["bp"], jnp.zeros((2 * Co1,), jnp.float32)])[None, :]
    const = (_mm_bf16(emb, w_all[C:]) + bias_vec)[None]                  # (1, V, 512+2*Co1)

    # block 1: adjacency + gcn1 fused (z streamed once; adj reused by gcn2/3)
    adj, h1, ps1, ss1 = adj_gcn1_pallas(zb, w_all_z, const, q1["bias"], tb, B)
    sc1, sh1 = bn_affine(ps1, ss1, n_true, q1["gamma"], q1["beta"])

    # block 2: BN1+ReLU fused into gcn2
    h2, ps2, ss2 = bn_relu_gcn_pallas(
        h1, sc1, sh1, adj, q2["w12_t"].astype(_BF16), q2["bias"], tb, B)
    sc2, sh2 = bn_affine(ps2, ss2, n_true, q2["gamma"], q2["beta"])

    # block 3: BN2+ReLU fused into gcn3
    h3, ps3, ss3 = bn_relu_gcn_pallas(
        h2, sc2, sh2, adj, q3["w12_t"].astype(_BF16), q3["bias"], tb, B)
    sc3, sh3 = bn_affine(ps3, ss3, n_true, q3["gamma"], q3["beta"])

    # final BN3 + ReLU (pure streaming: big tile)
    y = bn_relu_pallas(h3, sc3, sh3, _bn_tile(tb, G, tb_bn))
    return y[:B].reshape(N, T, M, V, -1)


# --------------------------------------------------------------------------
# Pure-JAX reference (mirrors the PyTorch forward in training mode, with the
# same precision policy as the kernels: bf16 matmul operands / f32 accumulate
# and bf16 storage of adj and per-block activations).
# --------------------------------------------------------------------------
def reference_forward(z, p):
    N, T, M, V, C = z.shape
    B = N * T * M
    emb = jnp.broadcast_to(joint_embedding(p, V), (N, T, M, V, 64))
    x = jnp.concatenate([z, emb], axis=-1).reshape(B, V, -1)

    def mm(a, b):
        return jnp.einsum("bvc,cd->bvd", a.astype(_BF16), b.astype(_BF16),
                          preferred_element_type=jnp.float32)

    theta = mm(x, p["wt"].T) + p["bt"]
    phi = mm(x, p["wp"].T) + p["bp"]
    S = jnp.einsum("bvk,bwk->bvw", theta.astype(_BF16), phi.astype(_BF16),
                   preferred_element_type=jnp.float32)
    adj = jax.nn.softmax(S, axis=-2).astype(_BF16)           # stored bf16 by kernel

    def block(xb, q):
        c_out = q["bias"].shape[-1]
        xw1 = mm(xb, q["w12_t"][:, :c_out])
        xw2 = mm(xb, q["w12_t"][:, c_out:])
        h = (jnp.einsum("bvw,bwd->bvd", adj, xw1.astype(_BF16),
                        preferred_element_type=jnp.float32)
             + xw2 + 2.0 * q["bias"])                        # bias added twice (GCN.forward)
        mean = jnp.mean(h, axis=(0, 1), keepdims=True)
        var = jnp.mean(h * h, axis=(0, 1), keepdims=True) - mean * mean
        hq = h.astype(_BF16).astype(jnp.float32)             # stored bf16 by kernel
        scale = q["gamma"] * jax.lax.rsqrt(var + BN_EPS)
        shift = q["beta"] - mean * scale
        return jnp.maximum(hq * scale + shift, 0.0)

    xb = block(x, p["gcn1"])
    xb = block(xb, p["gcn2"])
    xb = block(xb, p["gcn3"])
    return xb.reshape(N, T, M, V, -1)


# --------------------------------------------------------------------------
if __name__ == "__main__":
    key = jax.random.PRNGKey(0)
    kp, kz1, kz2 = jax.random.split(key, 3)

    V, C = 16, 64                    # num_joints=16, num_features=64 (C+64 = 128)
    params = init_params(kp, V, C)
    fwd = jax.jit(joint_level_forward)
    ref_fn = jax.jit(reference_forward)

    # Config 1: B = N*T*M = 12 -> tb=8, 2 grid steps (v7x 2-TC split) + padding.
    N, T, M = 2, 3, 2
    z = jax.random.normal(kz1, (N, T, M, V, C), jnp.float32)
    out = jax.block_until_ready(fwd(z, params))
    assert out.shape == (N, T, M, V, 256), out.shape
    ref = jax.block_until_ready(ref_fn(z, params))
    np.testing.assert_allclose(np.asarray(out), np.asarray(ref),
                               rtol=2e-2, atol=2e-2)

    # Config 2: B = 5 (not a tile multiple) -> exercises batch padding + masked
    # BatchNorm statistics with a single grid step.
    N2, T2, M2 = 1, 5, 1
    z2 = jax.random.normal(kz2, (N2, T2, M2, V, C), jnp.float32)
    out2 = jax.block_until_ready(fwd(z2, params))
    ref2 = jax.block_until_ready(ref_fn(z2, params))
    np.testing.assert_allclose(np.asarray(out2), np.asarray(ref2),
                               rtol=2e-2, atol=2e-2)

    print("KERNEL_OK")
</pallas_src>

<mosaic_0001>
module attributes {stable_mosaic.version = 11 : i64} {
  func.func @bn_relu_gcn_kernel(%arg0: i32, %arg1: memref<8x16x128xbf16, #tpu.memory_space<vmem>>, %arg2: memref<1x128xf32, #tpu.memory_space<vmem>>, %arg3: memref<1x128xf32, #tpu.memory_space<vmem>>, %arg4: memref<8x16x16xbf16, #tpu.memory_space<vmem>>, %arg5: memref<128x512xbf16, #tpu.memory_space<vmem>>, %arg6: memref<1x256xf32, #tpu.memory_space<vmem>>, %arg7: memref<8x16x256xbf16, #tpu.memory_space<vmem>>, %arg8: memref<1x1x256xf32, #tpu.memory_space<vmem>>, %arg9: memref<1x1x256xf32, #tpu.memory_space<vmem>>) attributes {dimension_semantics = [#tpu.dimension_semantics<parallel>], iteration_bounds = array<i64: 2>, scalar_prefetch = 0 : i64, scratch_operands = 0 : i64, tpu.core_type = #tpu.core_type<tc>, window_params = [{transform_indices = @transform_0, window_bounds = array<i64: 8, 16, 128>}, {pipeline_mode = #tpu.pipeline_mode<synchronous>, transform_indices = @transform_1, window_bounds = array<i64: 1, 128>}, {pipeline_mode = #tpu.pipeline_mode<synchronous>, transform_indices = @transform_2, window_bounds = array<i64: 1, 128>}, {transform_indices = @transform_3, window_bounds = array<i64: 8, 16, 16>}, {pipeline_mode = #tpu.pipeline_mode<synchronous>, transform_indices = @transform_4, window_bounds = array<i64: 128, 512>}, {pipeline_mode = #tpu.pipeline_mode<synchronous>, transform_indices = @transform_5, window_bounds = array<i64: 1, 256>}, {transform_indices = @transform_6, window_bounds = array<i64: 8, 16, 256>}, {transform_indices = @transform_7, window_bounds = array<i64: 1, 1, 256>}, {transform_indices = @transform_8, window_bounds = array<i64: 1, 1, 256>}]} {
    %c0 = arith.constant 0 : index
    %c0_0 = arith.constant 0 : index
    %c0_1 = arith.constant 0 : index
    %0 = vector.load %arg1[%c0, %c0_0, %c0_1] : memref<8x16x128xbf16, #tpu.memory_space<vmem>>, vector<8x16x128xbf16>
    %1 = arith.extf %0 : vector<8x16x128xbf16> to vector<8x16x128xf32>
    %c0_2 = arith.constant 0 : index
    %c0_3 = arith.constant 0 : index
    %2 = vector.load %arg2[%c0_2, %c0_3] : memref<1x128xf32, #tpu.memory_space<vmem>>, vector<1x128xf32>
    %3 = vector.shape_cast %2 : vector<1x128xf32> to vector<1x1x128xf32>
    %4 = vector.broadcast %3 : vector<1x1x128xf32> to vector<8x16x128xf32>
    %5 = arith.mulf %1, %4 : vector<8x16x128xf32>
    %c0_4 = arith.constant 0 : index
    %c0_5 = arith.constant 0 : index
    %6 = vector.load %arg3[%c0_4, %c0_5] : memref<1x128xf32, #tpu.memory_space<vmem>>, vector<1x128xf32>
    %7 = vector.shape_cast %6 : vector<1x128xf32> to vector<1x1x128xf32>
    %8 = vector.broadcast %7 : vector<1x1x128xf32> to vector<8x16x128xf32>
    %9 = arith.addf %5, %8 : vector<8x16x128xf32>
    %cst = arith.constant 0.000000e+00 : f32
    %10 = vector.broadcast %cst : f32 to vector<8x16x128xf32>
    %11 = arith.maximumf %9, %10 : vector<8x16x128xf32>
    %12 = vector.shape_cast %11 : vector<8x16x128xf32> to vector<128x128xf32>
    %13 = arith.truncf %12 : vector<128x128xf32> to vector<128x128xbf16>
    %c0_6 = arith.constant 0 : index
    %c0_7 = arith.constant 0 : index
    %14 = vector.load %arg5[%c0_6, %c0_7] : memref<128x512xbf16, #tpu.memory_space<vmem>>, vector<128x512xbf16>
    %cst_8 = arith.constant dense<0.000000e+00> : vector<128x512xf32>
    %15 = tpu.matmul %13, %14, %cst_8 {dimension_numbers = #tpu.dot_dimension_numbers<[1], [0], [0], [1], [0, 0, 1, 1], [], []>} : vector<128x128xbf16>, vector<128x512xbf16>, vector<128x512xf32> -> vector<128x512xf32>
    %16 = vector.shape_cast %15 : vector<128x512xf32> to vector<8x16x512xf32>
    %17 = vector.extract_strided_slice %16 {offsets = [0, 0, 0], sizes = [8, 16, 256], strides = [1, 1, 1]} : vector<8x16x512xf32> to vector<8x16x256xf32>
    %18 = vector.extract_strided_slice %16 {offsets = [0, 0, 256], sizes = [8, 16, 256], strides = [1, 1, 1]} : vector<8x16x512xf32> to vector<8x16x256xf32>
    %c0_9 = arith.constant 0 : index
    %c0_10 = arith.constant 0 : index
    %c0_11 = arith.constant 0 : index
    %19 = vector.load %arg4[%c0_9, %c0_10, %c0_11] : memref<8x16x16xbf16, #tpu.memory_space<vmem>>, vector<8x16x16xbf16>
    %20 = arith.truncf %17 : vector<8x16x256xf32> to vector<8x16x256xbf16>
    "tpu.trace_start"() <{level = 10 : i32, message = "bvw,bwd->bvd"}> : () -> ()
    %cst_12 = arith.constant dense<0.000000e+00> : vector<8x16x256xf32>
    %21 = tpu.matmul %19, %20, %cst_12 {dimension_numbers = #tpu.dot_dimension_numbers<[2], [1], [1], [2], [0, 0, 0, 1, 1, 2], [0], [0]>} : vector<8x16x16xbf16>, vector<8x16x256xbf16>, vector<8x16x256xf32> -> vector<8x16x256xf32>
    "tpu.trace_stop"() : () -> ()
    %22 = arith.addf %21, %18 : vector<8x16x256xf32>
    %c0_13 = arith.constant 0 : index
    %c0_14 = arith.constant 0 : index
    %23 = vector.load %arg6[%c0_13, %c0_14] : memref<1x256xf32, #tpu.memory_space<vmem>>, vector<1x256xf32>
    %cst_15 = arith.constant 2.000000e+00 : f32
    %24 = vector.broadcast %cst_15 : f32 to vector<1x256xf32>
    %25 = arith.mulf %24, %23 : vector<1x256xf32>
    %26 = vector.shape_cast %25 : vector<1x256xf32> to vector<1x1x256xf32>
    %27 = vector.broadcast %26 : vector<1x1x256xf32> to vector<8x16x256xf32>
    %28 = arith.addf %22, %27 : vector<8x16x256xf32>
    %29 = arith.truncf %28 : vector<8x16x256xf32> to vector<8x16x256xbf16>
    %c0_16 = arith.constant 0 : index
    %c0_17 = arith.constant 0 : index
    %c0_18 = arith.constant 0 : index
    %30 = vector.load %arg7[%c0_16, %c0_17, %c0_18] : memref<8x16x256xbf16, #tpu.memory_space<vmem>>, vector<8x16x256xbf16>
    tpu.vector_store %arg7[%c0_16, %c0_17, %c0_18], %29 {strides = array<i32>} : memref<8x16x256xbf16, #tpu.memory_space<vmem>>, vector<8x16x256xbf16>,
    %31 = vector.shape_cast %28 : vector<8x16x256xf32> to vector<128x256xf32>
    %c8_i32 = arith.constant 8 : i32
    %32 = arith.muli %arg0, %c8_i32 : i32
    %33 = tpu.iota {dimensions = array<i32: 0>} : vector<128x1xi32>
    %c12_i32 = arith.constant 12 : i32
    %34 = arith.subi %c12_i32, %32 : i32
    %c16_i32 = arith.constant 16 : i32
    %35 = arith.muli %34, %c16_i32 : i32
    %36 = vector.broadcast %35 : i32 to vector<128x1xi32>
    %37 = arith.cmpi slt, %33, %36 : vector<128x1xi32>
    %38 = arith.extui %37 : vector<128x1xi1> to vector<128x1xi32>
    %39 = arith.sitofp %38 : vector<128x1xi32> to vector<128x1xf32>
    %40 = vector.broadcast %39 : vector<128x1xf32> to vector<128x256xf32>
    %41 = arith.mulf %31, %40 : vector<128x256xf32>
    %cst_19 = arith.constant dense<0.000000e+00> : vector<256xf32>
    %42 = vector.multi_reduction <add>, %41, %cst_19 [0] : vector<128x256xf32> to vector<256xf32>
    %43 = vector.shape_cast %42 : vector<256xf32> to vector<1x256xf32>
    %44 = vector.shape_cast %43 : vector<1x256xf32> to vector<1x1x256xf32>
    %c0_20 = arith.constant 0 : index
    %c0_21 = arith.constant 0 : index
    %c0_22 = arith.constant 0 : index
    %45 = vector.load %arg8[%c0_20, %c0_21, %c0_22] : memref<1x1x256xf32, #tpu.memory_space<vmem>>, vector<1x1x256xf32>
    tpu.vector_store %arg8[%c0_20, %c0_21, %c0_22], %44 {strides = array<i32>} : memref<1x1x256xf32, #tpu.memory_space<vmem>>, vector<1x1x256xf32>,
    %46 = arith.mulf %41, %31 : vector<128x256xf32>
    %cst_23 = arith.constant dense<0.000000e+00> : vector<256xf32>
    %47 = vector.multi_reduction <add>, %46, %cst_23 [0] : vector<128x256xf32> to vector<256xf32>
    %48 = vector.shape_cast %47 : vector<256xf32> to vector<1x256xf32>
    %49 = vector.shape_cast %48 : vector<1x256xf32> to vector<1x1x256xf32>
    %c0_24 = arith.constant 0 : index
    %c0_25 = arith.constant 0 : index
    %c0_26 = arith.constant 0 : index
    %50 = vector.load %arg9[%c0_24, %c0_25, %c0_26] : memref<1x1x256xf32, #tpu.memory_space<vmem>>, vector<1x1x256xf32>
    tpu.vector_store %arg9[%c0_24, %c0_25, %c0_26], %49 {strides = array<i32>} : memref<1x1x256xf32, #tpu.memory_space<vmem>>, vector<1x1x256xf32>,
    return
  }
  func.func @transform_0(%arg0: i32) -> (i32, i32, i32) {
    %c0_i32 = arith.constant 0 : i32
    %c0_i32_0 = arith.constant 0 : i32
    %c0_i32_1 = arith.constant 0 : i32
    return %arg0, %c0_i32, %c0_i32_0 : i32, i32, i32
  }
  func.func @transform_1(%arg0: i32) -> (i32, i32) {
    %c0_i32 = arith.constant 0 : i32
    %c0_i32_0 = arith.constant 0 : i32
    %c0_i32_1 = arith.constant 0 : i32
    return %c0_i32, %c0_i32_0 : i32, i32
  }
  func.func @transform_2(%arg0: i32) -> (i32, i32) {
    %c0_i32 = arith.constant 0 : i32
    %c0_i32_0 = arith.constant 0 : i32
    %c0_i32_1 = arith.constant 0 : i32
    return %c0_i32, %c0_i32_0 : i32, i32
  }
  func.func @transform_3(%arg0: i32) -> (i32, i32, i32) {
    %c0_i32 = arith.constant 0 : i32
    %c0_i32_0 = arith.constant 0 : i32
    %c0_i32_1 = arith.constant 0 : i32
    return %arg0, %c0_i32, %c0_i32_0 : i32, i32, i32
  }
  func.func @transform_4(%arg0: i32) -> (i32, i32) {
    %c0_i32 = arith.constant 0 : i32
    %c0_i32_0 = arith.constant 0 : i32
    %c0_i32_1 = arith.constant 0 : i32
    return %c0_i32, %c0_i32_0 : i32, i32
  }
  func.func @transform_5(%arg0: i32) -> (i32, i32) {
    %c0_i32 = arith.constant 0 : i32
    %c0_i32_0 = arith.constant 0 : i32
    %c0_i32_1 = arith.constant 0 : i32
    return %c0_i32, %c0_i32_0 : i32, i32
  }
  func.func @transform_6(%arg0: i32) -> (i32, i32, i32) {
    %c0_i32 = arith.constant 0 : i32
    %c0_i32_0 = arith.constant 0 : i32
    %c0_i32_1 = arith.constant 0 : i32
    return %arg0, %c0_i32, %c0_i32_0 : i32, i32, i32
  }
  func.func @transform_7(%arg0: i32) -> (i32, i32, i32) {
    %c0_i32 = arith.constant 0 : i32
    %c0_i32_0 = arith.constant 0 : i32
    %c0_i32_1 = arith.constant 0 : i32
    return %arg0, %c0_i32, %c0_i32_0 : i32, i32, i32
  }
  func.func @transform_8(%arg0: i32) -> (i32, i32, i32) {
    %c0_i32 = arith.constant 0 : i32
    %c0_i32_0 = arith.constant 0 : i32
    %c0_i32_1 = arith.constant 0 : i32
    return %arg0, %c0_i32, %c0_i32_0 : i32, i32, i32
  }
}

module attributes {stable_mosaic.version = 11 : i64} {
  func.func @adj_gcn1_kernel(%arg0: i32, %arg1: memref<8x16x64xbf16, #tpu.memory_space<vmem>>, %arg2: memref<64x768xbf16, #tpu.memory_space<vmem>>, %arg3: memref<1x16x768xf32, #tpu.memory_space<vmem>>, %arg4: memref<1x128xf32, #tpu.memory_space<vmem>>, %arg5: memref<8x16x16xbf16, #tpu.memory_space<vmem>>, %arg6: memref<8x16x128xbf16, #tpu.memory_space<vmem>>, %arg7: memref<1x1x128xf32, #tpu.memory_space<vmem>>, %arg8: memref<1x1x128xf32, #tpu.memory_space<vmem>>) attributes {dimension_semantics = [#tpu.dimension_semantics<parallel>], iteration_bounds = array<i64: 2>, scalar_prefetch = 0 : i64, scratch_operands = 0 : i64, tpu.core_type = #tpu.core_type<tc>, window_params = [{transform_indices = @transform_0, window_bounds = array<i64: 8, 16, 64>}, {pipeline_mode = #tpu.pipeline_mode<synchronous>, transform_indices = @transform_1, window_bounds = array<i64: 64, 768>}, {pipeline_mode = #tpu.pipeline_mode<synchronous>, transform_indices = @transform_2, window_bounds = array<i64: 1, 16, 768>}, {pipeline_mode = #tpu.pipeline_mode<synchronous>, transform_indices = @transform_3, window_bounds = array<i64: 1, 128>}, {transform_indices = @transform_4, window_bounds = array<i64: 8, 16, 16>}, {transform_indices = @transform_5, window_bounds = array<i64: 8, 16, 128>}, {transform_indices = @transform_6, window_bounds = array<i64: 1, 1, 128>}, {transform_indices = @transform_7, window_bounds = array<i64: 1, 1, 128>}]} {
    %c0 = arith.constant 0 : index
    %c0_0 = arith.constant 0 : index
    %c0_1 = arith.constant 0 : index
    %0 = vector.load %arg1[%c0, %c0_0, %c0_1] : memref<8x16x64xbf16, #tpu.memory_space<vmem>>, vector<8x16x64xbf16>
    %1 = vector.shape_cast %0 : vector<8x16x64xbf16> to vector<128x64xbf16>
    %c0_2 = arith.constant 0 : index
    %c0_3 = arith.constant 0 : index
    %2 = vector.load %arg2[%c0_2, %c0_3] : memref<64x768xbf16, #tpu.memory_space<vmem>>, vector<64x768xbf16>
    %cst = arith.constant dense<0.000000e+00> : vector<128x768xf32>
    %3 = tpu.matmul %1, %2, %cst {dimension_numbers = #tpu.dot_dimension_numbers<[1], [0], [0], [1], [0, 0, 1, 1], [], []>} : vector<128x64xbf16>, vector<64x768xbf16>, vector<128x768xf32> -> vector<128x768xf32>
    %4 = vector.shape_cast %3 : vector<128x768xf32> to vector<8x16x768xf32>
    %c0_4 = arith.constant 0 : index
    %c0_5 = arith.constant 0 : index
    %c0_6 = arith.constant 0 : index
    %5 = vector.load %arg3[%c0_4, %c0_5, %c0_6] : memref<1x16x768xf32, #tpu.memory_space<vmem>>, vector<1x16x768xf32>
    %6 = vector.broadcast %5 : vector<1x16x768xf32> to vector<8x16x768xf32>
    %7 = arith.addf %4, %6 : vector<8x16x768xf32>
    %8 = vector.extract_strided_slice %7 {offsets = [0, 0, 0], sizes = [8, 16, 256], strides = [1, 1, 1]} : vector<8x16x768xf32> to vector<8x16x256xf32>
    %9 = vector.extract_strided_slice %7 {offsets = [0, 0, 256], sizes = [8, 16, 256], strides = [1, 1, 1]} : vector<8x16x768xf32> to vector<8x16x256xf32>
    %10 = arith.truncf %8 : vector<8x16x256xf32> to vector<8x16x256xbf16>
    %11 = arith.truncf %9 : vector<8x16x256xf32> to vector<8x16x256xbf16>
    "tpu.trace_start"() <{level = 10 : i32, message = "bvk,bwk->bvw"}> : () -> ()
    %cst_7 = arith.constant dense<0.000000e+00> : vector<8x16x16xf32>
    %12 = tpu.matmul %10, %11, %cst_7 {dimension_numbers = #tpu.dot_dimension_numbers<[2], [2], [1], [1], [0, 0, 0, 1, 1, 1], [0], [0]>} : vector<8x16x256xbf16>, vector<8x16x256xbf16>, vector<8x16x16xf32> -> vector<8x16x16xf32>
    "tpu.trace_stop"() : () -> ()
    %cst_8 = arith.constant dense<0xFF800000> : vector<8x16xf32>
    %13 = vector.multi_reduction <maximumf>, %12, %cst_8 [1] : vector<8x16x16xf32> to vector<8x16xf32>
    %14 = vector.shape_cast %13 : vector<8x16xf32> to vector<8x1x16xf32>
    %15 = vector.broadcast %14 : vector<8x1x16xf32> to vector<8x16x16xf32>
    %16 = arith.subf %12, %15 : vector<8x16x16xf32>
    %17 = math.exp %16 : vector<8x16x16xf32>
    %cst_9 = arith.constant dense<0.000000e+00> : vector<8x16xf32>
    %18 = vector.multi_reduction <add>, %17, %cst_9 [1] : vector<8x16x16xf32> to vector<8x16xf32>
    %19 = vector.shape_cast %18 : vector<8x16xf32> to vector<8x1x16xf32>
    %20 = vector.broadcast %19 : vector<8x1x16xf32> to vector<8x16x16xf32>
    %21 = arith.divf %17, %20 : vector<8x16x16xf32>
    %22 = arith.truncf %21 : vector<8x16x16xf32> to vector<8x16x16xbf16>
    %c0_10 = arith.constant 0 : index
    %c0_11 = arith.constant 0 : index
    %c0_12 = arith.constant 0 : index
    %23 = vector.load %arg5[%c0_10, %c0_11, %c0_12] : memref<8x16x16xbf16, #tpu.memory_space<vmem>>, vector<8x16x16xbf16>
    tpu.vector_store %arg5[%c0_10, %c0_11, %c0_12], %22 {strides = array<i32>} : memref<8x16x16xbf16, #tpu.memory_space<vmem>>, vector<8x16x16xbf16>,
    %24 = vector.extract_strided_slice %7 {offsets = [0, 0, 512], sizes = [8, 16, 128], strides = [1, 1, 1]} : vector<8x16x768xf32> to vector<8x16x128xf32>
    %25 = vector.extract_strided_slice %7 {offsets = [0, 0, 640], sizes = [8, 16, 128], strides = [1, 1, 1]} : vector<8x16x768xf32> to vector<8x16x128xf32>
    %26 = arith.truncf %21 : vector<8x16x16xf32> to vector<8x16x16xbf16>
    %27 = arith.truncf %24 : vector<8x16x128xf32> to vector<8x16x128xbf16>
    "tpu.trace_start"() <{level = 10 : i32, message = "bvw,bwd->bvd"}> : () -> ()
    %cst_13 = arith.constant dense<0.000000e+00> : vector<8x16x128xf32>
    %28 = tpu.matmul %26, %27, %cst_13 {dimension_numbers = #tpu.dot_dimension_numbers<[2], [1], [1], [2], [0, 0, 0, 1, 1, 2], [0], [0]>} : vector<8x16x16xbf16>, vector<8x16x128xbf16>, vector<8x16x128xf32> -> vector<8x16x128xf32>
    "tpu.trace_stop"() : () -> ()
    %29 = arith.addf %28, %25 : vector<8x16x128xf32>
    %c0_14 = arith.constant 0 : index
    %c0_15 = arith.constant 0 : index
    %30 = vector.load %arg4[%c0_14, %c0_15] : memref<1x128xf32, #tpu.memory_space<vmem>>, vector<1x128xf32>
    %cst_16 = arith.constant 2.000000e+00 : f32
    %31 = vector.broadcast %cst_16 : f32 to vector<1x128xf32>
    %32 = arith.mulf %31, %30 : vector<1x128xf32>
    %33 = vector.shape_cast %32 : vector<1x128xf32> to vector<1x1x128xf32>
    %34 = vector.broadcast %33 : vector<1x1x128xf32> to vector<8x16x128xf32>
    %35 = arith.addf %29, %34 : vector<8x16x128xf32>
    %36 = arith.truncf %35 : vector<8x16x128xf32> to vector<8x16x128xbf16>
    %c0_17 = arith.constant 0 : index
    %c0_18 = arith.constant 0 : index
    %c0_19 = arith.constant 0 : index
    %37 = vector.load %arg6[%c0_17, %c0_18, %c0_19] : memref<8x16x128xbf16, #tpu.memory_space<vmem>>, vector<8x16x128xbf16>
    tpu.vector_store %arg6[%c0_17, %c0_18, %c0_19], %36 {strides = array<i32>} : memref<8x16x128xbf16, #tpu.memory_space<vmem>>, vector<8x16x128xbf16>,
    %38 = vector.shape_cast %35 : vector<8x16x128xf32> to vector<128x128xf32>
    %c8_i32 = arith.constant 8 : i32
    %39 = arith.muli %arg0, %c8_i32 : i32
    %40 = tpu.iota {dimensions = array<i32: 0>} : vector<128x1xi32>
    %c12_i32 = arith.constant 12 : i32
    %41 = arith.subi %c12_i32, %39 : i32
    %c16_i32 = arith.constant 16 : i32
    %42 = arith.muli %41, %c16_i32 : i32
    %43 = vector.broadcast %42 : i32 to vector<128x1xi32>
    %44 = arith.cmpi slt, %40, %43 : vector<128x1xi32>
    %45 = arith.extui %44 : vector<128x1xi1> to vector<128x1xi32>
    %46 = arith.sitofp %45 : vector<128x1xi32> to vector<128x1xf32>
    %47 = vector.broadcast %46 : vector<128x1xf32> to vector<128x128xf32>
    %48 = arith.mulf %38, %47 : vector<128x128xf32>
    %cst_20 = arith.constant dense<0.000000e+00> : vector<128xf32>
    %49 = vector.multi_reduction <add>, %48, %cst_20 [0] : vector<128x128xf32> to vector<128xf32>
    %50 = vector.shape_cast %49 : vector<128xf32> to vector<1x128xf32>
    %51 = vector.shape_cast %50 : vector<1x128xf32> to vector<1x1x128xf32>
    %c0_21 = arith.constant 0 : index
    %c0_22 = arith.constant 0 : index
    %c0_23 = arith.constant 0 : index
    %52 = vector.load %arg7[%c0_21, %c0_22, %c0_23] : memref<1x1x128xf32, #tpu.memory_space<vmem>>, vector<1x1x128xf32>
    tpu.vector_store %arg7[%c0_21, %c0_22, %c0_23], %51 {strides = array<i32>} : memref<1x1x128xf32, #tpu.memory_space<vmem>>, vector<1x1x128xf32>,
    %53 = arith.mulf %48, %38 : vector<128x128xf32>
    %cst_24 = arith.constant dense<0.000000e+00> : vector<128xf32>
    %54 = vector.multi_reduction <add>, %53, %cst_24 [0] : vector<128x128xf32> to vector<128xf32>
    %55 = vector.shape_cast %54 : vector<128xf32> to vector<1x128xf32>
    %56 = vector.shape_cast %55 : vector<1x128xf32> to vector<1x1x128xf32>
    %c0_25 = arith.constant 0 : index
    %c0_26 = arith.constant 0 : index
    %c0_27 = arith.constant 0 : index
    %57 = vector.load %arg8[%c0_25, %c0_26, %c0_27] : memref<1x1x128xf32, #tpu.memory_space<vmem>>, vector<1x1x128xf32>
    tpu.vector_store %arg8[%c0_25, %c0_26, %c0_27], %56 {strides = array<i32>} : memref<1x1x128xf32, #tpu.memory_space<vmem>>, vector<1x1x128xf32>,
    return
  }
  func.func @transform_0(%arg0: i32) -> (i32, i32, i32) {
    %c0_i32 = arith.constant 0 : i32
    %c0_i32_0 = arith.constant 0 : i32
    %c0_i32_1 = arith.constant 0 : i32
    return %arg0, %c0_i32, %c0_i32_0 : i32, i32, i32
  }
  func.func @transform_1(%arg0: i32) -> (i32, i32) {
    %c0_i32 = arith.constant 0 : i32
    %c0_i32_0 = arith.constant 0 : i32
    %c0_i32_1 = arith.constant 0 : i32
    return %c0_i32, %c0_i32_0 : i32, i32
  }
  func.func @transform_2(%arg0: i32) -> (i32, i32, i32) {
    %c0_i32 = arith.constant 0 : i32
    %c0_i32_0 = arith.constant 0 : i32
    %c0_i32_1 = arith.constant 0 : i32
    %c0_i32_2 = arith.constant 0 : i32
    return %c0_i32, %c0_i32_0, %c0_i32_1 : i32, i32, i32
  }
  func.func @transform_3(%arg0: i32) -> (i32, i32) {
    %c0_i32 = arith.constant 0 : i32
    %c0_i32_0 = arith.constant 0 : i32
    %c0_i32_1 = arith.constant 0 : i32
    return %c0_i32, %c0_i32_0 : i32, i32
  }
  func.func @transform_4(%arg0: i32) -> (i32, i32, i32) {
    %c0_i32 = arith.constant 0 : i32
    %c0_i32_0 = arith.constant 0 : i32
    %c0_i32_1 = arith.constant 0 : i32
    return %arg0, %c0_i32, %c0_i32_0 : i32, i32, i32
  }
  func.func @transform_5(%arg0: i32) -> (i32, i32, i32) {
    %c0_i32 = arith.constant 0 : i32
    %c0_i32_0 = arith.constant 0 : i32
    %c0_i32_1 = arith.constant 0 : i32
    return %arg0, %c0_i32, %c0_i32_0 : i32, i32, i32
  }
  func.func @transform_6(%arg0: i32) -> (i32, i32, i32) {
    %c0_i32 = arith.constant 0 : i32
    %c0_i32_0 = arith.constant 0 : i32
    %c0_i32_1 = arith.constant 0 : i32
    return %arg0, %c0_i32, %c0_i32_0 : i32, i32, i32
  }
  func.func @transform_7(%arg0: i32) -> (i32, i32, i32) {
    %c0_i32 = arith.constant 0 : i32
    %c0_i32_0 = arith.constant 0 : i32
    %c0_i32_1 = arith.constant 0 : i32
    return %arg0, %c0_i32, %c0_i32_0 : i32, i32, i32
  }
}

module attributes {stable_mosaic.version = 11 : i64} {
  func.func @bn_relu_gcn_kernel(%arg0: i32, %arg1: memref<8x16x256xbf16, #tpu.memory_space<vmem>>, %arg2: memref<1x256xf32, #tpu.memory_space<vmem>>, %arg3: memref<1x256xf32, #tpu.memory_space<vmem>>, %arg4: memref<8x16x16xbf16, #tpu.memory_space<vmem>>, %arg5: memref<256x512xbf16, #tpu.memory_space<vmem>>, %arg6: memref<1x256xf32, #tpu.memory_space<vmem>>, %arg7: memref<8x16x256xbf16, #tpu.memory_space<vmem>>, %arg8: memref<1x1x256xf32, #tpu.memory_space<vmem>>, %arg9: memref<1x1x256xf32, #tpu.memory_space<vmem>>) attributes {dimension_semantics = [#tpu.dimension_semantics<parallel>], iteration_bounds = array<i64: 2>, scalar_prefetch = 0 : i64, scratch_operands = 0 : i64, tpu.core_type = #tpu.core_type<tc>, window_params = [{transform_indices = @transform_0, window_bounds = array<i64: 8, 16, 256>}, {pipeline_mode = #tpu.pipeline_mode<synchronous>, transform_indices = @transform_1, window_bounds = array<i64: 1, 256>}, {pipeline_mode = #tpu.pipeline_mode<synchronous>, transform_indices = @transform_2, window_bounds = array<i64: 1, 256>}, {transform_indices = @transform_3, window_bounds = array<i64: 8, 16, 16>}, {pipeline_mode = #tpu.pipeline_mode<synchronous>, transform_indices = @transform_4, window_bounds = array<i64: 256, 512>}, {pipeline_mode = #tpu.pipeline_mode<synchronous>, transform_indices = @transform_5, window_bounds = array<i64: 1, 256>}, {transform_indices = @transform_6, window_bounds = array<i64: 8, 16, 256>}, {transform_indices = @transform_7, window_bounds = array<i64: 1, 1, 256>}, {transform_indices = @transform_8, window_bounds = array<i64: 1, 1, 256>}]} {
    %c0 = arith.constant 0 : index
    %c0_0 = arith.constant 0 : index
    %c0_1 = arith.constant 0 : index
    %0 = vector.load %arg1[%c0, %c0_0, %c0_1] : memref<8x16x256xbf16, #tpu.memory_space<vmem>>, vector<8x16x256xbf16>
    %1 = arith.extf %0 : vector<8x16x256xbf16> to vector<8x16x256xf32>
    %c0_2 = arith.constant 0 : index
    %c0_3 = arith.constant 0 : index
    %2 = vector.load %arg2[%c0_2, %c0_3] : memref<1x256xf32, #tpu.memory_space<vmem>>, vector<1x256xf32>
    %3 = vector.shape_cast %2 : vector<1x256xf32> to vector<1x1x256xf32>
    %4 = vector.broadcast %3 : vector<1x1x256xf32> to vector<8x16x256xf32>
    %5 = arith.mulf %1, %4 : vector<8x16x256xf32>
    %c0_4 = arith.constant 0 : index
    %c0_5 = arith.constant 0 : index
    %6 = vector.load %arg3[%c0_4, %c0_5] : memref<1x256xf32, #tpu.memory_space<vmem>>, vector<1x256xf32>
    %7 = vector.shape_cast %6 : vector<1x256xf32> to vector<1x1x256xf32>
    %8 = vector.broadcast %7 : vector<1x1x256xf32> to vector<8x16x256xf32>
    %9 = arith.addf %5, %8 : vector<8x16x256xf32>
    %cst = arith.constant 0.000000e+00 : f32
    %10 = vector.broadcast %cst : f32 to vector<8x16x256xf32>
    %11 = arith.maximumf %9, %10 : vector<8x16x256xf32>
    %12 = vector.shape_cast %11 : vector<8x16x256xf32> to vector<128x256xf32>
    %13 = arith.truncf %12 : vector<128x256xf32> to vector<128x256xbf16>
    %c0_6 = arith.constant 0 : index
    %c0_7 = arith.constant 0 : index
    %14 = vector.load %arg5[%c0_6, %c0_7] : memref<256x512xbf16, #tpu.memory_space<vmem>>, vector<256x512xbf16>
    %cst_8 = arith.constant dense<0.000000e+00> : vector<128x512xf32>
    %15 = tpu.matmul %13, %14, %cst_8 {dimension_numbers = #tpu.dot_dimension_numbers<[1], [0], [0], [1], [0, 0, 1, 1], [], []>} : vector<128x256xbf16>, vector<256x512xbf16>, vector<128x512xf32> -> vector<128x512xf32>
    %16 = vector.shape_cast %15 : vector<128x512xf32> to vector<8x16x512xf32>
    %17 = vector.extract_strided_slice %16 {offsets = [0, 0, 0], sizes = [8, 16, 256], strides = [1, 1, 1]} : vector<8x16x512xf32> to vector<8x16x256xf32>
    %18 = vector.extract_strided_slice %16 {offsets = [0, 0, 256], sizes = [8, 16, 256], strides = [1, 1, 1]} : vector<8x16x512xf32> to vector<8x16x256xf32>
    %c0_9 = arith.constant 0 : index
    %c0_10 = arith.constant 0 : index
    %c0_11 = arith.constant 0 : index
    %19 = vector.load %arg4[%c0_9, %c0_10, %c0_11] : memref<8x16x16xbf16, #tpu.memory_space<vmem>>, vector<8x16x16xbf16>
    %20 = arith.truncf %17 : vector<8x16x256xf32> to vector<8x16x256xbf16>
    "tpu.trace_start"() <{level = 10 : i32, message = "bvw,bwd->bvd"}> : () -> ()
    %cst_12 = arith.constant dense<0.000000e+00> : vector<8x16x256xf32>
    %21 = tpu.matmul %19, %20, %cst_12 {dimension_numbers = #tpu.dot_dimension_numbers<[2], [1], [1], [2], [0, 0, 0, 1, 1, 2], [0], [0]>} : vector<8x16x16xbf16>, vector<8x16x256xbf16>, vector<8x16x256xf32> -> vector<8x16x256xf32>
    "tpu.trace_stop"() : () -> ()
    %22 = arith.addf %21, %18 : vector<8x16x256xf32>
    %c0_13 = arith.constant 0 : index
    %c0_14 = arith.constant 0 : index
    %23 = vector.load %arg6[%c0_13, %c0_14] : memref<1x256xf32, #tpu.memory_space<vmem>>, vector<1x256xf32>
    %cst_15 = arith.constant 2.000000e+00 : f32
    %24 = vector.broadcast %cst_15 : f32 to vector<1x256xf32>
    %25 = arith.mulf %24, %23 : vector<1x256xf32>
    %26 = vector.shape_cast %25 : vector<1x256xf32> to vector<1x1x256xf32>
    %27 = vector.broadcast %26 : vector<1x1x256xf32> to vector<8x16x256xf32>
    %28 = arith.addf %22, %27 : vector<8x16x256xf32>
    %29 = arith.truncf %28 : vector<8x16x256xf32> to vector<8x16x256xbf16>
    %c0_16 = arith.constant 0 : index
    %c0_17 = arith.constant 0 : index
    %c0_18 = arith.constant 0 : index
    %30 = vector.load %arg7[%c0_16, %c0_17, %c0_18] : memref<8x16x256xbf16, #tpu.memory_space<vmem>>, vector<8x16x256xbf16>
    tpu.vector_store %arg7[%c0_16, %c0_17, %c0_18], %29 {strides = array<i32>} : memref<8x16x256xbf16, #tpu.memory_space<vmem>>, vector<8x16x256xbf16>,
    %31 = vector.shape_cast %28 : vector<8x16x256xf32> to vector<128x256xf32>
    %c8_i32 = arith.constant 8 : i32
    %32 = arith.muli %arg0, %c8_i32 : i32
    %33 = tpu.iota {dimensions = array<i32: 0>} : vector<128x1xi32>
    %c12_i32 = arith.constant 12 : i32
    %34 = arith.subi %c12_i32, %32 : i32
    %c16_i32 = arith.constant 16 : i32
    %35 = arith.muli %34, %c16_i32 : i32
    %36 = vector.broadcast %35 : i32 to vector<128x1xi32>
    %37 = arith.cmpi slt, %33, %36 : vector<128x1xi32>
    %38 = arith.extui %37 : vector<128x1xi1> to vector<128x1xi32>
    %39 = arith.sitofp %38 : vector<128x1xi32> to vector<128x1xf32>
    %40 = vector.broadcast %39 : vector<128x1xf32> to vector<128x256xf32>
    %41 = arith.mulf %31, %40 : vector<128x256xf32>
    %cst_19 = arith.constant dense<0.000000e+00> : vector<256xf32>
    %42 = vector.multi_reduction <add>, %41, %cst_19 [0] : vector<128x256xf32> to vector<256xf32>
    %43 = vector.shape_cast %42 : vector<256xf32> to vector<1x256xf32>
    %44 = vector.shape_cast %43 : vector<1x256xf32> to vector<1x1x256xf32>
    %c0_20 = arith.constant 0 : index
    %c0_21 = arith.constant 0 : index
    %c0_22 = arith.constant 0 : index
    %45 = vector.load %arg8[%c0_20, %c0_21, %c0_22] : memref<1x1x256xf32, #tpu.memory_space<vmem>>, vector<1x1x256xf32>
    tpu.vector_store %arg8[%c0_20, %c0_21, %c0_22], %44 {strides = array<i32>} : memref<1x1x256xf32, #tpu.memory_space<vmem>>, vector<1x1x256xf32>,
    %46 = arith.mulf %41, %31 : vector<128x256xf32>
    %cst_23 = arith.constant dense<0.000000e+00> : vector<256xf32>
    %47 = vector.multi_reduction <add>, %46, %cst_23 [0] : vector<128x256xf32> to vector<256xf32>
    %48 = vector.shape_cast %47 : vector<256xf32> to vector<1x256xf32>
    %49 = vector.shape_cast %48 : vector<1x256xf32> to vector<1x1x256xf32>
    %c0_24 = arith.constant 0 : index
    %c0_25 = arith.constant 0 : index
    %c0_26 = arith.constant 0 : index
    %50 = vector.load %arg9[%c0_24, %c0_25, %c0_26] : memref<1x1x256xf32, #tpu.memory_space<vmem>>, vector<1x1x256xf32>
    tpu.vector_store %arg9[%c0_24, %c0_25, %c0_26], %49 {strides = array<i32>} : memref<1x1x256xf32, #tpu.memory_space<vmem>>, vector<1x1x256xf32>,
    return
  }
  func.func @transform_0(%arg0: i32) -> (i32, i32, i32) {
    %c0_i32 = arith.constant 0 : i32
    %c0_i32_0 = arith.constant 0 : i32
    %c0_i32_1 = arith.constant 0 : i32
    return %arg0, %c0_i32, %c0_i32_0 : i32, i32, i32
  }
  func.func @transform_1(%arg0: i32) -> (i32, i32) {
    %c0_i32 = arith.constant 0 : i32
    %c0_i32_0 = arith.constant 0 : i32
    %c0_i32_1 = arith.constant 0 : i32
    return %c0_i32, %c0_i32_0 : i32, i32
  }
  func.func @transform_2(%arg0: i32) -> (i32, i32) {
    %c0_i32 = arith.constant 0 : i32
    %c0_i32_0 = arith.constant 0 : i32
    %c0_i32_1 = arith.constant 0 : i32
    return %c0_i32, %c0_i32_0 : i32, i32
  }
  func.func @transform_3(%arg0: i32) -> (i32, i32, i32) {
    %c0_i32 = arith.constant 0 : i32
    %c0_i32_0 = arith.constant 0 : i32
    %c0_i32_1 = arith.constant 0 : i32
    return %arg0, %c0_i32, %c0_i32_0 : i32, i32, i32
  }
  func.func @transform_4(%arg0: i32) -> (i32, i32) {
    %c0_i32 = arith.constant 0 : i32
    %c0_i32_0 = arith.constant 0 : i32
    %c0_i32_1 = arith.constant 0 : i32
    return %c0_i32, %c0_i32_0 : i32, i32
  }
  func.func @transform_5(%arg0: i32) -> (i32, i32) {
    %c0_i32 = arith.constant 0 : i32
    %c0_i32_0 = arith.constant 0 : i32
    %c0_i32_1 = arith.constant 0 : i32
    return %c0_i32, %c0_i32_0 : i32, i32
  }
  func.func @transform_6(%arg0: i32) -> (i32, i32, i32) {
    %c0_i32 = arith.constant 0 : i32
    %c0_i32_0 = arith.constant 0 : i32
    %c0_i32_1 = arith.constant 0 : i32
    return %arg0, %c0_i32, %c0_i32_0 : i32, i32, i32
  }
  func.func @transform_7(%arg0: i32) -> (i32, i32, i32) {
    %c0_i32 = arith.constant 0 : i32
    %c0_i32_0 = arith.constant 0 : i32
    %c0_i32_1 = arith.constant 0 : i32
    return %arg0, %c0_i32, %c0_i32_0 : i32, i32, i32
  }
  func.func @transform_8(%arg0: i32) -> (i32, i32, i32) {
    %c0_i32 = arith.constant 0 : i32
    %c0_i32_0 = arith.constant 0 : i32
    %c0_i32_1 = arith.constant 0 : i32
    return %arg0, %c0_i32, %c0_i32_0 : i32, i32, i32
  }
}

module attributes {stable_mosaic.version = 11 : i64} {
  func.func @bn_relu_kernel(%arg0: i32, %arg1: memref<16x16x256xbf16, #tpu.memory_space<vmem>>, %arg2: memref<1x256xf32, #tpu.memory_space<vmem>>, %arg3: memref<1x256xf32, #tpu.memory_space<vmem>>, %arg4: memref<16x16x256xf32, #tpu.memory_space<vmem>>) attributes {dimension_semantics = [#tpu.dimension_semantics<parallel>], iteration_bounds = array<i64: 1>, scalar_prefetch = 0 : i64, scratch_operands = 0 : i64, tpu.core_type = #tpu.core_type<tc>, window_params = [{transform_indices = @transform_0, window_bounds = array<i64: 16, 16, 256>}, {pipeline_mode = #tpu.pipeline_mode<synchronous>, transform_indices = @transform_1, window_bounds = array<i64: 1, 256>}, {pipeline_mode = #tpu.pipeline_mode<synchronous>, transform_indices = @transform_2, window_bounds = array<i64: 1, 256>}, {transform_indices = @transform_3, window_bounds = array<i64: 16, 16, 256>}]} {
    %c0 = arith.constant 0 : index
    %c0_0 = arith.constant 0 : index
    %c0_1 = arith.constant 0 : index
    %0 = vector.load %arg1[%c0, %c0_0, %c0_1] : memref<16x16x256xbf16, #tpu.memory_space<vmem>>, vector<16x16x256xbf16>
    %1 = arith.extf %0 : vector<16x16x256xbf16> to vector<16x16x256xf32>
    %c0_2 = arith.constant 0 : index
    %c0_3 = arith.constant 0 : index
    %2 = vector.load %arg2[%c0_2, %c0_3] : memref<1x256xf32, #tpu.memory_space<vmem>>, vector<1x256xf32>
    %3 = vector.shape_cast %2 : vector<1x256xf32> to vector<1x1x256xf32>
    %4 = vector.broadcast %3 : vector<1x1x256xf32> to vector<16x16x256xf32>
    %5 = arith.mulf %1, %4 : vector<16x16x256xf32>
    %c0_4 = arith.constant 0 : index
    %c0_5 = arith.constant 0 : index
    %6 = vector.load %arg3[%c0_4, %c0_5] : memref<1x256xf32, #tpu.memory_space<vmem>>, vector<1x256xf32>
    %7 = vector.shape_cast %6 : vector<1x256xf32> to vector<1x1x256xf32>
    %8 = vector.broadcast %7 : vector<1x1x256xf32> to vector<16x16x256xf32>
    %9 = arith.addf %5, %8 : vector<16x16x256xf32>
    %cst = arith.constant 0.000000e+00 : f32
    %10 = vector.broadcast %cst : f32 to vector<16x16x256xf32>
    %11 = arith.maximumf %9, %10 : vector<16x16x256xf32>
    %c0_6 = arith.constant 0 : index
    %c0_7 = arith.constant 0 : index
    %c0_8 = arith.constant 0 : index
    %12 = vector.load %arg4[%c0_6, %c0_7, %c0_8] : memref<16x16x256xf32, #tpu.memory_space<vmem>>, vector<16x16x256xf32>
    tpu.vector_store %arg4[%c0_6, %c0_7, %c0_8], %11 {strides = array<i32>} : memref<16x16x256xf32, #tpu.memory_space<vmem>>, vector<16x16x256xf32>,
    return
  }
  func.func @transform_0(%arg0: i32) -> (i32, i32, i32) {
    %c0_i32 = arith.constant 0 : i32
    %c0_i32_0 = arith.constant 0 : i32
    %c0_i32_1 = arith.constant 0 : i32
    return %arg0, %c0_i32, %c0_i32_0 : i32, i32, i32
  }
  func.func @transform_1(%arg0: i32) -> (i32, i32) {
    %c0_i32 = arith.constant 0 : i32
    %c0_i32_0 = arith.constant 0 : i32
    %c0_i32_1 = arith.constant 0 : i32
    return %c0_i32, %c0_i32_0 : i32, i32
  }
  func.func @transform_2(%arg0: i32) -> (i32, i32) {
    %c0_i32 = arith.constant 0 : i32
    %c0_i32_0 = arith.constant 0 : i32
    %c0_i32_1 = arith.constant 0 : i32
    return %c0_i32, %c0_i32_0 : i32, i32
  }
  func.func @transform_3(%arg0: i32) -> (i32, i32, i32) {
    %c0_i32 = arith.constant 0 : i32
    %c0_i32_0 = arith.constant 0 : i32
    %c0_i32_1 = arith.constant 0 : i32
    return %arg0, %c0_i32, %c0_i32_0 : i32, i32, i32
  }
}

</mosaic_0001>

<llo_original>
// kernel: joint_level_forward.5
$region0: #{joint_level_forward.5}
  #allocation0 [shape = 'u32[]', space=smem, size = 0x4, offset = 0x4, fixed_abs, tag = 'smem constant byte address 0x4 - core index']
  #allocation1 [shape = 'u32[144,128]{1,0:T(1,128)}', space=vmem, size = 0x12000, scoped, tag = 'internal scratch']
  %s0 = inlined_call_operand.vmem [shape: bf16[16,16,128], index: 0, kind: input, shape index: {}]
  %s1 = inlined_call_operand.vmem [shape: f32[1,128], index: 1, kind: input, shape index: {}]
  %s2 = inlined_call_operand.vmem [shape: f32[1,128], index: 2, kind: input, shape index: {}]
  %s3 = inlined_call_operand.vmem [shape: bf16[16,16,16], index: 3, kind: input, shape index: {}]
  %s4 = inlined_call_operand.vmem [shape: bf16[128,512], index: 4, kind: input, shape index: {}]
  %s5 = inlined_call_operand.vmem [shape: f32[1,256], index: 5, kind: input, shape index: {}]
  %s6 = inlined_call_operand.vmem [shape: bf16[16,16,256], index: 6, kind: output, shape index: {0}]
  %s7 = inlined_call_operand.vmem [shape: f32[2,1,256], index: 7, kind: output, shape index: {1}]
  %s8 = inlined_call_operand.vmem [shape: f32[2,1,256], index: 8, kind: output, shape index: {2}]
  %9 = xla_tuple %s6, %s7, %s8
  %s10 = sld [smem:[#allocation0]]
  $region73: #{joint_level_forward.5} parent=0
    _
  %s12 = ssub.s32 1, %s10
  %s13 = scalar_select 0, %s12, %s10
  loop: start=0, step=1, limit=4
  $region2: #{joint_level_forward.5} parent=0 // loop_pre_header
    _
  $region3: #{joint_level_forward.5} parent=0 // loop_header
    %s15 = sphi 0, %s19
    %p16 = scmp.ge.s32.totalorder %s15, 4
    %s25 = sphi 0, %s27
    %s28 = sphi 0, %s25
    %s29 = sphi 0, %s28
    %s45 = sphi 0, %s29
    %s49 = sphi 0, %s49
    %s51 = sphi 0, %s49
    %s52 = sphi 0, %s51
    %s66 = sphi 0, %s52
    %s70 = sphi 0, %s70
    %s72 = sphi 0, %s70
    %s73 = sphi 0, %s72
    %s87 = sphi 0, %s73
    %s93 = sphi 0, %s95
    %s96 = sphi 0, %s93
    %s97 = sphi 0, %s96
    %s113 = sphi 0, %s97
    %s117 = sphi 0, %s117
    %s119 = sphi 0, %s117
    %s120 = sphi 0, %s119
    %s134 = sphi 0, %s120
    %s138 = sphi 0, %s138
    %s140 = sphi 0, %s138
    %s141 = sphi 0, %s140
    %s155 = sphi 0, %s141
    %s161 = sphi 0, %s163
    %s164 = sphi 0, %s161
    %s165 = sphi 0, %s164
    %s181 = sphi 0, %s165
    %s187 = sphi 0, %s189
    %s190 = sphi 0, %s187
    %s191 = sphi 0, %s190
    %s207 = sphi 0, %s191
    %s213 = sphi 0, %s215
    %s216 = sphi 0, %s213
    %s217 = sphi 0, %s216
    %s233 = sphi 0, %s217
  $region4: #{joint_level_forward.5} parent=0 // loop_header_branch
    %18 = sbr.rel (%p16) target = $region8
  $region5: #{joint_level_forward.5} parent=0 // loop_body
    %s20 = ssub.s32 %s15, 1
    %s21 = ssub.s32 %s15, 2
    %s22 = sadd.s32 %s15, 1
    %s23 = ssub.s32 %s15, %s22
    %p24 = scmp.eq.s32.totalorder %s23, 0
    %s26 = sadd.s32 %s25, 1
    %s27 = scalar_select %p24, %s25, %s26
    %p30 = pneg %p24
    %p31 = scmp.eq.s32.totalorder %s15, 1
    %p32 = por %p30, %p31
    %p33 = scmp.ne.s32.totalorder %s25, %s28
    %p34 = scmp.eq.s32.totalorder %s15, 0
    %p35 = por %p33, %p34
    %p36 = scmp.ne.s32.totalorder %s25, %s28
    %p37 = scmp.eq.s32.totalorder %s20, 1
    %p38 = por %p36, %p37
    %p39 = scmp.ne.s32.totalorder %s28, %s29
    %p40 = scmp.eq.s32.totalorder %s20, 0
    %p41 = por %p39, %p40
    %p42 = scmp.ne.s32.totalorder %s28, %s29
    %p43 = scmp.eq.s32.totalorder %s21, 1
    %p44 = por %p42, %p43
    %p46 = scmp.ne.s32.totalorder %s29, %s45
    %p47 = scmp.eq.s32.totalorder %s21, 0
    %p48 = por %p46, %p47
    %s50 = sadd.s32 %s49, 1
    %p53 = scmp.eq.s32.totalorder %s15, 1
    %p54 = scmp.ne.s32.totalorder %s49, %s51
    %p55 = scmp.eq.s32.totalorder %s15, 0
    %p56 = por %p54, %p55
    %p57 = scmp.ne.s32.totalorder %s49, %s51
    %p58 = scmp.eq.s32.totalorder %s20, 1
    %p59 = por %p57, %p58
    %p60 = scmp.ne.s32.totalorder %s51, %s52
    %p61 = scmp.eq.s32.totalorder %s20, 0
    %p62 = por %p60, %p61
    %p63 = scmp.ne.s32.totalorder %s51, %s52
    %p64 = scmp.eq.s32.totalorder %s21, 1
    %p65 = por %p63, %p64
    %p67 = scmp.ne.s32.totalorder %s52, %s66
    %p68 = scmp.eq.s32.totalorder %s21, 0
    %p69 = por %p67, %p68
    %s71 = sadd.s32 %s70, 1
    %p74 = scmp.eq.s32.totalorder %s15, 1
    %p75 = scmp.ne.s32.totalorder %s70, %s72
    %p76 = scmp.eq.s32.totalorder %s15, 0
    %p77 = por %p75, %p76
    %p78 = scmp.ne.s32.totalorder %s70, %s72
    %p79 = scmp.eq.s32.totalorder %s20, 1
    %p80 = por %p78, %p79
    %p81 = scmp.ne.s32.totalorder %s72, %s73
    %p82 = scmp.eq.s32.totalorder %s20, 0
    %p83 = por %p81, %p82
    %p84 = scmp.ne.s32.totalorder %s72, %s73
    %p85 = scmp.eq.s32.totalorder %s21, 1
    %p86 = por %p84, %p85
    %p88 = scmp.ne.s32.totalorder %s73, %s87
    %p89 = scmp.eq.s32.totalorder %s21, 0
    %p90 = por %p88, %p89
    %s91 = ssub.s32 %s15, %s22
    %p92 = scmp.eq.s32.totalorder %s91, 0
    %s94 = sadd.s32 %s93, 1
    %s95 = scalar_select %p92, %s93, %s94
    %p98 = pneg %p92
    %p99 = scmp.eq.s32.totalorder %s15, 1
    %p100 = por %p98, %p99
    %p101 = scmp.ne.s32.totalorder %s93, %s96
    %p102 = scmp.eq.s32.totalorder %s15, 0
    %p103 = por %p101, %p102
    %p104 = scmp.ne.s32.totalorder %s93, %s96
    %p105 = scmp.eq.s32.totalorder %s20, 1
    %p106 = por %p104, %p105
    %p107 = scmp.ne.s32.totalorder %s96, %s97
    %p108 = scmp.eq.s32.totalorder %s20, 0
    %p109 = por %p107, %p108
    %p110 = scmp.ne.s32.totalorder %s96, %s97
    %p111 = scmp.eq.s32.totalorder %s21, 1
    %p112 = por %p110, %p111
    %p114 = scmp.ne.s32.totalorder %s97, %s113
    %p115 = scmp.eq.s32.totalorder %s21, 0
    %p116 = por %p114, %p115
    %s118 = sadd.s32 %s117, 1
    %p121 = scmp.eq.s32.totalorder %s15, 1
    %p122 = scmp.ne.s32.totalorder %s117, %s119
    %p123 = scmp.eq.s32.totalorder %s15, 0
    %p124 = por %p122, %p123
    %p125 = scmp.ne.s32.totalorder %s117, %s119
    %p126 = scmp.eq.s32.totalorder %s20, 1
    %p127 = por %p125, %p126
    %p128 = scmp.ne.s32.totalorder %s119, %s120
    %p129 = scmp.eq.s32.totalorder %s20, 0
    %p130 = por %p128, %p129
    %p131 = scmp.ne.s32.totalorder %s119, %s120
    %p132 = scmp.eq.s32.totalorder %s21, 1
    %p133 = por %p131, %p132
    %p135 = scmp.ne.s32.totalorder %s120, %s134
    %p136 = scmp.eq.s32.totalorder %s21, 0
    %p137 = por %p135, %p136
    %s139 = sadd.s32 %s138, 1
    %p142 = scmp.eq.s32.totalorder %s15, 1
    %p143 = scmp.ne.s32.totalorder %s138, %s140
    %p144 = scmp.eq.s32.totalorder %s15, 0
    %p145 = por %p143, %p144
    %p146 = scmp.ne.s32.totalorder %s138, %s140
    %p147 = scmp.eq.s32.totalorder %s20, 1
    %p148 = por %p146, %p147
    %p149 = scmp.ne.s32.totalorder %s140, %s141
    %p150 = scmp.eq.s32.totalorder %s20, 0
    %p151 = por %p149, %p150
    %p152 = scmp.ne.s32.totalorder %s140, %s141
    %p153 = scmp.eq.s32.totalorder %s21, 1
    %p154 = por %p152, %p153
    %p156 = scmp.ne.s32.totalorder %s141, %s155
    %p157 = scmp.eq.s32.totalorder %s21, 0
    %p158 = por %p156, %p157
    %s159 = ssub.s32 %s15, %s22
    %p160 = scmp.eq.s32.totalorder %s159, 0
    %s162 = sadd.s32 %s161, 1
    %s163 = scalar_select %p160, %s161, %s162
    %p166 = pneg %p160
    %p167 = scmp.eq.s32.totalorder %s15, 1
    %p168 = por %p166, %p167
    %p169 = scmp.ne.s32.totalorder %s161, %s164
    %p170 = scmp.eq.s32.totalorder %s15, 0
    %p171 = por %p169, %p170
    %p172 = scmp.ne.s32.totalorder %s161, %s164
    %p173 = scmp.eq.s32.totalorder %s20, 1
    %p174 = por %p172, %p173
    %p175 = scmp.ne.s32.totalorder %s164, %s165
    %p176 = scmp.eq.s32.totalorder %s20, 0
    %p177 = por %p175, %p176
    %p178 = scmp.ne.s32.totalorder %s164, %s165
    %p179 = scmp.eq.s32.totalorder %s21, 1
    %p180 = por %p178, %p179
    %p182 = scmp.ne.s32.totalorder %s165, %s181
    %p183 = scmp.eq.s32.totalorder %s21, 0
    %p184 = por %p182, %p183
    %s185 = ssub.s32 %s15, %s22
    %p186 = scmp.eq.s32.totalorder %s185, 0
    %s188 = sadd.s32 %s187, 1
    %s189 = scalar_select %p186, %s187, %s188
    %p192 = pneg %p186
    %p193 = scmp.eq.s32.totalorder %s15, 1
    %p194 = por %p192, %p193
    %p195 = scmp.ne.s32.totalorder %s187, %s190
    %p196 = scmp.eq.s32.totalorder %s15, 0
    %p197 = por %p195, %p196
    %p198 = scmp.ne.s32.totalorder %s187, %s190
    %p199 = scmp.eq.s32.totalorder %s20, 1
    %p200 = por %p198, %p199
    %p201 = scmp.ne.s32.totalorder %s190, %s191
    %p202 = scmp.eq.s32.totalorder %s20, 0
    %p203 = por %p201, %p202
    %p204 = scmp.ne.s32.totalorder %s190, %s191
    %p205 = scmp.eq.s32.totalorder %s21, 1
    %p206 = por %p204, %p205
    %p208 = scmp.ne.s32.totalorder %s191, %s207
    %p209 = scmp.eq.s32.totalorder %s21, 0
    %p210 = por %p208, %p209
    %s211 = ssub.s32 %s15, %s22
    %p212 = scmp.eq.s32.totalorder %s211, 0
    %s214 = sadd.s32 %s213, 1
    %s215 = scalar_select %p212, %s213, %s214
    %p218 = pneg %p212
    %p219 = scmp.eq.s32.totalorder %s15, 1
    %p220 = por %p218, %p219
    %p221 = scmp.ne.s32.totalorder %s213, %s216
    %p222 = scmp.eq.s32.totalorder %s15, 0
    %p223 = por %p221, %p222
    %p224 = scmp.ne.s32.totalorder %s213, %s216
    %p225 = scmp.eq.s32.totalorder %s20, 1
    %p226 = por %p224, %p225
    %p227 = scmp.ne.s32.totalorder %s216, %s217
    %p228 = scmp.eq.s32.totalorder %s20, 0
    %p229 = por %p227, %p228
    %p230 = scmp.ne.s32.totalorder %s216, %s217
    %p231 = scmp.eq.s32.totalorder %s21, 1
    %p232 = por %p230, %p231
    %p234 = scmp.ne.s32.totalorder %s217, %s233
    %p235 = scmp.eq.s32.totalorder %s21, 0
    %p236 = por %p234, %p235
    %p237 = scmp.le.s32.totalorder 1, %s15
    %p238 = scmp.lt.s32.totalorder %s15, 3
    %p239 = pnand %p237, %p238
    %p240 = pneg %p239
    // Predicated region
    $region9: #{joint_level_forward.5} parent=5 // pred_check
      _
    $region10: #{joint_level_forward.5} parent=5 // pred_check_branch
      %242 = sbr.rel (%p239) target = $region12
    $region11: #{joint_level_forward.5} parent=5 // pred_region
      %s243 = ssub.s32 %s15, 1
      // Predicated region
      $region13: #{joint_level_forward.5} parent=11 // pred_check
        %p244 = pneg %p62
      $region14: #{joint_level_forward.5} parent=11 // pred_check_branch
        %246 = sbr.rel (%p244) target = $region16
      $region15: #{joint_level_forward.5} parent=11 // pred_region
        _
      $region16: #{joint_level_forward.5} parent=11 // pred_fallthru
        _
      // Predicated region
      $region17: #{joint_level_forward.5} parent=11 // pred_check
        %p247 = pneg %p83
      $region18: #{joint_level_forward.5} parent=11 // pred_check_branch
        %249 = sbr.rel (%p247) target = $region20
      $region19: #{joint_level_forward.5} parent=11 // pred_region
        _
      $region20: #{joint_level_forward.5} parent=11 // pred_fallthru
        _
      // Predicated region
      $region21: #{joint_level_forward.5} parent=11 // pred_check
        %p250 = pneg %p130
      $region22: #{joint_level_forward.5} parent=11 // pred_check_branch
        %252 = sbr.rel (%p250) target = $region24
      $region23: #{joint_level_forward.5} parent=11 // pred_region
        _
      $region24: #{joint_level_forward.5} parent=11 // pred_fallthru
        _
      // Predicated region
      $region25: #{joint_level_forward.5} parent=11 // pred_check
        %p253 = pneg %p151
      $region26: #{joint_level_forward.5} parent=11 // pred_check_branch
        %255 = sbr.rel (%p253) target = $region28
      $region27: #{joint_level_forward.5} parent=11 // pred_region
        _
      $region28: #{joint_level_forward.5} parent=11 // pred_fallthru
        _
    $region12: #{joint_level_forward.5} parent=5 // pred_fallthru
      _
    %p256 = scmp.lt.s32.totalorder %s15, 2
    // Predicated region
    $region29: #{joint_level_forward.5} parent=5 // pred_check
      %p257 = pneg %p256
    $region30: #{joint_level_forward.5} parent=5 // pred_check_branch
      %259 = sbr.rel (%p257) target = $region32
    $region31: #{joint_level_forward.5} parent=5 // pred_region
      // Predicated region
      $region33: #{joint_level_forward.5} parent=31 // pred_check
        %p260 = pneg %p35
      $region34: #{joint_level_forward.5} parent=31 // pred_check_branch
        %262 = sbr.rel (%p260) target = $region36
      $region35: #{joint_level_forward.5} parent=31 // pred_region
        %s263 = smul.u32 8, %s15
        %p264 = scmp.lt.s32.totalorder %s263, 15
        %s265 = scalar_select %p264, %s263, 15
        %s266 = smul.addr %s265, 2
        %s267 = smul.addr %s266, 4
        %s268 = scalar_lea.vmem %s0, %s267
        %s269 = smul.u32 8, %s15
      $region36: #{joint_level_forward.5} parent=31 // pred_fallthru
        _
      // Predicated region
      $region37: #{joint_level_forward.5} parent=31 // pred_check
        %p270 = pneg %p103
      $region38: #{joint_level_forward.5} parent=31 // pred_check_branch
        %272 = sbr.rel (%p270) target = $region40
      $region39: #{joint_level_forward.5} parent=31 // pred_region
        %s273 = smul.u32 8, %s15
        %p274 = scmp.lt.s32.totalorder %s273, 15
        %s275 = scalar_select %p274, %s273, 15
        %s276 = smul.addr %s275, 2
        %s277 = smul.addr %s276, 4
        %s278 = scalar_lea.vmem %s3, %s277
        %s279 = smul.u32 8, %s15
      $region40: #{joint_level_forward.5} parent=31 // pred_fallthru
        _
    $region32: #{joint_level_forward.5} parent=5 // pred_fallthru
      _
    %p280 = scmp.le.s32.totalorder 1, %s15
    %p281 = scmp.lt.s32.totalorder %s15, 3
    %p282 = pnand %p280, %p281
    %p283 = pneg %p282
    // Predicated region
    $region41: #{joint_level_forward.5} parent=5 // pred_check
      _
    $region42: #{joint_level_forward.5} parent=5 // pred_check_branch
      %285 = sbr.rel (%p282) target = $region44
    $region43: #{joint_level_forward.5} parent=5 // pred_region
      %s286 = ssub.s32 %s15, 1
      %s287 = smul.u32 8, %s20
      %p288 = scmp.lt.s32.totalorder %s287, 15
      %s289 = scalar_select %p288, %s287, 15
      %s290 = smul.addr %s289, 2
      %s291 = smul.addr %s290, 4
      %s292 = scalar_lea.vmem %s0, %s291
      %p293 = pneg %p41
      %p294 = pneg %p38
      %p295 = pneg %p62
      %p296 = pneg %p59
      %p297 = pneg %p83
      %p298 = pneg %p80
      %s299 = smul.u32 8, %s20
      %p300 = scmp.lt.s32.totalorder %s299, 15
      %s301 = scalar_select %p300, %s299, 15
      %s302 = smul.addr %s301, 2
      %s303 = smul.addr %s302, 4
      %s304 = scalar_lea.vmem %s3, %s303
      %p305 = pneg %p109
      %p306 = pneg %p106
      %p307 = pneg %p130
      %p308 = pneg %p127
      %p309 = pneg %p151
      %p310 = pneg %p148
      %p311 = pneg %p177
      %p312 = pneg %p174
      %s313 = smul.u32 8, %s20
      %p314 = scmp.lt.s32.totalorder %s313, 15
      %s315 = scalar_select %p314, %s313, 15
      %s316 = smul.addr %s315, 4
      %s317 = smul.addr %s316, 4
      %s318 = scalar_lea.vmem %s6, %s317
      %p319 = pneg %p203
      %p320 = pneg %p200
      %p321 = scmp.lt.s32.totalorder %s20, 1
      %s322 = scalar_select %p321, %s20, 1
      %s323 = smul.addr %s322, 2
      %s324 = scalar_lea.vmem %s7, %s323
      %p325 = pneg %p229
      %p326 = pneg %p226
      %p327 = scmp.lt.s32.totalorder %s20, 1
      %s328 = scalar_select %p327, %s20, 1
      %s329 = smul.addr %s328, 2
      %s330 = scalar_lea.vmem %s8, %s329
      %s331 = smul.u32 8, %s20
      %p332 = scmp.lt.s32.totalorder %s331, 15
      %s333 = scalar_select %p332, %s331, 15
      %s334 = smul.addr %s333, 2
      %s335 = smul.addr %s334, 4
      %s336 = scalar_lea.vmem %s0, %s335
      %s337 = smul.u32 8, %s20
      %s338 = smul.u32 8, %s20
      %p339 = scmp.lt.s32.totalorder %s338, 15
      %s340 = scalar_select %p339, %s338, 15
      %s341 = smul.addr %s340, 2
      %s342 = smul.addr %s341, 4
      %s343 = scalar_lea.vmem %s3, %s342
      %s344 = smul.u32 8, %s20
      %s345 = smul.u32 8, %s20
      %p346 = scmp.lt.s32.totalorder %s345, 15
      %s347 = scalar_select %p346, %s345, 15
      %s348 = smul.addr %s347, 4
      %s349 = smul.addr %s348, 4
      %s350 = scalar_lea.vmem %s6, %s349
      %s351 = smul.u32 8, %s20
      %p352 = scmp.lt.s32.totalorder %s20, 1
      %s353 = scalar_select %p352, %s20, 1
      %s354 = smul.addr %s353, 2
      %s355 = scalar_lea.vmem %s7, %s354
      %p356 = scmp.lt.s32.totalorder %s20, 1
      %s357 = scalar_select %p356, %s20, 1
      %s358 = smul.addr %s357, 2
      %s359 = scalar_lea.vmem %s8, %s358
      %v361 = vld [vmem:[%s336] sm:$0xf]
      %v362 = vld [vmem:[%s336 + $0x4] sm:$0xf]
      %v363 = vld [vmem:[%s336 + $0x8] sm:$0xf]
      %v364 = vld [vmem:[%s336 + $0xc] sm:$0xf]
      %v365 = vld [vmem:[%s336 + $0x10] sm:$0xf]
      %v366 = vld [vmem:[%s336 + $0x14] sm:$0xf]
      %v367 = vld [vmem:[%s336 + $0x18] sm:$0xf]
      %v368 = vld [vmem:[%s336 + $0x1c] sm:$0xf]
      %v369 = vld [vmem:[%s336 + $0x20] sm:$0xf]
      %v370 = vld [vmem:[%s336 + $0x24] sm:$0xf]
      %v371 = vld [vmem:[%s336 + $0x28] sm:$0xf]
      %v372 = vld [vmem:[%s336 + $0x2c] sm:$0xf]
      %v373 = vld [vmem:[%s336 + $0x30] sm:$0xf]
      %v374 = vld [vmem:[%s336 + $0x34] sm:$0xf]
      %v375 = vld [vmem:[%s336 + $0x38] sm:$0xf]
      %v376 = vld [vmem:[%s336 + $0x3c] sm:$0xf]
      %v377 = vunpack.c.l.bf16 %v361
      %v378 = vunpack.c.l.bf16 %v362
      %v379 = vunpack.c.l.bf16 %v363
      %v380 = vunpack.c.l.bf16 %v364
      %v381 = vunpack.c.l.bf16 %v365
      %v382 = vunpack.c.l.bf16 %v366
      %v383 = vunpack.c.l.bf16 %v367
      %v384 = vunpack.c.l.bf16 %v368
      %v385 = vunpack.c.l.bf16 %v369
      %v386 = vunpack.c.l.bf16 %v370
      %v387 = vunpack.c.l.bf16 %v371
      %v388 = vunpack.c.l.bf16 %v372
      %v389 = vunpack.c.l.bf16 %v373
      %v390 = vunpack.c.l.bf16 %v374
      %v391 = vunpack.c.l.bf16 %v375
      %v392 = vunpack.c.l.bf16 %v376
      %v393 = vld [vmem:[%s1] sm:$0x1]
      %v395 = vlaneseq
      %v396 = vshrl.u32 %v395, 7
      %v397 = vsub.s32 0, %v396
      %v398 = vrot.slane %v393, %v397
      %v400 = vmul.f32 %v377, %v398
      %v401 = vmul.f32 %v378, %v398
      %v402 = vmul.f32 %v379, %v398
      %v403 = vmul.f32 %v380, %v398
      %v404 = vmul.f32 %v381, %v398
      %v405 = vmul.f32 %v382, %v398
      %v406 = vmul.f32 %v383, %v398
      %v407 = vmul.f32 %v384, %v398
      %v408 = vmul.f32 %v385, %v398
      %v409 = vmul.f32 %v386, %v398
      %v410 = vmul.f32 %v387, %v398
      %v411 = vmul.f32 %v388, %v398
      %v412 = vmul.f32 %v389, %v398
      %v413 = vmul.f32 %v390, %v398
      %v414 = vmul.f32 %v391, %v398
      %v415 = vmul.f32 %v392, %v398
      %v416 = vld [vmem:[%s2] sm:$0x1]
      %v418 = vlaneseq
      %v419 = vshrl.u32 %v418, 7
      %v420 = vsub.s32 0, %v419
      %v421 = vrot.slane %v416, %v420
      %v423 = vadd.f32 %v400, %v421
      %v424 = vadd.f32 %v401, %v421
      %v425 = vadd.f32 %v402, %v421
      %v426 = vadd.f32 %v403, %v421
      %v427 = vadd.f32 %v404, %v421
      %v428 = vadd.f32 %v405, %v421
      %v429 = vadd.f32 %v406, %v421
      %v430 = vadd.f32 %v407, %v421
      %v431 = vadd.f32 %v408, %v421
      %v432 = vadd.f32 %v409, %v421
      %v433 = vadd.f32 %v410, %v421
      %v434 = vadd.f32 %v411, %v421
      %v435 = vadd.f32 %v412, %v421
      %v436 = vadd.f32 %v413, %v421
      %v437 = vadd.f32 %v414, %v421
      %v438 = vadd.f32 %v415, %v421
      %v439 = vmax.f32 %v423, 0.0
      %v440 = vmax.f32 %v424, 0.0
      %v441 = vmax.f32 %v425, 0.0
      %v442 = vmax.f32 %v426, 0.0
      %v443 = vmax.f32 %v427, 0.0
      %v444 = vmax.f32 %v428, 0.0
      %v445 = vmax.f32 %v429, 0.0
      %v446 = vmax.f32 %v430, 0.0
      %v447 = vmax.f32 %v431, 0.0
      %v448 = vmax.f32 %v432, 0.0
      %v449 = vmax.f32 %v433, 0.0
      %v450 = vmax.f32 %v434, 0.0
      %v451 = vmax.f32 %v435, 0.0
      %v452 = vmax.f32 %v436, 0.0
      %v453 = vmax.f32 %v437, 0.0
      %v454 = vmax.f32 %v438, 0.0
      %v455 = vpack.c.bf16 %v440, %v439
      %v456 = vpack.c.bf16 %v442, %v441
      %v457 = vpack.c.bf16 %v444, %v443
      %v458 = vpack.c.bf16 %v446, %v445
      %v459 = vpack.c.bf16 %v448, %v447
      %v460 = vpack.c.bf16 %v450, %v449
      %v461 = vpack.c.bf16 %v452, %v451
      %v462 = vpack.c.bf16 %v454, %v453
      %v463 = vld [vmem:[%s4] sm:$0xff]
      %v464 = vld [vmem:[%s4 + $0x8] sm:$0xff]
      %v465 = vld [vmem:[%s4 + $0x10] sm:$0xff]
      %v466 = vld [vmem:[%s4 + $0x18] sm:$0xff]
      %v467 = vld [vmem:[%s4 + $0x20] sm:$0xff]
      %v468 = vld [vmem:[%s4 + $0x28] sm:$0xff]
      %v469 = vld [vmem:[%s4 + $0x30] sm:$0xff]
      %v470 = vld [vmem:[%s4 + $0x38] sm:$0xff]
      %v471 = vld [vmem:[%s4 + $0x40] sm:$0xff]
      %v472 = vld [vmem:[%s4 + $0x48] sm:$0xff]
      %v473 = vld [vmem:[%s4 + $0x50] sm:$0xff]
      %v474 = vld [vmem:[%s4 + $0x58] sm:$0xff]
      %v475 = vld [vmem:[%s4 + $0x60] sm:$0xff]
      %v476 = vld [vmem:[%s4 + $0x68] sm:$0xff]
      %v477 = vld [vmem:[%s4 + $0x70] sm:$0xff]
      %v478 = vld [vmem:[%s4 + $0x78] sm:$0xff]
      %v479 = vld [vmem:[%s4 + $0x80] sm:$0xff]
      %v480 = vld [vmem:[%s4 + $0x88] sm:$0xff]
      %v481 = vld [vmem:[%s4 + $0x90] sm:$0xff]
      %v482 = vld [vmem:[%s4 + $0x98] sm:$0xff]
      %v483 = vld [vmem:[%s4 + $0xa0] sm:$0xff]
      %v484 = vld [vmem:[%s4 + $0xa8] sm:$0xff]
      %v485 = vld [vmem:[%s4 + $0xb0] sm:$0xff]
      %v486 = vld [vmem:[%s4 + $0xb8] sm:$0xff]
      %v487 = vld [vmem:[%s4 + $0xc0] sm:$0xff]
      %v488 = vld [vmem:[%s4 + $0xc8] sm:$0xff]
      %v489 = vld [vmem:[%s4 + $0xd0] sm:$0xff]
      %v490 = vld [vmem:[%s4 + $0xd8] sm:$0xff]
      %v491 = vld [vmem:[%s4 + $0xe0] sm:$0xff]
      %v492 = vld [vmem:[%s4 + $0xe8] sm:$0xff]
      %v493 = vld [vmem:[%s4 + $0xf0] sm:$0xff]
      %v494 = vld [vmem:[%s4 + $0xf8] sm:$0xff]
      %v527 = vunpack.c.l.b16 %v463
      %v528 = vunpack.c.h.b16 %v463
      %v529 = vunpack.c.l.b16 %v464
      %v530 = vunpack.c.h.b16 %v464
      %v531 = vunpack.c.l.b16 %v465
      %v532 = vunpack.c.h.b16 %v465
      %v533 = vunpack.c.l.b16 %v466
      %v534 = vunpack.c.h.b16 %v466
      %v535 = vunpack.c.l.b16 %v467
      %v536 = vunpack.c.h.b16 %v467
      %v537 = vunpack.c.l.b16 %v468
      %v538 = vunpack.c.h.b16 %v468
      %v539 = vunpack.c.l.b16 %v469
      %v540 = vunpack.c.h.b16 %v469
      %v541 = vunpack.c.l.b16 %v470
      %v542 = vunpack.c.h.b16 %v470
      %v543 = vunpack.c.l.b16 %v471
      %v544 = vunpack.c.h.b16 %v471
      %v545 = vunpack.c.l.b16 %v472
      %v546 = vunpack.c.h.b16 %v472
      %v547 = vunpack.c.l.b16 %v473
      %v548 = vunpack.c.h.b16 %v473
      %v549 = vunpack.c.l.b16 %v474
      %v550 = vunpack.c.h.b16 %v474
      %v551 = vunpack.c.l.b16 %v475
      %v552 = vunpack.c.h.b16 %v475
      %v553 = vunpack.c.l.b16 %v476
      %v554 = vunpack.c.h.b16 %v476
      %v555 = vunpack.c.l.b16 %v477
      %v556 = vunpack.c.h.b16 %v477
      %v557 = vunpack.c.l.b16 %v478
      %v558 = vunpack.c.h.b16 %v478
      %v559 = vunpack.c.l.b16 %v479
      %v560 = vunpack.c.h.b16 %v479
      %v561 = vunpack.c.l.b16 %v480
      %v562 = vunpack.c.h.b16 %v480
      %v563 = vunpack.c.l.b16 %v481
      %v564 = vunpack.c.h.b16 %v481
      %v565 = vunpack.c.l.b16 %v482
      %v566 = vunpack.c.h.b16 %v482
      %v567 = vunpack.c.l.b16 %v483
      %v568 = vunpack.c.h.b16 %v483
      %v569 = vunpack.c.l.b16 %v484
      %v570 = vunpack.c.h.b16 %v484
      %v571 = vunpack.c.l.b16 %v485
      %v572 = vunpack.c.h.b16 %v485
      %v573 = vunpack.c.l.b16 %v486
      %v574 = vunpack.c.h.b16 %v486
      %v575 = vunpack.c.l.b16 %v487
      %v576 = vunpack.c.h.b16 %v487
      %v577 = vunpack.c.l.b16 %v488
      %v578 = vunpack.c.h.b16 %v488
      %v579 = vunpack.c.l.b16 %v489
      %v580 = vunpack.c.h.b16 %v489
      %v581 = vunpack.c.l.b16 %v490
      %v582 = vunpack.c.h.b16 %v490
      %v583 = vunpack.c.l.b16 %v491
      %v584 = vunpack.c.h.b16 %v491
      %v585 = vunpack.c.l.b16 %v492
      %v586 = vunpack.c.h.b16 %v492
      %v587 = vunpack.c.l.b16 %v493
      %v588 = vunpack.c.h.b16 %v493
      %v589 = vunpack.c.l.b16 %v494
      %v590 = vunpack.c.h.b16 %v494
      %v591 = vpack.c.b16 %v531, %v527
      %v592 = vpack.c.b16 %v532, %v528
      %v593 = vpack.c.b16 %v533, %v529
      %v594 = vpack.c.b16 %v534, %v530
      %v595 = vpack.c.b16 %v539, %v535
      %v596 = vpack.c.b16 %v540, %v536
      %v597 = vpack.c.b16 %v541, %v537
      %v598 = vpack.c.b16 %v542, %v538
      %v599 = vpack.c.b16 %v547, %v543
      %v600 = vpack.c.b16 %v548, %v544
      %v601 = vpack.c.b16 %v549, %v545
      %v602 = vpack.c.b16 %v550, %v546
      %v603 = vpack.c.b16 %v555, %v551
      %v604 = vpack.c.b16 %v556, %v552
      %v605 = vpack.c.b16 %v557, %v553
      %v606 = vpack.c.b16 %v558, %v554
      %v607 = vpack.c.b16 %v563, %v559
      %v608 = vpack.c.b16 %v564, %v560
      %v609 = vpack.c.b16 %v565, %v561
      %v610 = vpack.c.b16 %v566, %v562
      %v611 = vpack.c.b16 %v571, %v567
      %v612 = vpack.c.b16 %v572, %v568
      %v613 = vpack.c.b16 %v573, %v569
      %v614 = vpack.c.b16 %v574, %v570
      %v615 = vpack.c.b16 %v579, %v575
      %v616 = vpack.c.b16 %v580, %v576
      %v617 = vpack.c.b16 %v581, %v577
      %v618 = vpack.c.b16 %v582, %v578
      %v619 = vpack.c.b16 %v587, %v583
      %v620 = vpack.c.b16 %v588, %v584
      %v621 = vpack.c.b16 %v589, %v585
      %v622 = vpack.c.b16 %v590, %v586
      %655 = vmatprep.subr.bf16.mxu0 %v592
      %656 = vmatpush1.bf16.msra.mxu0 %v591
      %657 = vmatprep.subr.bf16.mxu0 %v596
      %658 = vmatpush1.bf16.msra.mxu0 %v595
      %659 = vmatprep.subr.bf16.mxu0 %v600
      %660 = vmatpush1.bf16.msra.mxu0 %v599
      %661 = vmatprep.subr.bf16.mxu0 %v604
      %662 = vmatpush1.bf16.msra.mxu0 %v603
      %663 = vmatprep.subr.bf16.mxu0 %v608
      %664 = vmatpush1.bf16.msra.mxu0 %v607
      %665 = vmatprep.subr.bf16.mxu0 %v612
      %666 = vmatpush1.bf16.msra.mxu0 %v611
      %667 = vmatprep.subr.bf16.mxu0 %v616
      %668 = vmatpush1.bf16.msra.mxu0 %v615
      %669 = vmatprep.subr.bf16.mxu0 %v620
      %670 = vmatpush1.bf16.msra.mxu0 %v619
      %671 = vmatprep.subr.bf16.mxu0 0
      %672 = vmatpush1.bf16.msra.mxu0 0
      %673 = vmatprep.subr.bf16.mxu0 0
      %674 = vmatpush1.bf16.msra.mxu0 0
      %675 = vmatprep.subr.bf16.mxu0 0
      %676 = vmatpush1.bf16.msra.mxu0 0
      %677 = vmatprep.subr.bf16.mxu0 0
      %678 = vmatpush1.bf16.msra.mxu0 0
      %679 = vmatprep.subr.bf16.mxu0 0
      %680 = vmatpush1.bf16.msra.mxu0 0
      %681 = vmatprep.subr.bf16.mxu0 0
      %682 = vmatpush1.bf16.msra.mxu0 0
      %683 = vmatprep.subr.bf16.mxu0 0
      %684 = vmatpush1.bf16.msra.mxu0 0
      %685 = vmatprep.subr.bf16.mxu0 0
      %686 = vmatpush1.bf16.msra.mxu0 0
      %687 = vmatprep.mubr.bf16.mxu0 0
      %688 = vmatmul.mubr.bf16.gmra.mrb[0].mxu0 %v455
      %v689 = vpop.f32.mrb[0].mxu0
      %v690 = vadd.f32 0.0, %v689
      %v691 = vpop.f32.mrb[0].mxu0
      %v692 = vadd.f32 0.0, %v691
      %v693 = vpop.f32.mrb[0].mxu0
      %v694 = vadd.f32 0.0, %v693
      %v695 = vpop.f32.mrb[0].mxu0
      %v696 = vadd.f32 0.0, %v695
      %697 = vmatprep.mubr.bf16.mxu0 0
      %698 = vmatmul.mubr.bf16.gmra.mrb[0].mxu0 %v456
      %v699 = vpop.f32.mrb[0].mxu0
      %v700 = vadd.f32 0.0, %v699
      %v701 = vpop.f32.mrb[0].mxu0
      %v702 = vadd.f32 0.0, %v701
      %v703 = vpop.f32.mrb[0].mxu0
      %v704 = vadd.f32 0.0, %v703
      %v705 = vpop.f32.mrb[0].mxu0
      %v706 = vadd.f32 0.0, %v705
      %707 = vmatprep.mubr.bf16.mxu0 0
      %708 = vmatmul.mubr.bf16.gmra.mrb[0].mxu0 %v457
      %v709 = vpop.f32.mrb[0].mxu0
      %v710 = vadd.f32 0.0, %v709
      %v711 = vpop.f32.mrb[0].mxu0
      %v712 = vadd.f32 0.0, %v711
      %v713 = vpop.f32.mrb[0].mxu0
      %v714 = vadd.f32 0.0, %v713
      %v715 = vpop.f32.mrb[0].mxu0
      %v716 = vadd.f32 0.0, %v715
      %717 = vmatprep.mubr.bf16.mxu0 0
      %718 = vmatmul.mubr.bf16.gmra.mrb[0].mxu0 %v458
      %v719 = vpop.f32.mrb[0].mxu0
      %v720 = vadd.f32 0.0, %v719
      %v721 = vpop.f32.mrb[0].mxu0
      %v722 = vadd.f32 0.0, %v721
      %v723 = vpop.f32.mrb[0].mxu0
      %v724 = vadd.f32 0.0, %v723
      %v725 = vpop.f32.mrb[0].mxu0
      %v726 = vadd.f32 0.0, %v725
      %727 = vmatprep.mubr.bf16.mxu0 0
      %728 = vmatmul.mubr.bf16.gmra.mrb[0].mxu0 %v459
      %v729 = vpop.f32.mrb[0].mxu0
      %v730 = vadd.f32 0.0, %v729
      %v731 = vpop.f32.mrb[0].mxu0
      %v732 = vadd.f32 0.0, %v731
      %v733 = vpop.f32.mrb[0].mxu0
      %v734 = vadd.f32 0.0, %v733
      %v735 = vpop.f32.mrb[0].mxu0
      %v736 = vadd.f32 0.0, %v735
      %737 = vmatprep.mubr.bf16.mxu0 0
      %738 = vmatmul.mubr.bf16.gmra.mrb[0].mxu0 %v460
      %v739 = vpop.f32.mrb[0].mxu0
      %v740 = vadd.f32 0.0, %v739
      %v741 = vpop.f32.mrb[0].mxu0
      %v742 = vadd.f32 0.0, %v741
      %v743 = vpop.f32.mrb[0].mxu0
      %v744 = vadd.f32 0.0, %v743
      %v745 = vpop.f32.mrb[0].mxu0
      %v746 = vadd.f32 0.0, %v745
      %747 = vmatprep.mubr.bf16.mxu0 0
      %748 = vmatmul.mubr.bf16.gmra.mrb[0].mxu0 %v461
      %v749 = vpop.f32.mrb[0].mxu0
      %v750 = vadd.f32 0.0, %v749
      %v751 = vpop.f32.mrb[0].mxu0
      %v752 = vadd.f32 0.0, %v751
      %v753 = vpop.f32.mrb[0].mxu0
      %v754 = vadd.f32 0.0, %v753
      %v755 = vpop.f32.mrb[0].mxu0
      %v756 = vadd.f32 0.0, %v755
      %757 = vmatprep.mubr.bf16.mxu0 0
      %758 = vmatmul.mubr.bf16.gmra.mrb[0].mxu0 %v462
      %v759 = vpop.f32.mrb[0].mxu0
      %v760 = vadd.f32 0.0, %v759
      %v761 = vpop.f32.mrb[0].mxu0
      %v762 = vadd.f32 0.0, %v761
      %v763 = vpop.f32.mrb[0].mxu0
      %v764 = vadd.f32 0.0, %v763
      %v765 = vpop.f32.mrb[0].mxu0
      %v766 = vadd.f32 0.0, %v765
      %767 = vdwg.mxu0
      %768 = vmatprep.subr.bf16.mxu0 %v594
      %769 = vmatpush1.bf16.msra.mxu0 %v593
      %770 = vmatprep.subr.bf16.mxu0 %v598
      %771 = vmatpush1.bf16.msra.mxu0 %v597
      %772 = vmatprep.subr.bf16.mxu0 %v602
      %773 = vmatpush1.bf16.msra.mxu0 %v601
      %774 = vmatprep.subr.bf16.mxu0 %v606
      %775 = vmatpush1.bf16.msra.mxu0 %v605
      %776 = vmatprep.subr.bf16.mxu0 %v610
      %777 = vmatpush1.bf16.msra.mxu0 %v609
      %778 = vmatprep.subr.bf16.mxu0 %v614
      %779 = vmatpush1.bf16.msra.mxu0 %v613
      %780 = vmatprep.subr.bf16.mxu0 %v618
      %781 = vmatpush1.bf16.msra.mxu0 %v617
      %782 = vmatprep.subr.bf16.mxu0 %v622
      %783 = vmatpush1.bf16.msra.mxu0 %v621
      %784 = vmatprep.subr.bf16.mxu0 0
      %785 = vmatpush1.bf16.msra.mxu0 0
      %786 = vmatprep.subr.bf16.mxu0 0
      %787 = vmatpush1.bf16.msra.mxu0 0
      %788 = vmatprep.subr.bf16.mxu0 0
      %789 = vmatpush1.bf16.msra.mxu0 0
      %790 = vmatprep.subr.bf16.mxu0 0
      %791 = vmatpush1.bf16.msra.mxu0 0
      %792 = vmatprep.subr.bf16.mxu0 0
      %793 = vmatpush1.bf16.msra.mxu0 0
      %794 = vmatprep.subr.bf16.mxu0 0
      %795 = vmatpush1.bf16.msra.mxu0 0
      %796 = vmatprep.subr.bf16.mxu0 0
      %797 = vmatpush1.bf16.msra.mxu0 0
      %798 = vmatprep.subr.bf16.mxu0 0
      %799 = vmatpush1.bf16.msra.mxu0 0
      %800 = vmatprep.mubr.bf16.mxu0 0
      %801 = vmatmul.mubr.bf16.gmra.mrb[0].mxu0 %v455
      %v802 = vpop.f32.mrb[0].mxu0
      %v803 = vadd.f32 0.0, %v802
      %v804 = vpop.f32.mrb[0].mxu0
      %v805 = vadd.f32 0.0, %v804
      %v806 = vpop.f32.mrb[0].mxu0
      %v807 = vadd.f32 0.0, %v806
      %v808 = vpop.f32.mrb[0].mxu0
      %v809 = vadd.f32 0.0, %v808
      %810 = vmatprep.mubr.bf16.mxu0 0
      %811 = vmatmul.mubr.bf16.gmra.mrb[0].mxu0 %v456
      %v812 = vpop.f32.mrb[0].mxu0
      %v813 = vadd.f32 0.0, %v812
      %v814 = vpop.f32.mrb[0].mxu0
      %v815 = vadd.f32 0.0, %v814
      %v816 = vpop.f32.mrb[0].mxu0
      %v817 = vadd.f32 0.0, %v816
      %v818 = vpop.f32.mrb[0].mxu0
      %v819 = vadd.f32 0.0, %v818
      %820 = vmatprep.mubr.bf16.mxu0 0
      %821 = vmatmul.mubr.bf16.gmra.mrb[0].mxu0 %v457
      %v822 = vpop.f32.mrb[0].mxu0
      %v823 = vadd.f32 0.0, %v822
      %v824 = vpop.f32.mrb[0].mxu0
      %v825 = vadd.f32 0.0, %v824
      %v826 = vpop.f32.mrb[0].mxu0
      %v827 = vadd.f32 0.0, %v826
      %v828 = vpop.f32.mrb[0].mxu0
      %v829 = vadd.f32 0.0, %v828
      %830 = vmatprep.mubr.bf16.mxu0 0
      %831 = vmatmul.mubr.bf16.gmra.mrb[0].mxu0 %v458
      %v832 = vpop.f32.mrb[0].mxu0
      %v833 = vadd.f32 0.0, %v832
      %v834 = vpop.f32.mrb[0].mxu0
      %v835 = vadd.f32 0.0, %v834
      %v836 = vpop.f32.mrb[0].mxu0
      %v837 = vadd.f32 0.0, %v836
      %v838 = vpop.f32.mrb[0].mxu0
      %v839 = vadd.f32 0.0, %v838
      %840 = vmatprep.mubr.bf16.mxu0 0
      %841 = vmatmul.mubr.bf16.gmra.mrb[0].mxu0 %v459
      %v842 = vpop.f32.mrb[0].mxu0
      %v843 = vadd.f32 0.0, %v842
      %v844 = vpop.f32.mrb[0].mxu0
      %v845 = vadd.f32 0.0, %v844
      %v846 = vpop.f32.mrb[0].mxu0
      %v847 = vadd.f32 0.0, %v846
      %v848 = vpop.f32.mrb[0].mxu0
      %v849 = vadd.f32 0.0, %v848
      %850 = vmatprep.mubr.bf16.mxu0 0
      %851 = vmatmul.mubr.bf16.gmra.mrb[0].mxu0 %v460
      %v852 = vpop.f32.mrb[0].mxu0
      %v853 = vadd.f32 0.0, %v852
      %v854 = vpop.f32.mrb[0].mxu0
      %v855 = vadd.f32 0.0, %v854
      %v856 = vpop.f32.mrb[0].mxu0
      %v857 = vadd.f32 0.0, %v856
      %v858 = vpop.f32.mrb[0].mxu0
      %v859 = vadd.f32 0.0, %v858
      %860 = vmatprep.mubr.bf16.mxu0 0
      %861 = vmatmul.mubr.bf16.gmra.mrb[0].mxu0 %v461
      %v862 = vpop.f32.mrb[0].mxu0
      %v863 = vadd.f32 0.0, %v862
      %v864 = vpop.f32.mrb[0].mxu0
      %v865 = vadd.f32 0.0, %v864
      %v866 = vpop.f32.mrb[0].mxu0
      %v867 = vadd.f32 0.0, %v866
      %v868 = vpop.f32.mrb[0].mxu0
      %v869 = vadd.f32 0.0, %v868
      %870 = vmatprep.mubr.bf16.mxu0 0
      %871 = vmatmul.mubr.bf16.gmra.mrb[0].mxu0 %v462
      %v872 = vpop.f32.mrb[0].mxu0
      %v873 = vadd.f32 0.0, %v872
      %v874 = vpop.f32.mrb[0].mxu0
      %v875 = vadd.f32 0.0, %v874
      %v876 = vpop.f32.mrb[0].mxu0
      %v877 = vadd.f32 0.0, %v876
      %v878 = vpop.f32.mrb[0].mxu0
      %v879 = vadd.f32 0.0, %v878
      %880 = vdwg.mxu0
      %v881 = vld [vmem:[%s343] sm:$0xf]
      %v882 = vld [vmem:[%s343 + $0x4] sm:$0xf]
      %v883 = vld [vmem:[%s343 + $0x8] sm:$0xf]
      %v884 = vld [vmem:[%s343 + $0xc] sm:$0xf]
      %v885 = vld [vmem:[%s343 + $0x10] sm:$0xf]
      %v886 = vld [vmem:[%s343 + $0x14] sm:$0xf]
      %v887 = vld [vmem:[%s343 + $0x18] sm:$0xf]
      %v888 = vld [vmem:[%s343 + $0x1c] sm:$0xf]
      %v889 = vld [vmem:[%s343 + $0x20] sm:$0xf]
      %v890 = vld [vmem:[%s343 + $0x24] sm:$0xf]
      %v891 = vld [vmem:[%s343 + $0x28] sm:$0xf]
      %v892 = vld [vmem:[%s343 + $0x2c] sm:$0xf]
      %v893 = vld [vmem:[%s343 + $0x30] sm:$0xf]
      %v894 = vld [vmem:[%s343 + $0x34] sm:$0xf]
      %v895 = vld [vmem:[%s343 + $0x38] sm:$0xf]
      %v896 = vld [vmem:[%s343 + $0x3c] sm:$0xf]
      %v897 = vpack.c.bf16 %v694, %v690
      %v898 = vpack.c.bf16 %v696, %v692
      %v899 = vpack.c.bf16 %v704, %v700
      %v900 = vpack.c.bf16 %v706, %v702
      %v901 = vpack.c.bf16 %v714, %v710
      %v902 = vpack.c.bf16 %v716, %v712
      %v903 = vpack.c.bf16 %v724, %v720
      %v904 = vpack.c.bf16 %v726, %v722
      %v905 = vpack.c.bf16 %v734, %v730
      %v906 = vpack.c.bf16 %v736, %v732
      %v907 = vpack.c.bf16 %v744, %v740
      %v908 = vpack.c.bf16 %v746, %v742
      %v909 = vpack.c.bf16 %v754, %v750
      %v910 = vpack.c.bf16 %v756, %v752
      %v911 = vpack.c.bf16 %v764, %v760
      %v912 = vpack.c.bf16 %v766, %v762
      %v915 = vunpack.c.l.b16 %v881
      %v916 = vunpack.c.l.b16 %v882
      %v917 = vpack.c.b16 %v916, %v915
      %vm918 = vcmask 130048
      %v920 = vsel %vm918, %v917, 0
      %922 = vmatprep.subr.bf16.mxu0 %v898
      %923 = vmatpush1.bf16.msra.mxu0 %v897
      %924 = vmatprep.subr.bf16.mxu0 0
      %925 = vmatpush1.bf16.msra.mxu0 0
      %926 = vmatprep.subr.bf16.mxu0 0
      %927 = vmatpush1.bf16.msra.mxu0 0
      %928 = vmatprep.subr.bf16.mxu0 0
      %929 = vmatpush1.bf16.msra.mxu0 0
      %930 = vmatprep.subr.bf16.mxu0 0
      %931 = vmatpush1.bf16.msra.mxu0 0
      %932 = vmatprep.subr.bf16.mxu0 0
      %933 = vmatpush1.bf16.msra.mxu0 0
      %934 = vmatprep.subr.bf16.mxu0 0
      %935 = vmatpush1.bf16.msra.mxu0 0
      %936 = vmatprep.subr.bf16.mxu0 0
      %937 = vmatpush1.bf16.msra.mxu0 0
      %938 = vmatprep.subr.bf16.mxu0 0
      %939 = vmatpush1.bf16.msra.mxu0 0
      %940 = vmatprep.subr.bf16.mxu0 0
      %941 = vmatpush1.bf16.msra.mxu0 0
      %942 = vmatprep.subr.bf16.mxu0 0
      %943 = vmatpush1.bf16.msra.mxu0 0
      %944 = vmatprep.subr.bf16.mxu0 0
      %945 = vmatpush1.bf16.msra.mxu0 0
      %946 = vmatprep.subr.bf16.mxu0 0
      %947 = vmatpush1.bf16.msra.mxu0 0
      %948 = vmatprep.subr.bf16.mxu0 0
      %949 = vmatpush1.bf16.msra.mxu0 0
      %950 = vmatprep.subr.bf16.mxu0 0
      %951 = vmatpush1.bf16.msra.mxu0 0
      %952 = vmatprep.subr.bf16.mxu0 0
      %953 = vmatpush1.bf16.msra.mxu0 0
      %954 = vmatprep.mubr.bf16.mxu0 0
      %955 = vmatmul.mubr.bf16.gmra.mrb[0].mxu0 %v920
      %v956 = vpop.f32.mrb[0].mxu0
      %v957 = vadd.f32 %v803, %v956
      %v958 = vpop.f32.mrb[0].mxu0
      %v959 = vadd.f32 %v805, %v958
      %v960 = vpop.f32.mrb[0].mxu0
      %v961 = vadd.f32 %v807, %v960
      %v962 = vpop.f32.mrb[0].mxu0
      %v963 = vadd.f32 %v809, %v962
      %964 = vdwg.mxu0
      %v967 = vunpack.c.l.b16 %v883
      %v968 = vunpack.c.l.b16 %v884
      %v969 = vpack.c.b16 %v968, %v967
      %v971 = vsel %vm918, %v969, 0
      %973 = vmatprep.subr.bf16.mxu0 %v900
      %974 = vmatpush1.bf16.msra.mxu0 %v899
      %975 = vmatprep.subr.bf16.mxu0 0
      %976 = vmatpush1.bf16.msra.mxu0 0
      %977 = vmatprep.subr.bf16.mxu0 0
      %978 = vmatpush1.bf16.msra.mxu0 0
      %979 = vmatprep.subr.bf16.mxu0 0
      %980 = vmatpush1.bf16.msra.mxu0 0
      %981 = vmatprep.subr.bf16.mxu0 0
      %982 = vmatpush1.bf16.msra.mxu0 0
      %983 = vmatprep.subr.bf16.mxu0 0
      %984 = vmatpush1.bf16.msra.mxu0 0
      %985 = vmatprep.subr.bf16.mxu0 0
      %986 = vmatpush1.bf16.msra.mxu0 0
      %987 = vmatprep.subr.bf16.mxu0 0
      %988 = vmatpush1.bf16.msra.mxu0 0
      %989 = vmatprep.subr.bf16.mxu0 0
      %990 = vmatpush1.bf16.msra.mxu0 0
      %991 = vmatprep.subr.bf16.mxu0 0
      %992 = vmatpush1.bf16.msra.mxu0 0
      %993 = vmatprep.subr.bf16.mxu0 0
      %994 = vmatpush1.bf16.msra.mxu0 0
      %995 = vmatprep.subr.bf16.mxu0 0
      %996 = vmatpush1.bf16.msra.mxu0 0
      %997 = vmatprep.subr.bf16.mxu0 0
      %998 = vmatpush1.bf16.msra.mxu0 0
      %999 = vmatprep.subr.bf16.mxu0 0
      %1000 = vmatpush1.bf16.msra.mxu0 0
      %1001 = vmatprep.subr.bf16.mxu0 0
      %1002 = vmatpush1.bf16.msra.mxu0 0
      %1003 = vmatprep.subr.bf16.mxu0 0
      %1004 = vmatpush1.bf16.msra.mxu0 0
      %1005 = vmatprep.mubr.bf16.mxu0 0
      %1006 = vmatmul.mubr.bf16.gmra.mrb[0].mxu0 %v971
      %v1007 = vpop.f32.mrb[0].mxu0
      %v1008 = vadd.f32 %v813, %v1007
      %v1009 = vpop.f32.mrb[0].mxu0
      %v1010 = vadd.f32 %v815, %v1009
      %v1011 = vpop.f32.mrb[0].mxu0
      %v1012 = vadd.f32 %v817, %v1011
      %v1013 = vpop.f32.mrb[0].mxu0
      %v1014 = vadd.f32 %v819, %v1013
      %1015 = vdwg.mxu0
      %v1018 = vunpack.c.l.b16 %v885
      %v1019 = vunpack.c.l.b16 %v886
      %v1020 = vpack.c.b16 %v1019, %v1018
      %v1022 = vsel %vm918, %v1020, 0
      %1024 = vmatprep.subr.bf16.mxu0 %v902
      %1025 = vmatpush1.bf16.msra.mxu0 %v901
      %1026 = vmatprep.subr.bf16.mxu0 0
      %1027 = vmatpush1.bf16.msra.mxu0 0
      %1028 = vmatprep.subr.bf16.mxu0 0
      %1029 = vmatpush1.bf16.msra.mxu0 0
      %1030 = vmatprep.subr.bf16.mxu0 0
      %1031 = vmatpush1.bf16.msra.mxu0 0
      %1032 = vmatprep.subr.bf16.mxu0 0
      %1033 = vmatpush1.bf16.msra.mxu0 0
      %1034 = vmatprep.subr.bf16.mxu0 0
      %1035 = vmatpush1.bf16.msra.mxu0 0
      %1036 = vmatprep.subr.bf16.mxu0 0
      %1037 = vmatpush1.bf16.msra.mxu0 0
      %1038 = vmatprep.subr.bf16.mxu0 0
      %1039 = vmatpush1.bf16.msra.mxu0 0
      %1040 = vmatprep.subr.bf16.mxu0 0
      %1041 = vmatpush1.bf16.msra.mxu0 0
      %1042 = vmatprep.subr.bf16.mxu0 0
      %1043 = vmatpush1.bf16.msra.mxu0 0
      %1044 = vmatprep.subr.bf16.mxu0 0
      %1045 = vmatpush1.bf16.msra.mxu0 0
      %1046 = vmatprep.subr.bf16.mxu0 0
      %1047 = vmatpush1.bf16.msra.mxu0 0
      %1048 = vmatprep.subr.bf16.mxu0 0
      %1049 = vmatpush1.bf16.msra.mxu0 0
      %1050 = vmatprep.subr.bf16.mxu0 0
      %1051 = vmatpush1.bf16.msra.mxu0 0
      %1052 = vmatprep.subr.bf16.mxu0 0
      %1053 = vmatpush1.bf16.msra.mxu0 0
      %1054 = vmatprep.subr.bf16.mxu0 0
      %1055 = vmatpush1.bf16.msra.mxu0 0
      %1056 = vmatprep.mubr.bf16.mxu0 0
      %1057 = vmatmul.mubr.bf16.gmra.mrb[0].mxu0 %v1022
      %v1058 = vpop.f32.mrb[0].mxu0
      %v1059 = vadd.f32 %v823, %v1058
      %v1060 = vpop.f32.mrb[0].mxu0
      %v1061 = vadd.f32 %v825, %v1060
      %v1062 = vpop.f32.mrb[0].mxu0
      %v1063 = vadd.f32 %v827, %v1062
      %v1064 = vpop.f32.mrb[0].mxu0
      %v1065 = vadd.f32 %v829, %v1064
      %1066 = vdwg.mxu0
      %v1069 = vunpack.c.l.b16 %v887
      %v1070 = vunpack.c.l.b16 %v888
      %v1071 = vpack.c.b16 %v1070, %v1069
      %v1073 = vsel %vm918, %v1071, 0
      %1075 = vmatprep.subr.bf16.mxu0 %v904
      %1076 = vmatpush1.bf16.msra.mxu0 %v903
      %1077 = vmatprep.subr.bf16.mxu0 0
      %1078 = vmatpush1.bf16.msra.mxu0 0
      %1079 = vmatprep.subr.bf16.mxu0 0
      %1080 = vmatpush1.bf16.msra.mxu0 0
      %1081 = vmatprep.subr.bf16.mxu0 0
      %1082 = vmatpush1.bf16.msra.mxu0 0
      %1083 = vmatprep.subr.bf16.mxu0 0
      %1084 = vmatpush1.bf16.msra.mxu0 0
      %1085 = vmatprep.subr.bf16.mxu0 0
      %1086 = vmatpush1.bf16.msra.mxu0 0
      %1087 = vmatprep.subr.bf16.mxu0 0
      %1088 = vmatpush1.bf16.msra.mxu0 0
      %1089 = vmatprep.subr.bf16.mxu0 0
      %1090 = vmatpush1.bf16.msra.mxu0 0
      %1091 = vmatprep.subr.bf16.mxu0 0
      %1092 = vmatpush1.bf16.msra.mxu0 0
      %1093 = vmatprep.subr.bf16.mxu0 0
      %1094 = vmatpush1.bf16.msra.mxu0 0
      %1095 = vmatprep.subr.bf16.mxu0 0
      %1096 = vmatpush1.bf16.msra.mxu0 0
      %1097 = vmatprep.subr.bf16.mxu0 0
      %1098 = vmatpush1.bf16.msra.mxu0 0
      %1099 = vmatprep.subr.bf16.mxu0 0
      %1100 = vmatpush1.bf16.msra.mxu0 0
      %1101 = vmatprep.subr.bf16.mxu0 0
      %1102 = vmatpush1.bf16.msra.mxu0 0
      %1103 = vmatprep.subr.bf16.mxu0 0
      %1104 = vmatpush1.bf16.msra.mxu0 0
      %1105 = vmatprep.subr.bf16.mxu0 0
      %1106 = vmatpush1.bf16.msra.mxu0 0
      %1107 = vmatprep.mubr.bf16.mxu0 0
      %1108 = vmatmul.mubr.bf16.gmra.mrb[0].mxu0 %v1073
      %v1109 = vpop.f32.mrb[0].mxu0
      %v1110 = vadd.f32 %v833, %v1109
      %v1111 = vpop.f32.mrb[0].mxu0
      %v1112 = vadd.f32 %v835, %v1111
      %v1113 = vpop.f32.mrb[0].mxu0
      %v1114 = vadd.f32 %v837, %v1113
      %v1115 = vpop.f32.mrb[0].mxu0
      %v1116 = vadd.f32 %v839, %v1115
      %1117 = vdwg.mxu0
      %v1120 = vunpack.c.l.b16 %v889
      %v1121 = vunpack.c.l.b16 %v890
      %v1122 = vpack.c.b16 %v1121, %v1120
      %v1124 = vsel %vm918, %v1122, 0
      %1126 = vmatprep.subr.bf16.mxu0 %v906
      %1127 = vmatpush1.bf16.msra.mxu0 %v905
      %1128 = vmatprep.subr.bf16.mxu0 0
      %1129 = vmatpush1.bf16.msra.mxu0 0
      %1130 = vmatprep.subr.bf16.mxu0 0
      %1131 = vmatpush1.bf16.msra.mxu0 0
      %1132 = vmatprep.subr.bf16.mxu0 0
      %1133 = vmatpush1.bf16.msra.mxu0 0
      %1134 = vmatprep.subr.bf16.mxu0 0
      %1135 = vmatpush1.bf16.msra.mxu0 0
      %1136 = vmatprep.subr.bf16.mxu0 0
      %1137 = vmatpush1.bf16.msra.mxu0 0
      %1138 = vmatprep.subr.bf16.mxu0 0
      %1139 = vmatpush1.bf16.msra.mxu0 0
      %1140 = vmatprep.subr.bf16.mxu0 0
      %1141 = vmatpush1.bf16.msra.mxu0 0
      %1142 = vmatprep.subr.bf16.mxu0 0
      %1143 = vmatpush1.bf16.msra.mxu0 0
      %1144 = vmatprep.subr.bf16.mxu0 0
      %1145 = vmatpush1.bf16.msra.mxu0 0
      %1146 = vmatprep.subr.bf16.mxu0 0
      %1147 = vmatpush1.bf16.msra.mxu0 0
      %1148 = vmatprep.subr.bf16.mxu0 0
      %1149 = vmatpush1.bf16.msra.mxu0 0
      %1150 = vmatprep.subr.bf16.mxu0 0
      %1151 = vmatpush1.bf16.msra.mxu0 0
      %1152 = vmatprep.subr.bf16.mxu0 0
      %1153 = vmatpush1.bf16.msra.mxu0 0
      %1154 = vmatprep.subr.bf16.mxu0 0
      %1155 = vmatpush1.bf16.msra.mxu0 0
      %1156 = vmatprep.subr.bf16.mxu0 0
      %1157 = vmatpush1.bf16.msra.mxu0 0
      %1158 = vmatprep.mubr.bf16.mxu0 0
      %1159 = vmatmul.mubr.bf16.gmra.mrb[0].mxu0 %v1124
      %v1160 = vpop.f32.mrb[0].mxu0
      %v1161 = vadd.f32 %v843, %v1160
      %v1162 = vpop.f32.mrb[0].mxu0
      %v1163 = vadd.f32 %v845, %v1162
      %v1164 = vpop.f32.mrb[0].mxu0
      %v1165 = vadd.f32 %v847, %v1164
      %v1166 = vpop.f32.mrb[0].mxu0
      %v1167 = vadd.f32 %v849, %v1166
      %1168 = vdwg.mxu0
      %v1171 = vunpack.c.l.b16 %v891
      %v1172 = vunpack.c.l.b16 %v892
      %v1173 = vpack.c.b16 %v1172, %v1171
      %v1175 = vsel %vm918, %v1173, 0
      %1177 = vmatprep.subr.bf16.mxu0 %v908
      %1178 = vmatpush1.bf16.msra.mxu0 %v907
      %1179 = vmatprep.subr.bf16.mxu0 0
      %1180 = vmatpush1.bf16.msra.mxu0 0
      %1181 = vmatprep.subr.bf16.mxu0 0
      %1182 = vmatpush1.bf16.msra.mxu0 0
      %1183 = vmatprep.subr.bf16.mxu0 0
      %1184 = vmatpush1.bf16.msra.mxu0 0
      %1185 = vmatprep.subr.bf16.mxu0 0
      %1186 = vmatpush1.bf16.msra.mxu0 0
      %1187 = vmatprep.subr.bf16.mxu0 0
      %1188 = vmatpush1.bf16.msra.mxu0 0
      %1189 = vmatprep.subr.bf16.mxu0 0
      %1190 = vmatpush1.bf16.msra.mxu0 0
      %1191 = vmatprep.subr.bf16.mxu0 0
      %1192 = vmatpush1.bf16.msra.mxu0 0
      %1193 = vmatprep.subr.bf16.mxu0 0
      %1194 = vmatpush1.bf16.msra.mxu0 0
      %1195 = vmatprep.subr.bf16.mxu0 0
      %1196 = vmatpush1.bf16.msra.mxu0 0
      %1197 = vmatprep.subr.bf16.mxu0 0
      %1198 = vmatpush1.bf16.msra.mxu0 0
      %1199 = vmatprep.subr.bf16.mxu0 0
      %1200 = vmatpush1.bf16.msra.mxu0 0
      %1201 = vmatprep.subr.bf16.mxu0 0
      %1202 = vmatpush1.bf16.msra.mxu0 0
      %1203 = vmatprep.subr.bf16.mxu0 0
      %1204 = vmatpush1.bf16.msra.mxu0 0
      %1205 = vmatprep.subr.bf16.mxu0 0
      %1206 = vmatpush1.bf16.msra.mxu0 0
      %1207 = vmatprep.subr.bf16.mxu0 0
      %1208 = vmatpush1.bf16.msra.mxu0 0
      %1209 = vmatprep.mubr.bf16.mxu0 0
      %1210 = vmatmul.mubr.bf16.gmra.mrb[0].mxu0 %v1175
      %v1211 = vpop.f32.mrb[0].mxu0
      %v1212 = vadd.f32 %v853, %v1211
      %v1213 = vpop.f32.mrb[0].mxu0
      %v1214 = vadd.f32 %v855, %v1213
      %v1215 = vpop.f32.mrb[0].mxu0
      %v1216 = vadd.f32 %v857, %v1215
      %v1217 = vpop.f32.mrb[0].mxu0
      %v1218 = vadd.f32 %v859, %v1217
      %1219 = vdwg.mxu0
      %v1222 = vunpack.c.l.b16 %v893
      %v1223 = vunpack.c.l.b16 %v894
      %v1224 = vpack.c.b16 %v1223, %v1222
      %v1226 = vsel %vm918, %v1224, 0
      %1228 = vmatprep.subr.bf16.mxu0 %v910
      %1229 = vmatpush1.bf16.msra.mxu0 %v909
      %1230 = vmatprep.subr.bf16.mxu0 0
      %1231 = vmatpush1.bf16.msra.mxu0 0
      %1232 = vmatprep.subr.bf16.mxu0 0
      %1233 = vmatpush1.bf16.msra.mxu0 0
      %1234 = vmatprep.subr.bf16.mxu0 0
      %1235 = vmatpush1.bf16.msra.mxu0 0
      %1236 = vmatprep.subr.bf16.mxu0 0
      %1237 = vmatpush1.bf16.msra.mxu0 0
      %1238 = vmatprep.subr.bf16.mxu0 0
      %1239 = vmatpush1.bf16.msra.mxu0 0
      %1240 = vmatprep.subr.bf16.mxu0 0
      %1241 = vmatpush1.bf16.msra.mxu0 0
      %1242 = vmatprep.subr.bf16.mxu0 0
      %1243 = vmatpush1.bf16.msra.mxu0 0
      %1244 = vmatprep.subr.bf16.mxu0 0
      %1245 = vmatpush1.bf16.msra.mxu0 0
      %1246 = vmatprep.subr.bf16.mxu0 0
      %1247 = vmatpush1.bf16.msra.mxu0 0
      %1248 = vmatprep.subr.bf16.mxu0 0
      %1249 = vmatpush1.bf16.msra.mxu0 0
      %1250 = vmatprep.subr.bf16.mxu0 0
      %1251 = vmatpush1.bf16.msra.mxu0 0
      %1252 = vmatprep.subr.bf16.mxu0 0
      %1253 = vmatpush1.bf16.msra.mxu0 0
      %1254 = vmatprep.subr.bf16.mxu0 0
      %1255 = vmatpush1.bf16.msra.mxu0 0
      %1256 = vmatprep.subr.bf16.mxu0 0
      %1257 = vmatpush1.bf16.msra.mxu0 0
      %1258 = vmatprep.subr.bf16.mxu0 0
      %1259 = vmatpush1.bf16.msra.mxu0 0
      %1260 = vmatprep.mubr.bf16.mxu0 0
      %1261 = vmatmul.mubr.bf16.gmra.mrb[0].mxu0 %v1226
      %v1262 = vpop.f32.mrb[0].mxu0
      %v1263 = vadd.f32 %v863, %v1262
      %v1264 = vpop.f32.mrb[0].mxu0
      %v1265 = vadd.f32 %v865, %v1264
      %v1266 = vpop.f32.mrb[0].mxu0
      %v1267 = vadd.f32 %v867, %v1266
      %v1268 = vpop.f32.mrb[0].mxu0
      %v1269 = vadd.f32 %v869, %v1268
      %1270 = vdwg.mxu0
      %v1273 = vunpack.c.l.b16 %v895
      %v1274 = vunpack.c.l.b16 %v896
      %v1275 = vpack.c.b16 %v1274, %v1273
      %v1277 = vsel %vm918, %v1275, 0
      %1279 = vmatprep.subr.bf16.mxu0 %v912
      %1280 = vmatpush1.bf16.msra.mxu0 %v911
      %1281 = vmatprep.subr.bf16.mxu0 0
      %1282 = vmatpush1.bf16.msra.mxu0 0
      %1283 = vmatprep.subr.bf16.mxu0 0
      %1284 = vmatpush1.bf16.msra.mxu0 0
      %1285 = vmatprep.subr.bf16.mxu0 0
      %1286 = vmatpush1.bf16.msra.mxu0 0
      %1287 = vmatprep.subr.bf16.mxu0 0
      %1288 = vmatpush1.bf16.msra.mxu0 0
      %1289 = vmatprep.subr.bf16.mxu0 0
      %1290 = vmatpush1.bf16.msra.mxu0 0
      %1291 = vmatprep.subr.bf16.mxu0 0
      %1292 = vmatpush1.bf16.msra.mxu0 0
      %1293 = vmatprep.subr.bf16.mxu0 0
      %1294 = vmatpush1.bf16.msra.mxu0 0
      %1295 = vmatprep.subr.bf16.mxu0 0
      %1296 = vmatpush1.bf16.msra.mxu0 0
      %1297 = vmatprep.subr.bf16.mxu0 0
      %1298 = vmatpush1.bf16.msra.mxu0 0
      %1299 = vmatprep.subr.bf16.mxu0 0
      %1300 = vmatpush1.bf16.msra.mxu0 0
      %1301 = vmatprep.subr.bf16.mxu0 0
      %1302 = vmatpush1.bf16.msra.mxu0 0
      %1303 = vmatprep.subr.bf16.mxu0 0
      %1304 = vmatpush1.bf16.msra.mxu0 0
      %1305 = vmatprep.subr.bf16.mxu0 0
      %1306 = vmatpush1.bf16.msra.mxu0 0
      %1307 = vmatprep.subr.bf16.mxu0 0
      %1308 = vmatpush1.bf16.msra.mxu0 0
      %1309 = vmatprep.subr.bf16.mxu0 0
      %1310 = vmatpush1.bf16.msra.mxu0 0
      %1311 = vmatprep.mubr.bf16.mxu0 0
      %1312 = vmatmul.mubr.bf16.gmra.mrb[0].mxu0 %v1277
      %v1313 = vpop.f32.mrb[0].mxu0
      %v1314 = vadd.f32 %v873, %v1313
      %v1315 = vpop.f32.mrb[0].mxu0
      %v1316 = vadd.f32 %v875, %v1315
      %v1317 = vpop.f32.mrb[0].mxu0
      %v1318 = vadd.f32 %v877, %v1317
      %v1319 = vpop.f32.mrb[0].mxu0
      %v1320 = vadd.f32 %v879, %v1319
      %1321 = vdwg.mxu0
      %v1322 = vld [vmem:[%s5] sm:$0x3]
      %v1323 = vmul.f32 %v1322, 2.0
      %v1325 = vlaneseq
      %v1326 = vshrl.u32 %v1325, 7
      %v1327 = vsub.s32 0, %v1326
      %v1328 = vrot.slane %v1323, %v1327
      %v1329 = vlaneseq
      %v1330 = vshrl.u32 %v1329, 7
      %v1331 = vsub.s32 1, %v1330
      %v1332 = vrot.slane %v1323, %v1331
      %v1335 = vadd.f32 %v957, %v1328
      %v1336 = vadd.f32 %v959, %v1332
      %v1337 = vadd.f32 %v961, %v1328
      %v1338 = vadd.f32 %v963, %v1332
      %v1339 = vadd.f32 %v1008, %v1328
      %v1340 = vadd.f32 %v1010, %v1332
      %v1341 = vadd.f32 %v1012, %v1328
      %v1342 = vadd.f32 %v1014, %v1332
      %v1343 = vadd.f32 %v1059, %v1328
      %v1344 = vadd.f32 %v1061, %v1332
      %v1345 = vadd.f32 %v1063, %v1328
      %v1346 = vadd.f32 %v1065, %v1332
      %v1347 = vadd.f32 %v1110, %v1328
      %v1348 = vadd.f32 %v1112, %v1332
      %v1349 = vadd.f32 %v1114, %v1328
      %v1350 = vadd.f32 %v1116, %v1332
      %v1351 = vadd.f32 %v1161, %v1328
      %v1352 = vadd.f32 %v1163, %v1332
      %v1353 = vadd.f32 %v1165, %v1328
      %v1354 = vadd.f32 %v1167, %v1332
      %v1355 = vadd.f32 %v1212, %v1328
      %v1356 = vadd.f32 %v1214, %v1332
      %v1357 = vadd.f32 %v1216, %v1328
      %v1358 = vadd.f32 %v1218, %v1332
      %v1359 = vadd.f32 %v1263, %v1328
      %v1360 = vadd.f32 %v1265, %v1332
      %v1361 = vadd.f32 %v1267, %v1328
      %v1362 = vadd.f32 %v1269, %v1332
      %v1363 = vadd.f32 %v1314, %v1328
      %v1364 = vadd.f32 %v1316, %v1332
      %v1365 = vadd.f32 %v1318, %v1328
      %v1366 = vadd.f32 %v1320, %v1332
      %v1367 = vpack.c.bf16 %v1337, %v1335
      %v1368 = vpack.c.bf16 %v1338, %v1336
      %v1369 = vpack.c.bf16 %v1341, %v1339
      %v1370 = vpack.c.bf16 %v1342, %v1340
      %v1371 = vpack.c.bf16 %v1345, %v1343
      %v1372 = vpack.c.bf16 %v1346, %v1344
      %v1373 = vpack.c.bf16 %v1349, %v1347
      %v1374 = vpack.c.bf16 %v1350, %v1348
      %v1375 = vpack.c.bf16 %v1353, %v1351
      %v1376 = vpack.c.bf16 %v1354, %v1352
      %v1377 = vpack.c.bf16 %v1357, %v1355
      %v1378 = vpack.c.bf16 %v1358, %v1356
      %v1379 = vpack.c.bf16 %v1361, %v1359
      %v1380 = vpack.c.bf16 %v1362, %v1360
      %v1381 = vpack.c.bf16 %v1365, %v1363
      %v1382 = vpack.c.bf16 %v1366, %v1364
      %v1399 = vunpack.c.l.b16 %v1367
      %v1400 = vunpack.c.l.b16 %v1368
      %v1401 = vunpack.c.h.b16 %v1367
      %v1402 = vunpack.c.h.b16 %v1368
      %v1403 = vunpack.c.l.b16 %v1369
      %v1404 = vunpack.c.l.b16 %v1370
      %v1405 = vunpack.c.h.b16 %v1369
      %v1406 = vunpack.c.h.b16 %v1370
      %v1407 = vunpack.c.l.b16 %v1371
      %v1408 = vunpack.c.l.b16 %v1372
      %v1409 = vunpack.c.h.b16 %v1371
      %v1410 = vunpack.c.h.b16 %v1372
      %v1411 = vunpack.c.l.b16 %v1373
      %v1412 = vunpack.c.l.b16 %v1374
      %v1413 = vunpack.c.h.b16 %v1373
      %v1414 = vunpack.c.h.b16 %v1374
      %v1415 = vunpack.c.l.b16 %v1375
      %v1416 = vunpack.c.l.b16 %v1376
      %v1417 = vunpack.c.h.b16 %v1375
      %v1418 = vunpack.c.h.b16 %v1376
      %v1419 = vunpack.c.l.b16 %v1377
      %v1420 = vunpack.c.l.b16 %v1378
      %v1421 = vunpack.c.h.b16 %v1377
      %v1422 = vunpack.c.h.b16 %v1378
      %v1423 = vunpack.c.l.b16 %v1379
      %v1424 = vunpack.c.l.b16 %v1380
      %v1425 = vunpack.c.h.b16 %v1379
      %v1426 = vunpack.c.h.b16 %v1380
      %v1427 = vunpack.c.l.b16 %v1381
      %v1428 = vunpack.c.l.b16 %v1382
      %v1429 = vunpack.c.h.b16 %v1381
      %v1430 = vunpack.c.h.b16 %v1382
      %v1431 = vpack.c.b16 %v1400, %v1399
      %v1432 = vpack.c.b16 %v1402, %v1401
      %v1433 = vpack.c.b16 %v1404, %v1403
      %v1434 = vpack.c.b16 %v1406, %v1405
      %v1435 = vpack.c.b16 %v1408, %v1407
      %v1436 = vpack.c.b16 %v1410, %v1409
      %v1437 = vpack.c.b16 %v1412, %v1411
      %v1438 = vpack.c.b16 %v1414, %v1413
      %v1439 = vpack.c.b16 %v1416, %v1415
      %v1440 = vpack.c.b16 %v1418, %v1417
      %v1441 = vpack.c.b16 %v1420, %v1419
      %v1442 = vpack.c.b16 %v1422, %v1421
      %v1443 = vpack.c.b16 %v1424, %v1423
      %v1444 = vpack.c.b16 %v1426, %v1425
      %v1445 = vpack.c.b16 %v1428, %v1427
      %v1446 = vpack.c.b16 %v1430, %v1429
      %1463 = vst [vmem:[%s350] sm:$0xff] %v1431
      %1464 = vst [vmem:[%s350 + $0x8] sm:$0xff] %v1432
      %1465 = vst [vmem:[%s350 + $0x10] sm:$0xff] %v1433
      %1466 = vst [vmem:[%s350 + $0x18] sm:$0xff] %v1434
      %1467 = vst [vmem:[%s350 + $0x20] sm:$0xff] %v1435
      %1468 = vst [vmem:[%s350 + $0x28] sm:$0xff] %v1436
      %1469 = vst [vmem:[%s350 + $0x30] sm:$0xff] %v1437
      %1470 = vst [vmem:[%s350 + $0x38] sm:$0xff] %v1438
      %1471 = vst [vmem:[%s350 + $0x40] sm:$0xff] %v1439
      %1472 = vst [vmem:[%s350 + $0x48] sm:$0xff] %v1440
      %1473 = vst [vmem:[%s350 + $0x50] sm:$0xff] %v1441
      %1474 = vst [vmem:[%s350 + $0x58] sm:$0xff] %v1442
      %1475 = vst [vmem:[%s350 + $0x60] sm:$0xff] %v1443
      %1476 = vst [vmem:[%s350 + $0x68] sm:$0xff] %v1444
      %1477 = vst [vmem:[%s350 + $0x70] sm:$0xff] %v1445
      %1478 = vst [vmem:[%s350 + $0x78] sm:$0xff] %v1446
      %s1479 = smul.u32 %s20, 8
      %v1480 = vlaneseq
      %v1481 = vshrl.u32 %v1480, 7
      %v1482 = vadd.s32 %v1481, 8
      %v1483 = vadd.s32 %v1481, 16
      %v1484 = vadd.s32 %v1481, 24
      %v1485 = vadd.s32 %v1481, 32
      %v1486 = vadd.s32 %v1481, 40
      %v1487 = vadd.s32 %v1481, 48
      %v1488 = vadd.s32 %v1481, 56
      %v1489 = vadd.s32 %v1481, 64
      %v1490 = vadd.s32 %v1481, 72
      %v1491 = vadd.s32 %v1481, 80
      %v1492 = vadd.s32 %v1481, 88
      %v1493 = vadd.s32 %v1481, 96
      %v1494 = vadd.s32 %v1481, 104
      %v1495 = vadd.s32 %v1481, 112
      %v1496 = vadd.s32 %v1481, 120
      %s1497 = ssub.s32 12, %s1479
      %s1498 = smul.u32 %s1497, 16
      %v1499 = vstv %s1498
      %vm1500 = vcmp.lt.s32.totalorder %v1481, %v1499
      %vm1501 = vcmp.lt.s32.totalorder %v1482, %v1499
      %vm1502 = vcmp.lt.s32.totalorder %v1483, %v1499
      %vm1503 = vcmp.lt.s32.totalorder %v1484, %v1499
      %vm1504 = vcmp.lt.s32.totalorder %v1485, %v1499
      %vm1505 = vcmp.lt.s32.totalorder %v1486, %v1499
      %vm1506 = vcmp.lt.s32.totalorder %v1487, %v1499
      %vm1507 = vcmp.lt.s32.totalorder %v1488, %v1499
      %vm1508 = vcmp.lt.s32.totalorder %v1489, %v1499
      %vm1509 = vcmp.lt.s32.totalorder %v1490, %v1499
      %vm1510 = vcmp.lt.s32.totalorder %v1491, %v1499
      %vm1511 = vcmp.lt.s32.totalorder %v1492, %v1499
      %vm1512 = vcmp.lt.s32.totalorder %v1493, %v1499
      %vm1513 = vcmp.lt.s32.totalorder %v1494, %v1499
      %vm1514 = vcmp.lt.s32.totalorder %v1495, %v1499
      %vm1515 = vcmp.lt.s32.totalorder %v1496, %v1499
      %v1516 = vsel %vm1500, 1, 0
      %v1517 = vsel %vm1501, 1, 0
      %v1518 = vsel %vm1502, 1, 0
      %v1519 = vsel %vm1503, 1, 0
      %v1520 = vsel %vm1504, 1, 0
      %v1521 = vsel %vm1505, 1, 0
      %v1522 = vsel %vm1506, 1, 0
      %v1523 = vsel %vm1507, 1, 0
      %v1524 = vsel %vm1508, 1, 0
      %v1525 = vsel %vm1509, 1, 0
      %v1526 = vsel %vm1510, 1, 0
      %v1527 = vsel %vm1511, 1, 0
      %v1528 = vsel %vm1512, 1, 0
      %v1529 = vsel %vm1513, 1, 0
      %v1530 = vsel %vm1514, 1, 0
      %v1531 = vsel %vm1515, 1, 0
      %v1532 = vcvt.s32.f32 %v1516
      %v1533 = vcvt.s32.f32 %v1517
      %v1534 = vcvt.s32.f32 %v1518
      %v1535 = vcvt.s32.f32 %v1519
      %v1536 = vcvt.s32.f32 %v1520
      %v1537 = vcvt.s32.f32 %v1521
      %v1538 = vcvt.s32.f32 %v1522
      %v1539 = vcvt.s32.f32 %v1523
      %v1540 = vcvt.s32.f32 %v1524
      %v1541 = vcvt.s32.f32 %v1525
      %v1542 = vcvt.s32.f32 %v1526
      %v1543 = vcvt.s32.f32 %v1527
      %v1544 = vcvt.s32.f32 %v1528
      %v1545 = vcvt.s32.f32 %v1529
      %v1546 = vcvt.s32.f32 %v1530
      %v1547 = vcvt.s32.f32 %v1531
      %v1548 = vmul.f32 %v1335, %v1532
      %v1549 = vmul.f32 %v1336, %v1532
      %v1550 = vmul.f32 %v1337, %v1533
      %v1551 = vmul.f32 %v1338, %v1533
      %v1552 = vmul.f32 %v1339, %v1534
      %v1553 = vmul.f32 %v1340, %v1534
      %v1554 = vmul.f32 %v1341, %v1535
      %v1555 = vmul.f32 %v1342, %v1535
      %v1556 = vmul.f32 %v1343, %v1536
      %v1557 = vmul.f32 %v1344, %v1536
      %v1558 = vmul.f32 %v1345, %v1537
      %v1559 = vmul.f32 %v1346, %v1537
      %v1560 = vmul.f32 %v1347, %v1538
      %v1561 = vmul.f32 %v1348, %v1538
      %v1562 = vmul.f32 %v1349, %v1539
      %v1563 = vmul.f32 %v1350, %v1539
      %v1564 = vmul.f32 %v1351, %v1540
      %v1565 = vmul.f32 %v1352, %v1540
      %v1566 = vmul.f32 %v1353, %v1541
      %v1567 = vmul.f32 %v1354, %v1541
      %v1568 = vmul.f32 %v1355, %v1542
      %v1569 = vmul.f32 %v1356, %v1542
      %v1570 = vmul.f32 %v1357, %v1543
      %v1571 = vmul.f32 %v1358, %v1543
      %v1572 = vmul.f32 %v1359, %v1544
      %v1573 = vmul.f32 %v1360, %v1544
      %v1574 = vmul.f32 %v1361, %v1545
      %v1575 = vmul.f32 %v1362, %v1545
      %v1576 = vmul.f32 %v1363, %v1546
      %v1577 = vmul.f32 %v1364, %v1546
      %v1578 = vmul.f32 %v1365, %v1547
      %v1579 = vmul.f32 %v1366, %v1547
      %v1580 = vadd.f32 %v1548, %v1550
      %v1581 = vadd.f32 %v1580, %v1552
      %v1582 = vadd.f32 %v1581, %v1554
      %v1583 = vadd.f32 %v1582, %v1556
      %v1584 = vadd.f32 %v1583, %v1558
      %v1585 = vadd.f32 %v1584, %v1560
      %v1586 = vadd.f32 %v1585, %v1562
      %v1587 = vadd.f32 %v1586, %v1564
      %v1588 = vadd.f32 %v1587, %v1566
      %v1589 = vadd.f32 %v1588, %v1568
      %v1590 = vadd.f32 %v1589, %v1570
      %v1591 = vadd.f32 %v1590, %v1572
      %v1592 = vadd.f32 %v1591, %v1574
      %v1593 = vadd.f32 %v1592, %v1576
      %v1594 = vadd.f32 %v1593, %v1578
      %v1595 = vrot.slane %v1594, 4
      %v1596 = vadd.f32 %v1594, %v1595
      %v1597 = vrot.slane %v1596, 2
      %v1598 = vadd.f32 %v1596, %v1597
      %v1599 = vrot.slane %v1598, 1
      %v1600 = vadd.f32 %v1598, %v1599
      %v1601 = vadd.f32 %v1549, %v1551
      %v1602 = vadd.f32 %v1601, %v1553
      %v1603 = vadd.f32 %v1602, %v1555
      %v1604 = vadd.f32 %v1603, %v1557
      %v1605 = vadd.f32 %v1604, %v1559
      %v1606 = vadd.f32 %v1605, %v1561
      %v1607 = vadd.f32 %v1606, %v1563
      %v1608 = vadd.f32 %v1607, %v1565
      %v1609 = vadd.f32 %v1608, %v1567
      %v1610 = vadd.f32 %v1609, %v1569
      %v1611 = vadd.f32 %v1610, %v1571
      %v1612 = vadd.f32 %v1611, %v1573
      %v1613 = vadd.f32 %v1612, %v1575
      %v1614 = vadd.f32 %v1613, %v1577
      %v1615 = vadd.f32 %v1614, %v1579
      %v1616 = vrot.slane %v1615, 4
      %v1617 = vadd.f32 %v1615, %v1616
      %v1618 = vrot.slane %v1617, 2
      %v1619 = vadd.f32 %v1617, %v1618
      %v1620 = vrot.slane %v1619, 1
      %v1621 = vadd.f32 %v1619, %v1620
      %v1624 = vcombine.low %v1600, %v1621
      %v1626 = vunpack.c.l.s4 1966171168
      %v1627 = vunpack.c.0.s8 %v1626
      %v1628 = vlaneseq
      %v1629 = vshrl.u32 %v1628, 7
      %v1630 = vsub.s32 %v1627, %v1629
      %v1631 = vrot.slane %v1624, %v1630
      %v1633 = vunpack.c.l.s4 1966171168
      %v1634 = vunpack.c.0.s8 %v1633
      %v1635 = vlaneseq
      %v1636 = vshrl.u32 %v1635, 7
      %v1637 = vsub.s32 %v1634, %v1636
      %v1638 = vrot.slane %v1631, %v1637
      %v1640 = vlaneseq
      %vm1641 = vcmp.ge.s32.totalorder %v1640, 0
      %vm1642 = vcmp.lt.s32.totalorder %v1640, 256
      %vm1643 = vmand %vm1641, %vm1642
      %1644 = vst.msk [vmem:[%s355] sm:$0x3] %vm1643, %v1638
      %v1645 = vmul.f32 %v1548, %v1335
      %v1646 = vmul.f32 %v1549, %v1336
      %v1647 = vmul.f32 %v1550, %v1337
      %v1648 = vmul.f32 %v1551, %v1338
      %v1649 = vmul.f32 %v1552, %v1339
      %v1650 = vmul.f32 %v1553, %v1340
      %v1651 = vmul.f32 %v1554, %v1341
      %v1652 = vmul.f32 %v1555, %v1342
      %v1653 = vmul.f32 %v1556, %v1343
      %v1654 = vmul.f32 %v1557, %v1344
      %v1655 = vmul.f32 %v1558, %v1345
      %v1656 = vmul.f32 %v1559, %v1346
      %v1657 = vmul.f32 %v1560, %v1347
      %v1658 = vmul.f32 %v1561, %v1348
      %v1659 = vmul.f32 %v1562, %v1349
      %v1660 = vmul.f32 %v1563, %v1350
      %v1661 = vmul.f32 %v1564, %v1351
      %v1662 = vmul.f32 %v1565, %v1352
      %v1663 = vmul.f32 %v1566, %v1353
      %v1664 = vmul.f32 %v1567, %v1354
      %v1665 = vmul.f32 %v1568, %v1355
      %v1666 = vmul.f32 %v1569, %v1356
      %v1667 = vmul.f32 %v1570, %v1357
      %v1668 = vmul.f32 %v1571, %v1358
      %v1669 = vmul.f32 %v1572, %v1359
      %v1670 = vmul.f32 %v1573, %v1360
      %v1671 = vmul.f32 %v1574, %v1361
      %v1672 = vmul.f32 %v1575, %v1362
      %v1673 = vmul.f32 %v1576, %v1363
      %v1674 = vmul.f32 %v1577, %v1364
      %v1675 = vmul.f32 %v1578, %v1365
      %v1676 = vmul.f32 %v1579, %v1366
      %v1677 = vadd.f32 %v1645, %v1647
      %v1678 = vadd.f32 %v1677, %v1649
      %v1679 = vadd.f32 %v1678, %v1651
      %v1680 = vadd.f32 %v1679, %v1653
      %v1681 = vadd.f32 %v1680, %v1655
      %v1682 = vadd.f32 %v1681, %v1657
      %v1683 = vadd.f32 %v1682, %v1659
      %v1684 = vadd.f32 %v1683, %v1661
      %v1685 = vadd.f32 %v1684, %v1663
      %v1686 = vadd.f32 %v1685, %v1665
      %v1687 = vadd.f32 %v1686, %v1667
      %v1688 = vadd.f32 %v1687, %v1669
      %v1689 = vadd.f32 %v1688, %v1671
      %v1690 = vadd.f32 %v1689, %v1673
      %v1691 = vadd.f32 %v1690, %v1675
      %v1692 = vrot.slane %v1691, 4
      %v1693 = vadd.f32 %v1691, %v1692
      %v1694 = vrot.slane %v1693, 2
      %v1695 = vadd.f32 %v1693, %v1694
      %v1696 = vrot.slane %v1695, 1
      %v1697 = vadd.f32 %v1695, %v1696
      %v1698 = vadd.f32 %v1646, %v1648
      %v1699 = vadd.f32 %v1698, %v1650
      %v1700 = vadd.f32 %v1699, %v1652
      %v1701 = vadd.f32 %v1700, %v1654
      %v1702 = vadd.f32 %v1701, %v1656
      %v1703 = vadd.f32 %v1702, %v1658
      %v1704 = vadd.f32 %v1703, %v1660
      %v1705 = vadd.f32 %v1704, %v1662
      %v1706 = vadd.f32 %v1705, %v1664
      %v1707 = vadd.f32 %v1706, %v1666
      %v1708 = vadd.f32 %v1707, %v1668
      %v1709 = vadd.f32 %v1708, %v1670
      %v1710 = vadd.f32 %v1709, %v1672
      %v1711 = vadd.f32 %v1710, %v1674
      %v1712 = vadd.f32 %v1711, %v1676
      %v1713 = vrot.slane %v1712, 4
      %v1714 = vadd.f32 %v1712, %v1713
      %v1715 = vrot.slane %v1714, 2
      %v1716 = vadd.f32 %v1714, %v1715
      %v1717 = vrot.slane %v1716, 1
      %v1718 = vadd.f32 %v1716, %v1717
      %v1721 = vcombine.low %v1697, %v1718
      %v1723 = vunpack.c.l.s4 1966171168
      %v1724 = vunpack.c.0.s8 %v1723
      %v1725 = vlaneseq
      %v1726 = vshrl.u32 %v1725, 7
      %v1727 = vsub.s32 %v1724, %v1726
      %v1728 = vrot.slane %v1721, %v1727
      %v1730 = vunpack.c.l.s4 1966171168
      %v1731 = vunpack.c.0.s8 %v1730
      %v1732 = vlaneseq
      %v1733 = vshrl.u32 %v1732, 7
      %v1734 = vsub.s32 %v1731, %v1733
      %v1735 = vrot.slane %v1728, %v1734
      %1737 = vst.msk [vmem:[%s359] sm:$0x3] %vm1643, %v1735
      %s1738 = smul.u32 8, %s20
      %p1739 = scmp.lt.s32.totalorder %s1738, 15
      %s1740 = scalar_select %p1739, %s1738, 15
      %s1741 = smul.addr %s1740, 4
      %s1742 = smul.addr %s1741, 4
      %s1743 = scalar_lea.vmem %s6, %s1742
      %p1744 = scmp.lt.s32.totalorder %s20, 1
      %s1745 = scalar_select %p1744, %s20, 1
      %s1746 = smul.addr %s1745, 2
      %s1747 = scalar_lea.vmem %s7, %s1746
      %p1748 = scmp.lt.s32.totalorder %s20, 1
      %s1749 = scalar_select %p1748, %s20, 1
      %s1750 = smul.addr %s1749, 2
      %s1751 = scalar_lea.vmem %s8, %s1750
      // Predicated region
      $region45: #{joint_level_forward.5} parent=43 // pred_check
        %p1752 = pneg %p174
      $region46: #{joint_level_forward.5} parent=43 // pred_check_branch
        %1754 = sbr.rel (%p1752) target = $region48
      $region47: #{joint_level_forward.5} parent=43 // pred_region
        %s1755 = smul.u32 8, %s20
      $region48: #{joint_level_forward.5} parent=43 // pred_fallthru
        _
      // Predicated region
      $region49: #{joint_level_forward.5} parent=43 // pred_check
        %p1756 = pneg %p200
      $region50: #{joint_level_forward.5} parent=43 // pred_check_branch
        %1758 = sbr.rel (%p1756) target = $region52
      $region51: #{joint_level_forward.5} parent=43 // pred_region
        _
      $region52: #{joint_level_forward.5} parent=43 // pred_fallthru
        _
      // Predicated region
      $region53: #{joint_level_forward.5} parent=43 // pred_check
        %p1759 = pneg %p226
      $region54: #{joint_level_forward.5} parent=43 // pred_check_branch
        %1761 = sbr.rel (%p1759) target = $region56
      $region55: #{joint_level_forward.5} parent=43 // pred_region
        _
      $region56: #{joint_level_forward.5} parent=43 // pred_fallthru
        _
    $region44: #{joint_level_forward.5} parent=5 // pred_fallthru
      _
    %p1762 = scmp.le.s32.totalorder 2, %s15
    // Predicated region
    $region57: #{joint_level_forward.5} parent=5 // pred_check
      %p1763 = pneg %p1762
    $region58: #{joint_level_forward.5} parent=5 // pred_check_branch
      %1765 = sbr.rel (%p1763) target = $region60
    $region59: #{joint_level_forward.5} parent=5 // pred_region
      %s1766 = ssub.s32 %s15, 2
      // Predicated region
      $region61: #{joint_level_forward.5} parent=59 // pred_check
        %p1767 = pneg %p180
      $region62: #{joint_level_forward.5} parent=59 // pred_check_branch
        %1769 = sbr.rel (%p1767) target = $region64
      $region63: #{joint_level_forward.5} parent=59 // pred_region
        %s1770 = smul.u32 8, %s21
        %p1771 = scmp.lt.s32.totalorder %s1770, 15
        %s1772 = scalar_select %p1771, %s1770, 15
        %s1773 = smul.addr %s1772, 4
        %s1774 = smul.addr %s1773, 4
        %s1775 = scalar_lea.vmem %s6, %s1774
      $region64: #{joint_level_forward.5} parent=59 // pred_fallthru
        _
      // Predicated region
      $region65: #{joint_level_forward.5} parent=59 // pred_check
        %p1776 = pneg %p206
      $region66: #{joint_level_forward.5} parent=59 // pred_check_branch
        %1778 = sbr.rel (%p1776) target = $region68
      $region67: #{joint_level_forward.5} parent=59 // pred_region
        %p1779 = scmp.lt.s32.totalorder %s21, 1
        %s1780 = scalar_select %p1779, %s21, 1
        %s1781 = smul.addr %s1780, 2
        %s1782 = scalar_lea.vmem %s7, %s1781
      $region68: #{joint_level_forward.5} parent=59 // pred_fallthru
        _
      // Predicated region
      $region69: #{joint_level_forward.5} parent=59 // pred_check
        %p1783 = pneg %p232
      $region70: #{joint_level_forward.5} parent=59 // pred_check_branch
        %1785 = sbr.rel (%p1783) target = $region72
      $region71: #{joint_level_forward.5} parent=59 // pred_region
        %p1786 = scmp.lt.s32.totalorder %s21, 1
        %s1787 = scalar_select %p1786, %s21, 1
        %s1788 = smul.addr %s1787, 2
        %s1789 = scalar_lea.vmem %s8, %s1788
      $region72: #{joint_level_forward.5} parent=59 // pred_fallthru
        _
    $region60: #{joint_level_forward.5} parent=5 // pred_fallthru
      _
  $region6: #{joint_level_forward.5} parent=0 // loop_footer
    %s19 = sadd.s32 1, %s15
  $region7: #{joint_level_forward.5} parent=0 // loop_footer_branch
    %14 = sbr.rel target = $region3
  $region8: #{joint_level_forward.5} parent=0 // loop_exit
    _

// kernel: joint_level_forward.6
$region0: #{joint_level_forward.6}
  #allocation0 [shape = 'u32[]', space=smem, size = 0x4, offset = 0x4, fixed_abs, tag = 'smem constant byte address 0x4 - core index']
  #allocation1 [shape = 'u32[144,128]{1,0:T(1,128)}', space=vmem, size = 0x12000, scoped, tag = 'internal scratch']
  %s0 = inlined_call_operand.vmem [shape: bf16[16,16,256], index: 0, kind: input, shape index: {}]
  %s1 = inlined_call_operand.vmem [shape: f32[1,256], index: 1, kind: input, shape index: {}]
  %s2 = inlined_call_operand.vmem [shape: f32[1,256], index: 2, kind: input, shape index: {}]
  %s3 = inlined_call_operand.vmem [shape: bf16[16,16,16], index: 3, kind: input, shape index: {}]
  %s4 = inlined_call_operand.vmem [shape: bf16[256,512], index: 4, kind: input, shape index: {}]
  %s5 = inlined_call_operand.vmem [shape: f32[1,256], index: 5, kind: input, shape index: {}]
  %s6 = inlined_call_operand.vmem [shape: bf16[16,16,256], index: 6, kind: output, shape index: {0}]
  %s7 = inlined_call_operand.vmem [shape: f32[2,1,256], index: 7, kind: output, shape index: {1}]
  %s8 = inlined_call_operand.vmem [shape: f32[2,1,256], index: 8, kind: output, shape index: {2}]
  %9 = xla_tuple %s6, %s7, %s8
  %s10 = sld [smem:[#allocation0]]
  $region73: #{joint_level_forward.6} parent=0
    _
  %s12 = ssub.s32 1, %s10
  %s13 = scalar_select 0, %s12, %s10
  loop: start=0, step=1, limit=4
  $region2: #{joint_level_forward.6} parent=0 // loop_pre_header
    _
  $region3: #{joint_level_forward.6} parent=0 // loop_header
    %s15 = sphi 0, %s19
    %p16 = scmp.ge.s32.totalorder %s15, 4
    %s25 = sphi 0, %s27
    %s28 = sphi 0, %s25
    %s29 = sphi 0, %s28
    %s45 = sphi 0, %s29
    %s49 = sphi 0, %s49
    %s51 = sphi 0, %s49
    %s52 = sphi 0, %s51
    %s66 = sphi 0, %s52
    %s70 = sphi 0, %s70
    %s72 = sphi 0, %s70
    %s73 = sphi 0, %s72
    %s87 = sphi 0, %s73
    %s93 = sphi 0, %s95
    %s96 = sphi 0, %s93
    %s97 = sphi 0, %s96
    %s113 = sphi 0, %s97
    %s117 = sphi 0, %s117
    %s119 = sphi 0, %s117
    %s120 = sphi 0, %s119
    %s134 = sphi 0, %s120
    %s138 = sphi 0, %s138
    %s140 = sphi 0, %s138
    %s141 = sphi 0, %s140
    %s155 = sphi 0, %s141
    %s161 = sphi 0, %s163
    %s164 = sphi 0, %s161
    %s165 = sphi 0, %s164
    %s181 = sphi 0, %s165
    %s187 = sphi 0, %s189
    %s190 = sphi 0, %s187
    %s191 = sphi 0, %s190
    %s207 = sphi 0, %s191
    %s213 = sphi 0, %s215
    %s216 = sphi 0, %s213
    %s217 = sphi 0, %s216
    %s233 = sphi 0, %s217
  $region4: #{joint_level_forward.6} parent=0 // loop_header_branch
    %18 = sbr.rel (%p16) target = $region8
  $region5: #{joint_level_forward.6} parent=0 // loop_body
    %s20 = ssub.s32 %s15, 1
    %s21 = ssub.s32 %s15, 2
    %s22 = sadd.s32 %s15, 1
    %s23 = ssub.s32 %s15, %s22
    %p24 = scmp.eq.s32.totalorder %s23, 0
    %s26 = sadd.s32 %s25, 1
    %s27 = scalar_select %p24, %s25, %s26
    %p30 = pneg %p24
    %p31 = scmp.eq.s32.totalorder %s15, 1
    %p32 = por %p30, %p31
    %p33 = scmp.ne.s32.totalorder %s25, %s28
    %p34 = scmp.eq.s32.totalorder %s15, 0
    %p35 = por %p33, %p34
    %p36 = scmp.ne.s32.totalorder %s25, %s28
    %p37 = scmp.eq.s32.totalorder %s20, 1
    %p38 = por %p36, %p37
    %p39 = scmp.ne.s32.totalorder %s28, %s29
    %p40 = scmp.eq.s32.totalorder %s20, 0
    %p41 = por %p39, %p40
    %p42 = scmp.ne.s32.totalorder %s28, %s29
    %p43 = scmp.eq.s32.totalorder %s21, 1
    %p44 = por %p42, %p43
    %p46 = scmp.ne.s32.totalorder %s29, %s45
    %p47 = scmp.eq.s32.totalorder %s21, 0
    %p48 = por %p46, %p47
    %s50 = sadd.s32 %s49, 1
    %p53 = scmp.eq.s32.totalorder %s15, 1
    %p54 = scmp.ne.s32.totalorder %s49, %s51
    %p55 = scmp.eq.s32.totalorder %s15, 0
    %p56 = por %p54, %p55
    %p57 = scmp.ne.s32.totalorder %s49, %s51
    %p58 = scmp.eq.s32.totalorder %s20, 1
    %p59 = por %p57, %p58
    %p60 = scmp.ne.s32.totalorder %s51, %s52
    %p61 = scmp.eq.s32.totalorder %s20, 0
    %p62 = por %p60, %p61
    %p63 = scmp.ne.s32.totalorder %s51, %s52
    %p64 = scmp.eq.s32.totalorder %s21, 1
    %p65 = por %p63, %p64
    %p67 = scmp.ne.s32.totalorder %s52, %s66
    %p68 = scmp.eq.s32.totalorder %s21, 0
    %p69 = por %p67, %p68
    %s71 = sadd.s32 %s70, 1
    %p74 = scmp.eq.s32.totalorder %s15, 1
    %p75 = scmp.ne.s32.totalorder %s70, %s72
    %p76 = scmp.eq.s32.totalorder %s15, 0
    %p77 = por %p75, %p76
    %p78 = scmp.ne.s32.totalorder %s70, %s72
    %p79 = scmp.eq.s32.totalorder %s20, 1
    %p80 = por %p78, %p79
    %p81 = scmp.ne.s32.totalorder %s72, %s73
    %p82 = scmp.eq.s32.totalorder %s20, 0
    %p83 = por %p81, %p82
    %p84 = scmp.ne.s32.totalorder %s72, %s73
    %p85 = scmp.eq.s32.totalorder %s21, 1
    %p86 = por %p84, %p85
    %p88 = scmp.ne.s32.totalorder %s73, %s87
    %p89 = scmp.eq.s32.totalorder %s21, 0
    %p90 = por %p88, %p89
    %s91 = ssub.s32 %s15, %s22
    %p92 = scmp.eq.s32.totalorder %s91, 0
    %s94 = sadd.s32 %s93, 1
    %s95 = scalar_select %p92, %s93, %s94
    %p98 = pneg %p92
    %p99 = scmp.eq.s32.totalorder %s15, 1
    %p100 = por %p98, %p99
    %p101 = scmp.ne.s32.totalorder %s93, %s96
    %p102 = scmp.eq.s32.totalorder %s15, 0
    %p103 = por %p101, %p102
    %p104 = scmp.ne.s32.totalorder %s93, %s96
    %p105 = scmp.eq.s32.totalorder %s20, 1
    %p106 = por %p104, %p105
    %p107 = scmp.ne.s32.totalorder %s96, %s97
    %p108 = scmp.eq.s32.totalorder %s20, 0
    %p109 = por %p107, %p108
    %p110 = scmp.ne.s32.totalorder %s96, %s97
    %p111 = scmp.eq.s32.totalorder %s21, 1
    %p112 = por %p110, %p111
    %p114 = scmp.ne.s32.totalorder %s97, %s113
    %p115 = scmp.eq.s32.totalorder %s21, 0
    %p116 = por %p114, %p115
    %s118 = sadd.s32 %s117, 1
    %p121 = scmp.eq.s32.totalorder %s15, 1
    %p122 = scmp.ne.s32.totalorder %s117, %s119
    %p123 = scmp.eq.s32.totalorder %s15, 0
    %p124 = por %p122, %p123
    %p125 = scmp.ne.s32.totalorder %s117, %s119
    %p126 = scmp.eq.s32.totalorder %s20, 1
    %p127 = por %p125, %p126
    %p128 = scmp.ne.s32.totalorder %s119, %s120
    %p129 = scmp.eq.s32.totalorder %s20, 0
    %p130 = por %p128, %p129
    %p131 = scmp.ne.s32.totalorder %s119, %s120
    %p132 = scmp.eq.s32.totalorder %s21, 1
    %p133 = por %p131, %p132
    %p135 = scmp.ne.s32.totalorder %s120, %s134
    %p136 = scmp.eq.s32.totalorder %s21, 0
    %p137 = por %p135, %p136
    %s139 = sadd.s32 %s138, 1
    %p142 = scmp.eq.s32.totalorder %s15, 1
    %p143 = scmp.ne.s32.totalorder %s138, %s140
    %p144 = scmp.eq.s32.totalorder %s15, 0
    %p145 = por %p143, %p144
    %p146 = scmp.ne.s32.totalorder %s138, %s140
    %p147 = scmp.eq.s32.totalorder %s20, 1
    %p148 = por %p146, %p147
    %p149 = scmp.ne.s32.totalorder %s140, %s141
    %p150 = scmp.eq.s32.totalorder %s20, 0
    %p151 = por %p149, %p150
    %p152 = scmp.ne.s32.totalorder %s140, %s141
    %p153 = scmp.eq.s32.totalorder %s21, 1
    %p154 = por %p152, %p153
    %p156 = scmp.ne.s32.totalorder %s141, %s155
    %p157 = scmp.eq.s32.totalorder %s21, 0
    %p158 = por %p156, %p157
    %s159 = ssub.s32 %s15, %s22
    %p160 = scmp.eq.s32.totalorder %s159, 0
    %s162 = sadd.s32 %s161, 1
    %s163 = scalar_select %p160, %s161, %s162
    %p166 = pneg %p160
    %p167 = scmp.eq.s32.totalorder %s15, 1
    %p168 = por %p166, %p167
    %p169 = scmp.ne.s32.totalorder %s161, %s164
    %p170 = scmp.eq.s32.totalorder %s15, 0
    %p171 = por %p169, %p170
    %p172 = scmp.ne.s32.totalorder %s161, %s164
    %p173 = scmp.eq.s32.totalorder %s20, 1
    %p174 = por %p172, %p173
    %p175 = scmp.ne.s32.totalorder %s164, %s165
    %p176 = scmp.eq.s32.totalorder %s20, 0
    %p177 = por %p175, %p176
    %p178 = scmp.ne.s32.totalorder %s164, %s165
    %p179 = scmp.eq.s32.totalorder %s21, 1
    %p180 = por %p178, %p179
    %p182 = scmp.ne.s32.totalorder %s165, %s181
    %p183 = scmp.eq.s32.totalorder %s21, 0
    %p184 = por %p182, %p183
    %s185 = ssub.s32 %s15, %s22
    %p186 = scmp.eq.s32.totalorder %s185, 0
    %s188 = sadd.s32 %s187, 1
    %s189 = scalar_select %p186, %s187, %s188
    %p192 = pneg %p186
    %p193 = scmp.eq.s32.totalorder %s15, 1
    %p194 = por %p192, %p193
    %p195 = scmp.ne.s32.totalorder %s187, %s190
    %p196 = scmp.eq.s32.totalorder %s15, 0
    %p197 = por %p195, %p196
    %p198 = scmp.ne.s32.totalorder %s187, %s190
    %p199 = scmp.eq.s32.totalorder %s20, 1
    %p200 = por %p198, %p199
    %p201 = scmp.ne.s32.totalorder %s190, %s191
    %p202 = scmp.eq.s32.totalorder %s20, 0
    %p203 = por %p201, %p202
    %p204 = scmp.ne.s32.totalorder %s190, %s191
    %p205 = scmp.eq.s32.totalorder %s21, 1
    %p206 = por %p204, %p205
    %p208 = scmp.ne.s32.totalorder %s191, %s207
    %p209 = scmp.eq.s32.totalorder %s21, 0
    %p210 = por %p208, %p209
    %s211 = ssub.s32 %s15, %s22
    %p212 = scmp.eq.s32.totalorder %s211, 0
    %s214 = sadd.s32 %s213, 1
    %s215 = scalar_select %p212, %s213, %s214
    %p218 = pneg %p212
    %p219 = scmp.eq.s32.totalorder %s15, 1
    %p220 = por %p218, %p219
    %p221 = scmp.ne.s32.totalorder %s213, %s216
    %p222 = scmp.eq.s32.totalorder %s15, 0
    %p223 = por %p221, %p222
    %p224 = scmp.ne.s32.totalorder %s213, %s216
    %p225 = scmp.eq.s32.totalorder %s20, 1
    %p226 = por %p224, %p225
    %p227 = scmp.ne.s32.totalorder %s216, %s217
    %p228 = scmp.eq.s32.totalorder %s20, 0
    %p229 = por %p227, %p228
    %p230 = scmp.ne.s32.totalorder %s216, %s217
    %p231 = scmp.eq.s32.totalorder %s21, 1
    %p232 = por %p230, %p231
    %p234 = scmp.ne.s32.totalorder %s217, %s233
    %p235 = scmp.eq.s32.totalorder %s21, 0
    %p236 = por %p234, %p235
    %p237 = scmp.le.s32.totalorder 1, %s15
    %p238 = scmp.lt.s32.totalorder %s15, 3
    %p239 = pnand %p237, %p238
    %p240 = pneg %p239
    // Predicated region
    $region9: #{joint_level_forward.6} parent=5 // pred_check
      _
    $region10: #{joint_level_forward.6} parent=5 // pred_check_branch
      %242 = sbr.rel (%p239) target = $region12
    $region11: #{joint_level_forward.6} parent=5 // pred_region
      %s243 = ssub.s32 %s15, 1
      // Predicated region
      $region13: #{joint_level_forward.6} parent=11 // pred_check
        %p244 = pneg %p62
      $region14: #{joint_level_forward.6} parent=11 // pred_check_branch
        %246 = sbr.rel (%p244) target = $region16
      $region15: #{joint_level_forward.6} parent=11 // pred_region
        _
      $region16: #{joint_level_forward.6} parent=11 // pred_fallthru
        _
      // Predicated region
      $region17: #{joint_level_forward.6} parent=11 // pred_check
        %p247 = pneg %p83
      $region18: #{joint_level_forward.6} parent=11 // pred_check_branch
        %249 = sbr.rel (%p247) target = $region20
      $region19: #{joint_level_forward.6} parent=11 // pred_region
        _
      $region20: #{joint_level_forward.6} parent=11 // pred_fallthru
        _
      // Predicated region
      $region21: #{joint_level_forward.6} parent=11 // pred_check
        %p250 = pneg %p130
      $region22: #{joint_level_forward.6} parent=11 // pred_check_branch
        %252 = sbr.rel (%p250) target = $region24
      $region23: #{joint_level_forward.6} parent=11 // pred_region
        _
      $region24: #{joint_level_forward.6} parent=11 // pred_fallthru
        _
      // Predicated region
      $region25: #{joint_level_forward.6} parent=11 // pred_check
        %p253 = pneg %p151
      $region26: #{joint_level_forward.6} parent=11 // pred_check_branch
        %255 = sbr.rel (%p253) target = $region28
      $region27: #{joint_level_forward.6} parent=11 // pred_region
        _
      $region28: #{joint_level_forward.6} parent=11 // pred_fallthru
        _
    $region12: #{joint_level_forward.6} parent=5 // pred_fallthru
      _
    %p256 = scmp.lt.s32.totalorder %s15, 2
    // Predicated region
    $region29: #{joint_level_forward.6} parent=5 // pred_check
      %p257 = pneg %p256
    $region30: #{joint_level_forward.6} parent=5 // pred_check_branch
      %259 = sbr.rel (%p257) target = $region32
    $region31: #{joint_level_forward.6} parent=5 // pred_region
      // Predicated region
      $region33: #{joint_level_forward.6} parent=31 // pred_check
        %p260 = pneg %p35
      $region34: #{joint_level_forward.6} parent=31 // pred_check_branch
        %262 = sbr.rel (%p260) target = $region36
      $region35: #{joint_level_forward.6} parent=31 // pred_region
        %s263 = smul.u32 8, %s15
        %p264 = scmp.lt.s32.totalorder %s263, 15
        %s265 = scalar_select %p264, %s263, 15
        %s266 = smul.addr %s265, 4
        %s267 = smul.addr %s266, 4
        %s268 = scalar_lea.vmem %s0, %s267
        %s269 = smul.u32 8, %s15
      $region36: #{joint_level_forward.6} parent=31 // pred_fallthru
        _
      // Predicated region
      $region37: #{joint_level_forward.6} parent=31 // pred_check
        %p270 = pneg %p103
      $region38: #{joint_level_forward.6} parent=31 // pred_check_branch
        %272 = sbr.rel (%p270) target = $region40
      $region39: #{joint_level_forward.6} parent=31 // pred_region
        %s273 = smul.u32 8, %s15
        %p274 = scmp.lt.s32.totalorder %s273, 15
        %s275 = scalar_select %p274, %s273, 15
        %s276 = smul.addr %s275, 2
        %s277 = smul.addr %s276, 4
        %s278 = scalar_lea.vmem %s3, %s277
        %s279 = smul.u32 8, %s15
      $region40: #{joint_level_forward.6} parent=31 // pred_fallthru
        _
    $region32: #{joint_level_forward.6} parent=5 // pred_fallthru
      _
    %p280 = scmp.le.s32.totalorder 1, %s15
    %p281 = scmp.lt.s32.totalorder %s15, 3
    %p282 = pnand %p280, %p281
    %p283 = pneg %p282
    // Predicated region
    $region41: #{joint_level_forward.6} parent=5 // pred_check
      _
    $region42: #{joint_level_forward.6} parent=5 // pred_check_branch
      %285 = sbr.rel (%p282) target = $region44
    $region43: #{joint_level_forward.6} parent=5 // pred_region
      %s286 = ssub.s32 %s15, 1
      %s287 = smul.u32 8, %s20
      %p288 = scmp.lt.s32.totalorder %s287, 15
      %s289 = scalar_select %p288, %s287, 15
      %s290 = smul.addr %s289, 4
      %s291 = smul.addr %s290, 4
      %s292 = scalar_lea.vmem %s0, %s291
      %p293 = pneg %p41
      %p294 = pneg %p38
      %p295 = pneg %p62
      %p296 = pneg %p59
      %p297 = pneg %p83
      %p298 = pneg %p80
      %s299 = smul.u32 8, %s20
      %p300 = scmp.lt.s32.totalorder %s299, 15
      %s301 = scalar_select %p300, %s299, 15
      %s302 = smul.addr %s301, 2
      %s303 = smul.addr %s302, 4
      %s304 = scalar_lea.vmem %s3, %s303
      %p305 = pneg %p109
      %p306 = pneg %p106
      %p307 = pneg %p130
      %p308 = pneg %p127
      %p309 = pneg %p151
      %p310 = pneg %p148
      %p311 = pneg %p177
      %p312 = pneg %p174
      %s313 = smul.u32 8, %s20
      %p314 = scmp.lt.s32.totalorder %s313, 15
      %s315 = scalar_select %p314, %s313, 15
      %s316 = smul.addr %s315, 4
      %s317 = smul.addr %s316, 4
      %s318 = scalar_lea.vmem %s6, %s317
      %p319 = pneg %p203
      %p320 = pneg %p200
      %p321 = scmp.lt.s32.totalorder %s20, 1
      %s322 = scalar_select %p321, %s20, 1
      %s323 = smul.addr %s322, 2
      %s324 = scalar_lea.vmem %s7, %s323
      %p325 = pneg %p229
      %p326 = pneg %p226
      %p327 = scmp.lt.s32.totalorder %s20, 1
      %s328 = scalar_select %p327, %s20, 1
      %s329 = smul.addr %s328, 2
      %s330 = scalar_lea.vmem %s8, %s329
      %s331 = smul.u32 8, %s20
      %p332 = scmp.lt.s32.totalorder %s331, 15
      %s333 = scalar_select %p332, %s331, 15
      %s334 = smul.addr %s333, 4
      %s335 = smul.addr %s334, 4
      %s336 = scalar_lea.vmem %s0, %s335
      %s337 = smul.u32 8, %s20
      %s338 = smul.u32 8, %s20
      %p339 = scmp.lt.s32.totalorder %s338, 15
      %s340 = scalar_select %p339, %s338, 15
      %s341 = smul.addr %s340, 2
      %s342 = smul.addr %s341, 4
      %s343 = scalar_lea.vmem %s3, %s342
      %s344 = smul.u32 8, %s20
      %s345 = smul.u32 8, %s20
      %p346 = scmp.lt.s32.totalorder %s345, 15
      %s347 = scalar_select %p346, %s345, 15
      %s348 = smul.addr %s347, 4
      %s349 = smul.addr %s348, 4
      %s350 = scalar_lea.vmem %s6, %s349
      %s351 = smul.u32 8, %s20
      %p352 = scmp.lt.s32.totalorder %s20, 1
      %s353 = scalar_select %p352, %s20, 1
      %s354 = smul.addr %s353, 2
      %s355 = scalar_lea.vmem %s7, %s354
      %p356 = scmp.lt.s32.totalorder %s20, 1
      %s357 = scalar_select %p356, %s20, 1
      %s358 = smul.addr %s357, 2
      %s359 = scalar_lea.vmem %s8, %s358
      %v361 = vld [vmem:[%s336] sm:$0xff]
      %v362 = vld [vmem:[%s336 + $0x8] sm:$0xff]
      %v363 = vld [vmem:[%s336 + $0x10] sm:$0xff]
      %v364 = vld [vmem:[%s336 + $0x18] sm:$0xff]
      %v365 = vld [vmem:[%s336 + $0x20] sm:$0xff]
      %v366 = vld [vmem:[%s336 + $0x28] sm:$0xff]
      %v367 = vld [vmem:[%s336 + $0x30] sm:$0xff]
      %v368 = vld [vmem:[%s336 + $0x38] sm:$0xff]
      %v369 = vld [vmem:[%s336 + $0x40] sm:$0xff]
      %v370 = vld [vmem:[%s336 + $0x48] sm:$0xff]
      %v371 = vld [vmem:[%s336 + $0x50] sm:$0xff]
      %v372 = vld [vmem:[%s336 + $0x58] sm:$0xff]
      %v373 = vld [vmem:[%s336 + $0x60] sm:$0xff]
      %v374 = vld [vmem:[%s336 + $0x68] sm:$0xff]
      %v375 = vld [vmem:[%s336 + $0x70] sm:$0xff]
      %v376 = vld [vmem:[%s336 + $0x78] sm:$0xff]
      %v377 = vunpack.c.l.bf16 %v361
      %v378 = vunpack.c.h.bf16 %v361
      %v379 = vunpack.c.l.bf16 %v362
      %v380 = vunpack.c.h.bf16 %v362
      %v381 = vunpack.c.l.bf16 %v363
      %v382 = vunpack.c.h.bf16 %v363
      %v383 = vunpack.c.l.bf16 %v364
      %v384 = vunpack.c.h.bf16 %v364
      %v385 = vunpack.c.l.bf16 %v365
      %v386 = vunpack.c.h.bf16 %v365
      %v387 = vunpack.c.l.bf16 %v366
      %v388 = vunpack.c.h.bf16 %v366
      %v389 = vunpack.c.l.bf16 %v367
      %v390 = vunpack.c.h.bf16 %v367
      %v391 = vunpack.c.l.bf16 %v368
      %v392 = vunpack.c.h.bf16 %v368
      %v393 = vunpack.c.l.bf16 %v369
      %v394 = vunpack.c.h.bf16 %v369
      %v395 = vunpack.c.l.bf16 %v370
      %v396 = vunpack.c.h.bf16 %v370
      %v397 = vunpack.c.l.bf16 %v371
      %v398 = vunpack.c.h.bf16 %v371
      %v399 = vunpack.c.l.bf16 %v372
      %v400 = vunpack.c.h.bf16 %v372
      %v401 = vunpack.c.l.bf16 %v373
      %v402 = vunpack.c.h.bf16 %v373
      %v403 = vunpack.c.l.bf16 %v374
      %v404 = vunpack.c.h.bf16 %v374
      %v405 = vunpack.c.l.bf16 %v375
      %v406 = vunpack.c.h.bf16 %v375
      %v407 = vunpack.c.l.bf16 %v376
      %v408 = vunpack.c.h.bf16 %v376
      %v409 = vld [vmem:[%s1] sm:$0x3]
      %v411 = vlaneseq
      %v412 = vshrl.u32 %v411, 7
      %v413 = vsub.s32 0, %v412
      %v414 = vrot.slane %v409, %v413
      %v415 = vlaneseq
      %v416 = vshrl.u32 %v415, 7
      %v417 = vsub.s32 1, %v416
      %v418 = vrot.slane %v409, %v417
      %v421 = vmul.f32 %v377, %v414
      %v422 = vmul.f32 %v378, %v418
      %v423 = vmul.f32 %v379, %v414
      %v424 = vmul.f32 %v380, %v418
      %v425 = vmul.f32 %v381, %v414
      %v426 = vmul.f32 %v382, %v418
      %v427 = vmul.f32 %v383, %v414
      %v428 = vmul.f32 %v384, %v418
      %v429 = vmul.f32 %v385, %v414
      %v430 = vmul.f32 %v386, %v418
      %v431 = vmul.f32 %v387, %v414
      %v432 = vmul.f32 %v388, %v418
      %v433 = vmul.f32 %v389, %v414
      %v434 = vmul.f32 %v390, %v418
      %v435 = vmul.f32 %v391, %v414
      %v436 = vmul.f32 %v392, %v418
      %v437 = vmul.f32 %v393, %v414
      %v438 = vmul.f32 %v394, %v418
      %v439 = vmul.f32 %v395, %v414
      %v440 = vmul.f32 %v396, %v418
      %v441 = vmul.f32 %v397, %v414
      %v442 = vmul.f32 %v398, %v418
      %v443 = vmul.f32 %v399, %v414
      %v444 = vmul.f32 %v400, %v418
      %v445 = vmul.f32 %v401, %v414
      %v446 = vmul.f32 %v402, %v418
      %v447 = vmul.f32 %v403, %v414
      %v448 = vmul.f32 %v404, %v418
      %v449 = vmul.f32 %v405, %v414
      %v450 = vmul.f32 %v406, %v418
      %v451 = vmul.f32 %v407, %v414
      %v452 = vmul.f32 %v408, %v418
      %v453 = vld [vmem:[%s2] sm:$0x3]
      %v455 = vlaneseq
      %v456 = vshrl.u32 %v455, 7
      %v457 = vsub.s32 0, %v456
      %v458 = vrot.slane %v453, %v457
      %v459 = vlaneseq
      %v460 = vshrl.u32 %v459, 7
      %v461 = vsub.s32 1, %v460
      %v462 = vrot.slane %v453, %v461
      %v465 = vadd.f32 %v421, %v458
      %v466 = vadd.f32 %v422, %v462
      %v467 = vadd.f32 %v423, %v458
      %v468 = vadd.f32 %v424, %v462
      %v469 = vadd.f32 %v425, %v458
      %v470 = vadd.f32 %v426, %v462
      %v471 = vadd.f32 %v427, %v458
      %v472 = vadd.f32 %v428, %v462
      %v473 = vadd.f32 %v429, %v458
      %v474 = vadd.f32 %v430, %v462
      %v475 = vadd.f32 %v431, %v458
      %v476 = vadd.f32 %v432, %v462
      %v477 = vadd.f32 %v433, %v458
      %v478 = vadd.f32 %v434, %v462
      %v479 = vadd.f32 %v435, %v458
      %v480 = vadd.f32 %v436, %v462
      %v481 = vadd.f32 %v437, %v458
      %v482 = vadd.f32 %v438, %v462
      %v483 = vadd.f32 %v439, %v458
      %v484 = vadd.f32 %v440, %v462
      %v485 = vadd.f32 %v441, %v458
      %v486 = vadd.f32 %v442, %v462
      %v487 = vadd.f32 %v443, %v458
      %v488 = vadd.f32 %v444, %v462
      %v489 = vadd.f32 %v445, %v458
      %v490 = vadd.f32 %v446, %v462
      %v491 = vadd.f32 %v447, %v458
      %v492 = vadd.f32 %v448, %v462
      %v493 = vadd.f32 %v449, %v458
      %v494 = vadd.f32 %v450, %v462
      %v495 = vadd.f32 %v451, %v458
      %v496 = vadd.f32 %v452, %v462
      %v497 = vmax.f32 %v465, 0.0
      %v498 = vmax.f32 %v466, 0.0
      %v499 = vmax.f32 %v467, 0.0
      %v500 = vmax.f32 %v468, 0.0
      %v501 = vmax.f32 %v469, 0.0
      %v502 = vmax.f32 %v470, 0.0
      %v503 = vmax.f32 %v471, 0.0
      %v504 = vmax.f32 %v472, 0.0
      %v505 = vmax.f32 %v473, 0.0
      %v506 = vmax.f32 %v474, 0.0
      %v507 = vmax.f32 %v475, 0.0
      %v508 = vmax.f32 %v476, 0.0
      %v509 = vmax.f32 %v477, 0.0
      %v510 = vmax.f32 %v478, 0.0
      %v511 = vmax.f32 %v479, 0.0
      %v512 = vmax.f32 %v480, 0.0
      %v513 = vmax.f32 %v481, 0.0
      %v514 = vmax.f32 %v482, 0.0
      %v515 = vmax.f32 %v483, 0.0
      %v516 = vmax.f32 %v484, 0.0
      %v517 = vmax.f32 %v485, 0.0
      %v518 = vmax.f32 %v486, 0.0
      %v519 = vmax.f32 %v487, 0.0
      %v520 = vmax.f32 %v488, 0.0
      %v521 = vmax.f32 %v489, 0.0
      %v522 = vmax.f32 %v490, 0.0
      %v523 = vmax.f32 %v491, 0.0
      %v524 = vmax.f32 %v492, 0.0
      %v525 = vmax.f32 %v493, 0.0
      %v526 = vmax.f32 %v494, 0.0
      %v527 = vmax.f32 %v495, 0.0
      %v528 = vmax.f32 %v496, 0.0
      %v529 = vpack.c.bf16 %v499, %v497
      %v530 = vpack.c.bf16 %v500, %v498
      %v531 = vpack.c.bf16 %v503, %v501
      %v532 = vpack.c.bf16 %v504, %v502
      %v533 = vpack.c.bf16 %v507, %v505
      %v534 = vpack.c.bf16 %v508, %v506
      %v535 = vpack.c.bf16 %v511, %v509
      %v536 = vpack.c.bf16 %v512, %v510
      %v537 = vpack.c.bf16 %v515, %v513
      %v538 = vpack.c.bf16 %v516, %v514
      %v539 = vpack.c.bf16 %v519, %v517
      %v540 = vpack.c.bf16 %v520, %v518
      %v541 = vpack.c.bf16 %v523, %v521
      %v542 = vpack.c.bf16 %v524, %v522
      %v543 = vpack.c.bf16 %v527, %v525
      %v544 = vpack.c.bf16 %v528, %v526
      %v545 = vld [vmem:[%s4] sm:$0xff]
      %v546 = vld [vmem:[%s4 + $0x8] sm:$0xff]
      %v547 = vld [vmem:[%s4 + $0x10] sm:$0xff]
      %v548 = vld [vmem:[%s4 + $0x18] sm:$0xff]
      %v549 = vld [vmem:[%s4 + $0x20] sm:$0xff]
      %v550 = vld [vmem:[%s4 + $0x28] sm:$0xff]
      %v551 = vld [vmem:[%s4 + $0x30] sm:$0xff]
      %v552 = vld [vmem:[%s4 + $0x38] sm:$0xff]
      %v553 = vld [vmem:[%s4 + $0x40] sm:$0xff]
      %v554 = vld [vmem:[%s4 + $0x48] sm:$0xff]
      %v555 = vld [vmem:[%s4 + $0x50] sm:$0xff]
      %v556 = vld [vmem:[%s4 + $0x58] sm:$0xff]
      %v557 = vld [vmem:[%s4 + $0x60] sm:$0xff]
      %v558 = vld [vmem:[%s4 + $0x68] sm:$0xff]
      %v559 = vld [vmem:[%s4 + $0x70] sm:$0xff]
      %v560 = vld [vmem:[%s4 + $0x78] sm:$0xff]
      %v561 = vld [vmem:[%s4 + $0x80] sm:$0xff]
      %v562 = vld [vmem:[%s4 + $0x88] sm:$0xff]
      %v563 = vld [vmem:[%s4 + $0x90] sm:$0xff]
      %v564 = vld [vmem:[%s4 + $0x98] sm:$0xff]
      %v565 = vld [vmem:[%s4 + $0xa0] sm:$0xff]
      %v566 = vld [vmem:[%s4 + $0xa8] sm:$0xff]
      %v567 = vld [vmem:[%s4 + $0xb0] sm:$0xff]
      %v568 = vld [vmem:[%s4 + $0xb8] sm:$0xff]
      %v569 = vld [vmem:[%s4 + $0xc0] sm:$0xff]
      %v570 = vld [vmem:[%s4 + $0xc8] sm:$0xff]
      %v571 = vld [vmem:[%s4 + $0xd0] sm:$0xff]
      %v572 = vld [vmem:[%s4 + $0xd8] sm:$0xff]
      %v573 = vld [vmem:[%s4 + $0xe0] sm:$0xff]
      %v574 = vld [vmem:[%s4 + $0xe8] sm:$0xff]
      %v575 = vld [vmem:[%s4 + $0xf0] sm:$0xff]
      %v576 = vld [vmem:[%s4 + $0xf8] sm:$0xff]
      %v577 = vld [vmem:[%s4 + $0x100] sm:$0xff]
      %v578 = vld [vmem:[%s4 + $0x108] sm:$0xff]
      %v579 = vld [vmem:[%s4 + $0x110] sm:$0xff]
      %v580 = vld [vmem:[%s4 + $0x118] sm:$0xff]
      %v581 = vld [vmem:[%s4 + $0x120] sm:$0xff]
      %v582 = vld [vmem:[%s4 + $0x128] sm:$0xff]
      %v583 = vld [vmem:[%s4 + $0x130] sm:$0xff]
      %v584 = vld [vmem:[%s4 + $0x138] sm:$0xff]
      %v585 = vld [vmem:[%s4 + $0x140] sm:$0xff]
      %v586 = vld [vmem:[%s4 + $0x148] sm:$0xff]
      %v587 = vld [vmem:[%s4 + $0x150] sm:$0xff]
      %v588 = vld [vmem:[%s4 + $0x158] sm:$0xff]
      %v589 = vld [vmem:[%s4 + $0x160] sm:$0xff]
      %v590 = vld [vmem:[%s4 + $0x168] sm:$0xff]
      %v591 = vld [vmem:[%s4 + $0x170] sm:$0xff]
      %v592 = vld [vmem:[%s4 + $0x178] sm:$0xff]
      %v593 = vld [vmem:[%s4 + $0x180] sm:$0xff]
      %v594 = vld [vmem:[%s4 + $0x188] sm:$0xff]
      %v595 = vld [vmem:[%s4 + $0x190] sm:$0xff]
      %v596 = vld [vmem:[%s4 + $0x198] sm:$0xff]
      %v597 = vld [vmem:[%s4 + $0x1a0] sm:$0xff]
      %v598 = vld [vmem:[%s4 + $0x1a8] sm:$0xff]
      %v599 = vld [vmem:[%s4 + $0x1b0] sm:$0xff]
      %v600 = vld [vmem:[%s4 + $0x1b8] sm:$0xff]
      %v601 = vld [vmem:[%s4 + $0x1c0] sm:$0xff]
      %v602 = vld [vmem:[%s4 + $0x1c8] sm:$0xff]
      %v603 = vld [vmem:[%s4 + $0x1d0] sm:$0xff]
      %v604 = vld [vmem:[%s4 + $0x1d8] sm:$0xff]
      %v605 = vld [vmem:[%s4 + $0x1e0] sm:$0xff]
      %v606 = vld [vmem:[%s4 + $0x1e8] sm:$0xff]
      %v607 = vld [vmem:[%s4 + $0x1f0] sm:$0xff]
      %v608 = vld [vmem:[%s4 + $0x1f8] sm:$0xff]
      %v673 = vunpack.c.l.b16 %v545
      %v674 = vunpack.c.h.b16 %v545
      %v675 = vunpack.c.l.b16 %v546
      %v676 = vunpack.c.h.b16 %v546
      %v677 = vunpack.c.l.b16 %v547
      %v678 = vunpack.c.h.b16 %v547
      %v679 = vunpack.c.l.b16 %v548
      %v680 = vunpack.c.h.b16 %v548
      %v681 = vunpack.c.l.b16 %v549
      %v682 = vunpack.c.h.b16 %v549
      %v683 = vunpack.c.l.b16 %v550
      %v684 = vunpack.c.h.b16 %v550
      %v685 = vunpack.c.l.b16 %v551
      %v686 = vunpack.c.h.b16 %v551
      %v687 = vunpack.c.l.b16 %v552
      %v688 = vunpack.c.h.b16 %v552
      %v689 = vunpack.c.l.b16 %v553
      %v690 = vunpack.c.h.b16 %v553
      %v691 = vunpack.c.l.b16 %v554
      %v692 = vunpack.c.h.b16 %v554
      %v693 = vunpack.c.l.b16 %v555
      %v694 = vunpack.c.h.b16 %v555
      %v695 = vunpack.c.l.b16 %v556
      %v696 = vunpack.c.h.b16 %v556
      %v697 = vunpack.c.l.b16 %v557
      %v698 = vunpack.c.h.b16 %v557
      %v699 = vunpack.c.l.b16 %v558
      %v700 = vunpack.c.h.b16 %v558
      %v701 = vunpack.c.l.b16 %v559
      %v702 = vunpack.c.h.b16 %v559
      %v703 = vunpack.c.l.b16 %v560
      %v704 = vunpack.c.h.b16 %v560
      %v705 = vunpack.c.l.b16 %v561
      %v706 = vunpack.c.h.b16 %v561
      %v707 = vunpack.c.l.b16 %v562
      %v708 = vunpack.c.h.b16 %v562
      %v709 = vunpack.c.l.b16 %v563
      %v710 = vunpack.c.h.b16 %v563
      %v711 = vunpack.c.l.b16 %v564
      %v712 = vunpack.c.h.b16 %v564
      %v713 = vunpack.c.l.b16 %v565
      %v714 = vunpack.c.h.b16 %v565
      %v715 = vunpack.c.l.b16 %v566
      %v716 = vunpack.c.h.b16 %v566
      %v717 = vunpack.c.l.b16 %v567
      %v718 = vunpack.c.h.b16 %v567
      %v719 = vunpack.c.l.b16 %v568
      %v720 = vunpack.c.h.b16 %v568
      %v721 = vunpack.c.l.b16 %v569
      %v722 = vunpack.c.h.b16 %v569
      %v723 = vunpack.c.l.b16 %v570
      %v724 = vunpack.c.h.b16 %v570
      %v725 = vunpack.c.l.b16 %v571
      %v726 = vunpack.c.h.b16 %v571
      %v727 = vunpack.c.l.b16 %v572
      %v728 = vunpack.c.h.b16 %v572
      %v729 = vunpack.c.l.b16 %v573
      %v730 = vunpack.c.h.b16 %v573
      %v731 = vunpack.c.l.b16 %v574
      %v732 = vunpack.c.h.b16 %v574
      %v733 = vunpack.c.l.b16 %v575
      %v734 = vunpack.c.h.b16 %v575
      %v735 = vunpack.c.l.b16 %v576
      %v736 = vunpack.c.h.b16 %v576
      %v737 = vunpack.c.l.b16 %v577
      %v738 = vunpack.c.h.b16 %v577
      %v739 = vunpack.c.l.b16 %v578
      %v740 = vunpack.c.h.b16 %v578
      %v741 = vunpack.c.l.b16 %v579
      %v742 = vunpack.c.h.b16 %v579
      %v743 = vunpack.c.l.b16 %v580
      %v744 = vunpack.c.h.b16 %v580
      %v745 = vunpack.c.l.b16 %v581
      %v746 = vunpack.c.h.b16 %v581
      %v747 = vunpack.c.l.b16 %v582
      %v748 = vunpack.c.h.b16 %v582
      %v749 = vunpack.c.l.b16 %v583
      %v750 = vunpack.c.h.b16 %v583
      %v751 = vunpack.c.l.b16 %v584
      %v752 = vunpack.c.h.b16 %v584
      %v753 = vunpack.c.l.b16 %v585
      %v754 = vunpack.c.h.b16 %v585
      %v755 = vunpack.c.l.b16 %v586
      %v756 = vunpack.c.h.b16 %v586
      %v757 = vunpack.c.l.b16 %v587
      %v758 = vunpack.c.h.b16 %v587
      %v759 = vunpack.c.l.b16 %v588
      %v760 = vunpack.c.h.b16 %v588
      %v761 = vunpack.c.l.b16 %v589
      %v762 = vunpack.c.h.b16 %v589
      %v763 = vunpack.c.l.b16 %v590
      %v764 = vunpack.c.h.b16 %v590
      %v765 = vunpack.c.l.b16 %v591
      %v766 = vunpack.c.h.b16 %v591
      %v767 = vunpack.c.l.b16 %v592
      %v768 = vunpack.c.h.b16 %v592
      %v769 = vunpack.c.l.b16 %v593
      %v770 = vunpack.c.h.b16 %v593
      %v771 = vunpack.c.l.b16 %v594
      %v772 = vunpack.c.h.b16 %v594
      %v773 = vunpack.c.l.b16 %v595
      %v774 = vunpack.c.h.b16 %v595
      %v775 = vunpack.c.l.b16 %v596
      %v776 = vunpack.c.h.b16 %v596
      %v777 = vunpack.c.l.b16 %v597
      %v778 = vunpack.c.h.b16 %v597
      %v779 = vunpack.c.l.b16 %v598
      %v780 = vunpack.c.h.b16 %v598
      %v781 = vunpack.c.l.b16 %v599
      %v782 = vunpack.c.h.b16 %v599
      %v783 = vunpack.c.l.b16 %v600
      %v784 = vunpack.c.h.b16 %v600
      %v785 = vunpack.c.l.b16 %v601
      %v786 = vunpack.c.h.b16 %v601
      %v787 = vunpack.c.l.b16 %v602
      %v788 = vunpack.c.h.b16 %v602
      %v789 = vunpack.c.l.b16 %v603
      %v790 = vunpack.c.h.b16 %v603
      %v791 = vunpack.c.l.b16 %v604
      %v792 = vunpack.c.h.b16 %v604
      %v793 = vunpack.c.l.b16 %v605
      %v794 = vunpack.c.h.b16 %v605
      %v795 = vunpack.c.l.b16 %v606
      %v796 = vunpack.c.h.b16 %v606
      %v797 = vunpack.c.l.b16 %v607
      %v798 = vunpack.c.h.b16 %v607
      %v799 = vunpack.c.l.b16 %v608
      %v800 = vunpack.c.h.b16 %v608
      %v801 = vpack.c.b16 %v677, %v673
      %v802 = vpack.c.b16 %v678, %v674
      %v803 = vpack.c.b16 %v679, %v675
      %v804 = vpack.c.b16 %v680, %v676
      %v805 = vpack.c.b16 %v685, %v681
      %v806 = vpack.c.b16 %v686, %v682
      %v807 = vpack.c.b16 %v687, %v683
      %v808 = vpack.c.b16 %v688, %v684
      %v809 = vpack.c.b16 %v693, %v689
      %v810 = vpack.c.b16 %v694, %v690
      %v811 = vpack.c.b16 %v695, %v691
      %v812 = vpack.c.b16 %v696, %v692
      %v813 = vpack.c.b16 %v701, %v697
      %v814 = vpack.c.b16 %v702, %v698
      %v815 = vpack.c.b16 %v703, %v699
      %v816 = vpack.c.b16 %v704, %v700
      %v817 = vpack.c.b16 %v709, %v705
      %v818 = vpack.c.b16 %v710, %v706
      %v819 = vpack.c.b16 %v711, %v707
      %v820 = vpack.c.b16 %v712, %v708
      %v821 = vpack.c.b16 %v717, %v713
      %v822 = vpack.c.b16 %v718, %v714
      %v823 = vpack.c.b16 %v719, %v715
      %v824 = vpack.c.b16 %v720, %v716
      %v825 = vpack.c.b16 %v725, %v721
      %v826 = vpack.c.b16 %v726, %v722
      %v827 = vpack.c.b16 %v727, %v723
      %v828 = vpack.c.b16 %v728, %v724
      %v829 = vpack.c.b16 %v733, %v729
      %v830 = vpack.c.b16 %v734, %v730
      %v831 = vpack.c.b16 %v735, %v731
      %v832 = vpack.c.b16 %v736, %v732
      %v833 = vpack.c.b16 %v741, %v737
      %v834 = vpack.c.b16 %v742, %v738
      %v835 = vpack.c.b16 %v743, %v739
      %v836 = vpack.c.b16 %v744, %v740
      %v837 = vpack.c.b16 %v749, %v745
      %v838 = vpack.c.b16 %v750, %v746
      %v839 = vpack.c.b16 %v751, %v747
      %v840 = vpack.c.b16 %v752, %v748
      %v841 = vpack.c.b16 %v757, %v753
      %v842 = vpack.c.b16 %v758, %v754
      %v843 = vpack.c.b16 %v759, %v755
      %v844 = vpack.c.b16 %v760, %v756
      %v845 = vpack.c.b16 %v765, %v761
      %v846 = vpack.c.b16 %v766, %v762
      %v847 = vpack.c.b16 %v767, %v763
      %v848 = vpack.c.b16 %v768, %v764
      %v849 = vpack.c.b16 %v773, %v769
      %v850 = vpack.c.b16 %v774, %v770
      %v851 = vpack.c.b16 %v775, %v771
      %v852 = vpack.c.b16 %v776, %v772
      %v853 = vpack.c.b16 %v781, %v777
      %v854 = vpack.c.b16 %v782, %v778
      %v855 = vpack.c.b16 %v783, %v779
      %v856 = vpack.c.b16 %v784, %v780
      %v857 = vpack.c.b16 %v789, %v785
      %v858 = vpack.c.b16 %v790, %v786
      %v859 = vpack.c.b16 %v791, %v787
      %v860 = vpack.c.b16 %v792, %v788
      %v861 = vpack.c.b16 %v797, %v793
      %v862 = vpack.c.b16 %v798, %v794
      %v863 = vpack.c.b16 %v799, %v795
      %v864 = vpack.c.b16 %v800, %v796
      %929 = vmatprep.subr.bf16.mxu0 %v802
      %930 = vmatpush1.bf16.msra.mxu0 %v801
      %931 = vmatprep.subr.bf16.mxu0 %v806
      %932 = vmatpush1.bf16.msra.mxu0 %v805
      %933 = vmatprep.subr.bf16.mxu0 %v810
      %934 = vmatpush1.bf16.msra.mxu0 %v809
      %935 = vmatprep.subr.bf16.mxu0 %v814
      %936 = vmatpush1.bf16.msra.mxu0 %v813
      %937 = vmatprep.subr.bf16.mxu0 %v818
      %938 = vmatpush1.bf16.msra.mxu0 %v817
      %939 = vmatprep.subr.bf16.mxu0 %v822
      %940 = vmatpush1.bf16.msra.mxu0 %v821
      %941 = vmatprep.subr.bf16.mxu0 %v826
      %942 = vmatpush1.bf16.msra.mxu0 %v825
      %943 = vmatprep.subr.bf16.mxu0 %v830
      %944 = vmatpush1.bf16.msra.mxu0 %v829
      %945 = vmatprep.subr.bf16.mxu0 %v834
      %946 = vmatpush1.bf16.msra.mxu0 %v833
      %947 = vmatprep.subr.bf16.mxu0 %v838
      %948 = vmatpush1.bf16.msra.mxu0 %v837
      %949 = vmatprep.subr.bf16.mxu0 %v842
      %950 = vmatpush1.bf16.msra.mxu0 %v841
      %951 = vmatprep.subr.bf16.mxu0 %v846
      %952 = vmatpush1.bf16.msra.mxu0 %v845
      %953 = vmatprep.subr.bf16.mxu0 %v850
      %954 = vmatpush1.bf16.msra.mxu0 %v849
      %955 = vmatprep.subr.bf16.mxu0 %v854
      %956 = vmatpush1.bf16.msra.mxu0 %v853
      %957 = vmatprep.subr.bf16.mxu0 %v858
      %958 = vmatpush1.bf16.msra.mxu0 %v857
      %959 = vmatprep.subr.bf16.mxu0 %v862
      %960 = vmatpush1.bf16.msra.mxu0 %v861
      %961 = vmatprep.mubr.bf16.mxu0 %v530
      %962 = vmatmul.mubr.bf16.gmra.mrb[0].mxu0 %v529
      %v963 = vpop.f32.mrb[0].mxu0
      %v964 = vadd.f32 0.0, %v963
      %v965 = vpop.f32.mrb[0].mxu0
      %v966 = vadd.f32 0.0, %v965
      %v967 = vpop.f32.mrb[0].mxu0
      %v968 = vadd.f32 0.0, %v967
      %v969 = vpop.f32.mrb[0].mxu0
      %v970 = vadd.f32 0.0, %v969
      %971 = vmatprep.mubr.bf16.mxu0 %v532
      %972 = vmatmul.mubr.bf16.gmra.mrb[0].mxu0 %v531
      %v973 = vpop.f32.mrb[0].mxu0
      %v974 = vadd.f32 0.0, %v973
      %v975 = vpop.f32.mrb[0].mxu0
      %v976 = vadd.f32 0.0, %v975
      %v977 = vpop.f32.mrb[0].mxu0
      %v978 = vadd.f32 0.0, %v977
      %v979 = vpop.f32.mrb[0].mxu0
      %v980 = vadd.f32 0.0, %v979
      %981 = vmatprep.mubr.bf16.mxu0 %v534
      %982 = vmatmul.mubr.bf16.gmra.mrb[0].mxu0 %v533
      %v983 = vpop.f32.mrb[0].mxu0
      %v984 = vadd.f32 0.0, %v983
      %v985 = vpop.f32.mrb[0].mxu0
      %v986 = vadd.f32 0.0, %v985
      %v987 = vpop.f32.mrb[0].mxu0
      %v988 = vadd.f32 0.0, %v987
      %v989 = vpop.f32.mrb[0].mxu0
      %v990 = vadd.f32 0.0, %v989
      %991 = vmatprep.mubr.bf16.mxu0 %v536
      %992 = vmatmul.mubr.bf16.gmra.mrb[0].mxu0 %v535
      %v993 = vpop.f32.mrb[0].mxu0
      %v994 = vadd.f32 0.0, %v993
      %v995 = vpop.f32.mrb[0].mxu0
      %v996 = vadd.f32 0.0, %v995
      %v997 = vpop.f32.mrb[0].mxu0
      %v998 = vadd.f32 0.0, %v997
      %v999 = vpop.f32.mrb[0].mxu0
      %v1000 = vadd.f32 0.0, %v999
      %1001 = vmatprep.mubr.bf16.mxu0 %v538
      %1002 = vmatmul.mubr.bf16.gmra.mrb[0].mxu0 %v537
      %v1003 = vpop.f32.mrb[0].mxu0
      %v1004 = vadd.f32 0.0, %v1003
      %v1005 = vpop.f32.mrb[0].mxu0
      %v1006 = vadd.f32 0.0, %v1005
      %v1007 = vpop.f32.mrb[0].mxu0
      %v1008 = vadd.f32 0.0, %v1007
      %v1009 = vpop.f32.mrb[0].mxu0
      %v1010 = vadd.f32 0.0, %v1009
      %1011 = vmatprep.mubr.bf16.mxu0 %v540
      %1012 = vmatmul.mubr.bf16.gmra.mrb[0].mxu0 %v539
      %v1013 = vpop.f32.mrb[0].mxu0
      %v1014 = vadd.f32 0.0, %v1013
      %v1015 = vpop.f32.mrb[0].mxu0
      %v1016 = vadd.f32 0.0, %v1015
      %v1017 = vpop.f32.mrb[0].mxu0
      %v1018 = vadd.f32 0.0, %v1017
      %v1019 = vpop.f32.mrb[0].mxu0
      %v1020 = vadd.f32 0.0, %v1019
      %1021 = vmatprep.mubr.bf16.mxu0 %v542
      %1022 = vmatmul.mubr.bf16.gmra.mrb[0].mxu0 %v541
      %v1023 = vpop.f32.mrb[0].mxu0
      %v1024 = vadd.f32 0.0, %v1023
      %v1025 = vpop.f32.mrb[0].mxu0
      %v1026 = vadd.f32 0.0, %v1025
      %v1027 = vpop.f32.mrb[0].mxu0
      %v1028 = vadd.f32 0.0, %v1027
      %v1029 = vpop.f32.mrb[0].mxu0
      %v1030 = vadd.f32 0.0, %v1029
      %1031 = vmatprep.mubr.bf16.mxu0 %v544
      %1032 = vmatmul.mubr.bf16.gmra.mrb[0].mxu0 %v543
      %v1033 = vpop.f32.mrb[0].mxu0
      %v1034 = vadd.f32 0.0, %v1033
      %v1035 = vpop.f32.mrb[0].mxu0
      %v1036 = vadd.f32 0.0, %v1035
      %v1037 = vpop.f32.mrb[0].mxu0
      %v1038 = vadd.f32 0.0, %v1037
      %v1039 = vpop.f32.mrb[0].mxu0
      %v1040 = vadd.f32 0.0, %v1039
      %1041 = vdwg.mxu0
      %1042 = vmatprep.subr.bf16.mxu0 %v804
      %1043 = vmatpush1.bf16.msra.mxu0 %v803
      %1044 = vmatprep.subr.bf16.mxu0 %v808
      %1045 = vmatpush1.bf16.msra.mxu0 %v807
      %1046 = vmatprep.subr.bf16.mxu0 %v812
      %1047 = vmatpush1.bf16.msra.mxu0 %v811
      %1048 = vmatprep.subr.bf16.mxu0 %v816
      %1049 = vmatpush1.bf16.msra.mxu0 %v815
      %1050 = vmatprep.subr.bf16.mxu0 %v820
      %1051 = vmatpush1.bf16.msra.mxu0 %v819
      %1052 = vmatprep.subr.bf16.mxu0 %v824
      %1053 = vmatpush1.bf16.msra.mxu0 %v823
      %1054 = vmatprep.subr.bf16.mxu0 %v828
      %1055 = vmatpush1.bf16.msra.mxu0 %v827
      %1056 = vmatprep.subr.bf16.mxu0 %v832
      %1057 = vmatpush1.bf16.msra.mxu0 %v831
      %1058 = vmatprep.subr.bf16.mxu0 %v836
      %1059 = vmatpush1.bf16.msra.mxu0 %v835
      %1060 = vmatprep.subr.bf16.mxu0 %v840
      %1061 = vmatpush1.bf16.msra.mxu0 %v839
      %1062 = vmatprep.subr.bf16.mxu0 %v844
      %1063 = vmatpush1.bf16.msra.mxu0 %v843
      %1064 = vmatprep.subr.bf16.mxu0 %v848
      %1065 = vmatpush1.bf16.msra.mxu0 %v847
      %1066 = vmatprep.subr.bf16.mxu0 %v852
      %1067 = vmatpush1.bf16.msra.mxu0 %v851
      %1068 = vmatprep.subr.bf16.mxu0 %v856
      %1069 = vmatpush1.bf16.msra.mxu0 %v855
      %1070 = vmatprep.subr.bf16.mxu0 %v860
      %1071 = vmatpush1.bf16.msra.mxu0 %v859
      %1072 = vmatprep.subr.bf16.mxu0 %v864
      %1073 = vmatpush1.bf16.msra.mxu0 %v863
      %1074 = vmatprep.mubr.bf16.mxu0 %v530
      %1075 = vmatmul.mubr.bf16.gmra.mrb[0].mxu0 %v529
      %v1076 = vpop.f32.mrb[0].mxu0
      %v1077 = vadd.f32 0.0, %v1076
      %v1078 = vpop.f32.mrb[0].mxu0
      %v1079 = vadd.f32 0.0, %v1078
      %v1080 = vpop.f32.mrb[0].mxu0
      %v1081 = vadd.f32 0.0, %v1080
      %v1082 = vpop.f32.mrb[0].mxu0
      %v1083 = vadd.f32 0.0, %v1082
      %1084 = vmatprep.mubr.bf16.mxu0 %v532
      %1085 = vmatmul.mubr.bf16.gmra.mrb[0].mxu0 %v531
      %v1086 = vpop.f32.mrb[0].mxu0
      %v1087 = vadd.f32 0.0, %v1086
      %v1088 = vpop.f32.mrb[0].mxu0
      %v1089 = vadd.f32 0.0, %v1088
      %v1090 = vpop.f32.mrb[0].mxu0
      %v1091 = vadd.f32 0.0, %v1090
      %v1092 = vpop.f32.mrb[0].mxu0
      %v1093 = vadd.f32 0.0, %v1092
      %1094 = vmatprep.mubr.bf16.mxu0 %v534
      %1095 = vmatmul.mubr.bf16.gmra.mrb[0].mxu0 %v533
      %v1096 = vpop.f32.mrb[0].mxu0
      %v1097 = vadd.f32 0.0, %v1096
      %v1098 = vpop.f32.mrb[0].mxu0
      %v1099 = vadd.f32 0.0, %v1098
      %v1100 = vpop.f32.mrb[0].mxu0
      %v1101 = vadd.f32 0.0, %v1100
      %v1102 = vpop.f32.mrb[0].mxu0
      %v1103 = vadd.f32 0.0, %v1102
      %1104 = vmatprep.mubr.bf16.mxu0 %v536
      %1105 = vmatmul.mubr.bf16.gmra.mrb[0].mxu0 %v535
      %v1106 = vpop.f32.mrb[0].mxu0
      %v1107 = vadd.f32 0.0, %v1106
      %v1108 = vpop.f32.mrb[0].mxu0
      %v1109 = vadd.f32 0.0, %v1108
      %v1110 = vpop.f32.mrb[0].mxu0
      %v1111 = vadd.f32 0.0, %v1110
      %v1112 = vpop.f32.mrb[0].mxu0
      %v1113 = vadd.f32 0.0, %v1112
      %1114 = vmatprep.mubr.bf16.mxu0 %v538
      %1115 = vmatmul.mubr.bf16.gmra.mrb[0].mxu0 %v537
      %v1116 = vpop.f32.mrb[0].mxu0
      %v1117 = vadd.f32 0.0, %v1116
      %v1118 = vpop.f32.mrb[0].mxu0
      %v1119 = vadd.f32 0.0, %v1118
      %v1120 = vpop.f32.mrb[0].mxu0
      %v1121 = vadd.f32 0.0, %v1120
      %v1122 = vpop.f32.mrb[0].mxu0
      %v1123 = vadd.f32 0.0, %v1122
      %1124 = vmatprep.mubr.bf16.mxu0 %v540
      %1125 = vmatmul.mubr.bf16.gmra.mrb[0].mxu0 %v539
      %v1126 = vpop.f32.mrb[0].mxu0
      %v1127 = vadd.f32 0.0, %v1126
      %v1128 = vpop.f32.mrb[0].mxu0
      %v1129 = vadd.f32 0.0, %v1128
      %v1130 = vpop.f32.mrb[0].mxu0
      %v1131 = vadd.f32 0.0, %v1130
      %v1132 = vpop.f32.mrb[0].mxu0
      %v1133 = vadd.f32 0.0, %v1132
      %1134 = vmatprep.mubr.bf16.mxu0 %v542
      %1135 = vmatmul.mubr.bf16.gmra.mrb[0].mxu0 %v541
      %v1136 = vpop.f32.mrb[0].mxu0
      %v1137 = vadd.f32 0.0, %v1136
      %v1138 = vpop.f32.mrb[0].mxu0
      %v1139 = vadd.f32 0.0, %v1138
      %v1140 = vpop.f32.mrb[0].mxu0
      %v1141 = vadd.f32 0.0, %v1140
      %v1142 = vpop.f32.mrb[0].mxu0
      %v1143 = vadd.f32 0.0, %v1142
      %1144 = vmatprep.mubr.bf16.mxu0 %v544
      %1145 = vmatmul.mubr.bf16.gmra.mrb[0].mxu0 %v543
      %v1146 = vpop.f32.mrb[0].mxu0
      %v1147 = vadd.f32 0.0, %v1146
      %v1148 = vpop.f32.mrb[0].mxu0
      %v1149 = vadd.f32 0.0, %v1148
      %v1150 = vpop.f32.mrb[0].mxu0
      %v1151 = vadd.f32 0.0, %v1150
      %v1152 = vpop.f32.mrb[0].mxu0
      %v1153 = vadd.f32 0.0, %v1152
      %1154 = vdwg.mxu0
      %v1155 = vld [vmem:[%s343] sm:$0xf]
      %v1156 = vld [vmem:[%s343 + $0x4] sm:$0xf]
      %v1157 = vld [vmem:[%s343 + $0x8] sm:$0xf]
      %v1158 = vld [vmem:[%s343 + $0xc] sm:$0xf]
      %v1159 = vld [vmem:[%s343 + $0x10] sm:$0xf]
      %v1160 = vld [vmem:[%s343 + $0x14] sm:$0xf]
      %v1161 = vld [vmem:[%s343 + $0x18] sm:$0xf]
      %v1162 = vld [vmem:[%s343 + $0x1c] sm:$0xf]
      %v1163 = vld [vmem:[%s343 + $0x20] sm:$0xf]
      %v1164 = vld [vmem:[%s343 + $0x24] sm:$0xf]
      %v1165 = vld [vmem:[%s343 + $0x28] sm:$0xf]
      %v1166 = vld [vmem:[%s343 + $0x2c] sm:$0xf]
      %v1167 = vld [vmem:[%s343 + $0x30] sm:$0xf]
      %v1168 = vld [vmem:[%s343 + $0x34] sm:$0xf]
      %v1169 = vld [vmem:[%s343 + $0x38] sm:$0xf]
      %v1170 = vld [vmem:[%s343 + $0x3c] sm:$0xf]
      %v1171 = vpack.c.bf16 %v968, %v964
      %v1172 = vpack.c.bf16 %v970, %v966
      %v1173 = vpack.c.bf16 %v978, %v974
      %v1174 = vpack.c.bf16 %v980, %v976
      %v1175 = vpack.c.bf16 %v988, %v984
      %v1176 = vpack.c.bf16 %v990, %v986
      %v1177 = vpack.c.bf16 %v998, %v994
      %v1178 = vpack.c.bf16 %v1000, %v996
      %v1179 = vpack.c.bf16 %v1008, %v1004
      %v1180 = vpack.c.bf16 %v1010, %v1006
      %v1181 = vpack.c.bf16 %v1018, %v1014
      %v1182 = vpack.c.bf16 %v1020, %v1016
      %v1183 = vpack.c.bf16 %v1028, %v1024
      %v1184 = vpack.c.bf16 %v1030, %v1026
      %v1185 = vpack.c.bf16 %v1038, %v1034
      %v1186 = vpack.c.bf16 %v1040, %v1036
      %v1189 = vunpack.c.l.b16 %v1155
      %v1190 = vunpack.c.l.b16 %v1156
      %v1191 = vpack.c.b16 %v1190, %v1189
      %vm1192 = vcmask 130048
      %v1194 = vsel %vm1192, %v1191, 0
      %1196 = vmatprep.subr.bf16.mxu0 %v1172
      %1197 = vmatpush1.bf16.msra.mxu0 %v1171
      %1198 = vmatprep.subr.bf16.mxu0 0
      %1199 = vmatpush1.bf16.msra.mxu0 0
      %1200 = vmatprep.subr.bf16.mxu0 0
      %1201 = vmatpush1.bf16.msra.mxu0 0
      %1202 = vmatprep.subr.bf16.mxu0 0
      %1203 = vmatpush1.bf16.msra.mxu0 0
      %1204 = vmatprep.subr.bf16.mxu0 0
      %1205 = vmatpush1.bf16.msra.mxu0 0
      %1206 = vmatprep.subr.bf16.mxu0 0
      %1207 = vmatpush1.bf16.msra.mxu0 0
      %1208 = vmatprep.subr.bf16.mxu0 0
      %1209 = vmatpush1.bf16.msra.mxu0 0
      %1210 = vmatprep.subr.bf16.mxu0 0
      %1211 = vmatpush1.bf16.msra.mxu0 0
      %1212 = vmatprep.subr.bf16.mxu0 0
      %1213 = vmatpush1.bf16.msra.mxu0 0
      %1214 = vmatprep.subr.bf16.mxu0 0
      %1215 = vmatpush1.bf16.msra.mxu0 0
      %1216 = vmatprep.subr.bf16.mxu0 0
      %1217 = vmatpush1.bf16.msra.mxu0 0
      %1218 = vmatprep.subr.bf16.mxu0 0
      %1219 = vmatpush1.bf16.msra.mxu0 0
      %1220 = vmatprep.subr.bf16.mxu0 0
      %1221 = vmatpush1.bf16.msra.mxu0 0
      %1222 = vmatprep.subr.bf16.mxu0 0
      %1223 = vmatpush1.bf16.msra.mxu0 0
      %1224 = vmatprep.subr.bf16.mxu0 0
      %1225 = vmatpush1.bf16.msra.mxu0 0
      %1226 = vmatprep.subr.bf16.mxu0 0
      %1227 = vmatpush1.bf16.msra.mxu0 0
      %1228 = vmatprep.mubr.bf16.mxu0 0
      %1229 = vmatmul.mubr.bf16.gmra.mrb[0].mxu0 %v1194
      %v1230 = vpop.f32.mrb[0].mxu0
      %v1231 = vadd.f32 %v1077, %v1230
      %v1232 = vpop.f32.mrb[0].mxu0
      %v1233 = vadd.f32 %v1079, %v1232
      %v1234 = vpop.f32.mrb[0].mxu0
      %v1235 = vadd.f32 %v1081, %v1234
      %v1236 = vpop.f32.mrb[0].mxu0
      %v1237 = vadd.f32 %v1083, %v1236
      %1238 = vdwg.mxu0
      %v1241 = vunpack.c.l.b16 %v1157
      %v1242 = vunpack.c.l.b16 %v1158
      %v1243 = vpack.c.b16 %v1242, %v1241
      %v1245 = vsel %vm1192, %v1243, 0
      %1247 = vmatprep.subr.bf16.mxu0 %v1174
      %1248 = vmatpush1.bf16.msra.mxu0 %v1173
      %1249 = vmatprep.subr.bf16.mxu0 0
      %1250 = vmatpush1.bf16.msra.mxu0 0
      %1251 = vmatprep.subr.bf16.mxu0 0
      %1252 = vmatpush1.bf16.msra.mxu0 0
      %1253 = vmatprep.subr.bf16.mxu0 0
      %1254 = vmatpush1.bf16.msra.mxu0 0
      %1255 = vmatprep.subr.bf16.mxu0 0
      %1256 = vmatpush1.bf16.msra.mxu0 0
      %1257 = vmatprep.subr.bf16.mxu0 0
      %1258 = vmatpush1.bf16.msra.mxu0 0
      %1259 = vmatprep.subr.bf16.mxu0 0
      %1260 = vmatpush1.bf16.msra.mxu0 0
      %1261 = vmatprep.subr.bf16.mxu0 0
      %1262 = vmatpush1.bf16.msra.mxu0 0
      %1263 = vmatprep.subr.bf16.mxu0 0
      %1264 = vmatpush1.bf16.msra.mxu0 0
      %1265 = vmatprep.subr.bf16.mxu0 0
      %1266 = vmatpush1.bf16.msra.mxu0 0
      %1267 = vmatprep.subr.bf16.mxu0 0
      %1268 = vmatpush1.bf16.msra.mxu0 0
      %1269 = vmatprep.subr.bf16.mxu0 0
      %1270 = vmatpush1.bf16.msra.mxu0 0
      %1271 = vmatprep.subr.bf16.mxu0 0
      %1272 = vmatpush1.bf16.msra.mxu0 0
      %1273 = vmatprep.subr.bf16.mxu0 0
      %1274 = vmatpush1.bf16.msra.mxu0 0
      %1275 = vmatprep.subr.bf16.mxu0 0
      %1276 = vmatpush1.bf16.msra.mxu0 0
      %1277 = vmatprep.subr.bf16.mxu0 0
      %1278 = vmatpush1.bf16.msra.mxu0 0
      %1279 = vmatprep.mubr.bf16.mxu0 0
      %1280 = vmatmul.mubr.bf16.gmra.mrb[0].mxu0 %v1245
      %v1281 = vpop.f32.mrb[0].mxu0
      %v1282 = vadd.f32 %v1087, %v1281
      %v1283 = vpop.f32.mrb[0].mxu0
      %v1284 = vadd.f32 %v1089, %v1283
      %v1285 = vpop.f32.mrb[0].mxu0
      %v1286 = vadd.f32 %v1091, %v1285
      %v1287 = vpop.f32.mrb[0].mxu0
      %v1288 = vadd.f32 %v1093, %v1287
      %1289 = vdwg.mxu0
      %v1292 = vunpack.c.l.b16 %v1159
      %v1293 = vunpack.c.l.b16 %v1160
      %v1294 = vpack.c.b16 %v1293, %v1292
      %v1296 = vsel %vm1192, %v1294, 0
      %1298 = vmatprep.subr.bf16.mxu0 %v1176
      %1299 = vmatpush1.bf16.msra.mxu0 %v1175
      %1300 = vmatprep.subr.bf16.mxu0 0
      %1301 = vmatpush1.bf16.msra.mxu0 0
      %1302 = vmatprep.subr.bf16.mxu0 0
      %1303 = vmatpush1.bf16.msra.mxu0 0
      %1304 = vmatprep.subr.bf16.mxu0 0
      %1305 = vmatpush1.bf16.msra.mxu0 0
      %1306 = vmatprep.subr.bf16.mxu0 0
      %1307 = vmatpush1.bf16.msra.mxu0 0
      %1308 = vmatprep.subr.bf16.mxu0 0
      %1309 = vmatpush1.bf16.msra.mxu0 0
      %1310 = vmatprep.subr.bf16.mxu0 0
      %1311 = vmatpush1.bf16.msra.mxu0 0
      %1312 = vmatprep.subr.bf16.mxu0 0
      %1313 = vmatpush1.bf16.msra.mxu0 0
      %1314 = vmatprep.subr.bf16.mxu0 0
      %1315 = vmatpush1.bf16.msra.mxu0 0
      %1316 = vmatprep.subr.bf16.mxu0 0
      %1317 = vmatpush1.bf16.msra.mxu0 0
      %1318 = vmatprep.subr.bf16.mxu0 0
      %1319 = vmatpush1.bf16.msra.mxu0 0
      %1320 = vmatprep.subr.bf16.mxu0 0
      %1321 = vmatpush1.bf16.msra.mxu0 0
      %1322 = vmatprep.subr.bf16.mxu0 0
      %1323 = vmatpush1.bf16.msra.mxu0 0
      %1324 = vmatprep.subr.bf16.mxu0 0
      %1325 = vmatpush1.bf16.msra.mxu0 0
      %1326 = vmatprep.subr.bf16.mxu0 0
      %1327 = vmatpush1.bf16.msra.mxu0 0
      %1328 = vmatprep.subr.bf16.mxu0 0
      %1329 = vmatpush1.bf16.msra.mxu0 0
      %1330 = vmatprep.mubr.bf16.mxu0 0
      %1331 = vmatmul.mubr.bf16.gmra.mrb[0].mxu0 %v1296
      %v1332 = vpop.f32.mrb[0].mxu0
      %v1333 = vadd.f32 %v1097, %v1332
      %v1334 = vpop.f32.mrb[0].mxu0
      %v1335 = vadd.f32 %v1099, %v1334
      %v1336 = vpop.f32.mrb[0].mxu0
      %v1337 = vadd.f32 %v1101, %v1336
      %v1338 = vpop.f32.mrb[0].mxu0
      %v1339 = vadd.f32 %v1103, %v1338
      %1340 = vdwg.mxu0
      %v1343 = vunpack.c.l.b16 %v1161
      %v1344 = vunpack.c.l.b16 %v1162
      %v1345 = vpack.c.b16 %v1344, %v1343
      %v1347 = vsel %vm1192, %v1345, 0
      %1349 = vmatprep.subr.bf16.mxu0 %v1178
      %1350 = vmatpush1.bf16.msra.mxu0 %v1177
      %1351 = vmatprep.subr.bf16.mxu0 0
      %1352 = vmatpush1.bf16.msra.mxu0 0
      %1353 = vmatprep.subr.bf16.mxu0 0
      %1354 = vmatpush1.bf16.msra.mxu0 0
      %1355 = vmatprep.subr.bf16.mxu0 0
      %1356 = vmatpush1.bf16.msra.mxu0 0
      %1357 = vmatprep.subr.bf16.mxu0 0
      %1358 = vmatpush1.bf16.msra.mxu0 0
      %1359 = vmatprep.subr.bf16.mxu0 0
      %1360 = vmatpush1.bf16.msra.mxu0 0
      %1361 = vmatprep.subr.bf16.mxu0 0
      %1362 = vmatpush1.bf16.msra.mxu0 0
      %1363 = vmatprep.subr.bf16.mxu0 0
      %1364 = vmatpush1.bf16.msra.mxu0 0
      %1365 = vmatprep.subr.bf16.mxu0 0
      %1366 = vmatpush1.bf16.msra.mxu0 0
      %1367 = vmatprep.subr.bf16.mxu0 0
      %1368 = vmatpush1.bf16.msra.mxu0 0
      %1369 = vmatprep.subr.bf16.mxu0 0
      %1370 = vmatpush1.bf16.msra.mxu0 0
      %1371 = vmatprep.subr.bf16.mxu0 0
      %1372 = vmatpush1.bf16.msra.mxu0 0
      %1373 = vmatprep.subr.bf16.mxu0 0
      %1374 = vmatpush1.bf16.msra.mxu0 0
      %1375 = vmatprep.subr.bf16.mxu0 0
      %1376 = vmatpush1.bf16.msra.mxu0 0
      %1377 = vmatprep.subr.bf16.mxu0 0
      %1378 = vmatpush1.bf16.msra.mxu0 0
      %1379 = vmatprep.subr.bf16.mxu0 0
      %1380 = vmatpush1.bf16.msra.mxu0 0
      %1381 = vmatprep.mubr.bf16.mxu0 0
      %1382 = vmatmul.mubr.bf16.gmra.mrb[0].mxu0 %v1347
      %v1383 = vpop.f32.mrb[0].mxu0
      %v1384 = vadd.f32 %v1107, %v1383
      %v1385 = vpop.f32.mrb[0].mxu0
      %v1386 = vadd.f32 %v1109, %v1385
      %v1387 = vpop.f32.mrb[0].mxu0
      %v1388 = vadd.f32 %v1111, %v1387
      %v1389 = vpop.f32.mrb[0].mxu0
      %v1390 = vadd.f32 %v1113, %v1389
      %1391 = vdwg.mxu0
      %v1394 = vunpack.c.l.b16 %v1163
      %v1395 = vunpack.c.l.b16 %v1164
      %v1396 = vpack.c.b16 %v1395, %v1394
      %v1398 = vsel %vm1192, %v1396, 0
      %1400 = vmatprep.subr.bf16.mxu0 %v1180
      %1401 = vmatpush1.bf16.msra.mxu0 %v1179
      %1402 = vmatprep.subr.bf16.mxu0 0
      %1403 = vmatpush1.bf16.msra.mxu0 0
      %1404 = vmatprep.subr.bf16.mxu0 0
      %1405 = vmatpush1.bf16.msra.mxu0 0
      %1406 = vmatprep.subr.bf16.mxu0 0
      %1407 = vmatpush1.bf16.msra.mxu0 0
      %1408 = vmatprep.subr.bf16.mxu0 0
      %1409 = vmatpush1.bf16.msra.mxu0 0
      %1410 = vmatprep.subr.bf16.mxu0 0
      %1411 = vmatpush1.bf16.msra.mxu0 0
      %1412 = vmatprep.subr.bf16.mxu0 0
      %1413 = vmatpush1.bf16.msra.mxu0 0
      %1414 = vmatprep.subr.bf16.mxu0 0
      %1415 = vmatpush1.bf16.msra.mxu0 0
      %1416 = vmatprep.subr.bf16.mxu0 0
      %1417 = vmatpush1.bf16.msra.mxu0 0
      %1418 = vmatprep.subr.bf16.mxu0 0
      %1419 = vmatpush1.bf16.msra.mxu0 0
      %1420 = vmatprep.subr.bf16.mxu0 0
      %1421 = vmatpush1.bf16.msra.mxu0 0
      %1422 = vmatprep.subr.bf16.mxu0 0
      %1423 = vmatpush1.bf16.msra.mxu0 0
      %1424 = vmatprep.subr.bf16.mxu0 0
      %1425 = vmatpush1.bf16.msra.mxu0 0
      %1426 = vmatprep.subr.bf16.mxu0 0
      %1427 = vmatpush1.bf16.msra.mxu0 0
      %1428 = vmatprep.subr.bf16.mxu0 0
      %1429 = vmatpush1.bf16.msra.mxu0 0
      %1430 = vmatprep.subr.bf16.mxu0 0
      %1431 = vmatpush1.bf16.msra.mxu0 0
      %1432 = vmatprep.mubr.bf16.mxu0 0
      %1433 = vmatmul.mubr.bf16.gmra.mrb[0].mxu0 %v1398
      %v1434 = vpop.f32.mrb[0].mxu0
      %v1435 = vadd.f32 %v1117, %v1434
      %v1436 = vpop.f32.mrb[0].mxu0
      %v1437 = vadd.f32 %v1119, %v1436
      %v1438 = vpop.f32.mrb[0].mxu0
      %v1439 = vadd.f32 %v1121, %v1438
      %v1440 = vpop.f32.mrb[0].mxu0
      %v1441 = vadd.f32 %v1123, %v1440
      %1442 = vdwg.mxu0
      %v1445 = vunpack.c.l.b16 %v1165
      %v1446 = vunpack.c.l.b16 %v1166
      %v1447 = vpack.c.b16 %v1446, %v1445
      %v1449 = vsel %vm1192, %v1447, 0
      %1451 = vmatprep.subr.bf16.mxu0 %v1182
      %1452 = vmatpush1.bf16.msra.mxu0 %v1181
      %1453 = vmatprep.subr.bf16.mxu0 0
      %1454 = vmatpush1.bf16.msra.mxu0 0
      %1455 = vmatprep.subr.bf16.mxu0 0
      %1456 = vmatpush1.bf16.msra.mxu0 0
      %1457 = vmatprep.subr.bf16.mxu0 0
      %1458 = vmatpush1.bf16.msra.mxu0 0
      %1459 = vmatprep.subr.bf16.mxu0 0
      %1460 = vmatpush1.bf16.msra.mxu0 0
      %1461 = vmatprep.subr.bf16.mxu0 0
      %1462 = vmatpush1.bf16.msra.mxu0 0
      %1463 = vmatprep.subr.bf16.mxu0 0
      %1464 = vmatpush1.bf16.msra.mxu0 0
      %1465 = vmatprep.subr.bf16.mxu0 0
      %1466 = vmatpush1.bf16.msra.mxu0 0
      %1467 = vmatprep.subr.bf16.mxu0 0
      %1468 = vmatpush1.bf16.msra.mxu0 0
      %1469 = vmatprep.subr.bf16.mxu0 0
      %1470 = vmatpush1.bf16.msra.mxu0 0
      %1471 = vmatprep.subr.bf16.mxu0 0
      %1472 = vmatpush1.bf16.msra.mxu0 0
      %1473 = vmatprep.subr.bf16.mxu0 0
      %1474 = vmatpush1.bf16.msra.mxu0 0
      %1475 = vmatprep.subr.bf16.mxu0 0
      %1476 = vmatpush1.bf16.msra.mxu0 0
      %1477 = vmatprep.subr.bf16.mxu0 0
      %1478 = vmatpush1.bf16.msra.mxu0 0
      %1479 = vmatprep.subr.bf16.mxu0 0
      %1480 = vmatpush1.bf16.msra.mxu0 0
      %1481 = vmatprep.subr.bf16.mxu0 0
      %1482 = vmatpush1.bf16.msra.mxu0 0
      %1483 = vmatprep.mubr.bf16.mxu0 0
      %1484 = vmatmul.mubr.bf16.gmra.mrb[0].mxu0 %v1449
      %v1485 = vpop.f32.mrb[0].mxu0
      %v1486 = vadd.f32 %v1127, %v1485
      %v1487 = vpop.f32.mrb[0].mxu0
      %v1488 = vadd.f32 %v1129, %v1487
      %v1489 = vpop.f32.mrb[0].mxu0
      %v1490 = vadd.f32 %v1131, %v1489
      %v1491 = vpop.f32.mrb[0].mxu0
      %v1492 = vadd.f32 %v1133, %v1491
      %1493 = vdwg.mxu0
      %v1496 = vunpack.c.l.b16 %v1167
      %v1497 = vunpack.c.l.b16 %v1168
      %v1498 = vpack.c.b16 %v1497, %v1496
      %v1500 = vsel %vm1192, %v1498, 0
      %1502 = vmatprep.subr.bf16.mxu0 %v1184
      %1503 = vmatpush1.bf16.msra.mxu0 %v1183
      %1504 = vmatprep.subr.bf16.mxu0 0
      %1505 = vmatpush1.bf16.msra.mxu0 0
      %1506 = vmatprep.subr.bf16.mxu0 0
      %1507 = vmatpush1.bf16.msra.mxu0 0
      %1508 = vmatprep.subr.bf16.mxu0 0
      %1509 = vmatpush1.bf16.msra.mxu0 0
      %1510 = vmatprep.subr.bf16.mxu0 0
      %1511 = vmatpush1.bf16.msra.mxu0 0
      %1512 = vmatprep.subr.bf16.mxu0 0
      %1513 = vmatpush1.bf16.msra.mxu0 0
      %1514 = vmatprep.subr.bf16.mxu0 0
      %1515 = vmatpush1.bf16.msra.mxu0 0
      %1516 = vmatprep.subr.bf16.mxu0 0
      %1517 = vmatpush1.bf16.msra.mxu0 0
      %1518 = vmatprep.subr.bf16.mxu0 0
      %1519 = vmatpush1.bf16.msra.mxu0 0
      %1520 = vmatprep.subr.bf16.mxu0 0
      %1521 = vmatpush1.bf16.msra.mxu0 0
      %1522 = vmatprep.subr.bf16.mxu0 0
      %1523 = vmatpush1.bf16.msra.mxu0 0
      %1524 = vmatprep.subr.bf16.mxu0 0
      %1525 = vmatpush1.bf16.msra.mxu0 0
      %1526 = vmatprep.subr.bf16.mxu0 0
      %1527 = vmatpush1.bf16.msra.mxu0 0
      %1528 = vmatprep.subr.bf16.mxu0 0
      %1529 = vmatpush1.bf16.msra.mxu0 0
      %1530 = vmatprep.subr.bf16.mxu0 0
      %1531 = vmatpush1.bf16.msra.mxu0 0
      %1532 = vmatprep.subr.bf16.mxu0 0
      %1533 = vmatpush1.bf16.msra.mxu0 0
      %1534 = vmatprep.mubr.bf16.mxu0 0
      %1535 = vmatmul.mubr.bf16.gmra.mrb[0].mxu0 %v1500
      %v1536 = vpop.f32.mrb[0].mxu0
      %v1537 = vadd.f32 %v1137, %v1536
      %v1538 = vpop.f32.mrb[0].mxu0
      %v1539 = vadd.f32 %v1139, %v1538
      %v1540 = vpop.f32.mrb[0].mxu0
      %v1541 = vadd.f32 %v1141, %v1540
      %v1542 = vpop.f32.mrb[0].mxu0
      %v1543 = vadd.f32 %v1143, %v1542
      %1544 = vdwg.mxu0
      %v1547 = vunpack.c.l.b16 %v1169
      %v1548 = vunpack.c.l.b16 %v1170
      %v1549 = vpack.c.b16 %v1548, %v1547
      %v1551 = vsel %vm1192, %v1549, 0
      %1553 = vmatprep.subr.bf16.mxu0 %v1186
      %1554 = vmatpush1.bf16.msra.mxu0 %v1185
      %1555 = vmatprep.subr.bf16.mxu0 0
      %1556 = vmatpush1.bf16.msra.mxu0 0
      %1557 = vmatprep.subr.bf16.mxu0 0
      %1558 = vmatpush1.bf16.msra.mxu0 0
      %1559 = vmatprep.subr.bf16.mxu0 0
      %1560 = vmatpush1.bf16.msra.mxu0 0
      %1561 = vmatprep.subr.bf16.mxu0 0
      %1562 = vmatpush1.bf16.msra.mxu0 0
      %1563 = vmatprep.subr.bf16.mxu0 0
      %1564 = vmatpush1.bf16.msra.mxu0 0
      %1565 = vmatprep.subr.bf16.mxu0 0
      %1566 = vmatpush1.bf16.msra.mxu0 0
      %1567 = vmatprep.subr.bf16.mxu0 0
      %1568 = vmatpush1.bf16.msra.mxu0 0
      %1569 = vmatprep.subr.bf16.mxu0 0
      %1570 = vmatpush1.bf16.msra.mxu0 0
      %1571 = vmatprep.subr.bf16.mxu0 0
      %1572 = vmatpush1.bf16.msra.mxu0 0
      %1573 = vmatprep.subr.bf16.mxu0 0
      %1574 = vmatpush1.bf16.msra.mxu0 0
      %1575 = vmatprep.subr.bf16.mxu0 0
      %1576 = vmatpush1.bf16.msra.mxu0 0
      %1577 = vmatprep.subr.bf16.mxu0 0
      %1578 = vmatpush1.bf16.msra.mxu0 0
      %1579 = vmatprep.subr.bf16.mxu0 0
      %1580 = vmatpush1.bf16.msra.mxu0 0
      %1581 = vmatprep.subr.bf16.mxu0 0
      %1582 = vmatpush1.bf16.msra.mxu0 0
      %1583 = vmatprep.subr.bf16.mxu0 0
      %1584 = vmatpush1.bf16.msra.mxu0 0
      %1585 = vmatprep.mubr.bf16.mxu0 0
      %1586 = vmatmul.mubr.bf16.gmra.mrb[0].mxu0 %v1551
      %v1587 = vpop.f32.mrb[0].mxu0
      %v1588 = vadd.f32 %v1147, %v1587
      %v1589 = vpop.f32.mrb[0].mxu0
      %v1590 = vadd.f32 %v1149, %v1589
      %v1591 = vpop.f32.mrb[0].mxu0
      %v1592 = vadd.f32 %v1151, %v1591
      %v1593 = vpop.f32.mrb[0].mxu0
      %v1594 = vadd.f32 %v1153, %v1593
      %1595 = vdwg.mxu0
      %v1596 = vld [vmem:[%s5] sm:$0x3]
      %v1597 = vmul.f32 %v1596, 2.0
      %v1599 = vlaneseq
      %v1600 = vshrl.u32 %v1599, 7
      %v1601 = vsub.s32 0, %v1600
      %v1602 = vrot.slane %v1597, %v1601
      %v1603 = vlaneseq
      %v1604 = vshrl.u32 %v1603, 7
      %v1605 = vsub.s32 1, %v1604
      %v1606 = vrot.slane %v1597, %v1605
      %v1609 = vadd.f32 %v1231, %v1602
      %v1610 = vadd.f32 %v1233, %v1606
      %v1611 = vadd.f32 %v1235, %v1602
      %v1612 = vadd.f32 %v1237, %v1606
      %v1613 = vadd.f32 %v1282, %v1602
      %v1614 = vadd.f32 %v1284, %v1606
      %v1615 = vadd.f32 %v1286, %v1602
      %v1616 = vadd.f32 %v1288, %v1606
      %v1617 = vadd.f32 %v1333, %v1602
      %v1618 = vadd.f32 %v1335, %v1606
      %v1619 = vadd.f32 %v1337, %v1602
      %v1620 = vadd.f32 %v1339, %v1606
      %v1621 = vadd.f32 %v1384, %v1602
      %v1622 = vadd.f32 %v1386, %v1606
      %v1623 = vadd.f32 %v1388, %v1602
      %v1624 = vadd.f32 %v1390, %v1606
      %v1625 = vadd.f32 %v1435, %v1602
      %v1626 = vadd.f32 %v1437, %v1606
      %v1627 = vadd.f32 %v1439, %v1602
      %v1628 = vadd.f32 %v1441, %v1606
      %v1629 = vadd.f32 %v1486, %v1602
      %v1630 = vadd.f32 %v1488, %v1606
      %v1631 = vadd.f32 %v1490, %v1602
      %v1632 = vadd.f32 %v1492, %v1606
      %v1633 = vadd.f32 %v1537, %v1602
      %v1634 = vadd.f32 %v1539, %v1606
      %v1635 = vadd.f32 %v1541, %v1602
      %v1636 = vadd.f32 %v1543, %v1606
      %v1637 = vadd.f32 %v1588, %v1602
      %v1638 = vadd.f32 %v1590, %v1606
      %v1639 = vadd.f32 %v1592, %v1602
      %v1640 = vadd.f32 %v1594, %v1606
      %v1641 = vpack.c.bf16 %v1611, %v1609
      %v1642 = vpack.c.bf16 %v1612, %v1610
      %v1643 = vpack.c.bf16 %v1615, %v1613
      %v1644 = vpack.c.bf16 %v1616, %v1614
      %v1645 = vpack.c.bf16 %v1619, %v1617
      %v1646 = vpack.c.bf16 %v1620, %v1618
      %v1647 = vpack.c.bf16 %v1623, %v1621
      %v1648 = vpack.c.bf16 %v1624, %v1622
      %v1649 = vpack.c.bf16 %v1627, %v1625
      %v1650 = vpack.c.bf16 %v1628, %v1626
      %v1651 = vpack.c.bf16 %v1631, %v1629
      %v1652 = vpack.c.bf16 %v1632, %v1630
      %v1653 = vpack.c.bf16 %v1635, %v1633
      %v1654 = vpack.c.bf16 %v1636, %v1634
      %v1655 = vpack.c.bf16 %v1639, %v1637
      %v1656 = vpack.c.bf16 %v1640, %v1638
      %v1673 = vunpack.c.l.b16 %v1641
      %v1674 = vunpack.c.l.b16 %v1642
      %v1675 = vunpack.c.h.b16 %v1641
      %v1676 = vunpack.c.h.b16 %v1642
      %v1677 = vunpack.c.l.b16 %v1643
      %v1678 = vunpack.c.l.b16 %v1644
      %v1679 = vunpack.c.h.b16 %v1643
      %v1680 = vunpack.c.h.b16 %v1644
      %v1681 = vunpack.c.l.b16 %v1645
      %v1682 = vunpack.c.l.b16 %v1646
      %v1683 = vunpack.c.h.b16 %v1645
      %v1684 = vunpack.c.h.b16 %v1646
      %v1685 = vunpack.c.l.b16 %v1647
      %v1686 = vunpack.c.l.b16 %v1648
      %v1687 = vunpack.c.h.b16 %v1647
      %v1688 = vunpack.c.h.b16 %v1648
      %v1689 = vunpack.c.l.b16 %v1649
      %v1690 = vunpack.c.l.b16 %v1650
      %v1691 = vunpack.c.h.b16 %v1649
      %v1692 = vunpack.c.h.b16 %v1650
      %v1693 = vunpack.c.l.b16 %v1651
      %v1694 = vunpack.c.l.b16 %v1652
      %v1695 = vunpack.c.h.b16 %v1651
      %v1696 = vunpack.c.h.b16 %v1652
      %v1697 = vunpack.c.l.b16 %v1653
      %v1698 = vunpack.c.l.b16 %v1654
      %v1699 = vunpack.c.h.b16 %v1653
      %v1700 = vunpack.c.h.b16 %v1654
      %v1701 = vunpack.c.l.b16 %v1655
      %v1702 = vunpack.c.l.b16 %v1656
      %v1703 = vunpack.c.h.b16 %v1655
      %v1704 = vunpack.c.h.b16 %v1656
      %v1705 = vpack.c.b16 %v1674, %v1673
      %v1706 = vpack.c.b16 %v1676, %v1675
      %v1707 = vpack.c.b16 %v1678, %v1677
      %v1708 = vpack.c.b16 %v1680, %v1679
      %v1709 = vpack.c.b16 %v1682, %v1681
      %v1710 = vpack.c.b16 %v1684, %v1683
      %v1711 = vpack.c.b16 %v1686, %v1685
      %v1712 = vpack.c.b16 %v1688, %v1687
      %v1713 = vpack.c.b16 %v1690, %v1689
      %v1714 = vpack.c.b16 %v1692, %v1691
      %v1715 = vpack.c.b16 %v1694, %v1693
      %v1716 = vpack.c.b16 %v1696, %v1695
      %v1717 = vpack.c.b16 %v1698, %v1697
      %v1718 = vpack.c.b16 %v1700, %v1699
      %v1719 = vpack.c.b16 %v1702, %v1701
      %v1720 = vpack.c.b16 %v1704, %v1703
      %1737 = vst [vmem:[%s350] sm:$0xff] %v1705
      %1738 = vst [vmem:[%s350 + $0x8] sm:$0xff] %v1706
      %1739 = vst [vmem:[%s350 + $0x10] sm:$0xff] %v1707
      %1740 = vst [vmem:[%s350 + $0x18] sm:$0xff] %v1708
      %1741 = vst [vmem:[%s350 + $0x20] sm:$0xff] %v1709
      %1742 = vst [vmem:[%s350 + $0x28] sm:$0xff] %v1710
      %1743 = vst [vmem:[%s350 + $0x30] sm:$0xff] %v1711
      %1744 = vst [vmem:[%s350 + $0x38] sm:$0xff] %v1712
      %1745 = vst [vmem:[%s350 + $0x40] sm:$0xff] %v1713
      %1746 = vst [vmem:[%s350 + $0x48] sm:$0xff] %v1714
      %1747 = vst [vmem:[%s350 + $0x50] sm:$0xff] %v1715
      %1748 = vst [vmem:[%s350 + $0x58] sm:$0xff] %v1716
      %1749 = vst [vmem:[%s350 + $0x60] sm:$0xff] %v1717
      %1750 = vst [vmem:[%s350 + $0x68] sm:$0xff] %v1718
      %1751 = vst [vmem:[%s350 + $0x70] sm:$0xff] %v1719
      %1752 = vst [vmem:[%s350 + $0x78] sm:$0xff] %v1720
      %s1753 = smul.u32 %s20, 8
      %v1754 = vlaneseq
      %v1755 = vshrl.u32 %v1754, 7
      %v1756 = vadd.s32 %v1755, 8
      %v1757 = vadd.s32 %v1755, 16
      %v1758 = vadd.s32 %v1755, 24
      %v1759 = vadd.s32 %v1755, 32
      %v1760 = vadd.s32 %v1755, 40
      %v1761 = vadd.s32 %v1755, 48
      %v1762 = vadd.s32 %v1755, 56
      %v1763 = vadd.s32 %v1755, 64
      %v1764 = vadd.s32 %v1755, 72
      %v1765 = vadd.s32 %v1755, 80
      %v1766 = vadd.s32 %v1755, 88
      %v1767 = vadd.s32 %v1755, 96
      %v1768 = vadd.s32 %v1755, 104
      %v1769 = vadd.s32 %v1755, 112
      %v1770 = vadd.s32 %v1755, 120
      %s1771 = ssub.s32 12, %s1753
      %s1772 = smul.u32 %s1771, 16
      %v1773 = vstv %s1772
      %vm1774 = vcmp.lt.s32.totalorder %v1755, %v1773
      %vm1775 = vcmp.lt.s32.totalorder %v1756, %v1773
      %vm1776 = vcmp.lt.s32.totalorder %v1757, %v1773
      %vm1777 = vcmp.lt.s32.totalorder %v1758, %v1773
      %vm1778 = vcmp.lt.s32.totalorder %v1759, %v1773
      %vm1779 = vcmp.lt.s32.totalorder %v1760, %v1773
      %vm1780 = vcmp.lt.s32.totalorder %v1761, %v1773
      %vm1781 = vcmp.lt.s32.totalorder %v1762, %v1773
      %vm1782 = vcmp.lt.s32.totalorder %v1763, %v1773
      %vm1783 = vcmp.lt.s32.totalorder %v1764, %v1773
      %vm1784 = vcmp.lt.s32.totalorder %v1765, %v1773
      %vm1785 = vcmp.lt.s32.totalorder %v1766, %v1773
      %vm1786 = vcmp.lt.s32.totalorder %v1767, %v1773
      %vm1787 = vcmp.lt.s32.totalorder %v1768, %v1773
      %vm1788 = vcmp.lt.s32.totalorder %v1769, %v1773
      %vm1789 = vcmp.lt.s32.totalorder %v1770, %v1773
      %v1790 = vsel %vm1774, 1, 0
      %v1791 = vsel %vm1775, 1, 0
      %v1792 = vsel %vm1776, 1, 0
      %v1793 = vsel %vm1777, 1, 0
      %v1794 = vsel %vm1778, 1, 0
      %v1795 = vsel %vm1779, 1, 0
      %v1796 = vsel %vm1780, 1, 0
      %v1797 = vsel %vm1781, 1, 0
      %v1798 = vsel %vm1782, 1, 0
      %v1799 = vsel %vm1783, 1, 0
      %v1800 = vsel %vm1784, 1, 0
      %v1801 = vsel %vm1785, 1, 0
      %v1802 = vsel %vm1786, 1, 0
      %v1803 = vsel %vm1787, 1, 0
      %v1804 = vsel %vm1788, 1, 0
      %v1805 = vsel %vm1789, 1, 0
      %v1806 = vcvt.s32.f32 %v1790
      %v1807 = vcvt.s32.f32 %v1791
      %v1808 = vcvt.s32.f32 %v1792
      %v1809 = vcvt.s32.f32 %v1793
      %v1810 = vcvt.s32.f32 %v1794
      %v1811 = vcvt.s32.f32 %v1795
      %v1812 = vcvt.s32.f32 %v1796
      %v1813 = vcvt.s32.f32 %v1797
      %v1814 = vcvt.s32.f32 %v1798
      %v1815 = vcvt.s32.f32 %v1799
      %v1816 = vcvt.s32.f32 %v1800
      %v1817 = vcvt.s32.f32 %v1801
      %v1818 = vcvt.s32.f32 %v1802
      %v1819 = vcvt.s32.f32 %v1803
      %v1820 = vcvt.s32.f32 %v1804
      %v1821 = vcvt.s32.f32 %v1805
      %v1822 = vmul.f32 %v1609, %v1806
      %v1823 = vmul.f32 %v1610, %v1806
      %v1824 = vmul.f32 %v1611, %v1807
      %v1825 = vmul.f32 %v1612, %v1807
      %v1826 = vmul.f32 %v1613, %v1808
      %v1827 = vmul.f32 %v1614, %v1808
      %v1828 = vmul.f32 %v1615, %v1809
      %v1829 = vmul.f32 %v1616, %v1809
      %v1830 = vmul.f32 %v1617, %v1810
      %v1831 = vmul.f32 %v1618, %v1810
      %v1832 = vmul.f32 %v1619, %v1811
      %v1833 = vmul.f32 %v1620, %v1811
      %v1834 = vmul.f32 %v1621, %v1812
      %v1835 = vmul.f32 %v1622, %v1812
      %v1836 = vmul.f32 %v1623, %v1813
      %v1837 = vmul.f32 %v1624, %v1813
      %v1838 = vmul.f32 %v1625, %v1814
      %v1839 = vmul.f32 %v1626, %v1814
      %v1840 = vmul.f32 %v1627, %v1815
      %v1841 = vmul.f32 %v1628, %v1815
      %v1842 = vmul.f32 %v1629, %v1816
      %v1843 = vmul.f32 %v1630, %v1816
      %v1844 = vmul.f32 %v1631, %v1817
      %v1845 = vmul.f32 %v1632, %v1817
      %v1846 = vmul.f32 %v1633, %v1818
      %v1847 = vmul.f32 %v1634, %v1818
      %v1848 = vmul.f32 %v1635, %v1819
      %v1849 = vmul.f32 %v1636, %v1819
      %v1850 = vmul.f32 %v1637, %v1820
      %v1851 = vmul.f32 %v1638, %v1820
      %v1852 = vmul.f32 %v1639, %v1821
      %v1853 = vmul.f32 %v1640, %v1821
      %v1854 = vadd.f32 %v1822, %v1824
      %v1855 = vadd.f32 %v1854, %v1826
      %v1856 = vadd.f32 %v1855, %v1828
      %v1857 = vadd.f32 %v1856, %v1830
      %v1858 = vadd.f32 %v1857, %v1832
      %v1859 = vadd.f32 %v1858, %v1834
      %v1860 = vadd.f32 %v1859, %v1836
      %v1861 = vadd.f32 %v1860, %v1838
      %v1862 = vadd.f32 %v1861, %v1840
      %v1863 = vadd.f32 %v1862, %v1842
      %v1864 = vadd.f32 %v1863, %v1844
      %v1865 = vadd.f32 %v1864, %v1846
      %v1866 = vadd.f32 %v1865, %v1848
      %v1867 = vadd.f32 %v1866, %v1850
      %v1868 = vadd.f32 %v1867, %v1852
      %v1869 = vrot.slane %v1868, 4
      %v1870 = vadd.f32 %v1868, %v1869
      %v1871 = vrot.slane %v1870, 2
      %v1872 = vadd.f32 %v1870, %v1871
      %v1873 = vrot.slane %v1872, 1
      %v1874 = vadd.f32 %v1872, %v1873
      %v1875 = vadd.f32 %v1823, %v1825
      %v1876 = vadd.f32 %v1875, %v1827
      %v1877 = vadd.f32 %v1876, %v1829
      %v1878 = vadd.f32 %v1877, %v1831
      %v1879 = vadd.f32 %v1878, %v1833
      %v1880 = vadd.f32 %v1879, %v1835
      %v1881 = vadd.f32 %v1880, %v1837
      %v1882 = vadd.f32 %v1881, %v1839
      %v1883 = vadd.f32 %v1882, %v1841
      %v1884 = vadd.f32 %v1883, %v1843
      %v1885 = vadd.f32 %v1884, %v1845
      %v1886 = vadd.f32 %v1885, %v1847
      %v1887 = vadd.f32 %v1886, %v1849
      %v1888 = vadd.f32 %v1887, %v1851
      %v1889 = vadd.f32 %v1888, %v1853
      %v1890 = vrot.slane %v1889, 4
      %v1891 = vadd.f32 %v1889, %v1890
      %v1892 = vrot.slane %v1891, 2
      %v1893 = vadd.f32 %v1891, %v1892
      %v1894 = vrot.slane %v1893, 1
      %v1895 = vadd.f32 %v1893, %v1894
      %v1898 = vcombine.low %v1874, %v1895
      %v1900 = vunpack.c.l.s4 1966171168
      %v1901 = vunpack.c.0.s8 %v1900
      %v1902 = vlaneseq
      %v1903 = vshrl.u32 %v1902, 7
      %v1904 = vsub.s32 %v1901, %v1903
      %v1905 = vrot.slane %v1898, %v1904
      %v1907 = vunpack.c.l.s4 1966171168
      %v1908 = vunpack.c.0.s8 %v1907
      %v1909 = vlaneseq
      %v1910 = vshrl.u32 %v1909, 7
      %v1911 = vsub.s32 %v1908, %v1910
      %v1912 = vrot.slane %v1905, %v1911
      %v1914 = vlaneseq
      %vm1915 = vcmp.ge.s32.totalorder %v1914, 0
      %vm1916 = vcmp.lt.s32.totalorder %v1914, 256
      %vm1917 = vmand %vm1915, %vm1916
      %1918 = vst.msk [vmem:[%s355] sm:$0x3] %vm1917, %v1912
      %v1919 = vmul.f32 %v1822, %v1609
      %v1920 = vmul.f32 %v1823, %v1610
      %v1921 = vmul.f32 %v1824, %v1611
      %v1922 = vmul.f32 %v1825, %v1612
      %v1923 = vmul.f32 %v1826, %v1613
      %v1924 = vmul.f32 %v1827, %v1614
      %v1925 = vmul.f32 %v1828, %v1615
      %v1926 = vmul.f32 %v1829, %v1616
      %v1927 = vmul.f32 %v1830, %v1617
      %v1928 = vmul.f32 %v1831, %v1618
      %v1929 = vmul.f32 %v1832, %v1619
      %v1930 = vmul.f32 %v1833, %v1620
      %v1931 = vmul.f32 %v1834, %v1621
      %v1932 = vmul.f32 %v1835, %v1622
      %v1933 = vmul.f32 %v1836, %v1623
      %v1934 = vmul.f32 %v1837, %v1624
      %v1935 = vmul.f32 %v1838, %v1625
      %v1936 = vmul.f32 %v1839, %v1626
      %v1937 = vmul.f32 %v1840, %v1627
      %v1938 = vmul.f32 %v1841, %v1628
      %v1939 = vmul.f32 %v1842, %v1629
      %v1940 = vmul.f32 %v1843, %v1630
      %v1941 = vmul.f32 %v1844, %v1631
      %v1942 = vmul.f32 %v1845, %v1632
      %v1943 = vmul.f32 %v1846, %v1633
      %v1944 = vmul.f32 %v1847, %v1634
      %v1945 = vmul.f32 %v1848, %v1635
      %v1946 = vmul.f32 %v1849, %v1636
      %v1947 = vmul.f32 %v1850, %v1637
      %v1948 = vmul.f32 %v1851, %v1638
      %v1949 = vmul.f32 %v1852, %v1639
      %v1950 = vmul.f32 %v1853, %v1640
      %v1951 = vadd.f32 %v1919, %v1921
      %v1952 = vadd.f32 %v1951, %v1923
      %v1953 = vadd.f32 %v1952, %v1925
      %v1954 = vadd.f32 %v1953, %v1927
      %v1955 = vadd.f32 %v1954, %v1929
      %v1956 = vadd.f32 %v1955, %v1931
      %v1957 = vadd.f32 %v1956, %v1933
      %v1958 = vadd.f32 %v1957, %v1935
      %v1959 = vadd.f32 %v1958, %v1937
      %v1960 = vadd.f32 %v1959, %v1939
      %v1961 = vadd.f32 %v1960, %v1941
      %v1962 = vadd.f32 %v1961, %v1943
      %v1963 = vadd.f32 %v1962, %v1945
      %v1964 = vadd.f32 %v1963, %v1947
      %v1965 = vadd.f32 %v1964, %v1949
      %v1966 = vrot.slane %v1965, 4
      %v1967 = vadd.f32 %v1965, %v1966
      %v1968 = vrot.slane %v1967, 2
      %v1969 = vadd.f32 %v1967, %v1968
      %v1970 = vrot.slane %v1969, 1
      %v1971 = vadd.f32 %v1969, %v1970
      %v1972 = vadd.f32 %v1920, %v1922
      %v1973 = vadd.f32 %v1972, %v1924
      %v1974 = vadd.f32 %v1973, %v1926
      %v1975 = vadd.f32 %v1974, %v1928
      %v1976 = vadd.f32 %v1975, %v1930
      %v1977 = vadd.f32 %v1976, %v1932
      %v1978 = vadd.f32 %v1977, %v1934
      %v1979 = vadd.f32 %v1978, %v1936
      %v1980 = vadd.f32 %v1979, %v1938
      %v1981 = vadd.f32 %v1980, %v1940
      %v1982 = vadd.f32 %v1981, %v1942
      %v1983 = vadd.f32 %v1982, %v1944
      %v1984 = vadd.f32 %v1983, %v1946
      %v1985 = vadd.f32 %v1984, %v1948
      %v1986 = vadd.f32 %v1985, %v1950
      %v1987 = vrot.slane %v1986, 4
      %v1988 = vadd.f32 %v1986, %v1987
      %v1989 = vrot.slane %v1988, 2
      %v1990 = vadd.f32 %v1988, %v1989
      %v1991 = vrot.slane %v1990, 1
      %v1992 = vadd.f32 %v1990, %v1991
      %v1995 = vcombine.low %v1971, %v1992
      %v1997 = vunpack.c.l.s4 1966171168
      %v1998 = vunpack.c.0.s8 %v1997
      %v1999 = vlaneseq
      %v2000 = vshrl.u32 %v1999, 7
      %v2001 = vsub.s32 %v1998, %v2000
      %v2002 = vrot.slane %v1995, %v2001
      %v2004 = vunpack.c.l.s4 1966171168
      %v2005 = vunpack.c.0.s8 %v2004
      %v2006 = vlaneseq
      %v2007 = vshrl.u32 %v2006, 7
      %v2008 = vsub.s32 %v2005, %v2007
      %v2009 = vrot.slane %v2002, %v2008
      %2011 = vst.msk [vmem:[%s359] sm:$0x3] %vm1917, %v2009
      %s2012 = smul.u32 8, %s20
      %p2013 = scmp.lt.s32.totalorder %s2012, 15
      %s2014 = scalar_select %p2013, %s2012, 15
      %s2015 = smul.addr %s2014, 4
      %s2016 = smul.addr %s2015, 4
      %s2017 = scalar_lea.vmem %s6, %s2016
      %p2018 = scmp.lt.s32.totalorder %s20, 1
      %s2019 = scalar_select %p2018, %s20, 1
      %s2020 = smul.addr %s2019, 2
      %s2021 = scalar_lea.vmem %s7, %s2020
      %p2022 = scmp.lt.s32.totalorder %s20, 1
      %s2023 = scalar_select %p2022, %s20, 1
      %s2024 = smul.addr %s2023, 2
      %s2025 = scalar_lea.vmem %s8, %s2024
      // Predicated region
      $region45: #{joint_level_forward.6} parent=43 // pred_check
        %p2026 = pneg %p174
      $region46: #{joint_level_forward.6} parent=43 // pred_check_branch
        %2028 = sbr.rel (%p2026) target = $region48
      $region47: #{joint_level_forward.6} parent=43 // pred_region
        %s2029 = smul.u32 8, %s20
      $region48: #{joint_level_forward.6} parent=43 // pred_fallthru
        _
      // Predicated region
      $region49: #{joint_level_forward.6} parent=43 // pred_check
        %p2030 = pneg %p200
      $region50: #{joint_level_forward.6} parent=43 // pred_check_branch
        %2032 = sbr.rel (%p2030) target = $region52
      $region51: #{joint_level_forward.6} parent=43 // pred_region
        _
      $region52: #{joint_level_forward.6} parent=43 // pred_fallthru
        _
      // Predicated region
      $region53: #{joint_level_forward.6} parent=43 // pred_check
        %p2033 = pneg %p226
      $region54: #{joint_level_forward.6} parent=43 // pred_check_branch
        %2035 = sbr.rel (%p2033) target = $region56
      $region55: #{joint_level_forward.6} parent=43 // pred_region
        _
      $region56: #{joint_level_forward.6} parent=43 // pred_fallthru
        _
    $region44: #{joint_level_forward.6} parent=5 // pred_fallthru
      _
    %p2036 = scmp.le.s32.totalorder 2, %s15
    // Predicated region
    $region57: #{joint_level_forward.6} parent=5 // pred_check
      %p2037 = pneg %p2036
    $region58: #{joint_level_forward.6} parent=5 // pred_check_branch
      %2039 = sbr.rel (%p2037) target = $region60
    $region59: #{joint_level_forward.6} parent=5 // pred_region
      %s2040 = ssub.s32 %s15, 2
      // Predicated region
      $region61: #{joint_level_forward.6} parent=59 // pred_check
        %p2041 = pneg %p180
      $region62: #{joint_level_forward.6} parent=59 // pred_check_branch
        %2043 = sbr.rel (%p2041) target = $region64
      $region63: #{joint_level_forward.6} parent=59 // pred_region
        %s2044 = smul.u32 8, %s21
        %p2045 = scmp.lt.s32.totalorder %s2044, 15
        %s2046 = scalar_select %p2045, %s2044, 15
        %s2047 = smul.addr %s2046, 4
        %s2048 = smul.addr %s2047, 4
        %s2049 = scalar_lea.vmem %s6, %s2048
      $region64: #{joint_level_forward.6} parent=59 // pred_fallthru
        _
      // Predicated region
      $region65: #{joint_level_forward.6} parent=59 // pred_check
        %p2050 = pneg %p206
      $region66: #{joint_level_forward.6} parent=59 // pred_check_branch
        %2052 = sbr.rel (%p2050) target = $region68
      $region67: #{joint_level_forward.6} parent=59 // pred_region
        %p2053 = scmp.lt.s32.totalorder %s21, 1
        %s2054 = scalar_select %p2053, %s21, 1
        %s2055 = smul.addr %s2054, 2
        %s2056 = scalar_lea.vmem %s7, %s2055
      $region68: #{joint_level_forward.6} parent=59 // pred_fallthru
        _
      // Predicated region
      $region69: #{joint_level_forward.6} parent=59 // pred_check
        %p2057 = pneg %p232
      $region70: #{joint_level_forward.6} parent=59 // pred_check_branch
        %2059 = sbr.rel (%p2057) target = $region72
      $region71: #{joint_level_forward.6} parent=59 // pred_region
        %p2060 = scmp.lt.s32.totalorder %s21, 1
        %s2061 = scalar_select %p2060, %s21, 1
        %s2062 = smul.addr %s2061, 2
        %s2063 = scalar_lea.vmem %s8, %s2062
      $region72: #{joint_level_forward.6} parent=59 // pred_fallthru
        _
    $region60: #{joint_level_forward.6} parent=5 // pred_fallthru
      _
  $region6: #{joint_level_forward.6} parent=0 // loop_footer
    %s19 = sadd.s32 1, %s15
  $region7: #{joint_level_forward.6} parent=0 // loop_footer_branch
    %14 = sbr.rel target = $region3
  $region8: #{joint_level_forward.6} parent=0 // loop_exit
    _

// kernel: joint_level_forward.7
$region0: #{joint_level_forward.7}
  #allocation0 [shape = 'u32[]', space=smem, size = 0x4, offset = 0x4, fixed_abs, tag = 'smem constant byte address 0x4 - core index']
  #allocation1 [shape = 'u32[144,128]{1,0:T(1,128)}', space=vmem, size = 0x12000, scoped, tag = 'internal scratch']
  %s0 = inlined_call_operand.vmem [shape: bf16[16,16,256], index: 0, kind: input, shape index: {}]
  %s1 = inlined_call_operand.vmem [shape: f32[1,256], index: 1, kind: input, shape index: {}]
  %s2 = inlined_call_operand.vmem [shape: f32[1,256], index: 2, kind: input, shape index: {}]
  %s3 = inlined_call_operand.vmem [shape: f32[16,16,256], index: 3, kind: output, shape index: {}]
  %s4 = sld [smem:[#allocation0]]
  $region22: #{joint_level_forward.7} parent=0
    _
  %s6 = ssub.s32 1, %s4
  %s7 = scalar_select 0, %s6, %s4
  // Predicated region
  $region2: #{joint_level_forward.7} parent=0 // pred_check
    _
  $region3: #{joint_level_forward.7} parent=0 // pred_check_branch
    %9 = sbr.rel (0) target = $region5
  $region4: #{joint_level_forward.7} parent=0 // pred_region
    _
  $region5: #{joint_level_forward.7} parent=0 // pred_fallthru
    _
  // Predicated region
  $region6: #{joint_level_forward.7} parent=0 // pred_check
    _
  $region7: #{joint_level_forward.7} parent=0 // pred_check_branch
    %11 = sbr.rel (0) target = $region9
  $region8: #{joint_level_forward.7} parent=0 // pred_region
    _
  $region9: #{joint_level_forward.7} parent=0 // pred_fallthru
    _
  // Predicated region
  $region10: #{joint_level_forward.7} parent=0 // pred_check
    _
  $region11: #{joint_level_forward.7} parent=0 // pred_check_branch
    %13 = sbr.rel (0) target = $region13
  $region12: #{joint_level_forward.7} parent=0 // pred_region
    _
  $region13: #{joint_level_forward.7} parent=0 // pred_fallthru
    _
  %v14 = vld [vmem:[%s0] sm:$0xff]
  %v15 = vld [vmem:[%s0 + $0x8] sm:$0xff]
  %v16 = vld [vmem:[%s0 + $0x10] sm:$0xff]
  %v17 = vld [vmem:[%s0 + $0x18] sm:$0xff]
  %v18 = vld [vmem:[%s0 + $0x20] sm:$0xff]
  %v19 = vld [vmem:[%s0 + $0x28] sm:$0xff]
  %v20 = vld [vmem:[%s0 + $0x30] sm:$0xff]
  %v21 = vld [vmem:[%s0 + $0x38] sm:$0xff]
  %v22 = vld [vmem:[%s0 + $0x40] sm:$0xff]
  %v23 = vld [vmem:[%s0 + $0x48] sm:$0xff]
  %v24 = vld [vmem:[%s0 + $0x50] sm:$0xff]
  %v25 = vld [vmem:[%s0 + $0x58] sm:$0xff]
  %v26 = vld [vmem:[%s0 + $0x60] sm:$0xff]
  %v27 = vld [vmem:[%s0 + $0x68] sm:$0xff]
  %v28 = vld [vmem:[%s0 + $0x70] sm:$0xff]
  %v29 = vld [vmem:[%s0 + $0x78] sm:$0xff]
  %v30 = vld [vmem:[%s0 + $0x80] sm:$0xff]
  %v31 = vld [vmem:[%s0 + $0x88] sm:$0xff]
  %v32 = vld [vmem:[%s0 + $0x90] sm:$0xff]
  %v33 = vld [vmem:[%s0 + $0x98] sm:$0xff]
  %v34 = vld [vmem:[%s0 + $0xa0] sm:$0xff]
  %v35 = vld [vmem:[%s0 + $0xa8] sm:$0xff]
  %v36 = vld [vmem:[%s0 + $0xb0] sm:$0xff]
  %v37 = vld [vmem:[%s0 + $0xb8] sm:$0xff]
  %v38 = vld [vmem:[%s0 + $0xc0] sm:$0xff]
  %v39 = vld [vmem:[%s0 + $0xc8] sm:$0xff]
  %v40 = vld [vmem:[%s0 + $0xd0] sm:$0xff]
  %v41 = vld [vmem:[%s0 + $0xd8] sm:$0xff]
  %v42 = vld [vmem:[%s0 + $0xe0] sm:$0xff]
  %v43 = vld [vmem:[%s0 + $0xe8] sm:$0xff]
  %v44 = vld [vmem:[%s0 + $0xf0] sm:$0xff]
  %v45 = vld [vmem:[%s0 + $0xf8] sm:$0xff]
  %v46 = vunpack.c.l.bf16 %v14
  %v47 = vunpack.c.h.bf16 %v14
  %v48 = vunpack.c.l.bf16 %v15
  %v49 = vunpack.c.h.bf16 %v15
  %v50 = vunpack.c.l.bf16 %v16
  %v51 = vunpack.c.h.bf16 %v16
  %v52 = vunpack.c.l.bf16 %v17
  %v53 = vunpack.c.h.bf16 %v17
  %v54 = vunpack.c.l.bf16 %v18
  %v55 = vunpack.c.h.bf16 %v18
  %v56 = vunpack.c.l.bf16 %v19
  %v57 = vunpack.c.h.bf16 %v19
  %v58 = vunpack.c.l.bf16 %v20
  %v59 = vunpack.c.h.bf16 %v20
  %v60 = vunpack.c.l.bf16 %v21
  %v61 = vunpack.c.h.bf16 %v21
  %v62 = vunpack.c.l.bf16 %v22
  %v63 = vunpack.c.h.bf16 %v22
  %v64 = vunpack.c.l.bf16 %v23
  %v65 = vunpack.c.h.bf16 %v23
  %v66 = vunpack.c.l.bf16 %v24
  %v67 = vunpack.c.h.bf16 %v24
  %v68 = vunpack.c.l.bf16 %v25
  %v69 = vunpack.c.h.bf16 %v25
  %v70 = vunpack.c.l.bf16 %v26
  %v71 = vunpack.c.h.bf16 %v26
  %v72 = vunpack.c.l.bf16 %v27
  %v73 = vunpack.c.h.bf16 %v27
  %v74 = vunpack.c.l.bf16 %v28
  %v75 = vunpack.c.h.bf16 %v28
  %v76 = vunpack.c.l.bf16 %v29
  %v77 = vunpack.c.h.bf16 %v29
  %v78 = vunpack.c.l.bf16 %v30
  %v79 = vunpack.c.h.bf16 %v30
  %v80 = vunpack.c.l.bf16 %v31
  %v81 = vunpack.c.h.bf16 %v31
  %v82 = vunpack.c.l.bf16 %v32
  %v83 = vunpack.c.h.bf16 %v32
  %v84 = vunpack.c.l.bf16 %v33
  %v85 = vunpack.c.h.bf16 %v33
  %v86 = vunpack.c.l.bf16 %v34
  %v87 = vunpack.c.h.bf16 %v34
  %v88 = vunpack.c.l.bf16 %v35
  %v89 = vunpack.c.h.bf16 %v35
  %v90 = vunpack.c.l.bf16 %v36
  %v91 = vunpack.c.h.bf16 %v36
  %v92 = vunpack.c.l.bf16 %v37
  %v93 = vunpack.c.h.bf16 %v37
  %v94 = vunpack.c.l.bf16 %v38
  %v95 = vunpack.c.h.bf16 %v38
  %v96 = vunpack.c.l.bf16 %v39
  %v97 = vunpack.c.h.bf16 %v39
  %v98 = vunpack.c.l.bf16 %v40
  %v99 = vunpack.c.h.bf16 %v40
  %v100 = vunpack.c.l.bf16 %v41
  %v101 = vunpack.c.h.bf16 %v41
  %v102 = vunpack.c.l.bf16 %v42
  %v103 = vunpack.c.h.bf16 %v42
  %v104 = vunpack.c.l.bf16 %v43
  %v105 = vunpack.c.h.bf16 %v43
  %v106 = vunpack.c.l.bf16 %v44
  %v107 = vunpack.c.h.bf16 %v44
  %v108 = vunpack.c.l.bf16 %v45
  %v109 = vunpack.c.h.bf16 %v45
  %v110 = vld [vmem:[%s1] sm:$0x3]
  %v112 = vlaneseq
  %v113 = vshrl.u32 %v112, 7
  %v114 = vsub.s32 0, %v113
  %v115 = vrot.slane %v110, %v114
  %v116 = vlaneseq
  %v117 = vshrl.u32 %v116, 7
  %v118 = vsub.s32 1, %v117
  %v119 = vrot.slane %v110, %v118
  %v122 = vmul.f32 %v46, %v115
  %v123 = vmul.f32 %v47, %v119
  %v124 = vmul.f32 %v48, %v115
  %v125 = vmul.f32 %v49, %v119
  %v126 = vmul.f32 %v50, %v115
  %v127 = vmul.f32 %v51, %v119
  %v128 = vmul.f32 %v52, %v115
  %v129 = vmul.f32 %v53, %v119
  %v130 = vmul.f32 %v54, %v115
  %v131 = vmul.f32 %v55, %v119
  %v132 = vmul.f32 %v56, %v115
  %v133 = vmul.f32 %v57, %v119
  %v134 = vmul.f32 %v58, %v115
  %v135 = vmul.f32 %v59, %v119
  %v136 = vmul.f32 %v60, %v115
  %v137 = vmul.f32 %v61, %v119
  %v138 = vmul.f32 %v62, %v115
  %v139 = vmul.f32 %v63, %v119
  %v140 = vmul.f32 %v64, %v115
  %v141 = vmul.f32 %v65, %v119
  %v142 = vmul.f32 %v66, %v115
  %v143 = vmul.f32 %v67, %v119
  %v144 = vmul.f32 %v68, %v115
  %v145 = vmul.f32 %v69, %v119
  %v146 = vmul.f32 %v70, %v115
  %v147 = vmul.f32 %v71, %v119
  %v148 = vmul.f32 %v72, %v115
  %v149 = vmul.f32 %v73, %v119
  %v150 = vmul.f32 %v74, %v115
  %v151 = vmul.f32 %v75, %v119
  %v152 = vmul.f32 %v76, %v115
  %v153 = vmul.f32 %v77, %v119
  %v154 = vmul.f32 %v78, %v115
  %v155 = vmul.f32 %v79, %v119
  %v156 = vmul.f32 %v80, %v115
  %v157 = vmul.f32 %v81, %v119
  %v158 = vmul.f32 %v82, %v115
  %v159 = vmul.f32 %v83, %v119
  %v160 = vmul.f32 %v84, %v115
  %v161 = vmul.f32 %v85, %v119
  %v162 = vmul.f32 %v86, %v115
  %v163 = vmul.f32 %v87, %v119
  %v164 = vmul.f32 %v88, %v115
  %v165 = vmul.f32 %v89, %v119
  %v166 = vmul.f32 %v90, %v115
  %v167 = vmul.f32 %v91, %v119
  %v168 = vmul.f32 %v92, %v115
  %v169 = vmul.f32 %v93, %v119
  %v170 = vmul.f32 %v94, %v115
  %v171 = vmul.f32 %v95, %v119
  %v172 = vmul.f32 %v96, %v115
  %v173 = vmul.f32 %v97, %v119
  %v174 = vmul.f32 %v98, %v115
  %v175 = vmul.f32 %v99, %v119
  %v176 = vmul.f32 %v100, %v115
  %v177 = vmul.f32 %v101, %v119
  %v178 = vmul.f32 %v102, %v115
  %v179 = vmul.f32 %v103, %v119
  %v180 = vmul.f32 %v104, %v115
  %v181 = vmul.f32 %v105, %v119
  %v182 = vmul.f32 %v106, %v115
  %v183 = vmul.f32 %v107, %v119
  %v184 = vmul.f32 %v108, %v115
  %v185 = vmul.f32 %v109, %v119
  %v186 = vld [vmem:[%s2] sm:$0x3]
  %v188 = vlaneseq
  %v189 = vshrl.u32 %v188, 7
  %v190 = vsub.s32 0, %v189
  %v191 = vrot.slane %v186, %v190
  %v192 = vlaneseq
  %v193 = vshrl.u32 %v192, 7
  %v194 = vsub.s32 1, %v193
  %v195 = vrot.slane %v186, %v194
  %v198 = vadd.f32 %v122, %v191
  %v199 = vadd.f32 %v123, %v195
  %v200 = vadd.f32 %v124, %v191
  %v201 = vadd.f32 %v125, %v195
  %v202 = vadd.f32 %v126, %v191
  %v203 = vadd.f32 %v127, %v195
  %v204 = vadd.f32 %v128, %v191
  %v205 = vadd.f32 %v129, %v195
  %v206 = vadd.f32 %v130, %v191
  %v207 = vadd.f32 %v131, %v195
  %v208 = vadd.f32 %v132, %v191
  %v209 = vadd.f32 %v133, %v195
  %v210 = vadd.f32 %v134, %v191
  %v211 = vadd.f32 %v135, %v195
  %v212 = vadd.f32 %v136, %v191
  %v213 = vadd.f32 %v137, %v195
  %v214 = vadd.f32 %v138, %v191
  %v215 = vadd.f32 %v139, %v195
  %v216 = vadd.f32 %v140, %v191
  %v217 = vadd.f32 %v141, %v195
  %v218 = vadd.f32 %v142, %v191
  %v219 = vadd.f32 %v143, %v195
  %v220 = vadd.f32 %v144, %v191
  %v221 = vadd.f32 %v145, %v195
  %v222 = vadd.f32 %v146, %v191
  %v223 = vadd.f32 %v147, %v195
  %v224 = vadd.f32 %v148, %v191
  %v225 = vadd.f32 %v149, %v195
  %v226 = vadd.f32 %v150, %v191
  %v227 = vadd.f32 %v151, %v195
  %v228 = vadd.f32 %v152, %v191
  %v229 = vadd.f32 %v153, %v195
  %v230 = vadd.f32 %v154, %v191
  %v231 = vadd.f32 %v155, %v195
  %v232 = vadd.f32 %v156, %v191
  %v233 = vadd.f32 %v157, %v195
  %v234 = vadd.f32 %v158, %v191
  %v235 = vadd.f32 %v159, %v195
  %v236 = vadd.f32 %v160, %v191
  %v237 = vadd.f32 %v161, %v195
  %v238 = vadd.f32 %v162, %v191
  %v239 = vadd.f32 %v163, %v195
  %v240 = vadd.f32 %v164, %v191
  %v241 = vadd.f32 %v165, %v195
  %v242 = vadd.f32 %v166, %v191
  %v243 = vadd.f32 %v167, %v195
  %v244 = vadd.f32 %v168, %v191
  %v245 = vadd.f32 %v169, %v195
  %v246 = vadd.f32 %v170, %v191
  %v247 = vadd.f32 %v171, %v195
  %v248 = vadd.f32 %v172, %v191
  %v249 = vadd.f32 %v173, %v195
  %v250 = vadd.f32 %v174, %v191
  %v251 = vadd.f32 %v175, %v195
  %v252 = vadd.f32 %v176, %v191
  %v253 = vadd.f32 %v177, %v195
  %v254 = vadd.f32 %v178, %v191
  %v255 = vadd.f32 %v179, %v195
  %v256 = vadd.f32 %v180, %v191
  %v257 = vadd.f32 %v181, %v195
  %v258 = vadd.f32 %v182, %v191
  %v259 = vadd.f32 %v183, %v195
  %v260 = vadd.f32 %v184, %v191
  %v261 = vadd.f32 %v185, %v195
  %v262 = vmax.f32 %v198, 0.0
  %v263 = vmax.f32 %v199, 0.0
  %v264 = vmax.f32 %v200, 0.0
  %v265 = vmax.f32 %v201, 0.0
  %v266 = vmax.f32 %v202, 0.0
  %v267 = vmax.f32 %v203, 0.0
  %v268 = vmax.f32 %v204, 0.0
  %v269 = vmax.f32 %v205, 0.0
  %v270 = vmax.f32 %v206, 0.0
  %v271 = vmax.f32 %v207, 0.0
  %v272 = vmax.f32 %v208, 0.0
  %v273 = vmax.f32 %v209, 0.0
  %v274 = vmax.f32 %v210, 0.0
  %v275 = vmax.f32 %v211, 0.0
  %v276 = vmax.f32 %v212, 0.0
  %v277 = vmax.f32 %v213, 0.0
  %v278 = vmax.f32 %v214, 0.0
  %v279 = vmax.f32 %v215, 0.0
  %v280 = vmax.f32 %v216, 0.0
  %v281 = vmax.f32 %v217, 0.0
  %v282 = vmax.f32 %v218, 0.0
  %v283 = vmax.f32 %v219, 0.0
  %v284 = vmax.f32 %v220, 0.0
  %v285 = vmax.f32 %v221, 0.0
  %v286 = vmax.f32 %v222, 0.0
  %v287 = vmax.f32 %v223, 0.0
  %v288 = vmax.f32 %v224, 0.0
  %v289 = vmax.f32 %v225, 0.0
  %v290 = vmax.f32 %v226, 0.0
  %v291 = vmax.f32 %v227, 0.0
  %v292 = vmax.f32 %v228, 0.0
  %v293 = vmax.f32 %v229, 0.0
  %v294 = vmax.f32 %v230, 0.0
  %v295 = vmax.f32 %v231, 0.0
  %v296 = vmax.f32 %v232, 0.0
  %v297 = vmax.f32 %v233, 0.0
  %v298 = vmax.f32 %v234, 0.0
  %v299 = vmax.f32 %v235, 0.0
  %v300 = vmax.f32 %v236, 0.0
  %v301 = vmax.f32 %v237, 0.0
  %v302 = vmax.f32 %v238, 0.0
  %v303 = vmax.f32 %v239, 0.0
  %v304 = vmax.f32 %v240, 0.0
  %v305 = vmax.f32 %v241, 0.0
  %v306 = vmax.f32 %v242, 0.0
  %v307 = vmax.f32 %v243, 0.0
  %v308 = vmax.f32 %v244, 0.0
  %v309 = vmax.f32 %v245, 0.0
  %v310 = vmax.f32 %v246, 0.0
  %v311 = vmax.f32 %v247, 0.0
  %v312 = vmax.f32 %v248, 0.0
  %v313 = vmax.f32 %v249, 0.0
  %v314 = vmax.f32 %v250, 0.0
  %v315 = vmax.f32 %v251, 0.0
  %v316 = vmax.f32 %v252, 0.0
  %v317 = vmax.f32 %v253, 0.0
  %v318 = vmax.f32 %v254, 0.0
  %v319 = vmax.f32 %v255, 0.0
  %v320 = vmax.f32 %v256, 0.0
  %v321 = vmax.f32 %v257, 0.0
  %v322 = vmax.f32 %v258, 0.0
  %v323 = vmax.f32 %v259, 0.0
  %v324 = vmax.f32 %v260, 0.0
  %v325 = vmax.f32 %v261, 0.0
  %326 = vst [vmem:[%s3] sm:$0xff] %v262
  %327 = vst [vmem:[%s3 + $0x8] sm:$0xff] %v263
  %328 = vst [vmem:[%s3 + $0x10] sm:$0xff] %v264
  %329 = vst [vmem:[%s3 + $0x18] sm:$0xff] %v265
  %330 = vst [vmem:[%s3 + $0x20] sm:$0xff] %v266
  %331 = vst [vmem:[%s3 + $0x28] sm:$0xff] %v267
  %332 = vst [vmem:[%s3 + $0x30] sm:$0xff] %v268
  %333 = vst [vmem:[%s3 + $0x38] sm:$0xff] %v269
  %334 = vst [vmem:[%s3 + $0x40] sm:$0xff] %v270
  %335 = vst [vmem:[%s3 + $0x48] sm:$0xff] %v271
  %336 = vst [vmem:[%s3 + $0x50] sm:$0xff] %v272
  %337 = vst [vmem:[%s3 + $0x58] sm:$0xff] %v273
  %338 = vst [vmem:[%s3 + $0x60] sm:$0xff] %v274
  %339 = vst [vmem:[%s3 + $0x68] sm:$0xff] %v275
  %340 = vst [vmem:[%s3 + $0x70] sm:$0xff] %v276
  %341 = vst [vmem:[%s3 + $0x78] sm:$0xff] %v277
  %342 = vst [vmem:[%s3 + $0x80] sm:$0xff] %v278
  %343 = vst [vmem:[%s3 + $0x88] sm:$0xff] %v279
  %344 = vst [vmem:[%s3 + $0x90] sm:$0xff] %v280
  %345 = vst [vmem:[%s3 + $0x98] sm:$0xff] %v281
  %346 = vst [vmem:[%s3 + $0xa0] sm:$0xff] %v282
  %347 = vst [vmem:[%s3 + $0xa8] sm:$0xff] %v283
  %348 = vst [vmem:[%s3 + $0xb0] sm:$0xff] %v284
  %349 = vst [vmem:[%s3 + $0xb8] sm:$0xff] %v285
  %350 = vst [vmem:[%s3 + $0xc0] sm:$0xff] %v286
  %351 = vst [vmem:[%s3 + $0xc8] sm:$0xff] %v287
  %352 = vst [vmem:[%s3 + $0xd0] sm:$0xff] %v288
  %353 = vst [vmem:[%s3 + $0xd8] sm:$0xff] %v289
  %354 = vst [vmem:[%s3 + $0xe0] sm:$0xff] %v290
  %355 = vst [vmem:[%s3 + $0xe8] sm:$0xff] %v291
  %356 = vst [vmem:[%s3 + $0xf0] sm:$0xff] %v292
  %357 = vst [vmem:[%s3 + $0xf8] sm:$0xff] %v293
  %358 = vst [vmem:[%s3 + $0x100] sm:$0xff] %v294
  %359 = vst [vmem:[%s3 + $0x108] sm:$0xff] %v295
  %360 = vst [vmem:[%s3 + $0x110] sm:$0xff] %v296
  %361 = vst [vmem:[%s3 + $0x118] sm:$0xff] %v297
  %362 = vst [vmem:[%s3 + $0x120] sm:$0xff] %v298
  %363 = vst [vmem:[%s3 + $0x128] sm:$0xff] %v299
  %364 = vst [vmem:[%s3 + $0x130] sm:$0xff] %v300
  %365 = vst [vmem:[%s3 + $0x138] sm:$0xff] %v301
  %366 = vst [vmem:[%s3 + $0x140] sm:$0xff] %v302
  %367 = vst [vmem:[%s3 + $0x148] sm:$0xff] %v303
  %368 = vst [vmem:[%s3 + $0x150] sm:$0xff] %v304
  %369 = vst [vmem:[%s3 + $0x158] sm:$0xff] %v305
  %370 = vst [vmem:[%s3 + $0x160] sm:$0xff] %v306
  %371 = vst [vmem:[%s3 + $0x168] sm:$0xff] %v307
  %372 = vst [vmem:[%s3 + $0x170] sm:$0xff] %v308
  %373 = vst [vmem:[%s3 + $0x178] sm:$0xff] %v309
  %374 = vst [vmem:[%s3 + $0x180] sm:$0xff] %v310
  %375 = vst [vmem:[%s3 + $0x188] sm:$0xff] %v311
  %376 = vst [vmem:[%s3 + $0x190] sm:$0xff] %v312
  %377 = vst [vmem:[%s3 + $0x198] sm:$0xff] %v313
  %378 = vst [vmem:[%s3 + $0x1a0] sm:$0xff] %v314
  %379 = vst [vmem:[%s3 + $0x1a8] sm:$0xff] %v315
  %380 = vst [vmem:[%s3 + $0x1b0] sm:$0xff] %v316
  %381 = vst [vmem:[%s3 + $0x1b8] sm:$0xff] %v317
  %382 = vst [vmem:[%s3 + $0x1c0] sm:$0xff] %v318
  %383 = vst [vmem:[%s3 + $0x1c8] sm:$0xff] %v319
  %384 = vst [vmem:[%s3 + $0x1d0] sm:$0xff] %v320
  %385 = vst [vmem:[%s3 + $0x1d8] sm:$0xff] %v321
  %386 = vst [vmem:[%s3 + $0x1e0] sm:$0xff] %v322
  %387 = vst [vmem:[%s3 + $0x1e8] sm:$0xff] %v323
  %388 = vst [vmem:[%s3 + $0x1f0] sm:$0xff] %v324
  %389 = vst [vmem:[%s3 + $0x1f8] sm:$0xff] %v325
  // Predicated region
  $region14: #{joint_level_forward.7} parent=0 // pred_check
    _
  $region15: #{joint_level_forward.7} parent=0 // pred_check_branch
    %391 = sbr.rel (0) target = $region17
  $region16: #{joint_level_forward.7} parent=0 // pred_region
    _
  $region17: #{joint_level_forward.7} parent=0 // pred_fallthru
    _
  // Predicated region
  $region18: #{joint_level_forward.7} parent=0 // pred_check
    _
  $region19: #{joint_level_forward.7} parent=0 // pred_check_branch
    %393 = sbr.rel (0) target = $region21
  $region20: #{joint_level_forward.7} parent=0 // pred_region
    _
  $region21: #{joint_level_forward.7} parent=0 // pred_fallthru
    _

// kernel: joint_level_forward.4
$region0: #{joint_level_forward.4}
  #allocation0 [shape = 'u32[]', space=smem, size = 0x4, offset = 0x4, fixed_abs, tag = 'smem constant byte address 0x4 - core index']
  #allocation1 [shape = 'u32[144,128]{1,0:T(1,128)}', space=vmem, size = 0x12000, scoped, tag = 'internal scratch']
  %s0 = inlined_call_operand.vmem [shape: bf16[16,16,64], index: 0, kind: input, shape index: {}]
  %s1 = inlined_call_operand.vmem [shape: bf16[64,768], index: 1, kind: input, shape index: {}]
  %s2 = inlined_call_operand.vmem [shape: f32[1,16,768], index: 2, kind: input, shape index: {}]
  %s3 = inlined_call_operand.vmem [shape: f32[1,128], index: 3, kind: input, shape index: {}]
  %s4 = inlined_call_operand.vmem [shape: bf16[16,16,16], index: 4, kind: output, shape index: {0}]
  %s5 = inlined_call_operand.vmem [shape: bf16[16,16,128], index: 5, kind: output, shape index: {1}]
  %s6 = inlined_call_operand.vmem [shape: f32[2,1,128], index: 6, kind: output, shape index: {2}]
  %s7 = inlined_call_operand.vmem [shape: f32[2,1,128], index: 7, kind: output, shape index: {3}]
  %8 = xla_tuple %s4, %s5, %s6, %s7
  %s9 = sld [smem:[#allocation0]]
  $region73: #{joint_level_forward.4} parent=0
    _
  %s11 = ssub.s32 1, %s9
  %s12 = scalar_select 0, %s11, %s9
  loop: start=0, step=1, limit=4
  $region2: #{joint_level_forward.4} parent=0 // loop_pre_header
    _
  $region3: #{joint_level_forward.4} parent=0 // loop_header
    %s14 = sphi 0, %s18
    %p15 = scmp.ge.s32.totalorder %s14, 4
    %s24 = sphi 0, %s26
    %s27 = sphi 0, %s24
    %s28 = sphi 0, %s27
    %s44 = sphi 0, %s28
    %s48 = sphi 0, %s48
    %s50 = sphi 0, %s48
    %s51 = sphi 0, %s50
    %s65 = sphi 0, %s51
    %s69 = sphi 0, %s69
    %s71 = sphi 0, %s69
    %s72 = sphi 0, %s71
    %s86 = sphi 0, %s72
    %s90 = sphi 0, %s90
    %s92 = sphi 0, %s90
    %s93 = sphi 0, %s92
    %s107 = sphi 0, %s93
    %s113 = sphi 0, %s115
    %s116 = sphi 0, %s113
    %s117 = sphi 0, %s116
    %s133 = sphi 0, %s117
    %s139 = sphi 0, %s141
    %s142 = sphi 0, %s139
    %s143 = sphi 0, %s142
    %s159 = sphi 0, %s143
    %s165 = sphi 0, %s167
    %s168 = sphi 0, %s165
    %s169 = sphi 0, %s168
    %s185 = sphi 0, %s169
    %s191 = sphi 0, %s193
    %s194 = sphi 0, %s191
    %s195 = sphi 0, %s194
    %s211 = sphi 0, %s195
  $region4: #{joint_level_forward.4} parent=0 // loop_header_branch
    %17 = sbr.rel (%p15) target = $region8
  $region5: #{joint_level_forward.4} parent=0 // loop_body
    %s19 = ssub.s32 %s14, 1
    %s20 = ssub.s32 %s14, 2
    %s21 = sadd.s32 %s14, 1
    %s22 = ssub.s32 %s14, %s21
    %p23 = scmp.eq.s32.totalorder %s22, 0
    %s25 = sadd.s32 %s24, 1
    %s26 = scalar_select %p23, %s24, %s25
    %p29 = pneg %p23
    %p30 = scmp.eq.s32.totalorder %s14, 1
    %p31 = por %p29, %p30
    %p32 = scmp.ne.s32.totalorder %s24, %s27
    %p33 = scmp.eq.s32.totalorder %s14, 0
    %p34 = por %p32, %p33
    %p35 = scmp.ne.s32.totalorder %s24, %s27
    %p36 = scmp.eq.s32.totalorder %s19, 1
    %p37 = por %p35, %p36
    %p38 = scmp.ne.s32.totalorder %s27, %s28
    %p39 = scmp.eq.s32.totalorder %s19, 0
    %p40 = por %p38, %p39
    %p41 = scmp.ne.s32.totalorder %s27, %s28
    %p42 = scmp.eq.s32.totalorder %s20, 1
    %p43 = por %p41, %p42
    %p45 = scmp.ne.s32.totalorder %s28, %s44
    %p46 = scmp.eq.s32.totalorder %s20, 0
    %p47 = por %p45, %p46
    %s49 = sadd.s32 %s48, 1
    %p52 = scmp.eq.s32.totalorder %s14, 1
    %p53 = scmp.ne.s32.totalorder %s48, %s50
    %p54 = scmp.eq.s32.totalorder %s14, 0
    %p55 = por %p53, %p54
    %p56 = scmp.ne.s32.totalorder %s48, %s50
    %p57 = scmp.eq.s32.totalorder %s19, 1
    %p58 = por %p56, %p57
    %p59 = scmp.ne.s32.totalorder %s50, %s51
    %p60 = scmp.eq.s32.totalorder %s19, 0
    %p61 = por %p59, %p60
    %p62 = scmp.ne.s32.totalorder %s50, %s51
    %p63 = scmp.eq.s32.totalorder %s20, 1
    %p64 = por %p62, %p63
    %p66 = scmp.ne.s32.totalorder %s51, %s65
    %p67 = scmp.eq.s32.totalorder %s20, 0
    %p68 = por %p66, %p67
    %s70 = sadd.s32 %s69, 1
    %p73 = scmp.eq.s32.totalorder %s14, 1
    %p74 = scmp.ne.s32.totalorder %s69, %s71
    %p75 = scmp.eq.s32.totalorder %s14, 0
    %p76 = por %p74, %p75
    %p77 = scmp.ne.s32.totalorder %s69, %s71
    %p78 = scmp.eq.s32.totalorder %s19, 1
    %p79 = por %p77, %p78
    %p80 = scmp.ne.s32.totalorder %s71, %s72
    %p81 = scmp.eq.s32.totalorder %s19, 0
    %p82 = por %p80, %p81
    %p83 = scmp.ne.s32.totalorder %s71, %s72
    %p84 = scmp.eq.s32.totalorder %s20, 1
    %p85 = por %p83, %p84
    %p87 = scmp.ne.s32.totalorder %s72, %s86
    %p88 = scmp.eq.s32.totalorder %s20, 0
    %p89 = por %p87, %p88
    %s91 = sadd.s32 %s90, 1
    %p94 = scmp.eq.s32.totalorder %s14, 1
    %p95 = scmp.ne.s32.totalorder %s90, %s92
    %p96 = scmp.eq.s32.totalorder %s14, 0
    %p97 = por %p95, %p96
    %p98 = scmp.ne.s32.totalorder %s90, %s92
    %p99 = scmp.eq.s32.totalorder %s19, 1
    %p100 = por %p98, %p99
    %p101 = scmp.ne.s32.totalorder %s92, %s93
    %p102 = scmp.eq.s32.totalorder %s19, 0
    %p103 = por %p101, %p102
    %p104 = scmp.ne.s32.totalorder %s92, %s93
    %p105 = scmp.eq.s32.totalorder %s20, 1
    %p106 = por %p104, %p105
    %p108 = scmp.ne.s32.totalorder %s93, %s107
    %p109 = scmp.eq.s32.totalorder %s20, 0
    %p110 = por %p108, %p109
    %s111 = ssub.s32 %s14, %s21
    %p112 = scmp.eq.s32.totalorder %s111, 0
    %s114 = sadd.s32 %s113, 1
    %s115 = scalar_select %p112, %s113, %s114
    %p118 = pneg %p112
    %p119 = scmp.eq.s32.totalorder %s14, 1
    %p120 = por %p118, %p119
    %p121 = scmp.ne.s32.totalorder %s113, %s116
    %p122 = scmp.eq.s32.totalorder %s14, 0
    %p123 = por %p121, %p122
    %p124 = scmp.ne.s32.totalorder %s113, %s116
    %p125 = scmp.eq.s32.totalorder %s19, 1
    %p126 = por %p124, %p125
    %p127 = scmp.ne.s32.totalorder %s116, %s117
    %p128 = scmp.eq.s32.totalorder %s19, 0
    %p129 = por %p127, %p128
    %p130 = scmp.ne.s32.totalorder %s116, %s117
    %p131 = scmp.eq.s32.totalorder %s20, 1
    %p132 = por %p130, %p131
    %p134 = scmp.ne.s32.totalorder %s117, %s133
    %p135 = scmp.eq.s32.totalorder %s20, 0
    %p136 = por %p134, %p135
    %s137 = ssub.s32 %s14, %s21
    %p138 = scmp.eq.s32.totalorder %s137, 0
    %s140 = sadd.s32 %s139, 1
    %s141 = scalar_select %p138, %s139, %s140
    %p144 = pneg %p138
    %p145 = scmp.eq.s32.totalorder %s14, 1
    %p146 = por %p144, %p145
    %p147 = scmp.ne.s32.totalorder %s139, %s142
    %p148 = scmp.eq.s32.totalorder %s14, 0
    %p149 = por %p147, %p148
    %p150 = scmp.ne.s32.totalorder %s139, %s142
    %p151 = scmp.eq.s32.totalorder %s19, 1
    %p152 = por %p150, %p151
    %p153 = scmp.ne.s32.totalorder %s142, %s143
    %p154 = scmp.eq.s32.totalorder %s19, 0
    %p155 = por %p153, %p154
    %p156 = scmp.ne.s32.totalorder %s142, %s143
    %p157 = scmp.eq.s32.totalorder %s20, 1
    %p158 = por %p156, %p157
    %p160 = scmp.ne.s32.totalorder %s143, %s159
    %p161 = scmp.eq.s32.totalorder %s20, 0
    %p162 = por %p160, %p161
    %s163 = ssub.s32 %s14, %s21
    %p164 = scmp.eq.s32.totalorder %s163, 0
    %s166 = sadd.s32 %s165, 1
    %s167 = scalar_select %p164, %s165, %s166
    %p170 = pneg %p164
    %p171 = scmp.eq.s32.totalorder %s14, 1
    %p172 = por %p170, %p171
    %p173 = scmp.ne.s32.totalorder %s165, %s168
    %p174 = scmp.eq.s32.totalorder %s14, 0
    %p175 = por %p173, %p174
    %p176 = scmp.ne.s32.totalorder %s165, %s168
    %p177 = scmp.eq.s32.totalorder %s19, 1
    %p178 = por %p176, %p177
    %p179 = scmp.ne.s32.totalorder %s168, %s169
    %p180 = scmp.eq.s32.totalorder %s19, 0
    %p181 = por %p179, %p180
    %p182 = scmp.ne.s32.totalorder %s168, %s169
    %p183 = scmp.eq.s32.totalorder %s20, 1
    %p184 = por %p182, %p183
    %p186 = scmp.ne.s32.totalorder %s169, %s185
    %p187 = scmp.eq.s32.totalorder %s20, 0
    %p188 = por %p186, %p187
    %s189 = ssub.s32 %s14, %s21
    %p190 = scmp.eq.s32.totalorder %s189, 0
    %s192 = sadd.s32 %s191, 1
    %s193 = scalar_select %p190, %s191, %s192
    %p196 = pneg %p190
    %p197 = scmp.eq.s32.totalorder %s14, 1
    %p198 = por %p196, %p197
    %p199 = scmp.ne.s32.totalorder %s191, %s194
    %p200 = scmp.eq.s32.totalorder %s14, 0
    %p201 = por %p199, %p200
    %p202 = scmp.ne.s32.totalorder %s191, %s194
    %p203 = scmp.eq.s32.totalorder %s19, 1
    %p204 = por %p202, %p203
    %p205 = scmp.ne.s32.totalorder %s194, %s195
    %p206 = scmp.eq.s32.totalorder %s19, 0
    %p207 = por %p205, %p206
    %p208 = scmp.ne.s32.totalorder %s194, %s195
    %p209 = scmp.eq.s32.totalorder %s20, 1
    %p210 = por %p208, %p209
    %p212 = scmp.ne.s32.totalorder %s195, %s211
    %p213 = scmp.eq.s32.totalorder %s20, 0
    %p214 = por %p212, %p213
    %p215 = scmp.le.s32.totalorder 1, %s14
    %p216 = scmp.lt.s32.totalorder %s14, 3
    %p217 = pnand %p215, %p216
    %p218 = pneg %p217
    // Predicated region
    $region9: #{joint_level_forward.4} parent=5 // pred_check
      _
    $region10: #{joint_level_forward.4} parent=5 // pred_check_branch
      %220 = sbr.rel (%p217) target = $region12
    $region11: #{joint_level_forward.4} parent=5 // pred_region
      %s221 = ssub.s32 %s14, 1
      // Predicated region
      $region13: #{joint_level_forward.4} parent=11 // pred_check
        %p222 = pneg %p61
      $region14: #{joint_level_forward.4} parent=11 // pred_check_branch
        %224 = sbr.rel (%p222) target = $region16
      $region15: #{joint_level_forward.4} parent=11 // pred_region
        _
      $region16: #{joint_level_forward.4} parent=11 // pred_fallthru
        _
      // Predicated region
      $region17: #{joint_level_forward.4} parent=11 // pred_check
        %p225 = pneg %p82
      $region18: #{joint_level_forward.4} parent=11 // pred_check_branch
        %227 = sbr.rel (%p225) target = $region20
      $region19: #{joint_level_forward.4} parent=11 // pred_region
        _
      $region20: #{joint_level_forward.4} parent=11 // pred_fallthru
        _
      // Predicated region
      $region21: #{joint_level_forward.4} parent=11 // pred_check
        %p228 = pneg %p103
      $region22: #{joint_level_forward.4} parent=11 // pred_check_branch
        %230 = sbr.rel (%p228) target = $region24
      $region23: #{joint_level_forward.4} parent=11 // pred_region
        _
      $region24: #{joint_level_forward.4} parent=11 // pred_fallthru
        _
    $region12: #{joint_level_forward.4} parent=5 // pred_fallthru
      _
    %p231 = scmp.lt.s32.totalorder %s14, 2
    // Predicated region
    $region25: #{joint_level_forward.4} parent=5 // pred_check
      %p232 = pneg %p231
    $region26: #{joint_level_forward.4} parent=5 // pred_check_branch
      %234 = sbr.rel (%p232) target = $region28
    $region27: #{joint_level_forward.4} parent=5 // pred_region
      // Predicated region
      $region29: #{joint_level_forward.4} parent=27 // pred_check
        %p235 = pneg %p34
      $region30: #{joint_level_forward.4} parent=27 // pred_check_branch
        %237 = sbr.rel (%p235) target = $region32
      $region31: #{joint_level_forward.4} parent=27 // pred_region
        %s238 = smul.u32 8, %s14
        %p239 = scmp.lt.s32.totalorder %s238, 15
        %s240 = scalar_select %p239, %s238, 15
        %s241 = smul.addr %s240, 2
        %s242 = smul.addr %s241, 4
        %s243 = scalar_lea.vmem %s0, %s242
        %s244 = smul.u32 8, %s14
      $region32: #{joint_level_forward.4} parent=27 // pred_fallthru
        _
    $region28: #{joint_level_forward.4} parent=5 // pred_fallthru
      _
    %p245 = scmp.le.s32.totalorder 1, %s14
    %p246 = scmp.lt.s32.totalorder %s14, 3
    %p247 = pnand %p245, %p246
    %p248 = pneg %p247
    // Predicated region
    $region33: #{joint_level_forward.4} parent=5 // pred_check
      _
    $region34: #{joint_level_forward.4} parent=5 // pred_check_branch
      %250 = sbr.rel (%p247) target = $region36
    $region35: #{joint_level_forward.4} parent=5 // pred_region
      %s251 = ssub.s32 %s14, 1
      %s252 = smul.u32 8, %s19
      %p253 = scmp.lt.s32.totalorder %s252, 15
      %s254 = scalar_select %p253, %s252, 15
      %s255 = smul.addr %s254, 2
      %s256 = smul.addr %s255, 4
      %s257 = scalar_lea.vmem %s0, %s256
      %p258 = pneg %p40
      %p259 = pneg %p37
      %p260 = pneg %p61
      %p261 = pneg %p58
      %p262 = pneg %p82
      %p263 = pneg %p79
      %p264 = pneg %p103
      %p265 = pneg %p100
      %p266 = pneg %p129
      %p267 = pneg %p126
      %s268 = smul.u32 8, %s19
      %p269 = scmp.lt.s32.totalorder %s268, 15
      %s270 = scalar_select %p269, %s268, 15
      %s271 = smul.addr %s270, 2
      %s272 = smul.addr %s271, 4
      %s273 = scalar_lea.vmem %s4, %s272
      %p274 = pneg %p155
      %p275 = pneg %p152
      %s276 = smul.u32 8, %s19
      %p277 = scmp.lt.s32.totalorder %s276, 15
      %s278 = scalar_select %p277, %s276, 15
      %s279 = smul.addr %s278, 2
      %s280 = smul.addr %s279, 4
      %s281 = scalar_lea.vmem %s5, %s280
      %p282 = pneg %p181
      %p283 = pneg %p178
      %p284 = scmp.lt.s32.totalorder %s19, 1
      %s285 = scalar_select %p284, %s19, 1
      %s286 = scalar_lea.vmem %s6, %s285
      %p287 = pneg %p207
      %p288 = pneg %p204
      %p289 = scmp.lt.s32.totalorder %s19, 1
      %s290 = scalar_select %p289, %s19, 1
      %s291 = scalar_lea.vmem %s7, %s290
      %s292 = smul.u32 8, %s19
      %p293 = scmp.lt.s32.totalorder %s292, 15
      %s294 = scalar_select %p293, %s292, 15
      %s295 = smul.addr %s294, 2
      %s296 = smul.addr %s295, 4
      %s297 = scalar_lea.vmem %s0, %s296
      %s298 = smul.u32 8, %s19
      %s299 = smul.u32 8, %s19
      %p300 = scmp.lt.s32.totalorder %s299, 15
      %s301 = scalar_select %p300, %s299, 15
      %s302 = smul.addr %s301, 2
      %s303 = smul.addr %s302, 4
      %s304 = scalar_lea.vmem %s4, %s303
      %s305 = smul.u32 8, %s19
      %s306 = smul.u32 8, %s19
      %p307 = scmp.lt.s32.totalorder %s306, 15
      %s308 = scalar_select %p307, %s306, 15
      %s309 = smul.addr %s308, 2
      %s310 = smul.addr %s309, 4
      %s311 = scalar_lea.vmem %s5, %s310
      %s312 = smul.u32 8, %s19
      %p313 = scmp.lt.s32.totalorder %s19, 1
      %s314 = scalar_select %p313, %s19, 1
      %s315 = scalar_lea.vmem %s6, %s314
      %p316 = scmp.lt.s32.totalorder %s19, 1
      %s317 = scalar_select %p316, %s19, 1
      %s318 = scalar_lea.vmem %s7, %s317
      %v320 = vld [vmem:[%s297] sm:$0xf]
      %v321 = vld [vmem:[%s297 + $0x4] sm:$0xf]
      %v322 = vld [vmem:[%s297 + $0x8] sm:$0xf]
      %v323 = vld [vmem:[%s297 + $0xc] sm:$0xf]
      %v324 = vld [vmem:[%s297 + $0x10] sm:$0xf]
      %v325 = vld [vmem:[%s297 + $0x14] sm:$0xf]
      %v326 = vld [vmem:[%s297 + $0x18] sm:$0xf]
      %v327 = vld [vmem:[%s297 + $0x1c] sm:$0xf]
      %v328 = vld [vmem:[%s297 + $0x20] sm:$0xf]
      %v329 = vld [vmem:[%s297 + $0x24] sm:$0xf]
      %v330 = vld [vmem:[%s297 + $0x28] sm:$0xf]
      %v331 = vld [vmem:[%s297 + $0x2c] sm:$0xf]
      %v332 = vld [vmem:[%s297 + $0x30] sm:$0xf]
      %v333 = vld [vmem:[%s297 + $0x34] sm:$0xf]
      %v334 = vld [vmem:[%s297 + $0x38] sm:$0xf]
      %v335 = vld [vmem:[%s297 + $0x3c] sm:$0xf]
      %v336 = vld [vmem:[%s1] sm:$0xff]
      %v337 = vld [vmem:[%s1 + $0x8] sm:$0xff]
      %v338 = vld [vmem:[%s1 + $0x10] sm:$0xff]
      %v339 = vld [vmem:[%s1 + $0x18] sm:$0xff]
      %v340 = vld [vmem:[%s1 + $0x20] sm:$0xff]
      %v341 = vld [vmem:[%s1 + $0x28] sm:$0xff]
      %v342 = vld [vmem:[%s1 + $0x30] sm:$0xff]
      %v343 = vld [vmem:[%s1 + $0x38] sm:$0xff]
      %v344 = vld [vmem:[%s1 + $0x40] sm:$0xff]
      %v345 = vld [vmem:[%s1 + $0x48] sm:$0xff]
      %v346 = vld [vmem:[%s1 + $0x50] sm:$0xff]
      %v347 = vld [vmem:[%s1 + $0x58] sm:$0xff]
      %v348 = vld [vmem:[%s1 + $0x60] sm:$0xff]
      %v349 = vld [vmem:[%s1 + $0x68] sm:$0xff]
      %v350 = vld [vmem:[%s1 + $0x70] sm:$0xff]
      %v351 = vld [vmem:[%s1 + $0x78] sm:$0xff]
      %v352 = vld [vmem:[%s1 + $0x80] sm:$0xff]
      %v353 = vld [vmem:[%s1 + $0x88] sm:$0xff]
      %v354 = vld [vmem:[%s1 + $0x90] sm:$0xff]
      %v355 = vld [vmem:[%s1 + $0x98] sm:$0xff]
      %v356 = vld [vmem:[%s1 + $0xa0] sm:$0xff]
      %v357 = vld [vmem:[%s1 + $0xa8] sm:$0xff]
      %v358 = vld [vmem:[%s1 + $0xb0] sm:$0xff]
      %v359 = vld [vmem:[%s1 + $0xb8] sm:$0xff]
      %v376 = vunpack.c.l.b16 %v320
      %v377 = vunpack.c.l.b16 %v321
      %v378 = vunpack.c.l.b16 %v322
      %v379 = vunpack.c.l.b16 %v323
      %v380 = vunpack.c.l.b16 %v324
      %v381 = vunpack.c.l.b16 %v325
      %v382 = vunpack.c.l.b16 %v326
      %v383 = vunpack.c.l.b16 %v327
      %v384 = vunpack.c.l.b16 %v328
      %v385 = vunpack.c.l.b16 %v329
      %v386 = vunpack.c.l.b16 %v330
      %v387 = vunpack.c.l.b16 %v331
      %v388 = vunpack.c.l.b16 %v332
      %v389 = vunpack.c.l.b16 %v333
      %v390 = vunpack.c.l.b16 %v334
      %v391 = vunpack.c.l.b16 %v335
      %v392 = vpack.c.b16 %v377, %v376
      %v393 = vpack.c.b16 %v379, %v378
      %v394 = vpack.c.b16 %v381, %v380
      %v395 = vpack.c.b16 %v383, %v382
      %v396 = vpack.c.b16 %v385, %v384
      %v397 = vpack.c.b16 %v387, %v386
      %v398 = vpack.c.b16 %v389, %v388
      %v399 = vpack.c.b16 %v391, %v390
      %v424 = vunpack.c.l.b16 %v336
      %v425 = vunpack.c.h.b16 %v336
      %v426 = vunpack.c.l.b16 %v337
      %v427 = vunpack.c.h.b16 %v337
      %v428 = vunpack.c.l.b16 %v338
      %v429 = vunpack.c.h.b16 %v338
      %v430 = vunpack.c.l.b16 %v339
      %v431 = vunpack.c.h.b16 %v339
      %v432 = vunpack.c.l.b16 %v340
      %v433 = vunpack.c.h.b16 %v340
      %v434 = vunpack.c.l.b16 %v341
      %v435 = vunpack.c.h.b16 %v341
      %v436 = vunpack.c.l.b16 %v342
      %v437 = vunpack.c.h.b16 %v342
      %v438 = vunpack.c.l.b16 %v343
      %v439 = vunpack.c.h.b16 %v343
      %v440 = vunpack.c.l.b16 %v344
      %v441 = vunpack.c.h.b16 %v344
      %v442 = vunpack.c.l.b16 %v345
      %v443 = vunpack.c.h.b16 %v345
      %v444 = vunpack.c.l.b16 %v346
      %v445 = vunpack.c.h.b16 %v346
      %v446 = vunpack.c.l.b16 %v347
      %v447 = vunpack.c.h.b16 %v347
      %v448 = vunpack.c.l.b16 %v348
      %v449 = vunpack.c.h.b16 %v348
      %v450 = vunpack.c.l.b16 %v349
      %v451 = vunpack.c.h.b16 %v349
      %v452 = vunpack.c.l.b16 %v350
      %v453 = vunpack.c.h.b16 %v350
      %v454 = vunpack.c.l.b16 %v351
      %v455 = vunpack.c.h.b16 %v351
      %v456 = vunpack.c.l.b16 %v352
      %v457 = vunpack.c.h.b16 %v352
      %v458 = vunpack.c.l.b16 %v353
      %v459 = vunpack.c.h.b16 %v353
      %v460 = vunpack.c.l.b16 %v354
      %v461 = vunpack.c.h.b16 %v354
      %v462 = vunpack.c.l.b16 %v355
      %v463 = vunpack.c.h.b16 %v355
      %v464 = vunpack.c.l.b16 %v356
      %v465 = vunpack.c.h.b16 %v356
      %v466 = vunpack.c.l.b16 %v357
      %v467 = vunpack.c.h.b16 %v357
      %v468 = vunpack.c.l.b16 %v358
      %v469 = vunpack.c.h.b16 %v358
      %v470 = vunpack.c.l.b16 %v359
      %v471 = vunpack.c.h.b16 %v359
      %v472 = vpack.c.b16 %v430, %v424
      %v473 = vpack.c.b16 %v431, %v425
      %v474 = vpack.c.b16 %v432, %v426
      %v475 = vpack.c.b16 %v433, %v427
      %v476 = vpack.c.b16 %v434, %v428
      %v477 = vpack.c.b16 %v435, %v429
      %v478 = vpack.c.b16 %v442, %v436
      %v479 = vpack.c.b16 %v443, %v437
      %v480 = vpack.c.b16 %v444, %v438
      %v481 = vpack.c.b16 %v445, %v439
      %v482 = vpack.c.b16 %v446, %v440
      %v483 = vpack.c.b16 %v447, %v441
      %v484 = vpack.c.b16 %v454, %v448
      %v485 = vpack.c.b16 %v455, %v449
      %v486 = vpack.c.b16 %v456, %v450
      %v487 = vpack.c.b16 %v457, %v451
      %v488 = vpack.c.b16 %v458, %v452
      %v489 = vpack.c.b16 %v459, %v453
      %v490 = vpack.c.b16 %v466, %v460
      %v491 = vpack.c.b16 %v467, %v461
      %v492 = vpack.c.b16 %v468, %v462
      %v493 = vpack.c.b16 %v469, %v463
      %v494 = vpack.c.b16 %v470, %v464
      %v495 = vpack.c.b16 %v471, %v465
      %vm520 = vcmask 523264
      %v522 = vsel %vm520, %v392, 0
      %v525 = vsel %vm520, %v393, 0
      %v528 = vsel %vm520, %v394, 0
      %v531 = vsel %vm520, %v395, 0
      %v534 = vsel %vm520, %v396, 0
      %v537 = vsel %vm520, %v397, 0
      %v540 = vsel %vm520, %v398, 0
      %v543 = vsel %vm520, %v399, 0
      %545 = vmatprep.subr.bf16.mxu0 %v473
      %546 = vmatpush1.bf16.msra.mxu0 %v472
      %547 = vmatprep.subr.bf16.mxu0 %v479
      %548 = vmatpush1.bf16.msra.mxu0 %v478
      %549 = vmatprep.subr.bf16.mxu0 %v485
      %550 = vmatpush1.bf16.msra.mxu0 %v484
      %551 = vmatprep.subr.bf16.mxu0 %v491
      %552 = vmatpush1.bf16.msra.mxu0 %v490
      %553 = vmatprep.subr.bf16.mxu0 0
      %554 = vmatpush1.bf16.msra.mxu0 0
      %555 = vmatprep.subr.bf16.mxu0 0
      %556 = vmatpush1.bf16.msra.mxu0 0
      %557 = vmatprep.subr.bf16.mxu0 0
      %558 = vmatpush1.bf16.msra.mxu0 0
      %559 = vmatprep.subr.bf16.mxu0 0
      %560 = vmatpush1.bf16.msra.mxu0 0
      %561 = vmatprep.subr.bf16.mxu0 0
      %562 = vmatpush1.bf16.msra.mxu0 0
      %563 = vmatprep.subr.bf16.mxu0 0
      %564 = vmatpush1.bf16.msra.mxu0 0
      %565 = vmatprep.subr.bf16.mxu0 0
      %566 = vmatpush1.bf16.msra.mxu0 0
      %567 = vmatprep.subr.bf16.mxu0 0
      %568 = vmatpush1.bf16.msra.mxu0 0
      %569 = vmatprep.subr.bf16.mxu0 0
      %570 = vmatpush1.bf16.msra.mxu0 0
      %571 = vmatprep.subr.bf16.mxu0 0
      %572 = vmatpush1.bf16.msra.mxu0 0
      %573 = vmatprep.subr.bf16.mxu0 0
      %574 = vmatpush1.bf16.msra.mxu0 0
      %575 = vmatprep.subr.bf16.mxu0 0
      %576 = vmatpush1.bf16.msra.mxu0 0
      %577 = vmatprep.mubr.bf16.mxu0 0
      %578 = vmatmul.mubr.bf16.gmra.mrb[0].mxu0 %v522
      %v579 = vpop.f32.mrb[0].mxu0
      %v580 = vadd.f32 0.0, %v579
      %v581 = vpop.f32.mrb[0].mxu0
      %v582 = vadd.f32 0.0, %v581
      %v583 = vpop.f32.mrb[0].mxu0
      %v584 = vadd.f32 0.0, %v583
      %v585 = vpop.f32.mrb[0].mxu0
      %v586 = vadd.f32 0.0, %v585
      %587 = vmatprep.mubr.bf16.mxu0 0
      %588 = vmatmul.mubr.bf16.gmra.mrb[0].mxu0 %v525
      %v589 = vpop.f32.mrb[0].mxu0
      %v590 = vadd.f32 0.0, %v589
      %v591 = vpop.f32.mrb[0].mxu0
      %v592 = vadd.f32 0.0, %v591
      %v593 = vpop.f32.mrb[0].mxu0
      %v594 = vadd.f32 0.0, %v593
      %v595 = vpop.f32.mrb[0].mxu0
      %v596 = vadd.f32 0.0, %v595
      %597 = vmatprep.mubr.bf16.mxu0 0
      %598 = vmatmul.mubr.bf16.gmra.mrb[0].mxu0 %v528
      %v599 = vpop.f32.mrb[0].mxu0
      %v600 = vadd.f32 0.0, %v599
      %v601 = vpop.f32.mrb[0].mxu0
      %v602 = vadd.f32 0.0, %v601
      %v603 = vpop.f32.mrb[0].mxu0
      %v604 = vadd.f32 0.0, %v603
      %v605 = vpop.f32.mrb[0].mxu0
      %v606 = vadd.f32 0.0, %v605
      %607 = vmatprep.mubr.bf16.mxu0 0
      %608 = vmatmul.mubr.bf16.gmra.mrb[0].mxu0 %v531
      %v609 = vpop.f32.mrb[0].mxu0
      %v610 = vadd.f32 0.0, %v609
      %v611 = vpop.f32.mrb[0].mxu0
      %v612 = vadd.f32 0.0, %v611
      %v613 = vpop.f32.mrb[0].mxu0
      %v614 = vadd.f32 0.0, %v613
      %v615 = vpop.f32.mrb[0].mxu0
      %v616 = vadd.f32 0.0, %v615
      %617 = vmatprep.mubr.bf16.mxu0 0
      %618 = vmatmul.mubr.bf16.gmra.mrb[0].mxu0 %v534
      %v619 = vpop.f32.mrb[0].mxu0
      %v620 = vadd.f32 0.0, %v619
      %v621 = vpop.f32.mrb[0].mxu0
      %v622 = vadd.f32 0.0, %v621
      %v623 = vpop.f32.mrb[0].mxu0
      %v624 = vadd.f32 0.0, %v623
      %v625 = vpop.f32.mrb[0].mxu0
      %v626 = vadd.f32 0.0, %v625
      %627 = vmatprep.mubr.bf16.mxu0 0
      %628 = vmatmul.mubr.bf16.gmra.mrb[0].mxu0 %v537
      %v629 = vpop.f32.mrb[0].mxu0
      %v630 = vadd.f32 0.0, %v629
      %v631 = vpop.f32.mrb[0].mxu0
      %v632 = vadd.f32 0.0, %v631
      %v633 = vpop.f32.mrb[0].mxu0
      %v634 = vadd.f32 0.0, %v633
      %v635 = vpop.f32.mrb[0].mxu0
      %v636 = vadd.f32 0.0, %v635
      %637 = vmatprep.mubr.bf16.mxu0 0
      %638 = vmatmul.mubr.bf16.gmra.mrb[0].mxu0 %v540
      %v639 = vpop.f32.mrb[0].mxu0
      %v640 = vadd.f32 0.0, %v639
      %v641 = vpop.f32.mrb[0].mxu0
      %v642 = vadd.f32 0.0, %v641
      %v643 = vpop.f32.mrb[0].mxu0
      %v644 = vadd.f32 0.0, %v643
      %v645 = vpop.f32.mrb[0].mxu0
      %v646 = vadd.f32 0.0, %v645
      %647 = vmatprep.mubr.bf16.mxu0 0
      %648 = vmatmul.mubr.bf16.gmra.mrb[0].mxu0 %v543
      %v649 = vpop.f32.mrb[0].mxu0
      %v650 = vadd.f32 0.0, %v649
      %v651 = vpop.f32.mrb[0].mxu0
      %v652 = vadd.f32 0.0, %v651
      %v653 = vpop.f32.mrb[0].mxu0
      %v654 = vadd.f32 0.0, %v653
      %v655 = vpop.f32.mrb[0].mxu0
      %v656 = vadd.f32 0.0, %v655
      %657 = vdwg.mxu0
      %658 = vmatprep.subr.bf16.mxu0 %v475
      %659 = vmatpush1.bf16.msra.mxu0 %v474
      %660 = vmatprep.subr.bf16.mxu0 %v481
      %661 = vmatpush1.bf16.msra.mxu0 %v480
      %662 = vmatprep.subr.bf16.mxu0 %v487
      %663 = vmatpush1.bf16.msra.mxu0 %v486
      %664 = vmatprep.subr.bf16.mxu0 %v493
      %665 = vmatpush1.bf16.msra.mxu0 %v492
      %666 = vmatprep.subr.bf16.mxu0 0
      %667 = vmatpush1.bf16.msra.mxu0 0
      %668 = vmatprep.subr.bf16.mxu0 0
      %669 = vmatpush1.bf16.msra.mxu0 0
      %670 = vmatprep.subr.bf16.mxu0 0
      %671 = vmatpush1.bf16.msra.mxu0 0
      %672 = vmatprep.subr.bf16.mxu0 0
      %673 = vmatpush1.bf16.msra.mxu0 0
      %674 = vmatprep.subr.bf16.mxu0 0
      %675 = vmatpush1.bf16.msra.mxu0 0
      %676 = vmatprep.subr.bf16.mxu0 0
      %677 = vmatpush1.bf16.msra.mxu0 0
      %678 = vmatprep.subr.bf16.mxu0 0
      %679 = vmatpush1.bf16.msra.mxu0 0
      %680 = vmatprep.subr.bf16.mxu0 0
      %681 = vmatpush1.bf16.msra.mxu0 0
      %682 = vmatprep.subr.bf16.mxu0 0
      %683 = vmatpush1.bf16.msra.mxu0 0
      %684 = vmatprep.subr.bf16.mxu0 0
      %685 = vmatpush1.bf16.msra.mxu0 0
      %686 = vmatprep.subr.bf16.mxu0 0
      %687 = vmatpush1.bf16.msra.mxu0 0
      %688 = vmatprep.subr.bf16.mxu0 0
      %689 = vmatpush1.bf16.msra.mxu0 0
      %690 = vmatprep.mubr.bf16.mxu0 0
      %691 = vmatmul.mubr.bf16.gmra.mrb[0].mxu0 %v522
      %v692 = vpop.f32.mrb[0].mxu0
      %v693 = vadd.f32 0.0, %v692
      %v694 = vpop.f32.mrb[0].mxu0
      %v695 = vadd.f32 0.0, %v694
      %v696 = vpop.f32.mrb[0].mxu0
      %v697 = vadd.f32 0.0, %v696
      %v698 = vpop.f32.mrb[0].mxu0
      %v699 = vadd.f32 0.0, %v698
      %700 = vmatprep.mubr.bf16.mxu0 0
      %701 = vmatmul.mubr.bf16.gmra.mrb[0].mxu0 %v525
      %v702 = vpop.f32.mrb[0].mxu0
      %v703 = vadd.f32 0.0, %v702
      %v704 = vpop.f32.mrb[0].mxu0
      %v705 = vadd.f32 0.0, %v704
      %v706 = vpop.f32.mrb[0].mxu0
      %v707 = vadd.f32 0.0, %v706
      %v708 = vpop.f32.mrb[0].mxu0
      %v709 = vadd.f32 0.0, %v708
      %710 = vmatprep.mubr.bf16.mxu0 0
      %711 = vmatmul.mubr.bf16.gmra.mrb[0].mxu0 %v528
      %v712 = vpop.f32.mrb[0].mxu0
      %v713 = vadd.f32 0.0, %v712
      %v714 = vpop.f32.mrb[0].mxu0
      %v715 = vadd.f32 0.0, %v714
      %v716 = vpop.f32.mrb[0].mxu0
      %v717 = vadd.f32 0.0, %v716
      %v718 = vpop.f32.mrb[0].mxu0
      %v719 = vadd.f32 0.0, %v718
      %720 = vmatprep.mubr.bf16.mxu0 0
      %721 = vmatmul.mubr.bf16.gmra.mrb[0].mxu0 %v531
      %v722 = vpop.f32.mrb[0].mxu0
      %v723 = vadd.f32 0.0, %v722
      %v724 = vpop.f32.mrb[0].mxu0
      %v725 = vadd.f32 0.0, %v724
      %v726 = vpop.f32.mrb[0].mxu0
      %v727 = vadd.f32 0.0, %v726
      %v728 = vpop.f32.mrb[0].mxu0
      %v729 = vadd.f32 0.0, %v728
      %730 = vmatprep.mubr.bf16.mxu0 0
      %731 = vmatmul.mubr.bf16.gmra.mrb[0].mxu0 %v534
      %v732 = vpop.f32.mrb[0].mxu0
      %v733 = vadd.f32 0.0, %v732
      %v734 = vpop.f32.mrb[0].mxu0
      %v735 = vadd.f32 0.0, %v734
      %v736 = vpop.f32.mrb[0].mxu0
      %v737 = vadd.f32 0.0, %v736
      %v738 = vpop.f32.mrb[0].mxu0
      %v739 = vadd.f32 0.0, %v738
      %740 = vmatprep.mubr.bf16.mxu0 0
      %741 = vmatmul.mubr.bf16.gmra.mrb[0].mxu0 %v537
      %v742 = vpop.f32.mrb[0].mxu0
      %v743 = vadd.f32 0.0, %v742
      %v744 = vpop.f32.mrb[0].mxu0
      %v745 = vadd.f32 0.0, %v744
      %v746 = vpop.f32.mrb[0].mxu0
      %v747 = vadd.f32 0.0, %v746
      %v748 = vpop.f32.mrb[0].mxu0
      %v749 = vadd.f32 0.0, %v748
      %750 = vmatprep.mubr.bf16.mxu0 0
      %751 = vmatmul.mubr.bf16.gmra.mrb[0].mxu0 %v540
      %v752 = vpop.f32.mrb[0].mxu0
      %v753 = vadd.f32 0.0, %v752
      %v754 = vpop.f32.mrb[0].mxu0
      %v755 = vadd.f32 0.0, %v754
      %v756 = vpop.f32.mrb[0].mxu0
      %v757 = vadd.f32 0.0, %v756
      %v758 = vpop.f32.mrb[0].mxu0
      %v759 = vadd.f32 0.0, %v758
      %760 = vmatprep.mubr.bf16.mxu0 0
      %761 = vmatmul.mubr.bf16.gmra.mrb[0].mxu0 %v543
      %v762 = vpop.f32.mrb[0].mxu0
      %v763 = vadd.f32 0.0, %v762
      %v764 = vpop.f32.mrb[0].mxu0
      %v765 = vadd.f32 0.0, %v764
      %v766 = vpop.f32.mrb[0].mxu0
      %v767 = vadd.f32 0.0, %v766
      %v768 = vpop.f32.mrb[0].mxu0
      %v769 = vadd.f32 0.0, %v768
      %770 = vdwg.mxu0
      %771 = vmatprep.subr.bf16.mxu0 %v477
      %772 = vmatpush1.bf16.msra.mxu0 %v476
      %773 = vmatprep.subr.bf16.mxu0 %v483
      %774 = vmatpush1.bf16.msra.mxu0 %v482
      %775 = vmatprep.subr.bf16.mxu0 %v489
      %776 = vmatpush1.bf16.msra.mxu0 %v488
      %777 = vmatprep.subr.bf16.mxu0 %v495
      %778 = vmatpush1.bf16.msra.mxu0 %v494
      %779 = vmatprep.subr.bf16.mxu0 0
      %780 = vmatpush1.bf16.msra.mxu0 0
      %781 = vmatprep.subr.bf16.mxu0 0
      %782 = vmatpush1.bf16.msra.mxu0 0
      %783 = vmatprep.subr.bf16.mxu0 0
      %784 = vmatpush1.bf16.msra.mxu0 0
      %785 = vmatprep.subr.bf16.mxu0 0
      %786 = vmatpush1.bf16.msra.mxu0 0
      %787 = vmatprep.subr.bf16.mxu0 0
      %788 = vmatpush1.bf16.msra.mxu0 0
      %789 = vmatprep.subr.bf16.mxu0 0
      %790 = vmatpush1.bf16.msra.mxu0 0
      %791 = vmatprep.subr.bf16.mxu0 0
      %792 = vmatpush1.bf16.msra.mxu0 0
      %793 = vmatprep.subr.bf16.mxu0 0
      %794 = vmatpush1.bf16.msra.mxu0 0
      %795 = vmatprep.subr.bf16.mxu0 0
      %796 = vmatpush1.bf16.msra.mxu0 0
      %797 = vmatprep.subr.bf16.mxu0 0
      %798 = vmatpush1.bf16.msra.mxu0 0
      %799 = vmatprep.subr.bf16.mxu0 0
      %800 = vmatpush1.bf16.msra.mxu0 0
      %801 = vmatprep.subr.bf16.mxu0 0
      %802 = vmatpush1.bf16.msra.mxu0 0
      %803 = vmatprep.mubr.bf16.mxu0 0
      %804 = vmatmul.mubr.bf16.gmra.mrb[0].mxu0 %v522
      %v805 = vpop.f32.mrb[0].mxu0
      %v806 = vadd.f32 0.0, %v805
      %v807 = vpop.f32.mrb[0].mxu0
      %v808 = vadd.f32 0.0, %v807
      %v809 = vpop.f32.mrb[0].mxu0
      %v810 = vadd.f32 0.0, %v809
      %v811 = vpop.f32.mrb[0].mxu0
      %v812 = vadd.f32 0.0, %v811
      %813 = vmatprep.mubr.bf16.mxu0 0
      %814 = vmatmul.mubr.bf16.gmra.mrb[0].mxu0 %v525
      %v815 = vpop.f32.mrb[0].mxu0
      %v816 = vadd.f32 0.0, %v815
      %v817 = vpop.f32.mrb[0].mxu0
      %v818 = vadd.f32 0.0, %v817
      %v819 = vpop.f32.mrb[0].mxu0
      %v820 = vadd.f32 0.0, %v819
      %v821 = vpop.f32.mrb[0].mxu0
      %v822 = vadd.f32 0.0, %v821
      %823 = vmatprep.mubr.bf16.mxu0 0
      %824 = vmatmul.mubr.bf16.gmra.mrb[0].mxu0 %v528
      %v825 = vpop.f32.mrb[0].mxu0
      %v826 = vadd.f32 0.0, %v825
      %v827 = vpop.f32.mrb[0].mxu0
      %v828 = vadd.f32 0.0, %v827
      %v829 = vpop.f32.mrb[0].mxu0
      %v830 = vadd.f32 0.0, %v829
      %v831 = vpop.f32.mrb[0].mxu0
      %v832 = vadd.f32 0.0, %v831
      %833 = vmatprep.mubr.bf16.mxu0 0
      %834 = vmatmul.mubr.bf16.gmra.mrb[0].mxu0 %v531
      %v835 = vpop.f32.mrb[0].mxu0
      %v836 = vadd.f32 0.0, %v835
      %v837 = vpop.f32.mrb[0].mxu0
      %v838 = vadd.f32 0.0, %v837
      %v839 = vpop.f32.mrb[0].mxu0
      %v840 = vadd.f32 0.0, %v839
      %v841 = vpop.f32.mrb[0].mxu0
      %v842 = vadd.f32 0.0, %v841
      %843 = vmatprep.mubr.bf16.mxu0 0
      %844 = vmatmul.mubr.bf16.gmra.mrb[0].mxu0 %v534
      %v845 = vpop.f32.mrb[0].mxu0
      %v846 = vadd.f32 0.0, %v845
      %v847 = vpop.f32.mrb[0].mxu0
      %v848 = vadd.f32 0.0, %v847
      %v849 = vpop.f32.mrb[0].mxu0
      %v850 = vadd.f32 0.0, %v849
      %v851 = vpop.f32.mrb[0].mxu0
      %v852 = vadd.f32 0.0, %v851
      %853 = vmatprep.mubr.bf16.mxu0 0
      %854 = vmatmul.mubr.bf16.gmra.mrb[0].mxu0 %v537
      %v855 = vpop.f32.mrb[0].mxu0
      %v856 = vadd.f32 0.0, %v855
      %v857 = vpop.f32.mrb[0].mxu0
      %v858 = vadd.f32 0.0, %v857
      %v859 = vpop.f32.mrb[0].mxu0
      %v860 = vadd.f32 0.0, %v859
      %v861 = vpop.f32.mrb[0].mxu0
      %v862 = vadd.f32 0.0, %v861
      %863 = vmatprep.mubr.bf16.mxu0 0
      %864 = vmatmul.mubr.bf16.gmra.mrb[0].mxu0 %v540
      %v865 = vpop.f32.mrb[0].mxu0
      %v866 = vadd.f32 0.0, %v865
      %v867 = vpop.f32.mrb[0].mxu0
      %v868 = vadd.f32 0.0, %v867
      %v869 = vpop.f32.mrb[0].mxu0
      %v870 = vadd.f32 0.0, %v869
      %v871 = vpop.f32.mrb[0].mxu0
      %v872 = vadd.f32 0.0, %v871
      %873 = vmatprep.mubr.bf16.mxu0 0
      %874 = vmatmul.mubr.bf16.gmra.mrb[0].mxu0 %v543
      %v875 = vpop.f32.mrb[0].mxu0
      %v876 = vadd.f32 0.0, %v875
      %v877 = vpop.f32.mrb[0].mxu0
      %v878 = vadd.f32 0.0, %v877
      %v879 = vpop.f32.mrb[0].mxu0
      %v880 = vadd.f32 0.0, %v879
      %v881 = vpop.f32.mrb[0].mxu0
      %v882 = vadd.f32 0.0, %v881
      %883 = vdwg.mxu0
      %v884 = vld [vmem:[%s2] sm:$0xff]
      %v885 = vld [vmem:[%s2 + $0x8] sm:$0xff]
      %v886 = vld [vmem:[%s2 + $0x10] sm:$0xff]
      %v887 = vld [vmem:[%s2 + $0x18] sm:$0xff]
      %v888 = vld [vmem:[%s2 + $0x20] sm:$0xff]
      %v889 = vld [vmem:[%s2 + $0x28] sm:$0xff]
      %v890 = vld [vmem:[%s2 + $0x30] sm:$0xff]
      %v891 = vld [vmem:[%s2 + $0x38] sm:$0xff]
      %v892 = vld [vmem:[%s2 + $0x40] sm:$0xff]
      %v893 = vld [vmem:[%s2 + $0x48] sm:$0xff]
      %v894 = vld [vmem:[%s2 + $0x50] sm:$0xff]
      %v895 = vld [vmem:[%s2 + $0x58] sm:$0xff]
      %v896 = vadd.f32 %v580, %v884
      %v897 = vadd.f32 %v582, %v885
      %v898 = vadd.f32 %v693, %v886
      %v899 = vadd.f32 %v695, %v887
      %v900 = vadd.f32 %v806, %v888
      %v901 = vadd.f32 %v808, %v889
      %v902 = vadd.f32 %v584, %v890
      %v903 = vadd.f32 %v586, %v891
      %v904 = vadd.f32 %v697, %v892
      %v905 = vadd.f32 %v699, %v893
      %v906 = vadd.f32 %v810, %v894
      %v907 = vadd.f32 %v812, %v895
      %v908 = vadd.f32 %v590, %v884
      %v909 = vadd.f32 %v592, %v885
      %v910 = vadd.f32 %v703, %v886
      %v911 = vadd.f32 %v705, %v887
      %v912 = vadd.f32 %v816, %v888
      %v913 = vadd.f32 %v818, %v889
      %v914 = vadd.f32 %v594, %v890
      %v915 = vadd.f32 %v596, %v891
      %v916 = vadd.f32 %v707, %v892
      %v917 = vadd.f32 %v709, %v893
      %v918 = vadd.f32 %v820, %v894
      %v919 = vadd.f32 %v822, %v895
      %v920 = vadd.f32 %v600, %v884
      %v921 = vadd.f32 %v602, %v885
      %v922 = vadd.f32 %v713, %v886
      %v923 = vadd.f32 %v715, %v887
      %v924 = vadd.f32 %v826, %v888
      %v925 = vadd.f32 %v828, %v889
      %v926 = vadd.f32 %v604, %v890
      %v927 = vadd.f32 %v606, %v891
      %v928 = vadd.f32 %v717, %v892
      %v929 = vadd.f32 %v719, %v893
      %v930 = vadd.f32 %v830, %v894
      %v931 = vadd.f32 %v832, %v895
      %v932 = vadd.f32 %v610, %v884
      %v933 = vadd.f32 %v612, %v885
      %v934 = vadd.f32 %v723, %v886
      %v935 = vadd.f32 %v725, %v887
      %v936 = vadd.f32 %v836, %v888
      %v937 = vadd.f32 %v838, %v889
      %v938 = vadd.f32 %v614, %v890
      %v939 = vadd.f32 %v616, %v891
      %v940 = vadd.f32 %v727, %v892
      %v941 = vadd.f32 %v729, %v893
      %v942 = vadd.f32 %v840, %v894
      %v943 = vadd.f32 %v842, %v895
      %v944 = vadd.f32 %v620, %v884
      %v945 = vadd.f32 %v622, %v885
      %v946 = vadd.f32 %v733, %v886
      %v947 = vadd.f32 %v735, %v887
      %v948 = vadd.f32 %v846, %v888
      %v949 = vadd.f32 %v848, %v889
      %v950 = vadd.f32 %v624, %v890
      %v951 = vadd.f32 %v626, %v891
      %v952 = vadd.f32 %v737, %v892
      %v953 = vadd.f32 %v739, %v893
      %v954 = vadd.f32 %v850, %v894
      %v955 = vadd.f32 %v852, %v895
      %v956 = vadd.f32 %v630, %v884
      %v957 = vadd.f32 %v632, %v885
      %v958 = vadd.f32 %v743, %v886
      %v959 = vadd.f32 %v745, %v887
      %v960 = vadd.f32 %v856, %v888
      %v961 = vadd.f32 %v858, %v889
      %v962 = vadd.f32 %v634, %v890
      %v963 = vadd.f32 %v636, %v891
      %v964 = vadd.f32 %v747, %v892
      %v965 = vadd.f32 %v749, %v893
      %v966 = vadd.f32 %v860, %v894
      %v967 = vadd.f32 %v862, %v895
      %v968 = vadd.f32 %v640, %v884
      %v969 = vadd.f32 %v642, %v885
      %v970 = vadd.f32 %v753, %v886
      %v971 = vadd.f32 %v755, %v887
      %v972 = vadd.f32 %v866, %v888
      %v973 = vadd.f32 %v868, %v889
      %v974 = vadd.f32 %v644, %v890
      %v975 = vadd.f32 %v646, %v891
      %v976 = vadd.f32 %v757, %v892
      %v977 = vadd.f32 %v759, %v893
      %v978 = vadd.f32 %v870, %v894
      %v979 = vadd.f32 %v872, %v895
      %v980 = vadd.f32 %v650, %v884
      %v981 = vadd.f32 %v652, %v885
      %v982 = vadd.f32 %v763, %v886
      %v983 = vadd.f32 %v765, %v887
      %v984 = vadd.f32 %v876, %v888
      %v985 = vadd.f32 %v878, %v889
      %v986 = vadd.f32 %v654, %v890
      %v987 = vadd.f32 %v656, %v891
      %v988 = vadd.f32 %v767, %v892
      %v989 = vadd.f32 %v769, %v893
      %v990 = vadd.f32 %v880, %v894
      %v991 = vadd.f32 %v882, %v895
      %v992 = vpack.c.bf16 %v902, %v896
      %v993 = vpack.c.bf16 %v903, %v897
      %v994 = vpack.c.bf16 %v914, %v908
      %v995 = vpack.c.bf16 %v915, %v909
      %v996 = vpack.c.bf16 %v926, %v920
      %v997 = vpack.c.bf16 %v927, %v921
      %v998 = vpack.c.bf16 %v938, %v932
      %v999 = vpack.c.bf16 %v939, %v933
      %v1000 = vpack.c.bf16 %v950, %v944
      %v1001 = vpack.c.bf16 %v951, %v945
      %v1002 = vpack.c.bf16 %v962, %v956
      %v1003 = vpack.c.bf16 %v963, %v957
      %v1004 = vpack.c.bf16 %v974, %v968
      %v1005 = vpack.c.bf16 %v975, %v969
      %v1006 = vpack.c.bf16 %v986, %v980
      %v1007 = vpack.c.bf16 %v987, %v981
      %v1008 = vpack.c.bf16 %v904, %v898
      %v1009 = vpack.c.bf16 %v905, %v899
      %v1010 = vpack.c.bf16 %v916, %v910
      %v1011 = vpack.c.bf16 %v917, %v911
      %v1012 = vpack.c.bf16 %v928, %v922
      %v1013 = vpack.c.bf16 %v929, %v923
      %v1014 = vpack.c.bf16 %v940, %v934
      %v1015 = vpack.c.bf16 %v941, %v935
      %v1016 = vpack.c.bf16 %v952, %v946
      %v1017 = vpack.c.bf16 %v953, %v947
      %v1018 = vpack.c.bf16 %v964, %v958
      %v1019 = vpack.c.bf16 %v965, %v959
      %v1020 = vpack.c.bf16 %v976, %v970
      %v1021 = vpack.c.bf16 %v977, %v971
      %v1022 = vpack.c.bf16 %v988, %v982
      %v1023 = vpack.c.bf16 %v989, %v983
      %1024 = vmatprep.subr.bf16.mxu0 %v1009
      %1025 = vmatpush1.bf16.xpose.msra.mxu0 %v1008
      %1026 = vmatprep.subr.bf16.mxu0 0
      %1027 = vmatpush1.bf16.xpose.msra.mxu0 0
      %1028 = vmatprep.subr.bf16.mxu0 0
      %1029 = vmatpush1.bf16.xpose.msra.mxu0 0
      %1030 = vmatprep.subr.bf16.mxu0 0
      %1031 = vmatpush1.bf16.xpose.msra.mxu0 0
      %1032 = vmatprep.subr.bf16.mxu0 0
      %1033 = vmatpush1.bf16.xpose.msra.mxu0 0
      %1034 = vmatprep.subr.bf16.mxu0 0
      %1035 = vmatpush1.bf16.xpose.msra.mxu0 0
      %1036 = vmatprep.subr.bf16.mxu0 0
      %1037 = vmatpush1.bf16.xpose.msra.mxu0 0
      %1038 = vmatprep.subr.bf16.mxu0 0
      %1039 = vmatpush1.bf16.xpose.msra.mxu0 0
      %1040 = vmatprep.subr.bf16.mxu0 0
      %1041 = vmatpush1.bf16.xpose.msra.mxu0 0
      %1042 = vmatprep.subr.bf16.mxu0 0
      %1043 = vmatpush1.bf16.xpose.msra.mxu0 0
      %1044 = vmatprep.subr.bf16.mxu0 0
      %1045 = vmatpush1.bf16.xpose.msra.mxu0 0
      %1046 = vmatprep.subr.bf16.mxu0 0
      %1047 = vmatpush1.bf16.xpose.msra.mxu0 0
      %1048 = vmatprep.subr.bf16.mxu0 0
      %1049 = vmatpush1.bf16.xpose.msra.mxu0 0
      %1050 = vmatprep.subr.bf16.mxu0 0
      %1051 = vmatpush1.bf16.xpose.msra.mxu0 0
      %1052 = vmatprep.subr.bf16.mxu0 0
      %1053 = vmatpush1.bf16.xpose.msra.mxu0 0
      %1054 = vmatprep.subr.bf16.mxu0 0
      %1055 = vmatpush1.bf16.xpose.msra.mxu0 0
      %1056 = vmatprep.mubr.bf16.mxu0 %v993
      %1057 = vmatmul.mubr.bf16.gmra.mrb[0].mxu0 %v992
      %v1058 = vpop.f32.mrb[0].mxu0
      %v1059 = vadd.f32 0.0, %v1058
      %v1060 = vpop.f32.mrb[0].mxu0
      %v1061 = vpop.f32.mrb[0].mxu0
      %v1062 = vadd.f32 0.0, %v1061
      %v1063 = vpop.f32.mrb[0].mxu0
      %1064 = vdwg.mxu0
      %1065 = vmatprep.subr.bf16.mxu0 %v1011
      %1066 = vmatpush1.bf16.xpose.msra.mxu0 %v1010
      %1067 = vmatprep.subr.bf16.mxu0 0
      %1068 = vmatpush1.bf16.xpose.msra.mxu0 0
      %1069 = vmatprep.subr.bf16.mxu0 0
      %1070 = vmatpush1.bf16.xpose.msra.mxu0 0
      %1071 = vmatprep.subr.bf16.mxu0 0
      %1072 = vmatpush1.bf16.xpose.msra.mxu0 0
      %1073 = vmatprep.subr.bf16.mxu0 0
      %1074 = vmatpush1.bf16.xpose.msra.mxu0 0
      %1075 = vmatprep.subr.bf16.mxu0 0
      %1076 = vmatpush1.bf16.xpose.msra.mxu0 0
      %1077 = vmatprep.subr.bf16.mxu0 0
      %1078 = vmatpush1.bf16.xpose.msra.mxu0 0
      %1079 = vmatprep.subr.bf16.mxu0 0
      %1080 = vmatpush1.bf16.xpose.msra.mxu0 0
      %1081 = vmatprep.subr.bf16.mxu0 0
      %1082 = vmatpush1.bf16.xpose.msra.mxu0 0
      %1083 = vmatprep.subr.bf16.mxu0 0
      %1084 = vmatpush1.bf16.xpose.msra.mxu0 0
      %1085 = vmatprep.subr.bf16.mxu0 0
      %1086 = vmatpush1.bf16.xpose.msra.mxu0 0
      %1087 = vmatprep.subr.bf16.mxu0 0
      %1088 = vmatpush1.bf16.xpose.msra.mxu0 0
      %1089 = vmatprep.subr.bf16.mxu0 0
      %1090 = vmatpush1.bf16.xpose.msra.mxu0 0
      %1091 = vmatprep.subr.bf16.mxu0 0
      %1092 = vmatpush1.bf16.xpose.msra.mxu0 0
      %1093 = vmatprep.subr.bf16.mxu0 0
      %1094 = vmatpush1.bf16.xpose.msra.mxu0 0
      %1095 = vmatprep.subr.bf16.mxu0 0
      %1096 = vmatpush1.bf16.xpose.msra.mxu0 0
      %1097 = vmatprep.mubr.bf16.mxu0 %v995
      %1098 = vmatmul.mubr.bf16.gmra.mrb[0].mxu0 %v994
      %v1099 = vpop.f32.mrb[0].mxu0
      %v1100 = vadd.f32 0.0, %v1099
      %v1101 = vpop.f32.mrb[0].mxu0
      %v1102 = vpop.f32.mrb[0].mxu0
      %v1103 = vadd.f32 0.0, %v1102
      %v1104 = vpop.f32.mrb[0].mxu0
      %1105 = vdwg.mxu0
      %1106 = vmatprep.subr.bf16.mxu0 %v1013
      %1107 = vmatpush1.bf16.xpose.msra.mxu0 %v1012
      %1108 = vmatprep.subr.bf16.mxu0 0
      %1109 = vmatpush1.bf16.xpose.msra.mxu0 0
      %1110 = vmatprep.subr.bf16.mxu0 0
      %1111 = vmatpush1.bf16.xpose.msra.mxu0 0
      %1112 = vmatprep.subr.bf16.mxu0 0
      %1113 = vmatpush1.bf16.xpose.msra.mxu0 0
      %1114 = vmatprep.subr.bf16.mxu0 0
      %1115 = vmatpush1.bf16.xpose.msra.mxu0 0
      %1116 = vmatprep.subr.bf16.mxu0 0
      %1117 = vmatpush1.bf16.xpose.msra.mxu0 0
      %1118 = vmatprep.subr.bf16.mxu0 0
      %1119 = vmatpush1.bf16.xpose.msra.mxu0 0
      %1120 = vmatprep.subr.bf16.mxu0 0
      %1121 = vmatpush1.bf16.xpose.msra.mxu0 0
      %1122 = vmatprep.subr.bf16.mxu0 0
      %1123 = vmatpush1.bf16.xpose.msra.mxu0 0
      %1124 = vmatprep.subr.bf16.mxu0 0
      %1125 = vmatpush1.bf16.xpose.msra.mxu0 0
      %1126 = vmatprep.subr.bf16.mxu0 0
      %1127 = vmatpush1.bf16.xpose.msra.mxu0 0
      %1128 = vmatprep.subr.bf16.mxu0 0
      %1129 = vmatpush1.bf16.xpose.msra.mxu0 0
      %1130 = vmatprep.subr.bf16.mxu0 0
      %1131 = vmatpush1.bf16.xpose.msra.mxu0 0
      %1132 = vmatprep.subr.bf16.mxu0 0
      %1133 = vmatpush1.bf16.xpose.msra.mxu0 0
      %1134 = vmatprep.subr.bf16.mxu0 0
      %1135 = vmatpush1.bf16.xpose.msra.mxu0 0
      %1136 = vmatprep.subr.bf16.mxu0 0
      %1137 = vmatpush1.bf16.xpose.msra.mxu0 0
      %1138 = vmatprep.mubr.bf16.mxu0 %v997
      %1139 = vmatmul.mubr.bf16.gmra.mrb[0].mxu0 %v996
      %v1140 = vpop.f32.mrb[0].mxu0
      %v1141 = vadd.f32 0.0, %v1140
      %v1142 = vpop.f32.mrb[0].mxu0
      %v1143 = vpop.f32.mrb[0].mxu0
      %v1144 = vadd.f32 0.0, %v1143
      %v1145 = vpop.f32.mrb[0].mxu0
      %1146 = vdwg.mxu0
      %1147 = vmatprep.subr.bf16.mxu0 %v1015
      %1148 = vmatpush1.bf16.xpose.msra.mxu0 %v1014
      %1149 = vmatprep.subr.bf16.mxu0 0
      %1150 = vmatpush1.bf16.xpose.msra.mxu0 0
      %1151 = vmatprep.subr.bf16.mxu0 0
      %1152 = vmatpush1.bf16.xpose.msra.mxu0 0
      %1153 = vmatprep.subr.bf16.mxu0 0
      %1154 = vmatpush1.bf16.xpose.msra.mxu0 0
      %1155 = vmatprep.subr.bf16.mxu0 0
      %1156 = vmatpush1.bf16.xpose.msra.mxu0 0
      %1157 = vmatprep.subr.bf16.mxu0 0
      %1158 = vmatpush1.bf16.xpose.msra.mxu0 0
      %1159 = vmatprep.subr.bf16.mxu0 0
      %1160 = vmatpush1.bf16.xpose.msra.mxu0 0
      %1161 = vmatprep.subr.bf16.mxu0 0
      %1162 = vmatpush1.bf16.xpose.msra.mxu0 0
      %1163 = vmatprep.subr.bf16.mxu0 0
      %1164 = vmatpush1.bf16.xpose.msra.mxu0 0
      %1165 = vmatprep.subr.bf16.mxu0 0
      %1166 = vmatpush1.bf16.xpose.msra.mxu0 0
      %1167 = vmatprep.subr.bf16.mxu0 0
      %1168 = vmatpush1.bf16.xpose.msra.mxu0 0
      %1169 = vmatprep.subr.bf16.mxu0 0
      %1170 = vmatpush1.bf16.xpose.msra.mxu0 0
      %1171 = vmatprep.subr.bf16.mxu0 0
      %1172 = vmatpush1.bf16.xpose.msra.mxu0 0
      %1173 = vmatprep.subr.bf16.mxu0 0
      %1174 = vmatpush1.bf16.xpose.msra.mxu0 0
      %1175 = vmatprep.subr.bf16.mxu0 0
      %1176 = vmatpush1.bf16.xpose.msra.mxu0 0
      %1177 = vmatprep.subr.bf16.mxu0 0
      %1178 = vmatpush1.bf16.xpose.msra.mxu0 0
      %1179 = vmatprep.mubr.bf16.mxu0 %v999
      %1180 = vmatmul.mubr.bf16.gmra.mrb[0].mxu0 %v998
      %v1181 = vpop.f32.mrb[0].mxu0
      %v1182 = vadd.f32 0.0, %v1181
      %v1183 = vpop.f32.mrb[0].mxu0
      %v1184 = vpop.f32.mrb[0].mxu0
      %v1185 = vadd.f32 0.0, %v1184
      %v1186 = vpop.f32.mrb[0].mxu0
      %1187 = vdwg.mxu0
      %1188 = vmatprep.subr.bf16.mxu0 %v1017
      %1189 = vmatpush1.bf16.xpose.msra.mxu0 %v1016
      %1190 = vmatprep.subr.bf16.mxu0 0
      %1191 = vmatpush1.bf16.xpose.msra.mxu0 0
      %1192 = vmatprep.subr.bf16.mxu0 0
      %1193 = vmatpush1.bf16.xpose.msra.mxu0 0
      %1194 = vmatprep.subr.bf16.mxu0 0
      %1195 = vmatpush1.bf16.xpose.msra.mxu0 0
      %1196 = vmatprep.subr.bf16.mxu0 0
      %1197 = vmatpush1.bf16.xpose.msra.mxu0 0
      %1198 = vmatprep.subr.bf16.mxu0 0
      %1199 = vmatpush1.bf16.xpose.msra.mxu0 0
      %1200 = vmatprep.subr.bf16.mxu0 0
      %1201 = vmatpush1.bf16.xpose.msra.mxu0 0
      %1202 = vmatprep.subr.bf16.mxu0 0
      %1203 = vmatpush1.bf16.xpose.msra.mxu0 0
      %1204 = vmatprep.subr.bf16.mxu0 0
      %1205 = vmatpush1.bf16.xpose.msra.mxu0 0
      %1206 = vmatprep.subr.bf16.mxu0 0
      %1207 = vmatpush1.bf16.xpose.msra.mxu0 0
      %1208 = vmatprep.subr.bf16.mxu0 0
      %1209 = vmatpush1.bf16.xpose.msra.mxu0 0
      %1210 = vmatprep.subr.bf16.mxu0 0
      %1211 = vmatpush1.bf16.xpose.msra.mxu0 0
      %1212 = vmatprep.subr.bf16.mxu0 0
      %1213 = vmatpush1.bf16.xpose.msra.mxu0 0
      %1214 = vmatprep.subr.bf16.mxu0 0
      %1215 = vmatpush1.bf16.xpose.msra.mxu0 0
      %1216 = vmatprep.subr.bf16.mxu0 0
      %1217 = vmatpush1.bf16.xpose.msra.mxu0 0
      %1218 = vmatprep.subr.bf16.mxu0 0
      %1219 = vmatpush1.bf16.xpose.msra.mxu0 0
      %1220 = vmatprep.mubr.bf16.mxu0 %v1001
      %1221 = vmatmul.mubr.bf16.gmra.mrb[0].mxu0 %v1000
      %v1222 = vpop.f32.mrb[0].mxu0
      %v1223 = vadd.f32 0.0, %v1222
      %v1224 = vpop.f32.mrb[0].mxu0
      %v1225 = vpop.f32.mrb[0].mxu0
      %v1226 = vadd.f32 0.0, %v1225
      %v1227 = vpop.f32.mrb[0].mxu0
      %1228 = vdwg.mxu0
      %1229 = vmatprep.subr.bf16.mxu0 %v1019
      %1230 = vmatpush1.bf16.xpose.msra.mxu0 %v1018
      %1231 = vmatprep.subr.bf16.mxu0 0
      %1232 = vmatpush1.bf16.xpose.msra.mxu0 0
      %1233 = vmatprep.subr.bf16.mxu0 0
      %1234 = vmatpush1.bf16.xpose.msra.mxu0 0
      %1235 = vmatprep.subr.bf16.mxu0 0
      %1236 = vmatpush1.bf16.xpose.msra.mxu0 0
      %1237 = vmatprep.subr.bf16.mxu0 0
      %1238 = vmatpush1.bf16.xpose.msra.mxu0 0
      %1239 = vmatprep.subr.bf16.mxu0 0
      %1240 = vmatpush1.bf16.xpose.msra.mxu0 0
      %1241 = vmatprep.subr.bf16.mxu0 0
      %1242 = vmatpush1.bf16.xpose.msra.mxu0 0
      %1243 = vmatprep.subr.bf16.mxu0 0
      %1244 = vmatpush1.bf16.xpose.msra.mxu0 0
      %1245 = vmatprep.subr.bf16.mxu0 0
      %1246 = vmatpush1.bf16.xpose.msra.mxu0 0
      %1247 = vmatprep.subr.bf16.mxu0 0
      %1248 = vmatpush1.bf16.xpose.msra.mxu0 0
      %1249 = vmatprep.subr.bf16.mxu0 0
      %1250 = vmatpush1.bf16.xpose.msra.mxu0 0
      %1251 = vmatprep.subr.bf16.mxu0 0
      %1252 = vmatpush1.bf16.xpose.msra.mxu0 0
      %1253 = vmatprep.subr.bf16.mxu0 0
      %1254 = vmatpush1.bf16.xpose.msra.mxu0 0
      %1255 = vmatprep.subr.bf16.mxu0 0
      %1256 = vmatpush1.bf16.xpose.msra.mxu0 0
      %1257 = vmatprep.subr.bf16.mxu0 0
      %1258 = vmatpush1.bf16.xpose.msra.mxu0 0
      %1259 = vmatprep.subr.bf16.mxu0 0
      %1260 = vmatpush1.bf16.xpose.msra.mxu0 0
      %1261 = vmatprep.mubr.bf16.mxu0 %v1003
      %1262 = vmatmul.mubr.bf16.gmra.mrb[0].mxu0 %v1002
      %v1263 = vpop.f32.mrb[0].mxu0
      %v1264 = vadd.f32 0.0, %v1263
      %v1265 = vpop.f32.mrb[0].mxu0
      %v1266 = vpop.f32.mrb[0].mxu0
      %v1267 = vadd.f32 0.0, %v1266
      %v1268 = vpop.f32.mrb[0].mxu0
      %1269 = vdwg.mxu0
      %1270 = vmatprep.subr.bf16.mxu0 %v1021
      %1271 = vmatpush1.bf16.xpose.msra.mxu0 %v1020
      %1272 = vmatprep.subr.bf16.mxu0 0
      %1273 = vmatpush1.bf16.xpose.msra.mxu0 0
      %1274 = vmatprep.subr.bf16.mxu0 0
      %1275 = vmatpush1.bf16.xpose.msra.mxu0 0
      %1276 = vmatprep.subr.bf16.mxu0 0
      %1277 = vmatpush1.bf16.xpose.msra.mxu0 0
      %1278 = vmatprep.subr.bf16.mxu0 0
      %1279 = vmatpush1.bf16.xpose.msra.mxu0 0
      %1280 = vmatprep.subr.bf16.mxu0 0
      %1281 = vmatpush1.bf16.xpose.msra.mxu0 0
      %1282 = vmatprep.subr.bf16.mxu0 0
      %1283 = vmatpush1.bf16.xpose.msra.mxu0 0
      %1284 = vmatprep.subr.bf16.mxu0 0
      %1285 = vmatpush1.bf16.xpose.msra.mxu0 0
      %1286 = vmatprep.subr.bf16.mxu0 0
      %1287 = vmatpush1.bf16.xpose.msra.mxu0 0
      %1288 = vmatprep.subr.bf16.mxu0 0
      %1289 = vmatpush1.bf16.xpose.msra.mxu0 0
      %1290 = vmatprep.subr.bf16.mxu0 0
      %1291 = vmatpush1.bf16.xpose.msra.mxu0 0
      %1292 = vmatprep.subr.bf16.mxu0 0
      %1293 = vmatpush1.bf16.xpose.msra.mxu0 0
      %1294 = vmatprep.subr.bf16.mxu0 0
      %1295 = vmatpush1.bf16.xpose.msra.mxu0 0
      %1296 = vmatprep.subr.bf16.mxu0 0
      %1297 = vmatpush1.bf16.xpose.msra.mxu0 0
      %1298 = vmatprep.subr.bf16.mxu0 0
      %1299 = vmatpush1.bf16.xpose.msra.mxu0 0
      %1300 = vmatprep.subr.bf16.mxu0 0
      %1301 = vmatpush1.bf16.xpose.msra.mxu0 0
      %1302 = vmatprep.mubr.bf16.mxu0 %v1005
      %1303 = vmatmul.mubr.bf16.gmra.mrb[0].mxu0 %v1004
      %v1304 = vpop.f32.mrb[0].mxu0
      %v1305 = vadd.f32 0.0, %v1304
      %v1306 = vpop.f32.mrb[0].mxu0
      %v1307 = vpop.f32.mrb[0].mxu0
      %v1308 = vadd.f32 0.0, %v1307
      %v1309 = vpop.f32.mrb[0].mxu0
      %1310 = vdwg.mxu0
      %1311 = vmatprep.subr.bf16.mxu0 %v1023
      %1312 = vmatpush1.bf16.xpose.msra.mxu0 %v1022
      %1313 = vmatprep.subr.bf16.mxu0 0
      %1314 = vmatpush1.bf16.xpose.msra.mxu0 0
      %1315 = vmatprep.subr.bf16.mxu0 0
      %1316 = vmatpush1.bf16.xpose.msra.mxu0 0
      %1317 = vmatprep.subr.bf16.mxu0 0
      %1318 = vmatpush1.bf16.xpose.msra.mxu0 0
      %1319 = vmatprep.subr.bf16.mxu0 0
      %1320 = vmatpush1.bf16.xpose.msra.mxu0 0
      %1321 = vmatprep.subr.bf16.mxu0 0
      %1322 = vmatpush1.bf16.xpose.msra.mxu0 0
      %1323 = vmatprep.subr.bf16.mxu0 0
      %1324 = vmatpush1.bf16.xpose.msra.mxu0 0
      %1325 = vmatprep.subr.bf16.mxu0 0
      %1326 = vmatpush1.bf16.xpose.msra.mxu0 0
      %1327 = vmatprep.subr.bf16.mxu0 0
      %1328 = vmatpush1.bf16.xpose.msra.mxu0 0
      %1329 = vmatprep.subr.bf16.mxu0 0
      %1330 = vmatpush1.bf16.xpose.msra.mxu0 0
      %1331 = vmatprep.subr.bf16.mxu0 0
      %1332 = vmatpush1.bf16.xpose.msra.mxu0 0
      %1333 = vmatprep.subr.bf16.mxu0 0
      %1334 = vmatpush1.bf16.xpose.msra.mxu0 0
      %1335 = vmatprep.subr.bf16.mxu0 0
      %1336 = vmatpush1.bf16.xpose.msra.mxu0 0
      %1337 = vmatprep.subr.bf16.mxu0 0
      %1338 = vmatpush1.bf16.xpose.msra.mxu0 0
      %1339 = vmatprep.subr.bf16.mxu0 0
      %1340 = vmatpush1.bf16.xpose.msra.mxu0 0
      %1341 = vmatprep.subr.bf16.mxu0 0
      %1342 = vmatpush1.bf16.xpose.msra.mxu0 0
      %1343 = vmatprep.mubr.bf16.mxu0 %v1007
      %1344 = vmatmul.mubr.bf16.gmra.mrb[0].mxu0 %v1006
      %v1345 = vpop.f32.mrb[0].mxu0
      %v1346 = vadd.f32 0.0, %v1345
      %v1347 = vpop.f32.mrb[0].mxu0
      %v1348 = vpop.f32.mrb[0].mxu0
      %v1349 = vadd.f32 0.0, %v1348
      %v1350 = vpop.f32.mrb[0].mxu0
      %1351 = vdwg.mxu0
      %vm1352 = vcmask 130048
      %v1353 = vsel %vm1352, %v1059, -inf
      %v1354 = vsel %vm1352, %v1062, -inf
      %v1355 = vmax.f32 %v1353, %v1354
      %v1356 = vrot.slane %v1355, 4
      %v1357 = vmax.f32 %v1355, %v1356
      %v1358 = vrot.slane %v1357, 2
      %v1359 = vmax.f32 %v1357, %v1358
      %v1360 = vrot.slane %v1359, 1
      %v1361 = vmax.f32 %v1359, %v1360
      %v1362 = vsel %vm1352, %v1100, -inf
      %v1363 = vsel %vm1352, %v1103, -inf
      %v1364 = vmax.f32 %v1362, %v1363
      %v1365 = vrot.slane %v1364, 4
      %v1366 = vmax.f32 %v1364, %v1365
      %v1367 = vrot.slane %v1366, 2
      %v1368 = vmax.f32 %v1366, %v1367
      %v1369 = vrot.slane %v1368, 1
      %v1370 = vmax.f32 %v1368, %v1369
      %v1371 = vsel %vm1352, %v1141, -inf
      %v1372 = vsel %vm1352, %v1144, -inf
      %v1373 = vmax.f32 %v1371, %v1372
      %v1374 = vrot.slane %v1373, 4
      %v1375 = vmax.f32 %v1373, %v1374
      %v1376 = vrot.slane %v1375, 2
      %v1377 = vmax.f32 %v1375, %v1376
      %v1378 = vrot.slane %v1377, 1
      %v1379 = vmax.f32 %v1377, %v1378
      %v1380 = vsel %vm1352, %v1182, -inf
      %v1381 = vsel %vm1352, %v1185, -inf
      %v1382 = vmax.f32 %v1380, %v1381
      %v1383 = vrot.slane %v1382, 4
      %v1384 = vmax.f32 %v1382, %v1383
      %v1385 = vrot.slane %v1384, 2
      %v1386 = vmax.f32 %v1384, %v1385
      %v1387 = vrot.slane %v1386, 1
      %v1388 = vmax.f32 %v1386, %v1387
      %v1389 = vsel %vm1352, %v1223, -inf
      %v1390 = vsel %vm1352, %v1226, -inf
      %v1391 = vmax.f32 %v1389, %v1390
      %v1392 = vrot.slane %v1391, 4
      %v1393 = vmax.f32 %v1391, %v1392
      %v1394 = vrot.slane %v1393, 2
      %v1395 = vmax.f32 %v1393, %v1394
      %v1396 = vrot.slane %v1395, 1
      %v1397 = vmax.f32 %v1395, %v1396
      %v1398 = vsel %vm1352, %v1264, -inf
      %v1399 = vsel %vm1352, %v1267, -inf
      %v1400 = vmax.f32 %v1398, %v1399
      %v1401 = vrot.slane %v1400, 4
      %v1402 = vmax.f32 %v1400, %v1401
      %v1403 = vrot.slane %v1402, 2
      %v1404 = vmax.f32 %v1402, %v1403
      %v1405 = vrot.slane %v1404, 1
      %v1406 = vmax.f32 %v1404, %v1405
      %v1407 = vsel %vm1352, %v1305, -inf
      %v1408 = vsel %vm1352, %v1308, -inf
      %v1409 = vmax.f32 %v1407, %v1408
      %v1410 = vrot.slane %v1409, 4
      %v1411 = vmax.f32 %v1409, %v1410
      %v1412 = vrot.slane %v1411, 2
      %v1413 = vmax.f32 %v1411, %v1412
      %v1414 = vrot.slane %v1413, 1
      %v1415 = vmax.f32 %v1413, %v1414
      %v1416 = vsel %vm1352, %v1346, -inf
      %v1417 = vsel %vm1352, %v1349, -inf
      %v1418 = vmax.f32 %v1416, %v1417
      %v1419 = vrot.slane %v1418, 4
      %v1420 = vmax.f32 %v1418, %v1419
      %v1421 = vrot.slane %v1420, 2
      %v1422 = vmax.f32 %v1420, %v1421
      %v1423 = vrot.slane %v1422, 1
      %v1424 = vmax.f32 %v1422, %v1423
      %v1425 = vsub.f32 %v1059, %v1361
      %v1426 = vsub.f32 %v1062, %v1361
      %v1427 = vsub.f32 %v1100, %v1370
      %v1428 = vsub.f32 %v1103, %v1370
      %v1429 = vsub.f32 %v1141, %v1379
      %v1430 = vsub.f32 %v1144, %v1379
      %v1431 = vsub.f32 %v1182, %v1388
      %v1432 = vsub.f32 %v1185, %v1388
      %v1433 = vsub.f32 %v1223, %v1397
      %v1434 = vsub.f32 %v1226, %v1397
      %v1435 = vsub.f32 %v1264, %v1406
      %v1436 = vsub.f32 %v1267, %v1406
      %v1437 = vsub.f32 %v1305, %v1415
      %v1438 = vsub.f32 %v1308, %v1415
      %v1439 = vsub.f32 %v1346, %v1424
      %v1440 = vsub.f32 %v1349, %v1424
      %v1441 = vmul.f32 %v1425, 1.442695
      %v1442 = vpow.pop %v1441
      %v1443 = vmul.f32 %v1426, 1.442695
      %v1444 = vpow.pop %v1443
      %v1445 = vmul.f32 %v1427, 1.442695
      %v1446 = vpow.pop %v1445
      %v1447 = vmul.f32 %v1428, 1.442695
      %v1448 = vpow.pop %v1447
      %v1449 = vmul.f32 %v1429, 1.442695
      %v1450 = vpow.pop %v1449
      %v1451 = vmul.f32 %v1430, 1.442695
      %v1452 = vpow.pop %v1451
      %v1453 = vmul.f32 %v1431, 1.442695
      %v1454 = vpow.pop %v1453
      %v1455 = vmul.f32 %v1432, 1.442695
      %v1456 = vpow.pop %v1455
      %v1457 = vmul.f32 %v1433, 1.442695
      %v1458 = vpow.pop %v1457
      %v1459 = vmul.f32 %v1434, 1.442695
      %v1460 = vpow.pop %v1459
      %v1461 = vmul.f32 %v1435, 1.442695
      %v1462 = vpow.pop %v1461
      %v1463 = vmul.f32 %v1436, 1.442695
      %v1464 = vpow.pop %v1463
      %v1465 = vmul.f32 %v1437, 1.442695
      %v1466 = vpow.pop %v1465
      %v1467 = vmul.f32 %v1438, 1.442695
      %v1468 = vpow.pop %v1467
      %v1469 = vmul.f32 %v1439, 1.442695
      %v1470 = vpow.pop %v1469
      %v1471 = vmul.f32 %v1440, 1.442695
      %v1472 = vpow.pop %v1471
      %v1473 = vsel %vm1352, %v1442, 0.0
      %v1474 = vsel %vm1352, %v1444, 0.0
      %v1475 = vadd.f32 %v1473, %v1474
      %v1476 = vrot.slane %v1475, 4
      %v1477 = vadd.f32 %v1475, %v1476
      %v1478 = vrot.slane %v1477, 2
      %v1479 = vadd.f32 %v1477, %v1478
      %v1480 = vrot.slane %v1479, 1
      %v1481 = vadd.f32 %v1479, %v1480
      %v1482 = vsel %vm1352, %v1446, 0.0
      %v1483 = vsel %vm1352, %v1448, 0.0
      %v1484 = vadd.f32 %v1482, %v1483
      %v1485 = vrot.slane %v1484, 4
      %v1486 = vadd.f32 %v1484, %v1485
      %v1487 = vrot.slane %v1486, 2
      %v1488 = vadd.f32 %v1486, %v1487
      %v1489 = vrot.slane %v1488, 1
      %v1490 = vadd.f32 %v1488, %v1489
      %v1491 = vsel %vm1352, %v1450, 0.0
      %v1492 = vsel %vm1352, %v1452, 0.0
      %v1493 = vadd.f32 %v1491, %v1492
      %v1494 = vrot.slane %v1493, 4
      %v1495 = vadd.f32 %v1493, %v1494
      %v1496 = vrot.slane %v1495, 2
      %v1497 = vadd.f32 %v1495, %v1496
      %v1498 = vrot.slane %v1497, 1
      %v1499 = vadd.f32 %v1497, %v1498
      %v1500 = vsel %vm1352, %v1454, 0.0
      %v1501 = vsel %vm1352, %v1456, 0.0
      %v1502 = vadd.f32 %v1500, %v1501
      %v1503 = vrot.slane %v1502, 4
      %v1504 = vadd.f32 %v1502, %v1503
      %v1505 = vrot.slane %v1504, 2
      %v1506 = vadd.f32 %v1504, %v1505
      %v1507 = vrot.slane %v1506, 1
      %v1508 = vadd.f32 %v1506, %v1507
      %v1509 = vsel %vm1352, %v1458, 0.0
      %v1510 = vsel %vm1352, %v1460, 0.0
      %v1511 = vadd.f32 %v1509, %v1510
      %v1512 = vrot.slane %v1511, 4
      %v1513 = vadd.f32 %v1511, %v1512
      %v1514 = vrot.slane %v1513, 2
      %v1515 = vadd.f32 %v1513, %v1514
      %v1516 = vrot.slane %v1515, 1
      %v1517 = vadd.f32 %v1515, %v1516
      %v1518 = vsel %vm1352, %v1462, 0.0
      %v1519 = vsel %vm1352, %v1464, 0.0
      %v1520 = vadd.f32 %v1518, %v1519
      %v1521 = vrot.slane %v1520, 4
      %v1522 = vadd.f32 %v1520, %v1521
      %v1523 = vrot.slane %v1522, 2
      %v1524 = vadd.f32 %v1522, %v1523
      %v1525 = vrot.slane %v1524, 1
      %v1526 = vadd.f32 %v1524, %v1525
      %v1527 = vsel %vm1352, %v1466, 0.0
      %v1528 = vsel %vm1352, %v1468, 0.0
      %v1529 = vadd.f32 %v1527, %v1528
      %v1530 = vrot.slane %v1529, 4
      %v1531 = vadd.f32 %v1529, %v1530
      %v1532 = vrot.slane %v1531, 2
      %v1533 = vadd.f32 %v1531, %v1532
      %v1534 = vrot.slane %v1533, 1
      %v1535 = vadd.f32 %v1533, %v1534
      %v1536 = vsel %vm1352, %v1470, 0.0
      %v1537 = vsel %vm1352, %v1472, 0.0
      %v1538 = vadd.f32 %v1536, %v1537
      %v1539 = vrot.slane %v1538, 4
      %v1540 = vadd.f32 %v1538, %v1539
      %v1541 = vrot.slane %v1540, 2
      %v1542 = vadd.f32 %v1540, %v1541
      %v1543 = vrot.slane %v1542, 1
      %v1544 = vadd.f32 %v1542, %v1543
      %v1545 = vrcp.pop %v1481
      %v1546 = vmul.f32 %v1442, %v1545
      %v1547 = vmul.f32 %v1444, %v1545
      %v1548 = vrcp.pop %v1490
      %v1549 = vmul.f32 %v1446, %v1548
      %v1550 = vmul.f32 %v1448, %v1548
      %v1551 = vrcp.pop %v1499
      %v1552 = vmul.f32 %v1450, %v1551
      %v1553 = vmul.f32 %v1452, %v1551
      %v1554 = vrcp.pop %v1508
      %v1555 = vmul.f32 %v1454, %v1554
      %v1556 = vmul.f32 %v1456, %v1554
      %v1557 = vrcp.pop %v1517
      %v1558 = vmul.f32 %v1458, %v1557
      %v1559 = vmul.f32 %v1460, %v1557
      %v1560 = vrcp.pop %v1526
      %v1561 = vmul.f32 %v1462, %v1560
      %v1562 = vmul.f32 %v1464, %v1560
      %v1563 = vrcp.pop %v1535
      %v1564 = vmul.f32 %v1466, %v1563
      %v1565 = vmul.f32 %v1468, %v1563
      %v1566 = vrcp.pop %v1544
      %v1567 = vmul.f32 %v1470, %v1566
      %v1568 = vmul.f32 %v1472, %v1566
      %v1569 = vpack.c.bf16 %v1547, %v1546
      %v1570 = vpack.c.bf16 %v1550, %v1549
      %v1571 = vpack.c.bf16 %v1553, %v1552
      %v1572 = vpack.c.bf16 %v1556, %v1555
      %v1573 = vpack.c.bf16 %v1559, %v1558
      %v1574 = vpack.c.bf16 %v1562, %v1561
      %v1575 = vpack.c.bf16 %v1565, %v1564
      %v1576 = vpack.c.bf16 %v1568, %v1567
      %v1585 = vunpack.c.l.b16 %v1569
      %v1586 = vunpack.c.h.b16 %v1569
      %v1587 = vunpack.c.l.b16 %v1570
      %v1588 = vunpack.c.h.b16 %v1570
      %v1589 = vunpack.c.l.b16 %v1571
      %v1590 = vunpack.c.h.b16 %v1571
      %v1591 = vunpack.c.l.b16 %v1572
      %v1592 = vunpack.c.h.b16 %v1572
      %v1593 = vunpack.c.l.b16 %v1573
      %v1594 = vunpack.c.h.b16 %v1573
      %v1595 = vunpack.c.l.b16 %v1574
      %v1596 = vunpack.c.h.b16 %v1574
      %v1597 = vunpack.c.l.b16 %v1575
      %v1598 = vunpack.c.h.b16 %v1575
      %v1599 = vunpack.c.l.b16 %v1576
      %v1600 = vunpack.c.h.b16 %v1576
      %v1601 = vpack.c.b16 %v1585, %v1585
      %v1602 = vpack.c.b16 %v1586, %v1586
      %v1603 = vpack.c.b16 %v1587, %v1587
      %v1604 = vpack.c.b16 %v1588, %v1588
      %v1605 = vpack.c.b16 %v1589, %v1589
      %v1606 = vpack.c.b16 %v1590, %v1590
      %v1607 = vpack.c.b16 %v1591, %v1591
      %v1608 = vpack.c.b16 %v1592, %v1592
      %v1609 = vpack.c.b16 %v1593, %v1593
      %v1610 = vpack.c.b16 %v1594, %v1594
      %v1611 = vpack.c.b16 %v1595, %v1595
      %v1612 = vpack.c.b16 %v1596, %v1596
      %v1613 = vpack.c.b16 %v1597, %v1597
      %v1614 = vpack.c.b16 %v1598, %v1598
      %v1615 = vpack.c.b16 %v1599, %v1599
      %v1616 = vpack.c.b16 %v1600, %v1600
      %vm1633 = vcmask 125952
      %1634 = vst.msk [vmem:[%s304] sm:$0xf] %vm1633, %v1601
      %1635 = vst.msk [vmem:[%s304 + $0x4] sm:$0xf] %vm1633, %v1602
      %1636 = vst.msk [vmem:[%s304 + $0x8] sm:$0xf] %vm1633, %v1603
      %1637 = vst.msk [vmem:[%s304 + $0xc] sm:$0xf] %vm1633, %v1604
      %1638 = vst.msk [vmem:[%s304 + $0x10] sm:$0xf] %vm1633, %v1605
      %1639 = vst.msk [vmem:[%s304 + $0x14] sm:$0xf] %vm1633, %v1606
      %1640 = vst.msk [vmem:[%s304 + $0x18] sm:$0xf] %vm1633, %v1607
      %1641 = vst.msk [vmem:[%s304 + $0x1c] sm:$0xf] %vm1633, %v1608
      %1642 = vst.msk [vmem:[%s304 + $0x20] sm:$0xf] %vm1633, %v1609
      %1643 = vst.msk [vmem:[%s304 + $0x24] sm:$0xf] %vm1633, %v1610
      %1644 = vst.msk [vmem:[%s304 + $0x28] sm:$0xf] %vm1633, %v1611
      %1645 = vst.msk [vmem:[%s304 + $0x2c] sm:$0xf] %vm1633, %v1612
      %1646 = vst.msk [vmem:[%s304 + $0x30] sm:$0xf] %vm1633, %v1613
      %1647 = vst.msk [vmem:[%s304 + $0x34] sm:$0xf] %vm1633, %v1614
      %1648 = vst.msk [vmem:[%s304 + $0x38] sm:$0xf] %vm1633, %v1615
      %1649 = vst.msk [vmem:[%s304 + $0x3c] sm:$0xf] %vm1633, %v1616
      %v1650 = vpack.c.bf16 %v906, %v900
      %v1651 = vpack.c.bf16 %v918, %v912
      %v1652 = vpack.c.bf16 %v930, %v924
      %v1653 = vpack.c.bf16 %v942, %v936
      %v1654 = vpack.c.bf16 %v954, %v948
      %v1655 = vpack.c.bf16 %v966, %v960
      %v1656 = vpack.c.bf16 %v978, %v972
      %v1657 = vpack.c.bf16 %v990, %v984
      %v1659 = vsel %vm1352, %v1569, 0
      %1661 = vmatprep.subr.bf16.mxu0 0
      %1662 = vmatpush1.bf16.msra.mxu0 %v1650
      %1663 = vmatprep.subr.bf16.mxu0 0
      %1664 = vmatpush1.bf16.msra.mxu0 0
      %1665 = vmatprep.subr.bf16.mxu0 0
      %1666 = vmatpush1.bf16.msra.mxu0 0
      %1667 = vmatprep.subr.bf16.mxu0 0
      %1668 = vmatpush1.bf16.msra.mxu0 0
      %1669 = vmatprep.subr.bf16.mxu0 0
      %1670 = vmatpush1.bf16.msra.mxu0 0
      %1671 = vmatprep.subr.bf16.mxu0 0
      %1672 = vmatpush1.bf16.msra.mxu0 0
      %1673 = vmatprep.subr.bf16.mxu0 0
      %1674 = vmatpush1.bf16.msra.mxu0 0
      %1675 = vmatprep.subr.bf16.mxu0 0
      %1676 = vmatpush1.bf16.msra.mxu0 0
      %1677 = vmatprep.subr.bf16.mxu0 0
      %1678 = vmatpush1.bf16.msra.mxu0 0
      %1679 = vmatprep.subr.bf16.mxu0 0
      %1680 = vmatpush1.bf16.msra.mxu0 0
      %1681 = vmatprep.subr.bf16.mxu0 0
      %1682 = vmatpush1.bf16.msra.mxu0 0
      %1683 = vmatprep.subr.bf16.mxu0 0
      %1684 = vmatpush1.bf16.msra.mxu0 0
      %1685 = vmatprep.subr.bf16.mxu0 0
      %1686 = vmatpush1.bf16.msra.mxu0 0
      %1687 = vmatprep.subr.bf16.mxu0 0
      %1688 = vmatpush1.bf16.msra.mxu0 0
      %1689 = vmatprep.subr.bf16.mxu0 0
      %1690 = vmatpush1.bf16.msra.mxu0 0
      %1691 = vmatprep.subr.bf16.mxu0 0
      %1692 = vmatpush1.bf16.msra.mxu0 0
      %1693 = vmatprep.mubr.bf16.mxu0 0
      %1694 = vmatmul.mubr.bf16.gmra.mrb[0].mxu0 %v1659
      %v1695 = vpop.f32.mrb[0].mxu0
      %v1696 = vadd.f32 %v901, %v1695
      %v1697 = vpop.f32.mrb[0].mxu0
      %v1698 = vpop.f32.mrb[0].mxu0
      %v1699 = vadd.f32 %v907, %v1698
      %v1700 = vpop.f32.mrb[0].mxu0
      %1701 = vdwg.mxu0
      %v1703 = vsel %vm1352, %v1570, 0
      %1705 = vmatprep.subr.bf16.mxu0 0
      %1706 = vmatpush1.bf16.msra.mxu0 %v1651
      %1707 = vmatprep.subr.bf16.mxu0 0
      %1708 = vmatpush1.bf16.msra.mxu0 0
      %1709 = vmatprep.subr.bf16.mxu0 0
      %1710 = vmatpush1.bf16.msra.mxu0 0
      %1711 = vmatprep.subr.bf16.mxu0 0
      %1712 = vmatpush1.bf16.msra.mxu0 0
      %1713 = vmatprep.subr.bf16.mxu0 0
      %1714 = vmatpush1.bf16.msra.mxu0 0
      %1715 = vmatprep.subr.bf16.mxu0 0
      %1716 = vmatpush1.bf16.msra.mxu0 0
      %1717 = vmatprep.subr.bf16.mxu0 0
      %1718 = vmatpush1.bf16.msra.mxu0 0
      %1719 = vmatprep.subr.bf16.mxu0 0
      %1720 = vmatpush1.bf16.msra.mxu0 0
      %1721 = vmatprep.subr.bf16.mxu0 0
      %1722 = vmatpush1.bf16.msra.mxu0 0
      %1723 = vmatprep.subr.bf16.mxu0 0
      %1724 = vmatpush1.bf16.msra.mxu0 0
      %1725 = vmatprep.subr.bf16.mxu0 0
      %1726 = vmatpush1.bf16.msra.mxu0 0
      %1727 = vmatprep.subr.bf16.mxu0 0
      %1728 = vmatpush1.bf16.msra.mxu0 0
      %1729 = vmatprep.subr.bf16.mxu0 0
      %1730 = vmatpush1.bf16.msra.mxu0 0
      %1731 = vmatprep.subr.bf16.mxu0 0
      %1732 = vmatpush1.bf16.msra.mxu0 0
      %1733 = vmatprep.subr.bf16.mxu0 0
      %1734 = vmatpush1.bf16.msra.mxu0 0
      %1735 = vmatprep.subr.bf16.mxu0 0
      %1736 = vmatpush1.bf16.msra.mxu0 0
      %1737 = vmatprep.mubr.bf16.mxu0 0
      %1738 = vmatmul.mubr.bf16.gmra.mrb[0].mxu0 %v1703
      %v1739 = vpop.f32.mrb[0].mxu0
      %v1740 = vadd.f32 %v913, %v1739
      %v1741 = vpop.f32.mrb[0].mxu0
      %v1742 = vpop.f32.mrb[0].mxu0
      %v1743 = vadd.f32 %v919, %v1742
      %v1744 = vpop.f32.mrb[0].mxu0
      %1745 = vdwg.mxu0
      %v1747 = vsel %vm1352, %v1571, 0
      %1749 = vmatprep.subr.bf16.mxu0 0
      %1750 = vmatpush1.bf16.msra.mxu0 %v1652
      %1751 = vmatprep.subr.bf16.mxu0 0
      %1752 = vmatpush1.bf16.msra.mxu0 0
      %1753 = vmatprep.subr.bf16.mxu0 0
      %1754 = vmatpush1.bf16.msra.mxu0 0
      %1755 = vmatprep.subr.bf16.mxu0 0
      %1756 = vmatpush1.bf16.msra.mxu0 0
      %1757 = vmatprep.subr.bf16.mxu0 0
      %1758 = vmatpush1.bf16.msra.mxu0 0
      %1759 = vmatprep.subr.bf16.mxu0 0
      %1760 = vmatpush1.bf16.msra.mxu0 0
      %1761 = vmatprep.subr.bf16.mxu0 0
      %1762 = vmatpush1.bf16.msra.mxu0 0
      %1763 = vmatprep.subr.bf16.mxu0 0
      %1764 = vmatpush1.bf16.msra.mxu0 0
      %1765 = vmatprep.subr.bf16.mxu0 0
      %1766 = vmatpush1.bf16.msra.mxu0 0
      %1767 = vmatprep.subr.bf16.mxu0 0
      %1768 = vmatpush1.bf16.msra.mxu0 0
      %1769 = vmatprep.subr.bf16.mxu0 0
      %1770 = vmatpush1.bf16.msra.mxu0 0
      %1771 = vmatprep.subr.bf16.mxu0 0
      %1772 = vmatpush1.bf16.msra.mxu0 0
      %1773 = vmatprep.subr.bf16.mxu0 0
      %1774 = vmatpush1.bf16.msra.mxu0 0
      %1775 = vmatprep.subr.bf16.mxu0 0
      %1776 = vmatpush1.bf16.msra.mxu0 0
      %1777 = vmatprep.subr.bf16.mxu0 0
      %1778 = vmatpush1.bf16.msra.mxu0 0
      %1779 = vmatprep.subr.bf16.mxu0 0
      %1780 = vmatpush1.bf16.msra.mxu0 0
      %1781 = vmatprep.mubr.bf16.mxu0 0
      %1782 = vmatmul.mubr.bf16.gmra.mrb[0].mxu0 %v1747
      %v1783 = vpop.f32.mrb[0].mxu0
      %v1784 = vadd.f32 %v925, %v1783
      %v1785 = vpop.f32.mrb[0].mxu0
      %v1786 = vpop.f32.mrb[0].mxu0
      %v1787 = vadd.f32 %v931, %v1786
      %v1788 = vpop.f32.mrb[0].mxu0
      %1789 = vdwg.mxu0
      %v1791 = vsel %vm1352, %v1572, 0
      %1793 = vmatprep.subr.bf16.mxu0 0
      %1794 = vmatpush1.bf16.msra.mxu0 %v1653
      %1795 = vmatprep.subr.bf16.mxu0 0
      %1796 = vmatpush1.bf16.msra.mxu0 0
      %1797 = vmatprep.subr.bf16.mxu0 0
      %1798 = vmatpush1.bf16.msra.mxu0 0
      %1799 = vmatprep.subr.bf16.mxu0 0
      %1800 = vmatpush1.bf16.msra.mxu0 0
      %1801 = vmatprep.subr.bf16.mxu0 0
      %1802 = vmatpush1.bf16.msra.mxu0 0
      %1803 = vmatprep.subr.bf16.mxu0 0
      %1804 = vmatpush1.bf16.msra.mxu0 0
      %1805 = vmatprep.subr.bf16.mxu0 0
      %1806 = vmatpush1.bf16.msra.mxu0 0
      %1807 = vmatprep.subr.bf16.mxu0 0
      %1808 = vmatpush1.bf16.msra.mxu0 0
      %1809 = vmatprep.subr.bf16.mxu0 0
      %1810 = vmatpush1.bf16.msra.mxu0 0
      %1811 = vmatprep.subr.bf16.mxu0 0
      %1812 = vmatpush1.bf16.msra.mxu0 0
      %1813 = vmatprep.subr.bf16.mxu0 0
      %1814 = vmatpush1.bf16.msra.mxu0 0
      %1815 = vmatprep.subr.bf16.mxu0 0
      %1816 = vmatpush1.bf16.msra.mxu0 0
      %1817 = vmatprep.subr.bf16.mxu0 0
      %1818 = vmatpush1.bf16.msra.mxu0 0
      %1819 = vmatprep.subr.bf16.mxu0 0
      %1820 = vmatpush1.bf16.msra.mxu0 0
      %1821 = vmatprep.subr.bf16.mxu0 0
      %1822 = vmatpush1.bf16.msra.mxu0 0
      %1823 = vmatprep.subr.bf16.mxu0 0
      %1824 = vmatpush1.bf16.msra.mxu0 0
      %1825 = vmatprep.mubr.bf16.mxu0 0
      %1826 = vmatmul.mubr.bf16.gmra.mrb[0].mxu0 %v1791
      %v1827 = vpop.f32.mrb[0].mxu0
      %v1828 = vadd.f32 %v937, %v1827
      %v1829 = vpop.f32.mrb[0].mxu0
      %v1830 = vpop.f32.mrb[0].mxu0
      %v1831 = vadd.f32 %v943, %v1830
      %v1832 = vpop.f32.mrb[0].mxu0
      %1833 = vdwg.mxu0
      %v1835 = vsel %vm1352, %v1573, 0
      %1837 = vmatprep.subr.bf16.mxu0 0
      %1838 = vmatpush1.bf16.msra.mxu0 %v1654
      %1839 = vmatprep.subr.bf16.mxu0 0
      %1840 = vmatpush1.bf16.msra.mxu0 0
      %1841 = vmatprep.subr.bf16.mxu0 0
      %1842 = vmatpush1.bf16.msra.mxu0 0
      %1843 = vmatprep.subr.bf16.mxu0 0
      %1844 = vmatpush1.bf16.msra.mxu0 0
      %1845 = vmatprep.subr.bf16.mxu0 0
      %1846 = vmatpush1.bf16.msra.mxu0 0
      %1847 = vmatprep.subr.bf16.mxu0 0
      %1848 = vmatpush1.bf16.msra.mxu0 0
      %1849 = vmatprep.subr.bf16.mxu0 0
      %1850 = vmatpush1.bf16.msra.mxu0 0
      %1851 = vmatprep.subr.bf16.mxu0 0
      %1852 = vmatpush1.bf16.msra.mxu0 0
      %1853 = vmatprep.subr.bf16.mxu0 0
      %1854 = vmatpush1.bf16.msra.mxu0 0
      %1855 = vmatprep.subr.bf16.mxu0 0
      %1856 = vmatpush1.bf16.msra.mxu0 0
      %1857 = vmatprep.subr.bf16.mxu0 0
      %1858 = vmatpush1.bf16.msra.mxu0 0
      %1859 = vmatprep.subr.bf16.mxu0 0
      %1860 = vmatpush1.bf16.msra.mxu0 0
      %1861 = vmatprep.subr.bf16.mxu0 0
      %1862 = vmatpush1.bf16.msra.mxu0 0
      %1863 = vmatprep.subr.bf16.mxu0 0
      %1864 = vmatpush1.bf16.msra.mxu0 0
      %1865 = vmatprep.subr.bf16.mxu0 0
      %1866 = vmatpush1.bf16.msra.mxu0 0
      %1867 = vmatprep.subr.bf16.mxu0 0
      %1868 = vmatpush1.bf16.msra.mxu0 0
      %1869 = vmatprep.mubr.bf16.mxu0 0
      %1870 = vmatmul.mubr.bf16.gmra.mrb[0].mxu0 %v1835
      %v1871 = vpop.f32.mrb[0].mxu0
      %v1872 = vadd.f32 %v949, %v1871
      %v1873 = vpop.f32.mrb[0].mxu0
      %v1874 = vpop.f32.mrb[0].mxu0
      %v1875 = vadd.f32 %v955, %v1874
      %v1876 = vpop.f32.mrb[0].mxu0
      %1877 = vdwg.mxu0
      %v1879 = vsel %vm1352, %v1574, 0
      %1881 = vmatprep.subr.bf16.mxu0 0
      %1882 = vmatpush1.bf16.msra.mxu0 %v1655
      %1883 = vmatprep.subr.bf16.mxu0 0
      %1884 = vmatpush1.bf16.msra.mxu0 0
      %1885 = vmatprep.subr.bf16.mxu0 0
      %1886 = vmatpush1.bf16.msra.mxu0 0
      %1887 = vmatprep.subr.bf16.mxu0 0
      %1888 = vmatpush1.bf16.msra.mxu0 0
      %1889 = vmatprep.subr.bf16.mxu0 0
      %1890 = vmatpush1.bf16.msra.mxu0 0
      %1891 = vmatprep.subr.bf16.mxu0 0
      %1892 = vmatpush1.bf16.msra.mxu0 0
      %1893 = vmatprep.subr.bf16.mxu0 0
      %1894 = vmatpush1.bf16.msra.mxu0 0
      %1895 = vmatprep.subr.bf16.mxu0 0
      %1896 = vmatpush1.bf16.msra.mxu0 0
      %1897 = vmatprep.subr.bf16.mxu0 0
      %1898 = vmatpush1.bf16.msra.mxu0 0
      %1899 = vmatprep.subr.bf16.mxu0 0
      %1900 = vmatpush1.bf16.msra.mxu0 0
      %1901 = vmatprep.subr.bf16.mxu0 0
      %1902 = vmatpush1.bf16.msra.mxu0 0
      %1903 = vmatprep.subr.bf16.mxu0 0
      %1904 = vmatpush1.bf16.msra.mxu0 0
      %1905 = vmatprep.subr.bf16.mxu0 0
      %1906 = vmatpush1.bf16.msra.mxu0 0
      %1907 = vmatprep.subr.bf16.mxu0 0
      %1908 = vmatpush1.bf16.msra.mxu0 0
      %1909 = vmatprep.subr.bf16.mxu0 0
      %1910 = vmatpush1.bf16.msra.mxu0 0
      %1911 = vmatprep.subr.bf16.mxu0 0
      %1912 = vmatpush1.bf16.msra.mxu0 0
      %1913 = vmatprep.mubr.bf16.mxu0 0
      %1914 = vmatmul.mubr.bf16.gmra.mrb[0].mxu0 %v1879
      %v1915 = vpop.f32.mrb[0].mxu0
      %v1916 = vadd.f32 %v961, %v1915
      %v1917 = vpop.f32.mrb[0].mxu0
      %v1918 = vpop.f32.mrb[0].mxu0
      %v1919 = vadd.f32 %v967, %v1918
      %v1920 = vpop.f32.mrb[0].mxu0
      %1921 = vdwg.mxu0
      %v1923 = vsel %vm1352, %v1575, 0
      %1925 = vmatprep.subr.bf16.mxu0 0
      %1926 = vmatpush1.bf16.msra.mxu0 %v1656
      %1927 = vmatprep.subr.bf16.mxu0 0
      %1928 = vmatpush1.bf16.msra.mxu0 0
      %1929 = vmatprep.subr.bf16.mxu0 0
      %1930 = vmatpush1.bf16.msra.mxu0 0
      %1931 = vmatprep.subr.bf16.mxu0 0
      %1932 = vmatpush1.bf16.msra.mxu0 0
      %1933 = vmatprep.subr.bf16.mxu0 0
      %1934 = vmatpush1.bf16.msra.mxu0 0
      %1935 = vmatprep.subr.bf16.mxu0 0
      %1936 = vmatpush1.bf16.msra.mxu0 0
      %1937 = vmatprep.subr.bf16.mxu0 0
      %1938 = vmatpush1.bf16.msra.mxu0 0
      %1939 = vmatprep.subr.bf16.mxu0 0
      %1940 = vmatpush1.bf16.msra.mxu0 0
      %1941 = vmatprep.subr.bf16.mxu0 0
      %1942 = vmatpush1.bf16.msra.mxu0 0
      %1943 = vmatprep.subr.bf16.mxu0 0
      %1944 = vmatpush1.bf16.msra.mxu0 0
      %1945 = vmatprep.subr.bf16.mxu0 0
      %1946 = vmatpush1.bf16.msra.mxu0 0
      %1947 = vmatprep.subr.bf16.mxu0 0
      %1948 = vmatpush1.bf16.msra.mxu0 0
      %1949 = vmatprep.subr.bf16.mxu0 0
      %1950 = vmatpush1.bf16.msra.mxu0 0
      %1951 = vmatprep.subr.bf16.mxu0 0
      %1952 = vmatpush1.bf16.msra.mxu0 0
      %1953 = vmatprep.subr.bf16.mxu0 0
      %1954 = vmatpush1.bf16.msra.mxu0 0
      %1955 = vmatprep.subr.bf16.mxu0 0
      %1956 = vmatpush1.bf16.msra.mxu0 0
      %1957 = vmatprep.mubr.bf16.mxu0 0
      %1958 = vmatmul.mubr.bf16.gmra.mrb[0].mxu0 %v1923
      %v1959 = vpop.f32.mrb[0].mxu0
      %v1960 = vadd.f32 %v973, %v1959
      %v1961 = vpop.f32.mrb[0].mxu0
      %v1962 = vpop.f32.mrb[0].mxu0
      %v1963 = vadd.f32 %v979, %v1962
      %v1964 = vpop.f32.mrb[0].mxu0
      %1965 = vdwg.mxu0
      %v1967 = vsel %vm1352, %v1576, 0
      %1969 = vmatprep.subr.bf16.mxu0 0
      %1970 = vmatpush1.bf16.msra.mxu0 %v1657
      %1971 = vmatprep.subr.bf16.mxu0 0
      %1972 = vmatpush1.bf16.msra.mxu0 0
      %1973 = vmatprep.subr.bf16.mxu0 0
      %1974 = vmatpush1.bf16.msra.mxu0 0
      %1975 = vmatprep.subr.bf16.mxu0 0
      %1976 = vmatpush1.bf16.msra.mxu0 0
      %1977 = vmatprep.subr.bf16.mxu0 0
      %1978 = vmatpush1.bf16.msra.mxu0 0
      %1979 = vmatprep.subr.bf16.mxu0 0
      %1980 = vmatpush1.bf16.msra.mxu0 0
      %1981 = vmatprep.subr.bf16.mxu0 0
      %1982 = vmatpush1.bf16.msra.mxu0 0
      %1983 = vmatprep.subr.bf16.mxu0 0
      %1984 = vmatpush1.bf16.msra.mxu0 0
      %1985 = vmatprep.subr.bf16.mxu0 0
      %1986 = vmatpush1.bf16.msra.mxu0 0
      %1987 = vmatprep.subr.bf16.mxu0 0
      %1988 = vmatpush1.bf16.msra.mxu0 0
      %1989 = vmatprep.subr.bf16.mxu0 0
      %1990 = vmatpush1.bf16.msra.mxu0 0
      %1991 = vmatprep.subr.bf16.mxu0 0
      %1992 = vmatpush1.bf16.msra.mxu0 0
      %1993 = vmatprep.subr.bf16.mxu0 0
      %1994 = vmatpush1.bf16.msra.mxu0 0
      %1995 = vmatprep.subr.bf16.mxu0 0
      %1996 = vmatpush1.bf16.msra.mxu0 0
      %1997 = vmatprep.subr.bf16.mxu0 0
      %1998 = vmatpush1.bf16.msra.mxu0 0
      %1999 = vmatprep.subr.bf16.mxu0 0
      %2000 = vmatpush1.bf16.msra.mxu0 0
      %2001 = vmatprep.mubr.bf16.mxu0 0
      %2002 = vmatmul.mubr.bf16.gmra.mrb[0].mxu0 %v1967
      %v2003 = vpop.f32.mrb[0].mxu0
      %v2004 = vadd.f32 %v985, %v2003
      %v2005 = vpop.f32.mrb[0].mxu0
      %v2006 = vpop.f32.mrb[0].mxu0
      %v2007 = vadd.f32 %v991, %v2006
      %v2008 = vpop.f32.mrb[0].mxu0
      %2009 = vdwg.mxu0
      %v2010 = vld [vmem:[%s3] sm:$0x1]
      %v2011 = vmul.f32 %v2010, 2.0
      %v2013 = vlaneseq
      %v2014 = vshrl.u32 %v2013, 7
      %v2015 = vsub.s32 0, %v2014
      %v2016 = vrot.slane %v2011, %v2015
      %v2018 = vadd.f32 %v1696, %v2016
      %v2019 = vadd.f32 %v1699, %v2016
      %v2020 = vadd.f32 %v1740, %v2016
      %v2021 = vadd.f32 %v1743, %v2016
      %v2022 = vadd.f32 %v1784, %v2016
      %v2023 = vadd.f32 %v1787, %v2016
      %v2024 = vadd.f32 %v1828, %v2016
      %v2025 = vadd.f32 %v1831, %v2016
      %v2026 = vadd.f32 %v1872, %v2016
      %v2027 = vadd.f32 %v1875, %v2016
      %v2028 = vadd.f32 %v1916, %v2016
      %v2029 = vadd.f32 %v1919, %v2016
      %v2030 = vadd.f32 %v1960, %v2016
      %v2031 = vadd.f32 %v1963, %v2016
      %v2032 = vadd.f32 %v2004, %v2016
      %v2033 = vadd.f32 %v2007, %v2016
      %v2034 = vpack.c.bf16 %v2019, %v2018
      %v2035 = vpack.c.bf16 %v2021, %v2020
      %v2036 = vpack.c.bf16 %v2023, %v2022
      %v2037 = vpack.c.bf16 %v2025, %v2024
      %v2038 = vpack.c.bf16 %v2027, %v2026
      %v2039 = vpack.c.bf16 %v2029, %v2028
      %v2040 = vpack.c.bf16 %v2031, %v2030
      %v2041 = vpack.c.bf16 %v2033, %v2032
      %v2050 = vunpack.c.l.b16 %v2034
      %v2051 = vunpack.c.h.b16 %v2034
      %v2052 = vunpack.c.l.b16 %v2035
      %v2053 = vunpack.c.h.b16 %v2035
      %v2054 = vunpack.c.l.b16 %v2036
      %v2055 = vunpack.c.h.b16 %v2036
      %v2056 = vunpack.c.l.b16 %v2037
      %v2057 = vunpack.c.h.b16 %v2037
      %v2058 = vunpack.c.l.b16 %v2038
      %v2059 = vunpack.c.h.b16 %v2038
      %v2060 = vunpack.c.l.b16 %v2039
      %v2061 = vunpack.c.h.b16 %v2039
      %v2062 = vunpack.c.l.b16 %v2040
      %v2063 = vunpack.c.h.b16 %v2040
      %v2064 = vunpack.c.l.b16 %v2041
      %v2065 = vunpack.c.h.b16 %v2041
      %v2066 = vpack.c.b16 %v2050, %v2050
      %v2067 = vpack.c.b16 %v2051, %v2051
      %v2068 = vpack.c.b16 %v2052, %v2052
      %v2069 = vpack.c.b16 %v2053, %v2053
      %v2070 = vpack.c.b16 %v2054, %v2054
      %v2071 = vpack.c.b16 %v2055, %v2055
      %v2072 = vpack.c.b16 %v2056, %v2056
      %v2073 = vpack.c.b16 %v2057, %v2057
      %v2074 = vpack.c.b16 %v2058, %v2058
      %v2075 = vpack.c.b16 %v2059, %v2059
      %v2076 = vpack.c.b16 %v2060, %v2060
      %v2077 = vpack.c.b16 %v2061, %v2061
      %v2078 = vpack.c.b16 %v2062, %v2062
      %v2079 = vpack.c.b16 %v2063, %v2063
      %v2080 = vpack.c.b16 %v2064, %v2064
      %v2081 = vpack.c.b16 %v2065, %v2065
      %2098 = vst [vmem:[%s311] sm:$0xf] %v2066
      %2099 = vst [vmem:[%s311 + $0x4] sm:$0xf] %v2067
      %2100 = vst [vmem:[%s311 + $0x8] sm:$0xf] %v2068
      %2101 = vst [vmem:[%s311 + $0xc] sm:$0xf] %v2069
      %2102 = vst [vmem:[%s311 + $0x10] sm:$0xf] %v2070
      %2103 = vst [vmem:[%s311 + $0x14] sm:$0xf] %v2071
      %2104 = vst [vmem:[%s311 + $0x18] sm:$0xf] %v2072
      %2105 = vst [vmem:[%s311 + $0x1c] sm:$0xf] %v2073
      %2106 = vst [vmem:[%s311 + $0x20] sm:$0xf] %v2074
      %2107 = vst [vmem:[%s311 + $0x24] sm:$0xf] %v2075
      %2108 = vst [vmem:[%s311 + $0x28] sm:$0xf] %v2076
      %2109 = vst [vmem:[%s311 + $0x2c] sm:$0xf] %v2077
      %2110 = vst [vmem:[%s311 + $0x30] sm:$0xf] %v2078
      %2111 = vst [vmem:[%s311 + $0x34] sm:$0xf] %v2079
      %2112 = vst [vmem:[%s311 + $0x38] sm:$0xf] %v2080
      %2113 = vst [vmem:[%s311 + $0x3c] sm:$0xf] %v2081
      %s2114 = smul.u32 %s19, 8
      %v2115 = vlaneseq
      %v2116 = vshrl.u32 %v2115, 7
      %v2117 = vadd.s32 %v2116, 8
      %v2118 = vadd.s32 %v2116, 16
      %v2119 = vadd.s32 %v2116, 24
      %v2120 = vadd.s32 %v2116, 32
      %v2121 = vadd.s32 %v2116, 40
      %v2122 = vadd.s32 %v2116, 48
      %v2123 = vadd.s32 %v2116, 56
      %v2124 = vadd.s32 %v2116, 64
      %v2125 = vadd.s32 %v2116, 72
      %v2126 = vadd.s32 %v2116, 80
      %v2127 = vadd.s32 %v2116, 88
      %v2128 = vadd.s32 %v2116, 96
      %v2129 = vadd.s32 %v2116, 104
      %v2130 = vadd.s32 %v2116, 112
      %v2131 = vadd.s32 %v2116, 120
      %s2132 = ssub.s32 12, %s2114
      %s2133 = smul.u32 %s2132, 16
      %v2134 = vstv %s2133
      %vm2135 = vcmp.lt.s32.totalorder %v2116, %v2134
      %vm2136 = vcmp.lt.s32.totalorder %v2117, %v2134
      %vm2137 = vcmp.lt.s32.totalorder %v2118, %v2134
      %vm2138 = vcmp.lt.s32.totalorder %v2119, %v2134
      %vm2139 = vcmp.lt.s32.totalorder %v2120, %v2134
      %vm2140 = vcmp.lt.s32.totalorder %v2121, %v2134
      %vm2141 = vcmp.lt.s32.totalorder %v2122, %v2134
      %vm2142 = vcmp.lt.s32.totalorder %v2123, %v2134
      %vm2143 = vcmp.lt.s32.totalorder %v2124, %v2134
      %vm2144 = vcmp.lt.s32.totalorder %v2125, %v2134
      %vm2145 = vcmp.lt.s32.totalorder %v2126, %v2134
      %vm2146 = vcmp.lt.s32.totalorder %v2127, %v2134
      %vm2147 = vcmp.lt.s32.totalorder %v2128, %v2134
      %vm2148 = vcmp.lt.s32.totalorder %v2129, %v2134
      %vm2149 = vcmp.lt.s32.totalorder %v2130, %v2134
      %vm2150 = vcmp.lt.s32.totalorder %v2131, %v2134
      %v2151 = vsel %vm2135, 1, 0
      %v2152 = vsel %vm2136, 1, 0
      %v2153 = vsel %vm2137, 1, 0
      %v2154 = vsel %vm2138, 1, 0
      %v2155 = vsel %vm2139, 1, 0
      %v2156 = vsel %vm2140, 1, 0
      %v2157 = vsel %vm2141, 1, 0
      %v2158 = vsel %vm2142, 1, 0
      %v2159 = vsel %vm2143, 1, 0
      %v2160 = vsel %vm2144, 1, 0
      %v2161 = vsel %vm2145, 1, 0
      %v2162 = vsel %vm2146, 1, 0
      %v2163 = vsel %vm2147, 1, 0
      %v2164 = vsel %vm2148, 1, 0
      %v2165 = vsel %vm2149, 1, 0
      %v2166 = vsel %vm2150, 1, 0
      %v2167 = vcvt.s32.f32 %v2151
      %v2168 = vcvt.s32.f32 %v2152
      %v2169 = vcvt.s32.f32 %v2153
      %v2170 = vcvt.s32.f32 %v2154
      %v2171 = vcvt.s32.f32 %v2155
      %v2172 = vcvt.s32.f32 %v2156
      %v2173 = vcvt.s32.f32 %v2157
      %v2174 = vcvt.s32.f32 %v2158
      %v2175 = vcvt.s32.f32 %v2159
      %v2176 = vcvt.s32.f32 %v2160
      %v2177 = vcvt.s32.f32 %v2161
      %v2178 = vcvt.s32.f32 %v2162
      %v2179 = vcvt.s32.f32 %v2163
      %v2180 = vcvt.s32.f32 %v2164
      %v2181 = vcvt.s32.f32 %v2165
      %v2182 = vcvt.s32.f32 %v2166
      %v2183 = vmul.f32 %v2018, %v2167
      %v2184 = vmul.f32 %v2019, %v2168
      %v2185 = vmul.f32 %v2020, %v2169
      %v2186 = vmul.f32 %v2021, %v2170
      %v2187 = vmul.f32 %v2022, %v2171
      %v2188 = vmul.f32 %v2023, %v2172
      %v2189 = vmul.f32 %v2024, %v2173
      %v2190 = vmul.f32 %v2025, %v2174
      %v2191 = vmul.f32 %v2026, %v2175
      %v2192 = vmul.f32 %v2027, %v2176
      %v2193 = vmul.f32 %v2028, %v2177
      %v2194 = vmul.f32 %v2029, %v2178
      %v2195 = vmul.f32 %v2030, %v2179
      %v2196 = vmul.f32 %v2031, %v2180
      %v2197 = vmul.f32 %v2032, %v2181
      %v2198 = vmul.f32 %v2033, %v2182
      %v2199 = vadd.f32 %v2183, %v2184
      %v2200 = vadd.f32 %v2199, %v2185
      %v2201 = vadd.f32 %v2200, %v2186
      %v2202 = vadd.f32 %v2201, %v2187
      %v2203 = vadd.f32 %v2202, %v2188
      %v2204 = vadd.f32 %v2203, %v2189
      %v2205 = vadd.f32 %v2204, %v2190
      %v2206 = vadd.f32 %v2205, %v2191
      %v2207 = vadd.f32 %v2206, %v2192
      %v2208 = vadd.f32 %v2207, %v2193
      %v2209 = vadd.f32 %v2208, %v2194
      %v2210 = vadd.f32 %v2209, %v2195
      %v2211 = vadd.f32 %v2210, %v2196
      %v2212 = vadd.f32 %v2211, %v2197
      %v2213 = vadd.f32 %v2212, %v2198
      %v2214 = vrot.slane %v2213, 4
      %v2215 = vadd.f32 %v2213, %v2214
      %v2216 = vrot.slane %v2215, 2
      %v2217 = vadd.f32 %v2215, %v2216
      %v2218 = vrot.slane %v2217, 1
      %v2219 = vadd.f32 %v2217, %v2218
      %2220 = vst [vmem:[%s315] sm:$0x1] %v2219
      %v2221 = vmul.f32 %v2183, %v2018
      %v2222 = vmul.f32 %v2184, %v2019
      %v2223 = vmul.f32 %v2185, %v2020
      %v2224 = vmul.f32 %v2186, %v2021
      %v2225 = vmul.f32 %v2187, %v2022
      %v2226 = vmul.f32 %v2188, %v2023
      %v2227 = vmul.f32 %v2189, %v2024
      %v2228 = vmul.f32 %v2190, %v2025
      %v2229 = vmul.f32 %v2191, %v2026
      %v2230 = vmul.f32 %v2192, %v2027
      %v2231 = vmul.f32 %v2193, %v2028
      %v2232 = vmul.f32 %v2194, %v2029
      %v2233 = vmul.f32 %v2195, %v2030
      %v2234 = vmul.f32 %v2196, %v2031
      %v2235 = vmul.f32 %v2197, %v2032
      %v2236 = vmul.f32 %v2198, %v2033
      %v2237 = vadd.f32 %v2221, %v2222
      %v2238 = vadd.f32 %v2237, %v2223
      %v2239 = vadd.f32 %v2238, %v2224
      %v2240 = vadd.f32 %v2239, %v2225
      %v2241 = vadd.f32 %v2240, %v2226
      %v2242 = vadd.f32 %v2241, %v2227
      %v2243 = vadd.f32 %v2242, %v2228
      %v2244 = vadd.f32 %v2243, %v2229
      %v2245 = vadd.f32 %v2244, %v2230
      %v2246 = vadd.f32 %v2245, %v2231
      %v2247 = vadd.f32 %v2246, %v2232
      %v2248 = vadd.f32 %v2247, %v2233
      %v2249 = vadd.f32 %v2248, %v2234
      %v2250 = vadd.f32 %v2249, %v2235
      %v2251 = vadd.f32 %v2250, %v2236
      %v2252 = vrot.slane %v2251, 4
      %v2253 = vadd.f32 %v2251, %v2252
      %v2254 = vrot.slane %v2253, 2
      %v2255 = vadd.f32 %v2253, %v2254
      %v2256 = vrot.slane %v2255, 1
      %v2257 = vadd.f32 %v2255, %v2256
      %2258 = vst [vmem:[%s318] sm:$0x1] %v2257
      %s2259 = smul.u32 8, %s19
      %p2260 = scmp.lt.s32.totalorder %s2259, 15
      %s2261 = scalar_select %p2260, %s2259, 15
      %s2262 = smul.addr %s2261, 2
      %s2263 = smul.addr %s2262, 4
      %s2264 = scalar_lea.vmem %s4, %s2263
      %s2265 = smul.u32 8, %s19
      %p2266 = scmp.lt.s32.totalorder %s2265, 15
      %s2267 = scalar_select %p2266, %s2265, 15
      %s2268 = smul.addr %s2267, 2
      %s2269 = smul.addr %s2268, 4
      %s2270 = scalar_lea.vmem %s5, %s2269
      %p2271 = scmp.lt.s32.totalorder %s19, 1
      %s2272 = scalar_select %p2271, %s19, 1
      %s2273 = scalar_lea.vmem %s6, %s2272
      %p2274 = scmp.lt.s32.totalorder %s19, 1
      %s2275 = scalar_select %p2274, %s19, 1
      %s2276 = scalar_lea.vmem %s7, %s2275
      // Predicated region
      $region37: #{joint_level_forward.4} parent=35 // pred_check
        %p2277 = pneg %p126
      $region38: #{joint_level_forward.4} parent=35 // pred_check_branch
        %2279 = sbr.rel (%p2277) target = $region40
      $region39: #{joint_level_forward.4} parent=35 // pred_region
        %s2280 = smul.u32 8, %s19
      $region40: #{joint_level_forward.4} parent=35 // pred_fallthru
        _
      // Predicated region
      $region41: #{joint_level_forward.4} parent=35 // pred_check
        %p2281 = pneg %p152
      $region42: #{joint_level_forward.4} parent=35 // pred_check_branch
        %2283 = sbr.rel (%p2281) target = $region44
      $region43: #{joint_level_forward.4} parent=35 // pred_region
        %s2284 = smul.u32 8, %s19
      $region44: #{joint_level_forward.4} parent=35 // pred_fallthru
        _
      // Predicated region
      $region45: #{joint_level_forward.4} parent=35 // pred_check
        %p2285 = pneg %p178
      $region46: #{joint_level_forward.4} parent=35 // pred_check_branch
        %2287 = sbr.rel (%p2285) target = $region48
      $region47: #{joint_level_forward.4} parent=35 // pred_region
        _
      $region48: #{joint_level_forward.4} parent=35 // pred_fallthru
        _
      // Predicated region
      $region49: #{joint_level_forward.4} parent=35 // pred_check
        %p2288 = pneg %p204
      $region50: #{joint_level_forward.4} parent=35 // pred_check_branch
        %2290 = sbr.rel (%p2288) target = $region52
      $region51: #{joint_level_forward.4} parent=35 // pred_region
        _
      $region52: #{joint_level_forward.4} parent=35 // pred_fallthru
        _
    $region36: #{joint_level_forward.4} parent=5 // pred_fallthru
      _
    %p2291 = scmp.le.s32.totalorder 2, %s14
    // Predicated region
    $region53: #{joint_level_forward.4} parent=5 // pred_check
      %p2292 = pneg %p2291
    $region54: #{joint_level_forward.4} parent=5 // pred_check_branch
      %2294 = sbr.rel (%p2292) target = $region56
    $region55: #{joint_level_forward.4} parent=5 // pred_region
      %s2295 = ssub.s32 %s14, 2
      // Predicated region
      $region57: #{joint_level_forward.4} parent=55 // pred_check
        %p2296 = pneg %p132
      $region58: #{joint_level_forward.4} parent=55 // pred_check_branch
        %2298 = sbr.rel (%p2296) target = $region60
      $region59: #{joint_level_forward.4} parent=55 // pred_region
        %s2299 = smul.u32 8, %s20
        %p2300 = scmp.lt.s32.totalorder %s2299, 15
        %s2301 = scalar_select %p2300, %s2299, 15
        %s2302 = smul.addr %s2301, 2
        %s2303 = smul.addr %s2302, 4
        %s2304 = scalar_lea.vmem %s4, %s2303
      $region60: #{joint_level_forward.4} parent=55 // pred_fallthru
        _
      // Predicated region
      $region61: #{joint_level_forward.4} parent=55 // pred_check
        %p2305 = pneg %p158
      $region62: #{joint_level_forward.4} parent=55 // pred_check_branch
        %2307 = sbr.rel (%p2305) target = $region64
      $region63: #{joint_level_forward.4} parent=55 // pred_region
        %s2308 = smul.u32 8, %s20
        %p2309 = scmp.lt.s32.totalorder %s2308, 15
        %s2310 = scalar_select %p2309, %s2308, 15
        %s2311 = smul.addr %s2310, 2
        %s2312 = smul.addr %s2311, 4
        %s2313 = scalar_lea.vmem %s5, %s2312
      $region64: #{joint_level_forward.4} parent=55 // pred_fallthru
        _
      // Predicated region
      $region65: #{joint_level_forward.4} parent=55 // pred_check
        %p2314 = pneg %p184
      $region66: #{joint_level_forward.4} parent=55 // pred_check_branch
        %2316 = sbr.rel (%p2314) target = $region68
      $region67: #{joint_level_forward.4} parent=55 // pred_region
        %p2317 = scmp.lt.s32.totalorder %s20, 1
        %s2318 = scalar_select %p2317, %s20, 1
        %s2319 = scalar_lea.vmem %s6, %s2318
      $region68: #{joint_level_forward.4} parent=55 // pred_fallthru
        _
      // Predicated region
      $region69: #{joint_level_forward.4} parent=55 // pred_check
        %p2320 = pneg %p210
      $region70: #{joint_level_forward.4} parent=55 // pred_check_branch
        %2322 = sbr.rel (%p2320) target = $region72
      $region71: #{joint_level_forward.4} parent=55 // pred_region
        %p2323 = scmp.lt.s32.totalorder %s20, 1
        %s2324 = scalar_select %p2323, %s20, 1
        %s2325 = scalar_lea.vmem %s7, %s2324
      $region72: #{joint_level_forward.4} parent=55 // pred_fallthru
        _
    $region56: #{joint_level_forward.4} parent=5 // pred_fallthru
      _
  $region6: #{joint_level_forward.4} parent=0 // loop_footer
    %s18 = sadd.s32 1, %s14
  $region7: #{joint_level_forward.4} parent=0 // loop_footer_branch
    %13 = sbr.rel target = $region3
  $region8: #{joint_level_forward.4} parent=0 // loop_exit
    _

</llo_original>
